<compile_context>
chip_gen: v7x
topology: tpu7x:2x2x1
jax: 0.10.0
libtpu: 0.0.40
codegen_flags: <defaults>
</compile_context>

<pallas_src>
import functools
import math

import jax
import jax.numpy as jnp
import numpy as np
from jax.experimental import pallas as pl
from jax.experimental.pallas import tpu as pltpu

# full-f32 matmuls so the Pallas kernel and the pure-JAX reference agree tightly
jax.config.update("jax_default_matmul_precision", "highest")


def fused_hgt_kernel(x_ref, src_oh_ref, dst_oh_ref, nt_oh_ref, et_oh_ref,
                     wkvq0_ref, wrel0_ref, wa0_ref,
                     wkvq1_ref, wrel1_ref, wa1_ref,
                     out_ref, *, num_types, num_rels, douts):
    f32 = jnp.float32
    S_src = src_oh_ref[...]     # [E, N] one-hot of edge source nodes
    S_dst = dst_oh_ref[...]     # [E, N] one-hot of edge destination nodes
    nt_oh = nt_oh_ref[...]      # [N, T] node-type one-hot
    et_oh = et_oh_ref[...]      # [E, R] edge-type one-hot

    TN = (((0,), (0,)), ((), ()))   # contract over the edge axis (lhs "transposed")
    NT = (((1,), (1,)), ((), ()))   # contract over the node axis (rhs "transposed")

    def layer(x, wkvq, wrel, wa, dout):
        N = x.shape[0]
        E = S_src.shape[0]
        d2 = 2 * dout
        d3 = 3 * dout

        # --- typed K/V/Q projection at NODE level: one wide matmul + type select
        xw = jnp.dot(x, wkvq, preferred_element_type=f32)              # [N, T*3*dout]
        kvq = jnp.zeros((N, d3), f32)
        for t in range(num_types):
            kvq = kvq + nt_oh[:, t:t + 1] * xw[:, t * d3:(t + 1) * d3]

        # --- gather K/V from source nodes, Q from destination nodes (MXU) ---
        kv_e = jnp.dot(S_src, kvq[:, :d2], preferred_element_type=f32)  # [E, 2*dout]
        q_e = jnp.dot(S_dst, kvq[:, d2:], preferred_element_type=f32)   # [E, dout]

        # --- per-relation transform: block-diag [Att*pri/sqrt_dk | Msg] matmul
        #     + one-hot relation select ---
        kv_rel = jnp.dot(kv_e, wrel, preferred_element_type=f32)        # [E, R*2*dout]
        kv2 = jnp.zeros((E, d2), f32)
        for r in range(num_rels):
            kv2 = kv2 + et_oh[:, r:r + 1] * kv_rel[:, r * d2:(r + 1) * d2]
        k2 = kv2[:, :dout]
        v2 = kv2[:, dout:]

        # --- attention score (pri / sqrt_dk already folded into Att block) ---
        score = jnp.sum(k2 * q_e, axis=1, keepdims=True)                # [E, 1]

        # --- segment softmax over destination node (unnormalized here; the
        #     denominator is applied after aggregation at node level) ---
        masked = jnp.where(S_dst > 0.5, score, -1e30)                   # [E, N]
        node_max = jnp.max(masked, axis=0, keepdims=True)               # [1, N]
        max_e = jax.lax.dot_general(S_dst, node_max, NT,
                                    preferred_element_type=f32)         # [E, 1]
        ex = jnp.exp(score - max_e)                                      # [E, 1]

        # --- scatter-sum of [msg | exp] to destination nodes in ONE MXU op ---
        ev = jnp.concatenate([v2 * ex, ex], axis=1)                      # [E, dout+1]
        aggd = jax.lax.dot_general(S_dst, ev, TN,
                                   preferred_element_type=f32)           # [N, dout+1]
        denom = aggd[:, dout:dout + 1] + 1e-16                           # [N, 1]
        agg = aggd[:, :dout] / denom                                      # [N, dout]

        # --- typed update ('upd'): one wide matmul + type select.
        #     sigmoid(skip) gate is folded into wa at pack time. ---
        aw = jnp.dot(agg, wa, preferred_element_type=f32)                # [N, T*dout]
        trans = jnp.zeros((N, dout), f32)
        for t in range(num_types):
            trans = trans + nt_oh[:, t:t + 1] * aw[:, t * dout:(t + 1) * dout]
        return trans

    h1 = layer(x_ref[...], wkvq0_ref[...], wrel0_ref[...], wa0_ref[...], douts[0])
    out_ref[...] = layer(h1, wkvq1_ref[...], wrel1_ref[...], wa1_ref[...], douts[1])


def pack_layer_params(p):
    """One-time parameter packing (glue): concatenated / block-diag weights.

    Folds relation_pri / sqrt_dk into the Att blocks (only the attention score
    consumes the Att output) and sigmoid(skip) into the typed-update weights.
    """
    T, din, dout = p["Wk"].shape
    R = p["Att"].shape[0]
    sqrt_dk = math.sqrt(dout)
    # [din, T*3*dout]: for each type t the columns are [Wk[t] | Wv[t] | Wq[t]]
    wkvq = jnp.concatenate([p["Wk"], p["Wv"], p["Wq"]], axis=-1)        # [T, din, 3*dout]
    wkvq = jnp.transpose(wkvq, (1, 0, 2)).reshape(din, T * 3 * dout)
    # block-diag relation weights: block r = [[Att[r]*pri[r]/sqrt_dk, 0], [0, Msg[r]]]
    att_scaled = p["Att"] * (p["pri"][:, :, None] / sqrt_dk)            # [R, dout, dout]
    z = jnp.zeros((dout, dout), jnp.float32)
    blocks = []
    for r in range(R):
        top = jnp.concatenate([att_scaled[r], z], axis=1)
        bot = jnp.concatenate([z, p["Msg"][r]], axis=1)
        blocks.append(jnp.concatenate([top, bot], axis=0))
    wrel = jnp.concatenate(blocks, axis=1)                              # [2*dout, R*2*dout]
    # typed update weights with sigmoid(skip) gate folded in: [dout, T*dout]
    a_scaled = p["A"] * jax.nn.sigmoid(p["skip"])[:, :, None]           # [T, dout, dout]
    wa = jnp.transpose(a_scaled, (1, 0, 2)).reshape(dout, T * dout)
    return wkvq, wrel, wa


def my_hgt_pallas(x, src_oh, dst_oh, nt_oh, et_oh, p0, p1, h_dim, out_dim):
    N = x.shape[0]
    T = nt_oh.shape[1]
    R = et_oh.shape[1]
    packed0 = pack_layer_params(p0)
    packed1 = pack_layer_params(p1)
    kernel = functools.partial(
        fused_hgt_kernel, num_types=T, num_rels=R, douts=(h_dim, out_dim))
    args = (x, src_oh, dst_oh, nt_oh, et_oh, *packed0, *packed1)
    return pl.pallas_call(
        kernel,
        out_shape=jax.ShapeDtypeStruct((N, out_dim), jnp.float32),
        in_specs=[pl.BlockSpec(memory_space=pltpu.MemorySpace.VMEM)] * len(args),
        out_specs=pl.BlockSpec(memory_space=pltpu.MemorySpace.VMEM),
    )(*args)


def make_layer_params(key, in_dim, out_dim, num_types, num_rels):
    ks = jax.random.split(key, 6)
    return {
        "Wk": jax.random.uniform(ks[0], (num_types, in_dim, out_dim), jnp.float32),
        "Wq": jax.random.uniform(ks[1], (num_types, in_dim, out_dim), jnp.float32),
        "Wv": jax.random.uniform(ks[2], (num_types, in_dim, out_dim), jnp.float32),
        "A": jax.random.uniform(ks[3], (num_types, out_dim, out_dim), jnp.float32),
        "Att": jax.random.uniform(ks[4], (num_rels, out_dim, out_dim), jnp.float32),
        "Msg": jax.random.uniform(ks[5], (num_rels, out_dim, out_dim), jnp.float32),
        "pri": jnp.ones((num_rels, 1), jnp.float32),     # relation_pri = ones
        "skip": jnp.ones((num_types, 1), jnp.float32),   # skip = ones
    }


# pure-JAX reference mirroring the PyTorch MyHGTLayer semantics exactly
def hgt_layer_ref(x, src, dst, edge_type, node_type, p, sqrt_dk):
    N = x.shape[0]
    x_j, x_i = x[src], x[dst]
    nt_j, nt_i = node_type[src], node_type[dst]
    k = jnp.einsum("ei,eio->eo", x_j, p["Wk"][nt_j])
    v = jnp.einsum("ei,eio->eo", x_j, p["Wv"][nt_j])
    q = jnp.einsum("ei,eio->eo", x_i, p["Wq"][nt_i])
    k = jnp.einsum("eo,eop->ep", k, p["Att"][edge_type])
    v = jnp.einsum("eo,eop->ep", v, p["Msg"][edge_type])
    score = jnp.sum(k * q, axis=1, keepdims=True) * p["pri"][edge_type] / sqrt_dk
    s = score[:, 0]
    seg_max = jnp.full((N,), -1e30, jnp.float32).at[dst].max(s)
    ex = jnp.exp(s - seg_max[dst])
    denom = jnp.zeros((N,), jnp.float32).at[dst].add(ex) + 1e-16
    alpha = (ex / denom[dst])[:, None]
    agg = jnp.zeros((N, v.shape[1]), jnp.float32).at[dst].add(v * alpha)
    trans = jnp.einsum("no,nop->np", agg, p["A"][node_type])
    return trans * jax.nn.sigmoid(p["skip"][node_type])


if __name__ == "__main__":
    key = jax.random.PRNGKey(0)
    N, E = 16, 48
    in_dim, h_dim, out_dim = 16, 32, 16
    num_node_types, num_rels = 3, 4

    k_h, k_src, k_dst, k_et, k_nt, k_p0, k_p1 = jax.random.split(key, 7)
    h = jax.random.uniform(k_h, (N, in_dim), jnp.float32)
    src = jax.random.randint(k_src, (E,), 0, N)          # adj[0]
    dst = jax.random.randint(k_dst, (E,), 0, N)          # adj[1]
    edge_type = jax.random.randint(k_et, (E,), 0, num_rels)
    node_type = jax.random.randint(k_nt, (N,), 0, num_node_types)

    p0 = make_layer_params(k_p0, in_dim, h_dim, num_node_types, num_rels)
    p1 = make_layer_params(k_p1, h_dim, out_dim, num_node_types, num_rels)

    # one-hot encodings (glue / parameter setup)
    src_oh = jax.nn.one_hot(src, N, dtype=jnp.float32)
    dst_oh = jax.nn.one_hot(dst, N, dtype=jnp.float32)
    nt_oh = jax.nn.one_hot(node_type, num_node_types, dtype=jnp.float32)
    et_oh = jax.nn.one_hot(edge_type, num_rels, dtype=jnp.float32)

    # MyHGT forward: layer0 (in_dim -> h_dim) + layer1 (h_dim -> out_dim), fused
    out = my_hgt_pallas(h, src_oh, dst_oh, nt_oh, et_oh, p0, p1, h_dim, out_dim)
    out = jax.block_until_ready(out)

    # correctness check against a pure-JAX reference of the PyTorch semantics
    r1 = hgt_layer_ref(h, src, dst, edge_type, node_type, p0, math.sqrt(h_dim))
    r2 = hgt_layer_ref(r1, src, dst, edge_type, node_type, p1, math.sqrt(out_dim))
    np.testing.assert_allclose(np.asarray(out), np.asarray(r2), rtol=1e-3, atol=1e-3)

    print("KERNEL_OK")
</pallas_src>

<mosaic_0001>
module attributes {stable_mosaic.version = 11 : i64} {
  func.func @fused_hgt_kernel(%arg0: memref<16x16xf32, #tpu.memory_space<vmem>>, %arg1: memref<48x16xf32, #tpu.memory_space<vmem>>, %arg2: memref<48x16xf32, #tpu.memory_space<vmem>>, %arg3: memref<16x3xf32, #tpu.memory_space<vmem>>, %arg4: memref<48x4xf32, #tpu.memory_space<vmem>>, %arg5: memref<16x288xf32, #tpu.memory_space<vmem>>, %arg6: memref<64x256xf32, #tpu.memory_space<vmem>>, %arg7: memref<32x96xf32, #tpu.memory_space<vmem>>, %arg8: memref<32x144xf32, #tpu.memory_space<vmem>>, %arg9: memref<32x128xf32, #tpu.memory_space<vmem>>, %arg10: memref<16x48xf32, #tpu.memory_space<vmem>>, %arg11: memref<16x16xf32, #tpu.memory_space<vmem>>) attributes {dimension_semantics = [], scalar_prefetch = 0 : i64, scratch_operands = 0 : i64, tpu.core_type = #tpu.core_type<tc>} {
    %c0 = arith.constant 0 : index
    %c0_0 = arith.constant 0 : index
    %0 = vector.load %arg1[%c0, %c0_0] : memref<48x16xf32, #tpu.memory_space<vmem>>, vector<48x16xf32>
    %c0_1 = arith.constant 0 : index
    %c0_2 = arith.constant 0 : index
    %1 = vector.load %arg2[%c0_1, %c0_2] : memref<48x16xf32, #tpu.memory_space<vmem>>, vector<48x16xf32>
    %c0_3 = arith.constant 0 : index
    %c0_4 = arith.constant 0 : index
    %2 = vector.load %arg3[%c0_3, %c0_4] : memref<16x3xf32, #tpu.memory_space<vmem>>, vector<16x3xf32>
    %c0_5 = arith.constant 0 : index
    %c0_6 = arith.constant 0 : index
    %3 = vector.load %arg4[%c0_5, %c0_6] : memref<48x4xf32, #tpu.memory_space<vmem>>, vector<48x4xf32>
    %c0_7 = arith.constant 0 : index
    %c0_8 = arith.constant 0 : index
    %4 = vector.load %arg0[%c0_7, %c0_8] : memref<16x16xf32, #tpu.memory_space<vmem>>, vector<16x16xf32>
    %c0_9 = arith.constant 0 : index
    %c0_10 = arith.constant 0 : index
    %5 = vector.load %arg5[%c0_9, %c0_10] : memref<16x288xf32, #tpu.memory_space<vmem>>, vector<16x288xf32>
    %c0_11 = arith.constant 0 : index
    %c0_12 = arith.constant 0 : index
    %6 = vector.load %arg6[%c0_11, %c0_12] : memref<64x256xf32, #tpu.memory_space<vmem>>, vector<64x256xf32>
    %c0_13 = arith.constant 0 : index
    %c0_14 = arith.constant 0 : index
    %7 = vector.load %arg7[%c0_13, %c0_14] : memref<32x96xf32, #tpu.memory_space<vmem>>, vector<32x96xf32>
    %cst = arith.constant dense<0.000000e+00> : vector<16x288xf32>
    %8 = tpu.matmul %4, %5, %cst {dimension_numbers = #tpu.dot_dimension_numbers<[1], [0], [0], [1], [0, 0, 1, 1], [], []>, precision = #tpu.contract_precision<fp32>} : vector<16x16xf32>, vector<16x288xf32>, vector<16x288xf32> -> vector<16x288xf32>
    %cst_15 = arith.constant 0.000000e+00 : f32
    %9 = vector.broadcast %cst_15 : f32 to vector<16x96xf32>
    %10 = vector.extract_strided_slice %2 {offsets = [0, 0], sizes = [16, 1], strides = [1, 1]} : vector<16x3xf32> to vector<16x1xf32>
    %11 = vector.extract_strided_slice %8 {offsets = [0, 0], sizes = [16, 96], strides = [1, 1]} : vector<16x288xf32> to vector<16x96xf32>
    %12 = vector.broadcast %10 : vector<16x1xf32> to vector<16x96xf32>
    %13 = arith.mulf %12, %11 : vector<16x96xf32>
    %14 = arith.addf %9, %13 : vector<16x96xf32>
    %15 = vector.extract_strided_slice %2 {offsets = [0, 1], sizes = [16, 1], strides = [1, 1]} : vector<16x3xf32> to vector<16x1xf32>
    %16 = vector.extract_strided_slice %8 {offsets = [0, 96], sizes = [16, 96], strides = [1, 1]} : vector<16x288xf32> to vector<16x96xf32>
    %17 = vector.broadcast %15 : vector<16x1xf32> to vector<16x96xf32>
    %18 = arith.mulf %17, %16 : vector<16x96xf32>
    %19 = arith.addf %14, %18 : vector<16x96xf32>
    %20 = vector.extract_strided_slice %2 {offsets = [0, 2], sizes = [16, 1], strides = [1, 1]} : vector<16x3xf32> to vector<16x1xf32>
    %21 = vector.extract_strided_slice %8 {offsets = [0, 192], sizes = [16, 96], strides = [1, 1]} : vector<16x288xf32> to vector<16x96xf32>
    %22 = vector.broadcast %20 : vector<16x1xf32> to vector<16x96xf32>
    %23 = arith.mulf %22, %21 : vector<16x96xf32>
    %24 = arith.addf %19, %23 : vector<16x96xf32>
    %25 = vector.extract_strided_slice %24 {offsets = [0, 0], sizes = [16, 64], strides = [1, 1]} : vector<16x96xf32> to vector<16x64xf32>
    %cst_16 = arith.constant dense<0.000000e+00> : vector<48x64xf32>
    %26 = tpu.matmul %0, %25, %cst_16 {dimension_numbers = #tpu.dot_dimension_numbers<[1], [0], [0], [1], [0, 0, 1, 1], [], []>, precision = #tpu.contract_precision<fp32>} : vector<48x16xf32>, vector<16x64xf32>, vector<48x64xf32> -> vector<48x64xf32>
    %27 = vector.extract_strided_slice %24 {offsets = [0, 64], sizes = [16, 32], strides = [1, 1]} : vector<16x96xf32> to vector<16x32xf32>
    %cst_17 = arith.constant dense<0.000000e+00> : vector<48x32xf32>
    %28 = tpu.matmul %1, %27, %cst_17 {dimension_numbers = #tpu.dot_dimension_numbers<[1], [0], [0], [1], [0, 0, 1, 1], [], []>, precision = #tpu.contract_precision<fp32>} : vector<48x16xf32>, vector<16x32xf32>, vector<48x32xf32> -> vector<48x32xf32>
    %cst_18 = arith.constant dense<0.000000e+00> : vector<48x256xf32>
    %29 = tpu.matmul %26, %6, %cst_18 {dimension_numbers = #tpu.dot_dimension_numbers<[1], [0], [0], [1], [0, 0, 1, 1], [], []>, precision = #tpu.contract_precision<fp32>} : vector<48x64xf32>, vector<64x256xf32>, vector<48x256xf32> -> vector<48x256xf32>
    %cst_19 = arith.constant 0.000000e+00 : f32
    %30 = vector.broadcast %cst_19 : f32 to vector<48x64xf32>
    %31 = vector.extract_strided_slice %3 {offsets = [0, 0], sizes = [48, 1], strides = [1, 1]} : vector<48x4xf32> to vector<48x1xf32>
    %32 = vector.extract_strided_slice %29 {offsets = [0, 0], sizes = [48, 64], strides = [1, 1]} : vector<48x256xf32> to vector<48x64xf32>
    %33 = vector.broadcast %31 : vector<48x1xf32> to vector<48x64xf32>
    %34 = arith.mulf %33, %32 : vector<48x64xf32>
    %35 = arith.addf %30, %34 : vector<48x64xf32>
    %36 = vector.extract_strided_slice %3 {offsets = [0, 1], sizes = [48, 1], strides = [1, 1]} : vector<48x4xf32> to vector<48x1xf32>
    %37 = vector.extract_strided_slice %29 {offsets = [0, 64], sizes = [48, 64], strides = [1, 1]} : vector<48x256xf32> to vector<48x64xf32>
    %38 = vector.broadcast %36 : vector<48x1xf32> to vector<48x64xf32>
    %39 = arith.mulf %38, %37 : vector<48x64xf32>
    %40 = arith.addf %35, %39 : vector<48x64xf32>
    %41 = vector.extract_strided_slice %3 {offsets = [0, 2], sizes = [48, 1], strides = [1, 1]} : vector<48x4xf32> to vector<48x1xf32>
    %42 = vector.extract_strided_slice %29 {offsets = [0, 128], sizes = [48, 64], strides = [1, 1]} : vector<48x256xf32> to vector<48x64xf32>
    %43 = vector.broadcast %41 : vector<48x1xf32> to vector<48x64xf32>
    %44 = arith.mulf %43, %42 : vector<48x64xf32>
    %45 = arith.addf %40, %44 : vector<48x64xf32>
    %46 = vector.extract_strided_slice %3 {offsets = [0, 3], sizes = [48, 1], strides = [1, 1]} : vector<48x4xf32> to vector<48x1xf32>
    %47 = vector.extract_strided_slice %29 {offsets = [0, 192], sizes = [48, 64], strides = [1, 1]} : vector<48x256xf32> to vector<48x64xf32>
    %48 = vector.broadcast %46 : vector<48x1xf32> to vector<48x64xf32>
    %49 = arith.mulf %48, %47 : vector<48x64xf32>
    %50 = arith.addf %45, %49 : vector<48x64xf32>
    %51 = vector.extract_strided_slice %50 {offsets = [0, 0], sizes = [48, 32], strides = [1, 1]} : vector<48x64xf32> to vector<48x32xf32>
    %52 = vector.extract_strided_slice %50 {offsets = [0, 32], sizes = [48, 32], strides = [1, 1]} : vector<48x64xf32> to vector<48x32xf32>
    %53 = arith.mulf %51, %28 : vector<48x32xf32>
    %cst_20 = arith.constant dense<0.000000e+00> : vector<48xf32>
    %54 = vector.multi_reduction <add>, %53, %cst_20 [1] : vector<48x32xf32> to vector<48xf32>
    %55 = vector.shape_cast %54 : vector<48xf32> to vector<48x1xf32>
    %cst_21 = arith.constant 5.000000e-01 : f32
    %56 = vector.broadcast %cst_21 : f32 to vector<48x16xf32>
    %57 = arith.cmpf ogt, %1, %56 : vector<48x16xf32>
    %cst_22 = arith.constant -1.000000e+30 : f32
    %58 = vector.shape_cast %55 : vector<48x1xf32> to vector<48x1xf32>
    %59 = vector.broadcast %58 : vector<48x1xf32> to vector<48x16xf32>
    %60 = vector.broadcast %cst_22 : f32 to vector<48x16xf32>
    %61 = arith.select %57, %59, %60 : vector<48x16xi1>, vector<48x16xf32>
    %cst_23 = arith.constant dense<0xFF800000> : vector<16xf32>
    %62 = vector.multi_reduction <maximumf>, %61, %cst_23 [0] : vector<48x16xf32> to vector<16xf32>
    %63 = vector.shape_cast %62 : vector<16xf32> to vector<1x16xf32>
    %cst_24 = arith.constant dense<0.000000e+00> : vector<48x1xf32>
    %64 = tpu.matmul %1, %63, %cst_24 {dimension_numbers = #tpu.dot_dimension_numbers<[1], [1], [0], [0], [0, 0, 1, 0], [], []>, precision = #tpu.contract_precision<fp32>} : vector<48x16xf32>, vector<1x16xf32>, vector<48x1xf32> -> vector<48x1xf32>
    %65 = arith.subf %55, %64 : vector<48x1xf32>
    %66 = math.exp %65 : vector<48x1xf32>
    %67 = vector.broadcast %66 : vector<48x1xf32> to vector<48x32xf32>
    %68 = arith.mulf %52, %67 : vector<48x32xf32>
    %69 = tpu.concatenate %68, %66 in 1 : vector<48x32xf32>, vector<48x1xf32> -> vector<48x33xf32>
    %cst_25 = arith.constant dense<0.000000e+00> : vector<16x33xf32>
    %70 = tpu.matmul %1, %69, %cst_25 {dimension_numbers = #tpu.dot_dimension_numbers<[0], [0], [1], [1], [0, 1, 1, 1], [], []>, precision = #tpu.contract_precision<fp32>} : vector<48x16xf32>, vector<48x33xf32>, vector<16x33xf32> -> vector<16x33xf32>
    %71 = vector.extract_strided_slice %70 {offsets = [0, 32], sizes = [16, 1], strides = [1, 1]} : vector<16x33xf32> to vector<16x1xf32>
    %cst_26 = arith.constant 1.000000e-16 : f32
    %72 = vector.broadcast %cst_26 : f32 to vector<16x1xf32>
    %73 = arith.addf %71, %72 : vector<16x1xf32>
    %74 = vector.extract_strided_slice %70 {offsets = [0, 0], sizes = [16, 32], strides = [1, 1]} : vector<16x33xf32> to vector<16x32xf32>
    %75 = vector.broadcast %73 : vector<16x1xf32> to vector<16x32xf32>
    %76 = arith.divf %74, %75 : vector<16x32xf32>
    %cst_27 = arith.constant dense<0.000000e+00> : vector<16x96xf32>
    %77 = tpu.matmul %76, %7, %cst_27 {dimension_numbers = #tpu.dot_dimension_numbers<[1], [0], [0], [1], [0, 0, 1, 1], [], []>, precision = #tpu.contract_precision<fp32>} : vector<16x32xf32>, vector<32x96xf32>, vector<16x96xf32> -> vector<16x96xf32>
    %cst_28 = arith.constant 0.000000e+00 : f32
    %78 = vector.broadcast %cst_28 : f32 to vector<16x32xf32>
    %79 = vector.extract_strided_slice %2 {offsets = [0, 0], sizes = [16, 1], strides = [1, 1]} : vector<16x3xf32> to vector<16x1xf32>
    %80 = vector.extract_strided_slice %77 {offsets = [0, 0], sizes = [16, 32], strides = [1, 1]} : vector<16x96xf32> to vector<16x32xf32>
    %81 = vector.broadcast %79 : vector<16x1xf32> to vector<16x32xf32>
    %82 = arith.mulf %81, %80 : vector<16x32xf32>
    %83 = arith.addf %78, %82 : vector<16x32xf32>
    %84 = vector.extract_strided_slice %2 {offsets = [0, 1], sizes = [16, 1], strides = [1, 1]} : vector<16x3xf32> to vector<16x1xf32>
    %85 = vector.extract_strided_slice %77 {offsets = [0, 32], sizes = [16, 32], strides = [1, 1]} : vector<16x96xf32> to vector<16x32xf32>
    %86 = vector.broadcast %84 : vector<16x1xf32> to vector<16x32xf32>
    %87 = arith.mulf %86, %85 : vector<16x32xf32>
    %88 = arith.addf %83, %87 : vector<16x32xf32>
    %89 = vector.extract_strided_slice %2 {offsets = [0, 2], sizes = [16, 1], strides = [1, 1]} : vector<16x3xf32> to vector<16x1xf32>
    %90 = vector.extract_strided_slice %77 {offsets = [0, 64], sizes = [16, 32], strides = [1, 1]} : vector<16x96xf32> to vector<16x32xf32>
    %91 = vector.broadcast %89 : vector<16x1xf32> to vector<16x32xf32>
    %92 = arith.mulf %91, %90 : vector<16x32xf32>
    %93 = arith.addf %88, %92 : vector<16x32xf32>
    %c0_29 = arith.constant 0 : index
    %c0_30 = arith.constant 0 : index
    %94 = vector.load %arg8[%c0_29, %c0_30] : memref<32x144xf32, #tpu.memory_space<vmem>>, vector<32x144xf32>
    %c0_31 = arith.constant 0 : index
    %c0_32 = arith.constant 0 : index
    %95 = vector.load %arg9[%c0_31, %c0_32] : memref<32x128xf32, #tpu.memory_space<vmem>>, vector<32x128xf32>
    %c0_33 = arith.constant 0 : index
    %c0_34 = arith.constant 0 : index
    %96 = vector.load %arg10[%c0_33, %c0_34] : memref<16x48xf32, #tpu.memory_space<vmem>>, vector<16x48xf32>
    %cst_35 = arith.constant dense<0.000000e+00> : vector<16x144xf32>
    %97 = tpu.matmul %93, %94, %cst_35 {dimension_numbers = #tpu.dot_dimension_numbers<[1], [0], [0], [1], [0, 0, 1, 1], [], []>, precision = #tpu.contract_precision<fp32>} : vector<16x32xf32>, vector<32x144xf32>, vector<16x144xf32> -> vector<16x144xf32>
    %cst_36 = arith.constant 0.000000e+00 : f32
    %98 = vector.broadcast %cst_36 : f32 to vector<16x48xf32>
    %99 = vector.extract_strided_slice %2 {offsets = [0, 0], sizes = [16, 1], strides = [1, 1]} : vector<16x3xf32> to vector<16x1xf32>
    %100 = vector.extract_strided_slice %97 {offsets = [0, 0], sizes = [16, 48], strides = [1, 1]} : vector<16x144xf32> to vector<16x48xf32>
    %101 = vector.broadcast %99 : vector<16x1xf32> to vector<16x48xf32>
    %102 = arith.mulf %101, %100 : vector<16x48xf32>
    %103 = arith.addf %98, %102 : vector<16x48xf32>
    %104 = vector.extract_strided_slice %2 {offsets = [0, 1], sizes = [16, 1], strides = [1, 1]} : vector<16x3xf32> to vector<16x1xf32>
    %105 = vector.extract_strided_slice %97 {offsets = [0, 48], sizes = [16, 48], strides = [1, 1]} : vector<16x144xf32> to vector<16x48xf32>
    %106 = vector.broadcast %104 : vector<16x1xf32> to vector<16x48xf32>
    %107 = arith.mulf %106, %105 : vector<16x48xf32>
    %108 = arith.addf %103, %107 : vector<16x48xf32>
    %109 = vector.extract_strided_slice %2 {offsets = [0, 2], sizes = [16, 1], strides = [1, 1]} : vector<16x3xf32> to vector<16x1xf32>
    %110 = vector.extract_strided_slice %97 {offsets = [0, 96], sizes = [16, 48], strides = [1, 1]} : vector<16x144xf32> to vector<16x48xf32>
    %111 = vector.broadcast %109 : vector<16x1xf32> to vector<16x48xf32>
    %112 = arith.mulf %111, %110 : vector<16x48xf32>
    %113 = arith.addf %108, %112 : vector<16x48xf32>
    %114 = vector.extract_strided_slice %113 {offsets = [0, 0], sizes = [16, 32], strides = [1, 1]} : vector<16x48xf32> to vector<16x32xf32>
    %cst_37 = arith.constant dense<0.000000e+00> : vector<48x32xf32>
    %115 = tpu.matmul %0, %114, %cst_37 {dimension_numbers = #tpu.dot_dimension_numbers<[1], [0], [0], [1], [0, 0, 1, 1], [], []>, precision = #tpu.contract_precision<fp32>} : vector<48x16xf32>, vector<16x32xf32>, vector<48x32xf32> -> vector<48x32xf32>
    %116 = vector.extract_strided_slice %113 {offsets = [0, 32], sizes = [16, 16], strides = [1, 1]} : vector<16x48xf32> to vector<16x16xf32>
    %cst_38 = arith.constant dense<0.000000e+00> : vector<48x16xf32>
    %117 = tpu.matmul %1, %116, %cst_38 {dimension_numbers = #tpu.dot_dimension_numbers<[1], [0], [0], [1], [0, 0, 1, 1], [], []>, precision = #tpu.contract_precision<fp32>} : vector<48x16xf32>, vector<16x16xf32>, vector<48x16xf32> -> vector<48x16xf32>
    %cst_39 = arith.constant dense<0.000000e+00> : vector<48x128xf32>
    %118 = tpu.matmul %115, %95, %cst_39 {dimension_numbers = #tpu.dot_dimension_numbers<[1], [0], [0], [1], [0, 0, 1, 1], [], []>, precision = #tpu.contract_precision<fp32>} : vector<48x32xf32>, vector<32x128xf32>, vector<48x128xf32> -> vector<48x128xf32>
    %cst_40 = arith.constant 0.000000e+00 : f32
    %119 = vector.broadcast %cst_40 : f32 to vector<48x32xf32>
    %120 = vector.extract_strided_slice %3 {offsets = [0, 0], sizes = [48, 1], strides = [1, 1]} : vector<48x4xf32> to vector<48x1xf32>
    %121 = vector.extract_strided_slice %118 {offsets = [0, 0], sizes = [48, 32], strides = [1, 1]} : vector<48x128xf32> to vector<48x32xf32>
    %122 = vector.broadcast %120 : vector<48x1xf32> to vector<48x32xf32>
    %123 = arith.mulf %122, %121 : vector<48x32xf32>
    %124 = arith.addf %119, %123 : vector<48x32xf32>
    %125 = vector.extract_strided_slice %3 {offsets = [0, 1], sizes = [48, 1], strides = [1, 1]} : vector<48x4xf32> to vector<48x1xf32>
    %126 = vector.extract_strided_slice %118 {offsets = [0, 32], sizes = [48, 32], strides = [1, 1]} : vector<48x128xf32> to vector<48x32xf32>
    %127 = vector.broadcast %125 : vector<48x1xf32> to vector<48x32xf32>
    %128 = arith.mulf %127, %126 : vector<48x32xf32>
    %129 = arith.addf %124, %128 : vector<48x32xf32>
    %130 = vector.extract_strided_slice %3 {offsets = [0, 2], sizes = [48, 1], strides = [1, 1]} : vector<48x4xf32> to vector<48x1xf32>
    %131 = vector.extract_strided_slice %118 {offsets = [0, 64], sizes = [48, 32], strides = [1, 1]} : vector<48x128xf32> to vector<48x32xf32>
    %132 = vector.broadcast %130 : vector<48x1xf32> to vector<48x32xf32>
    %133 = arith.mulf %132, %131 : vector<48x32xf32>
    %134 = arith.addf %129, %133 : vector<48x32xf32>
    %135 = vector.extract_strided_slice %3 {offsets = [0, 3], sizes = [48, 1], strides = [1, 1]} : vector<48x4xf32> to vector<48x1xf32>
    %136 = vector.extract_strided_slice %118 {offsets = [0, 96], sizes = [48, 32], strides = [1, 1]} : vector<48x128xf32> to vector<48x32xf32>
    %137 = vector.broadcast %135 : vector<48x1xf32> to vector<48x32xf32>
    %138 = arith.mulf %137, %136 : vector<48x32xf32>
    %139 = arith.addf %134, %138 : vector<48x32xf32>
    %140 = vector.extract_strided_slice %139 {offsets = [0, 0], sizes = [48, 16], strides = [1, 1]} : vector<48x32xf32> to vector<48x16xf32>
    %141 = vector.extract_strided_slice %139 {offsets = [0, 16], sizes = [48, 16], strides = [1, 1]} : vector<48x32xf32> to vector<48x16xf32>
    %142 = arith.mulf %140, %117 : vector<48x16xf32>
    %cst_41 = arith.constant dense<0.000000e+00> : vector<48xf32>
    %143 = vector.multi_reduction <add>, %142, %cst_41 [1] : vector<48x16xf32> to vector<48xf32>
    %144 = vector.shape_cast %143 : vector<48xf32> to vector<48x1xf32>
    %cst_42 = arith.constant 5.000000e-01 : f32
    %145 = vector.broadcast %cst_42 : f32 to vector<48x16xf32>
    %146 = arith.cmpf ogt, %1, %145 : vector<48x16xf32>
    %cst_43 = arith.constant -1.000000e+30 : f32
    %147 = vector.shape_cast %144 : vector<48x1xf32> to vector<48x1xf32>
    %148 = vector.broadcast %147 : vector<48x1xf32> to vector<48x16xf32>
    %149 = vector.broadcast %cst_43 : f32 to vector<48x16xf32>
    %150 = arith.select %146, %148, %149 : vector<48x16xi1>, vector<48x16xf32>
    %cst_44 = arith.constant dense<0xFF800000> : vector<16xf32>
    %151 = vector.multi_reduction <maximumf>, %150, %cst_44 [0] : vector<48x16xf32> to vector<16xf32>
    %152 = vector.shape_cast %151 : vector<16xf32> to vector<1x16xf32>
    %cst_45 = arith.constant dense<0.000000e+00> : vector<48x1xf32>
    %153 = tpu.matmul %1, %152, %cst_45 {dimension_numbers = #tpu.dot_dimension_numbers<[1], [1], [0], [0], [0, 0, 1, 0], [], []>, precision = #tpu.contract_precision<fp32>} : vector<48x16xf32>, vector<1x16xf32>, vector<48x1xf32> -> vector<48x1xf32>
    %154 = arith.subf %144, %153 : vector<48x1xf32>
    %155 = math.exp %154 : vector<48x1xf32>
    %156 = vector.broadcast %155 : vector<48x1xf32> to vector<48x16xf32>
    %157 = arith.mulf %141, %156 : vector<48x16xf32>
    %158 = tpu.concatenate %157, %155 in 1 : vector<48x16xf32>, vector<48x1xf32> -> vector<48x17xf32>
    %cst_46 = arith.constant dense<0.000000e+00> : vector<16x17xf32>
    %159 = tpu.matmul %1, %158, %cst_46 {dimension_numbers = #tpu.dot_dimension_numbers<[0], [0], [1], [1], [0, 1, 1, 1], [], []>, precision = #tpu.contract_precision<fp32>} : vector<48x16xf32>, vector<48x17xf32>, vector<16x17xf32> -> vector<16x17xf32>
    %160 = vector.extract_strided_slice %159 {offsets = [0, 16], sizes = [16, 1], strides = [1, 1]} : vector<16x17xf32> to vector<16x1xf32>
    %cst_47 = arith.constant 1.000000e-16 : f32
    %161 = vector.broadcast %cst_47 : f32 to vector<16x1xf32>
    %162 = arith.addf %160, %161 : vector<16x1xf32>
    %163 = vector.extract_strided_slice %159 {offsets = [0, 0], sizes = [16, 16], strides = [1, 1]} : vector<16x17xf32> to vector<16x16xf32>
    %164 = vector.broadcast %162 : vector<16x1xf32> to vector<16x16xf32>
    %165 = arith.divf %163, %164 : vector<16x16xf32>
    %cst_48 = arith.constant dense<0.000000e+00> : vector<16x48xf32>
    %166 = tpu.matmul %165, %96, %cst_48 {dimension_numbers = #tpu.dot_dimension_numbers<[1], [0], [0], [1], [0, 0, 1, 1], [], []>, precision = #tpu.contract_precision<fp32>} : vector<16x16xf32>, vector<16x48xf32>, vector<16x48xf32> -> vector<16x48xf32>
    %cst_49 = arith.constant 0.000000e+00 : f32
    %167 = vector.broadcast %cst_49 : f32 to vector<16x16xf32>
    %168 = vector.extract_strided_slice %2 {offsets = [0, 0], sizes = [16, 1], strides = [1, 1]} : vector<16x3xf32> to vector<16x1xf32>
    %169 = vector.extract_strided_slice %166 {offsets = [0, 0], sizes = [16, 16], strides = [1, 1]} : vector<16x48xf32> to vector<16x16xf32>
    %170 = vector.broadcast %168 : vector<16x1xf32> to vector<16x16xf32>
    %171 = arith.mulf %170, %169 : vector<16x16xf32>
    %172 = arith.addf %167, %171 : vector<16x16xf32>
    %173 = vector.extract_strided_slice %2 {offsets = [0, 1], sizes = [16, 1], strides = [1, 1]} : vector<16x3xf32> to vector<16x1xf32>
    %174 = vector.extract_strided_slice %166 {offsets = [0, 16], sizes = [16, 16], strides = [1, 1]} : vector<16x48xf32> to vector<16x16xf32>
    %175 = vector.broadcast %173 : vector<16x1xf32> to vector<16x16xf32>
    %176 = arith.mulf %175, %174 : vector<16x16xf32>
    %177 = arith.addf %172, %176 : vector<16x16xf32>
    %178 = vector.extract_strided_slice %2 {offsets = [0, 2], sizes = [16, 1], strides = [1, 1]} : vector<16x3xf32> to vector<16x1xf32>
    %179 = vector.extract_strided_slice %166 {offsets = [0, 32], sizes = [16, 16], strides = [1, 1]} : vector<16x48xf32> to vector<16x16xf32>
    %180 = vector.broadcast %178 : vector<16x1xf32> to vector<16x16xf32>
    %181 = arith.mulf %180, %179 : vector<16x16xf32>
    %182 = arith.addf %177, %181 : vector<16x16xf32>
    %c0_50 = arith.constant 0 : index
    %c0_51 = arith.constant 0 : index
    %183 = vector.load %arg11[%c0_50, %c0_51] : memref<16x16xf32, #tpu.memory_space<vmem>>, vector<16x16xf32>
    tpu.vector_store %arg11[%c0_50, %c0_51], %182 {strides = array<i32>} : memref<16x16xf32, #tpu.memory_space<vmem>>, vector<16x16xf32>,
    return
  }
}

</mosaic_0001>

<llo_original>
// kernel: tpu_custom_call.1
$region0: #{tpu_custom_call.1}
  #allocation0 [shape = 'u32[]', space=smem, size = 0x4, offset = 0x4, fixed_abs, tag = 'smem constant byte address 0x4 - core index']
  #allocation1 [shape = 'u32[144,128]{1,0:T(1,128)}', space=vmem, size = 0x12000, scoped, tag = 'internal scratch']
  %s0 = inlined_call_operand.hbm [shape: f32[16,16], index: 0, kind: input, shape index: {}]
  %s1 = inlined_call_operand.vmem [shape: f32[48,16], index: 1, kind: input, shape index: {}]
  %s2 = inlined_call_operand.vmem [shape: f32[48,16], index: 2, kind: input, shape index: {}]
  %s3 = inlined_call_operand.vmem [shape: f32[16,3], index: 3, kind: input, shape index: {}]
  %s4 = inlined_call_operand.vmem [shape: f32[48,4], index: 4, kind: input, shape index: {}]
  %s5 = inlined_call_operand.hbm [shape: f32[16,288], index: 5, kind: input, shape index: {}]
  %s6 = inlined_call_operand.vmem [shape: f32[64,256], index: 6, kind: input, shape index: {}]
  %s7 = inlined_call_operand.vmem [shape: f32[32,96], index: 7, kind: input, shape index: {}]
  %s8 = inlined_call_operand.vmem [shape: f32[32,144], index: 8, kind: input, shape index: {}]
  %s9 = inlined_call_operand.hbm [shape: f32[32,128], index: 9, kind: input, shape index: {}]
  %s10 = inlined_call_operand.hbm [shape: f32[16,48], index: 10, kind: input, shape index: {}]
  %s11 = inlined_call_operand.hbm [shape: f32[16,16], index: 11, kind: output, shape index: {}]
  %s12 = sld [smem:[#allocation0]]
  $region70: #{tpu_custom_call.1} parent=0
    _
  %s14 = ssub.s32 1, %s12
  %s15 = scalar_select 0, %s14, %s12
  $region1: #{tpu_custom_call.1} parent=0
    #allocation2 [shape = 'u8[8192]{0}', space=vmem, size = 0x2000, scoped, tag = 'input window, operand 0, single buffered']
    #allocation3 [shape = 's32[1]{0}', space=sflag, size = 0x4, scoped, tag = 'scoped memory for tpu_custom_call.1']
    #allocation4 [shape = 's32[1]{0}', space=sflag, size = 0x4, scoped, tag = 'scoped memory for tpu_custom_call.1']
    #allocation5 [shape = 'u8[24576]{0}', space=vmem, size = 0x6000, scoped, tag = 'input window, operand 5, single buffered']
    #allocation6 [shape = 's32[1]{0}', space=sflag, size = 0x4, scoped, tag = 'scoped memory for tpu_custom_call.1']
    #allocation7 [shape = 'u8[16384]{0}', space=vmem, size = 0x4000, scoped, tag = 'input window, operand 9, single buffered']
    #allocation8 [shape = 'u8[8192]{0}', space=vmem, size = 0x2000, scoped, tag = 'input window, operand 10, single buffered']
    #allocation9 [shape = 's32[1]{0}', space=sflag, size = 0x4, scoped, tag = 'scoped memory for tpu_custom_call.1']
    #allocation10 [shape = 'u8[8192]{0}', space=vmem, size = 0x2000, scoped, tag = 'output window, operand 0, single buffered']
    %16 = vsyncpa [#allocation3], 0
    %17 = vsyncpa [#allocation6], 0
    %18 = vsyncpa [#allocation9], 0
    %19 = vsyncpa [#allocation4], 0
    // Predicated region
    $region2: #{tpu_custom_call.1} parent=1 // pred_check
      _
    $region3: #{tpu_custom_call.1} parent=1 // pred_check_branch
      %21 = sbr.rel (0) target = $region5
    $region4: #{tpu_custom_call.1} parent=1 // pred_region
      %s23 = ssub.s32 256, 256
      %24 = vsyncadd [#allocation3], %s23
      %s25 = sshll.u32 [#allocation2], 4
      %s26 = int_to_ptr.vmem [resolvable:$true] %s25
      %31 = dma.hbm_to_vmem [thread:$0]  %s0, 256, %s26, [#allocation3], 128, 128, 8
    $region5: #{tpu_custom_call.1} parent=1 // pred_fallthru
      _
    // Predicated region
    $region6: #{tpu_custom_call.1} parent=1 // pred_check
      _
    $region7: #{tpu_custom_call.1} parent=1 // pred_check_branch
      %33 = sbr.rel (0) target = $region9
    $region8: #{tpu_custom_call.1} parent=1 // pred_region
      _
    $region9: #{tpu_custom_call.1} parent=1 // pred_fallthru
      _
    // Predicated region
    $region10: #{tpu_custom_call.1} parent=1 // pred_check
      _
    $region11: #{tpu_custom_call.1} parent=1 // pred_check_branch
      %35 = sbr.rel (0) target = $region13
    $region12: #{tpu_custom_call.1} parent=1 // pred_region
      _
    $region13: #{tpu_custom_call.1} parent=1 // pred_fallthru
      _
    // Predicated region
    $region14: #{tpu_custom_call.1} parent=1 // pred_check
      _
    $region15: #{tpu_custom_call.1} parent=1 // pred_check_branch
      %37 = sbr.rel (0) target = $region17
    $region16: #{tpu_custom_call.1} parent=1 // pred_region
      _
    $region17: #{tpu_custom_call.1} parent=1 // pred_fallthru
      _
    // Predicated region
    $region18: #{tpu_custom_call.1} parent=1 // pred_check
      _
    $region19: #{tpu_custom_call.1} parent=1 // pred_check_branch
      %39 = sbr.rel (0) target = $region21
    $region20: #{tpu_custom_call.1} parent=1 // pred_region
      _
    $region21: #{tpu_custom_call.1} parent=1 // pred_fallthru
      _
    // Predicated region
    $region22: #{tpu_custom_call.1} parent=1 // pred_check
      _
    $region23: #{tpu_custom_call.1} parent=1 // pred_check_branch
      %41 = sbr.rel (0) target = $region25
    $region24: #{tpu_custom_call.1} parent=1 // pred_region
      %s43 = ssub.s32 768, 768
      %44 = vsyncadd [#allocation6], %s43
      %s45 = sshll.u32 [#allocation5], 4
      %s46 = int_to_ptr.vmem [resolvable:$true] %s45
      %51 = dma.hbm_to_vmem [thread:$0]  %s5, 768, %s46, [#allocation6], 384, 384, 24
    $region25: #{tpu_custom_call.1} parent=1 // pred_fallthru
      _
    // Predicated region
    $region26: #{tpu_custom_call.1} parent=1 // pred_check
      _
    $region27: #{tpu_custom_call.1} parent=1 // pred_check_branch
      %53 = sbr.rel (0) target = $region29
    $region28: #{tpu_custom_call.1} parent=1 // pred_region
      _
    $region29: #{tpu_custom_call.1} parent=1 // pred_fallthru
      _
    // Predicated region
    $region30: #{tpu_custom_call.1} parent=1 // pred_check
      _
    $region31: #{tpu_custom_call.1} parent=1 // pred_check_branch
      %55 = sbr.rel (0) target = $region33
    $region32: #{tpu_custom_call.1} parent=1 // pred_region
      _
    $region33: #{tpu_custom_call.1} parent=1 // pred_fallthru
      _
    // Predicated region
    $region34: #{tpu_custom_call.1} parent=1 // pred_check
      _
    $region35: #{tpu_custom_call.1} parent=1 // pred_check_branch
      %57 = sbr.rel (0) target = $region37
    $region36: #{tpu_custom_call.1} parent=1 // pred_region
      _
    $region37: #{tpu_custom_call.1} parent=1 // pred_fallthru
      _
    // Predicated region
    $region38: #{tpu_custom_call.1} parent=1 // pred_check
      _
    $region39: #{tpu_custom_call.1} parent=1 // pred_check_branch
      %59 = sbr.rel (0) target = $region41
    $region40: #{tpu_custom_call.1} parent=1 // pred_region
      %s61 = ssub.s32 512, 512
      %62 = vsyncadd [#allocation6], %s61
      %s63 = sshll.u32 [#allocation7], 4
      %s64 = int_to_ptr.vmem [resolvable:$true] %s63
      %69 = dma.hbm_to_vmem [thread:$0]  %s9, 512, %s64, [#allocation6], 128, 128, 8
    $region41: #{tpu_custom_call.1} parent=1 // pred_fallthru
      _
    // Predicated region
    $region42: #{tpu_custom_call.1} parent=1 // pred_check
      _
    $region43: #{tpu_custom_call.1} parent=1 // pred_check_branch
      %71 = sbr.rel (0) target = $region45
    $region44: #{tpu_custom_call.1} parent=1 // pred_region
      %s73 = ssub.s32 256, 256
      %74 = vsyncadd [#allocation9], %s73
      %s75 = sshll.u32 [#allocation8], 4
      %s76 = int_to_ptr.vmem [resolvable:$true] %s75
      %81 = dma.hbm_to_vmem [thread:$0]  %s10, 256, %s76, [#allocation9], 128, 128, 8
    $region45: #{tpu_custom_call.1} parent=1 // pred_fallthru
      _
    // Predicated region
    $region46: #{tpu_custom_call.1} parent=1 // pred_check
      _
    $region47: #{tpu_custom_call.1} parent=1 // pred_check_branch
      %83 = sbr.rel (0) target = $region49
    $region48: #{tpu_custom_call.1} parent=1 // pred_region
      %84 = dma.done [#allocation3], 256
    $region49: #{tpu_custom_call.1} parent=1 // pred_fallthru
      _
    // Predicated region
    $region50: #{tpu_custom_call.1} parent=1 // pred_check
      _
    $region51: #{tpu_custom_call.1} parent=1 // pred_check_branch
      %86 = sbr.rel (0) target = $region53
    $region52: #{tpu_custom_call.1} parent=1 // pred_region
      %87 = dma.done [#allocation6], 768
    $region53: #{tpu_custom_call.1} parent=1 // pred_fallthru
      _
    // Predicated region
    $region54: #{tpu_custom_call.1} parent=1 // pred_check
      _
    $region55: #{tpu_custom_call.1} parent=1 // pred_check_branch
      %89 = sbr.rel (0) target = $region57
    $region56: #{tpu_custom_call.1} parent=1 // pred_region
      %90 = dma.done [#allocation6], 512
    $region57: #{tpu_custom_call.1} parent=1 // pred_fallthru
      _
    // Predicated region
    $region58: #{tpu_custom_call.1} parent=1 // pred_check
      _
    $region59: #{tpu_custom_call.1} parent=1 // pred_check_branch
      %92 = sbr.rel (0) target = $region61
    $region60: #{tpu_custom_call.1} parent=1 // pred_region
      %93 = dma.done [#allocation9], 256
    $region61: #{tpu_custom_call.1} parent=1 // pred_fallthru
      _
    %v94 = vld [vmem:[%s1] sm:$0xff]
    %v95 = vld [vmem:[%s1 + $0x8] sm:$0xff]
    %v96 = vld [vmem:[%s1 + $0x10] sm:$0xff]
    %v97 = vld [vmem:[%s1 + $0x18] sm:$0xff]
    %v98 = vld [vmem:[%s1 + $0x20] sm:$0xff]
    %v99 = vld [vmem:[%s1 + $0x28] sm:$0xff]
    %v100 = vld [vmem:[%s2] sm:$0xff]
    %v101 = vld [vmem:[%s2 + $0x8] sm:$0xff]
    %v102 = vld [vmem:[%s2 + $0x10] sm:$0xff]
    %v103 = vld [vmem:[%s2 + $0x18] sm:$0xff]
    %v104 = vld [vmem:[%s2 + $0x20] sm:$0xff]
    %v105 = vld [vmem:[%s2 + $0x28] sm:$0xff]
    %v106 = vld [vmem:[%s3] sm:$0xff]
    %v107 = vld [vmem:[%s3 + $0x8] sm:$0xff]
    %v108 = vld [vmem:[%s4] sm:$0xff]
    %v109 = vld [vmem:[%s4 + $0x8] sm:$0xff]
    %v110 = vld [vmem:[%s4 + $0x10] sm:$0xff]
    %v111 = vld [vmem:[%s4 + $0x18] sm:$0xff]
    %v112 = vld [vmem:[%s4 + $0x20] sm:$0xff]
    %v113 = vld [vmem:[%s4 + $0x28] sm:$0xff]
    %v114 = vld [vmem:[#allocation2] sm:$0xff]
    %v115 = vld [vmem:[#allocation2 + $0x8] sm:$0xff]
    %v116 = vld [vmem:[#allocation5] sm:$0xff]
    %v117 = vld [vmem:[#allocation5 + $0x8] sm:$0xff]
    %v118 = vld [vmem:[#allocation5 + $0x10] sm:$0xff]
    %v119 = vld [vmem:[#allocation5 + $0x18] sm:$0xff]
    %v120 = vld [vmem:[#allocation5 + $0x20] sm:$0xff]
    %v121 = vld [vmem:[#allocation5 + $0x28] sm:$0xff]
    %v122 = vld [vmem:[%s6] sm:$0xff]
    %v123 = vld [vmem:[%s6 + $0x8] sm:$0xff]
    %v124 = vld [vmem:[%s6 + $0x10] sm:$0xff]
    %v125 = vld [vmem:[%s6 + $0x18] sm:$0xff]
    %v126 = vld [vmem:[%s6 + $0x20] sm:$0xff]
    %v127 = vld [vmem:[%s6 + $0x28] sm:$0xff]
    %v128 = vld [vmem:[%s6 + $0x30] sm:$0xff]
    %v129 = vld [vmem:[%s6 + $0x38] sm:$0xff]
    %v130 = vld [vmem:[%s6 + $0x40] sm:$0xff]
    %v131 = vld [vmem:[%s6 + $0x48] sm:$0xff]
    %v132 = vld [vmem:[%s6 + $0x50] sm:$0xff]
    %v133 = vld [vmem:[%s6 + $0x58] sm:$0xff]
    %v134 = vld [vmem:[%s6 + $0x60] sm:$0xff]
    %v135 = vld [vmem:[%s6 + $0x68] sm:$0xff]
    %v136 = vld [vmem:[%s6 + $0x70] sm:$0xff]
    %v137 = vld [vmem:[%s6 + $0x78] sm:$0xff]
    %v138 = vld [vmem:[%s7] sm:$0xff]
    %v139 = vld [vmem:[%s7 + $0x8] sm:$0xff]
    %v140 = vld [vmem:[%s7 + $0x10] sm:$0xff]
    %v141 = vld [vmem:[%s7 + $0x18] sm:$0xff]
    %vm142 = vcmask 130048
    %v144 = vsel %vm142, %v114, 0
    %v147 = vsel %vm142, %v115, 0
    %v149 = vand.u32 %v117, 4294901760
    %150 = vmatprep.subr.mxu0 %v149
    %v151 = vand.u32 %v116, 4294901760
    %152 = vmatpush1.msra.mxu0 %v151
    %v153 = vand.u32 %v120, 4294901760
    %154 = vmatprep.subr.mxu0 %v153
    %v155 = vand.u32 %v119, 4294901760
    %156 = vmatpush1.msra.mxu0 %v155
    %157 = vmatprep.subr.mxu0 0.0
    %158 = vmatpush1.msra.mxu0 0.0
    %159 = vmatprep.subr.mxu0 0.0
    %160 = vmatpush1.msra.mxu0 0.0
    %161 = vmatprep.subr.mxu0 0.0
    %162 = vmatpush1.msra.mxu0 0.0
    %163 = vmatprep.subr.mxu0 0.0
    %164 = vmatpush1.msra.mxu0 0.0
    %165 = vmatprep.subr.mxu0 0.0
    %166 = vmatpush1.msra.mxu0 0.0
    %167 = vmatprep.subr.mxu0 0.0
    %168 = vmatpush1.msra.mxu0 0.0
    %169 = vmatprep.subr.mxu0 0.0
    %170 = vmatpush1.msra.mxu0 0.0
    %171 = vmatprep.subr.mxu0 0.0
    %172 = vmatpush1.msra.mxu0 0.0
    %173 = vmatprep.subr.mxu0 0.0
    %174 = vmatpush1.msra.mxu0 0.0
    %175 = vmatprep.subr.mxu0 0.0
    %176 = vmatpush1.msra.mxu0 0.0
    %177 = vmatprep.subr.mxu0 0.0
    %178 = vmatpush1.msra.mxu0 0.0
    %179 = vmatprep.subr.mxu0 0.0
    %180 = vmatpush1.msra.mxu0 0.0
    %181 = vmatprep.subr.mxu0 0.0
    %182 = vmatpush1.msra.mxu0 0.0
    %183 = vmatprep.subr.mxu0 0.0
    %184 = vmatpush1.msra.mxu0 0.0
    %185 = vmatprep.subr.mxu0 0.0
    %186 = vmatpush1.msra.mxu0 0.0
    %187 = vmatprep.subr.mxu0 0.0
    %188 = vmatpush1.msra.mxu0 0.0
    %189 = vmatprep.subr.mxu0 0.0
    %190 = vmatpush1.msra.mxu0 0.0
    %191 = vmatprep.subr.mxu0 0.0
    %192 = vmatpush1.msra.mxu0 0.0
    %193 = vmatprep.subr.mxu0 0.0
    %194 = vmatpush1.msra.mxu0 0.0
    %195 = vmatprep.subr.mxu0 0.0
    %196 = vmatpush1.msra.mxu0 0.0
    %197 = vmatprep.subr.mxu0 0.0
    %198 = vmatpush1.msra.mxu0 0.0
    %199 = vmatprep.subr.mxu0 0.0
    %200 = vmatpush1.msra.mxu0 0.0
    %201 = vmatprep.subr.mxu0 0.0
    %202 = vmatpush1.msra.mxu0 0.0
    %203 = vmatprep.subr.mxu0 0.0
    %204 = vmatpush1.msra.mxu0 0.0
    %205 = vmatprep.subr.mxu0 0.0
    %206 = vmatpush1.msra.mxu0 0.0
    %207 = vmatprep.subr.mxu0 0.0
    %208 = vmatpush1.msra.mxu0 0.0
    %209 = vmatprep.subr.mxu0 0.0
    %210 = vmatpush1.msra.mxu0 0.0
    %211 = vmatprep.subr.mxu0 0.0
    %212 = vmatpush1.msra.mxu0 0.0
    %213 = vmatprep.subr.mxu0 0.0
    %214 = vmatpush1.msra.mxu0 0.0
    %215 = vmatprep.subr.mxu0 0.0
    %216 = vmatpush1.msra.mxu0 0.0
    %217 = vmatprep.mubr.f32.mxu0 0.0
    %v218 = vand.u32 %v144, 4294901760
    %v219 = vsub.f32 %v144, %v218
    %v220 = vand.u32 %v219, 4294901760
    %v221 = vsub.f32 %v219, %v220
    %v222 = vand.u32 %v221, 4294901760
    %223 = vmatmul.mubr.f32.gmra.mrb[0].mxu0 %v222
    %v224 = vpop.f32.mrb[0].mxu0
    %v225 = vadd.f32 0.0, %v224
    %v226 = vpop.f32.mrb[0].mxu0
    %v227 = vadd.f32 0.0, %v226
    %228 = vmatprep.mubr.f32.mxu0 0.0
    %v229 = vand.u32 %v147, 4294901760
    %v230 = vsub.f32 %v147, %v229
    %v231 = vand.u32 %v230, 4294901760
    %v232 = vsub.f32 %v230, %v231
    %v233 = vand.u32 %v232, 4294901760
    %234 = vmatmul.mubr.f32.gmra.mrb[0].mxu0 %v233
    %v235 = vpop.f32.mrb[0].mxu0
    %v236 = vadd.f32 0.0, %v235
    %v237 = vpop.f32.mrb[0].mxu0
    %v238 = vadd.f32 0.0, %v237
    %239 = vdwg.mxu0
    %v240 = vand.u32 %v117, 4294901760
    %v241 = vsub.f32 %v117, %v240
    %v242 = vand.u32 %v241, 4294901760
    %v243 = vsub.f32 %v241, %v242
    %v244 = vand.u32 %v243, 4294901760
    %245 = vmatprep.subr.mxu0 %v244
    %v246 = vand.u32 %v116, 4294901760
    %v247 = vsub.f32 %v116, %v246
    %v248 = vand.u32 %v247, 4294901760
    %v249 = vsub.f32 %v247, %v248
    %v250 = vand.u32 %v249, 4294901760
    %251 = vmatpush1.msra.mxu0 %v250
    %v252 = vand.u32 %v120, 4294901760
    %v253 = vsub.f32 %v120, %v252
    %v254 = vand.u32 %v253, 4294901760
    %v255 = vsub.f32 %v253, %v254
    %v256 = vand.u32 %v255, 4294901760
    %257 = vmatprep.subr.mxu0 %v256
    %v258 = vand.u32 %v119, 4294901760
    %v259 = vsub.f32 %v119, %v258
    %v260 = vand.u32 %v259, 4294901760
    %v261 = vsub.f32 %v259, %v260
    %v262 = vand.u32 %v261, 4294901760
    %263 = vmatpush1.msra.mxu0 %v262
    %264 = vmatprep.subr.mxu0 0.0
    %265 = vmatpush1.msra.mxu0 0.0
    %266 = vmatprep.subr.mxu0 0.0
    %267 = vmatpush1.msra.mxu0 0.0
    %268 = vmatprep.subr.mxu0 0.0
    %269 = vmatpush1.msra.mxu0 0.0
    %270 = vmatprep.subr.mxu0 0.0
    %271 = vmatpush1.msra.mxu0 0.0
    %272 = vmatprep.subr.mxu0 0.0
    %273 = vmatpush1.msra.mxu0 0.0
    %274 = vmatprep.subr.mxu0 0.0
    %275 = vmatpush1.msra.mxu0 0.0
    %276 = vmatprep.subr.mxu0 0.0
    %277 = vmatpush1.msra.mxu0 0.0
    %278 = vmatprep.subr.mxu0 0.0
    %279 = vmatpush1.msra.mxu0 0.0
    %280 = vmatprep.subr.mxu0 0.0
    %281 = vmatpush1.msra.mxu0 0.0
    %282 = vmatprep.subr.mxu0 0.0
    %283 = vmatpush1.msra.mxu0 0.0
    %284 = vmatprep.subr.mxu0 0.0
    %285 = vmatpush1.msra.mxu0 0.0
    %286 = vmatprep.subr.mxu0 0.0
    %287 = vmatpush1.msra.mxu0 0.0
    %288 = vmatprep.subr.mxu0 0.0
    %289 = vmatpush1.msra.mxu0 0.0
    %290 = vmatprep.subr.mxu0 0.0
    %291 = vmatpush1.msra.mxu0 0.0
    %292 = vmatprep.subr.mxu0 0.0
    %293 = vmatpush1.msra.mxu0 0.0
    %294 = vmatprep.subr.mxu0 0.0
    %295 = vmatpush1.msra.mxu0 0.0
    %296 = vmatprep.subr.mxu0 0.0
    %297 = vmatpush1.msra.mxu0 0.0
    %298 = vmatprep.subr.mxu0 0.0
    %299 = vmatpush1.msra.mxu0 0.0
    %300 = vmatprep.subr.mxu0 0.0
    %301 = vmatpush1.msra.mxu0 0.0
    %302 = vmatprep.subr.mxu0 0.0
    %303 = vmatpush1.msra.mxu0 0.0
    %304 = vmatprep.subr.mxu0 0.0
    %305 = vmatpush1.msra.mxu0 0.0
    %306 = vmatprep.subr.mxu0 0.0
    %307 = vmatpush1.msra.mxu0 0.0
    %308 = vmatprep.subr.mxu0 0.0
    %309 = vmatpush1.msra.mxu0 0.0
    %310 = vmatprep.subr.mxu0 0.0
    %311 = vmatpush1.msra.mxu0 0.0
    %312 = vmatprep.subr.mxu0 0.0
    %313 = vmatpush1.msra.mxu0 0.0
    %314 = vmatprep.subr.mxu0 0.0
    %315 = vmatpush1.msra.mxu0 0.0
    %316 = vmatprep.subr.mxu0 0.0
    %317 = vmatpush1.msra.mxu0 0.0
    %318 = vmatprep.subr.mxu0 0.0
    %319 = vmatpush1.msra.mxu0 0.0
    %320 = vmatprep.subr.mxu0 0.0
    %321 = vmatpush1.msra.mxu0 0.0
    %322 = vmatprep.subr.mxu0 0.0
    %323 = vmatpush1.msra.mxu0 0.0
    %324 = vmatprep.mubr.f32.mxu0 0.0
    %v325 = vand.u32 %v144, 4294901760
    %326 = vmatmul.mubr.f32.gmra.mrb[0].mxu0 %v325
    %v327 = vpop.f32.mrb[0].mxu0
    %v328 = vadd.f32 %v225, %v327
    %v329 = vpop.f32.mrb[0].mxu0
    %v330 = vadd.f32 %v227, %v329
    %331 = vmatprep.mubr.f32.mxu0 0.0
    %v332 = vand.u32 %v147, 4294901760
    %333 = vmatmul.mubr.f32.gmra.mrb[0].mxu0 %v332
    %v334 = vpop.f32.mrb[0].mxu0
    %v335 = vadd.f32 %v236, %v334
    %v336 = vpop.f32.mrb[0].mxu0
    %v337 = vadd.f32 %v238, %v336
    %338 = vdwg.mxu0
    %v339 = vand.u32 %v117, 4294901760
    %v340 = vsub.f32 %v117, %v339
    %341 = vmatprep.subr.mxu0 %v340
    %v342 = vand.u32 %v116, 4294901760
    %v343 = vsub.f32 %v116, %v342
    %344 = vmatpush1.msra.mxu0 %v343
    %v345 = vand.u32 %v120, 4294901760
    %v346 = vsub.f32 %v120, %v345
    %347 = vmatprep.subr.mxu0 %v346
    %v348 = vand.u32 %v119, 4294901760
    %v349 = vsub.f32 %v119, %v348
    %350 = vmatpush1.msra.mxu0 %v349
    %351 = vmatprep.subr.mxu0 0.0
    %352 = vmatpush1.msra.mxu0 0.0
    %353 = vmatprep.subr.mxu0 0.0
    %354 = vmatpush1.msra.mxu0 0.0
    %355 = vmatprep.subr.mxu0 0.0
    %356 = vmatpush1.msra.mxu0 0.0
    %357 = vmatprep.subr.mxu0 0.0
    %358 = vmatpush1.msra.mxu0 0.0
    %359 = vmatprep.subr.mxu0 0.0
    %360 = vmatpush1.msra.mxu0 0.0
    %361 = vmatprep.subr.mxu0 0.0
    %362 = vmatpush1.msra.mxu0 0.0
    %363 = vmatprep.subr.mxu0 0.0
    %364 = vmatpush1.msra.mxu0 0.0
    %365 = vmatprep.subr.mxu0 0.0
    %366 = vmatpush1.msra.mxu0 0.0
    %367 = vmatprep.subr.mxu0 0.0
    %368 = vmatpush1.msra.mxu0 0.0
    %369 = vmatprep.subr.mxu0 0.0
    %370 = vmatpush1.msra.mxu0 0.0
    %371 = vmatprep.subr.mxu0 0.0
    %372 = vmatpush1.msra.mxu0 0.0
    %373 = vmatprep.subr.mxu0 0.0
    %374 = vmatpush1.msra.mxu0 0.0
    %375 = vmatprep.subr.mxu0 0.0
    %376 = vmatpush1.msra.mxu0 0.0
    %377 = vmatprep.subr.mxu0 0.0
    %378 = vmatpush1.msra.mxu0 0.0
    %379 = vmatprep.subr.mxu0 0.0
    %380 = vmatpush1.msra.mxu0 0.0
    %381 = vmatprep.subr.mxu0 0.0
    %382 = vmatpush1.msra.mxu0 0.0
    %383 = vmatprep.subr.mxu0 0.0
    %384 = vmatpush1.msra.mxu0 0.0
    %385 = vmatprep.subr.mxu0 0.0
    %386 = vmatpush1.msra.mxu0 0.0
    %387 = vmatprep.subr.mxu0 0.0
    %388 = vmatpush1.msra.mxu0 0.0
    %389 = vmatprep.subr.mxu0 0.0
    %390 = vmatpush1.msra.mxu0 0.0
    %391 = vmatprep.subr.mxu0 0.0
    %392 = vmatpush1.msra.mxu0 0.0
    %393 = vmatprep.subr.mxu0 0.0
    %394 = vmatpush1.msra.mxu0 0.0
    %395 = vmatprep.subr.mxu0 0.0
    %396 = vmatpush1.msra.mxu0 0.0
    %397 = vmatprep.subr.mxu0 0.0
    %398 = vmatpush1.msra.mxu0 0.0
    %399 = vmatprep.subr.mxu0 0.0
    %400 = vmatpush1.msra.mxu0 0.0
    %401 = vmatprep.subr.mxu0 0.0
    %402 = vmatpush1.msra.mxu0 0.0
    %403 = vmatprep.subr.mxu0 0.0
    %404 = vmatpush1.msra.mxu0 0.0
    %405 = vmatprep.subr.mxu0 0.0
    %406 = vmatpush1.msra.mxu0 0.0
    %407 = vmatprep.subr.mxu0 0.0
    %408 = vmatpush1.msra.mxu0 0.0
    %409 = vmatprep.subr.mxu0 0.0
    %410 = vmatpush1.msra.mxu0 0.0
    %411 = vmatprep.mubr.f32.mxu0 0.0
    %v412 = vand.u32 %v144, 4294901760
    %v413 = vsub.f32 %v144, %v412
    %414 = vmatmul.mubr.f32.gmra.mrb[0].mxu0 %v413
    %v415 = vpop.f32.mrb[0].mxu0
    %v416 = vadd.f32 %v328, %v415
    %v417 = vpop.f32.mrb[0].mxu0
    %v418 = vadd.f32 %v330, %v417
    %419 = vmatprep.mubr.f32.mxu0 0.0
    %v420 = vand.u32 %v147, 4294901760
    %v421 = vsub.f32 %v147, %v420
    %422 = vmatmul.mubr.f32.gmra.mrb[0].mxu0 %v421
    %v423 = vpop.f32.mrb[0].mxu0
    %v424 = vadd.f32 %v335, %v423
    %v425 = vpop.f32.mrb[0].mxu0
    %v426 = vadd.f32 %v337, %v425
    %427 = vdwg.mxu0
    %v428 = vand.u32 %v117, 4294901760
    %429 = vmatprep.subr.mxu0 %v428
    %v430 = vand.u32 %v116, 4294901760
    %431 = vmatpush1.msra.mxu0 %v430
    %v432 = vand.u32 %v120, 4294901760
    %433 = vmatprep.subr.mxu0 %v432
    %v434 = vand.u32 %v119, 4294901760
    %435 = vmatpush1.msra.mxu0 %v434
    %436 = vmatprep.subr.mxu0 0.0
    %437 = vmatpush1.msra.mxu0 0.0
    %438 = vmatprep.subr.mxu0 0.0
    %439 = vmatpush1.msra.mxu0 0.0
    %440 = vmatprep.subr.mxu0 0.0
    %441 = vmatpush1.msra.mxu0 0.0
    %442 = vmatprep.subr.mxu0 0.0
    %443 = vmatpush1.msra.mxu0 0.0
    %444 = vmatprep.subr.mxu0 0.0
    %445 = vmatpush1.msra.mxu0 0.0
    %446 = vmatprep.subr.mxu0 0.0
    %447 = vmatpush1.msra.mxu0 0.0
    %448 = vmatprep.subr.mxu0 0.0
    %449 = vmatpush1.msra.mxu0 0.0
    %450 = vmatprep.subr.mxu0 0.0
    %451 = vmatpush1.msra.mxu0 0.0
    %452 = vmatprep.subr.mxu0 0.0
    %453 = vmatpush1.msra.mxu0 0.0
    %454 = vmatprep.subr.mxu0 0.0
    %455 = vmatpush1.msra.mxu0 0.0
    %456 = vmatprep.subr.mxu0 0.0
    %457 = vmatpush1.msra.mxu0 0.0
    %458 = vmatprep.subr.mxu0 0.0
    %459 = vmatpush1.msra.mxu0 0.0
    %460 = vmatprep.subr.mxu0 0.0
    %461 = vmatpush1.msra.mxu0 0.0
    %462 = vmatprep.subr.mxu0 0.0
    %463 = vmatpush1.msra.mxu0 0.0
    %464 = vmatprep.subr.mxu0 0.0
    %465 = vmatpush1.msra.mxu0 0.0
    %466 = vmatprep.subr.mxu0 0.0
    %467 = vmatpush1.msra.mxu0 0.0
    %468 = vmatprep.subr.mxu0 0.0
    %469 = vmatpush1.msra.mxu0 0.0
    %470 = vmatprep.subr.mxu0 0.0
    %471 = vmatpush1.msra.mxu0 0.0
    %472 = vmatprep.subr.mxu0 0.0
    %473 = vmatpush1.msra.mxu0 0.0
    %474 = vmatprep.subr.mxu0 0.0
    %475 = vmatpush1.msra.mxu0 0.0
    %476 = vmatprep.subr.mxu0 0.0
    %477 = vmatpush1.msra.mxu0 0.0
    %478 = vmatprep.subr.mxu0 0.0
    %479 = vmatpush1.msra.mxu0 0.0
    %480 = vmatprep.subr.mxu0 0.0
    %481 = vmatpush1.msra.mxu0 0.0
    %482 = vmatprep.subr.mxu0 0.0
    %483 = vmatpush1.msra.mxu0 0.0
    %484 = vmatprep.subr.mxu0 0.0
    %485 = vmatpush1.msra.mxu0 0.0
    %486 = vmatprep.subr.mxu0 0.0
    %487 = vmatpush1.msra.mxu0 0.0
    %488 = vmatprep.subr.mxu0 0.0
    %489 = vmatpush1.msra.mxu0 0.0
    %490 = vmatprep.subr.mxu0 0.0
    %491 = vmatpush1.msra.mxu0 0.0
    %492 = vmatprep.subr.mxu0 0.0
    %493 = vmatpush1.msra.mxu0 0.0
    %494 = vmatprep.subr.mxu0 0.0
    %495 = vmatpush1.msra.mxu0 0.0
    %496 = vmatprep.mubr.f32.mxu0 0.0
    %v497 = vand.u32 %v144, 4294901760
    %v498 = vsub.f32 %v144, %v497
    %v499 = vand.u32 %v498, 4294901760
    %500 = vmatmul.mubr.f32.gmra.mrb[0].mxu0 %v499
    %v501 = vpop.f32.mrb[0].mxu0
    %v502 = vadd.f32 %v416, %v501
    %v503 = vpop.f32.mrb[0].mxu0
    %v504 = vadd.f32 %v418, %v503
    %505 = vmatprep.mubr.f32.mxu0 0.0
    %v506 = vand.u32 %v147, 4294901760
    %v507 = vsub.f32 %v147, %v506
    %v508 = vand.u32 %v507, 4294901760
    %509 = vmatmul.mubr.f32.gmra.mrb[0].mxu0 %v508
    %v510 = vpop.f32.mrb[0].mxu0
    %v511 = vadd.f32 %v424, %v510
    %v512 = vpop.f32.mrb[0].mxu0
    %v513 = vadd.f32 %v426, %v512
    %514 = vdwg.mxu0
    %v515 = vand.u32 %v117, 4294901760
    %v516 = vsub.f32 %v117, %v515
    %v517 = vand.u32 %v516, 4294901760
    %518 = vmatprep.subr.mxu0 %v517
    %v519 = vand.u32 %v116, 4294901760
    %v520 = vsub.f32 %v116, %v519
    %v521 = vand.u32 %v520, 4294901760
    %522 = vmatpush1.msra.mxu0 %v521
    %v523 = vand.u32 %v120, 4294901760
    %v524 = vsub.f32 %v120, %v523
    %v525 = vand.u32 %v524, 4294901760
    %526 = vmatprep.subr.mxu0 %v525
    %v527 = vand.u32 %v119, 4294901760
    %v528 = vsub.f32 %v119, %v527
    %v529 = vand.u32 %v528, 4294901760
    %530 = vmatpush1.msra.mxu0 %v529
    %531 = vmatprep.subr.mxu0 0.0
    %532 = vmatpush1.msra.mxu0 0.0
    %533 = vmatprep.subr.mxu0 0.0
    %534 = vmatpush1.msra.mxu0 0.0
    %535 = vmatprep.subr.mxu0 0.0
    %536 = vmatpush1.msra.mxu0 0.0
    %537 = vmatprep.subr.mxu0 0.0
    %538 = vmatpush1.msra.mxu0 0.0
    %539 = vmatprep.subr.mxu0 0.0
    %540 = vmatpush1.msra.mxu0 0.0
    %541 = vmatprep.subr.mxu0 0.0
    %542 = vmatpush1.msra.mxu0 0.0
    %543 = vmatprep.subr.mxu0 0.0
    %544 = vmatpush1.msra.mxu0 0.0
    %545 = vmatprep.subr.mxu0 0.0
    %546 = vmatpush1.msra.mxu0 0.0
    %547 = vmatprep.subr.mxu0 0.0
    %548 = vmatpush1.msra.mxu0 0.0
    %549 = vmatprep.subr.mxu0 0.0
    %550 = vmatpush1.msra.mxu0 0.0
    %551 = vmatprep.subr.mxu0 0.0
    %552 = vmatpush1.msra.mxu0 0.0
    %553 = vmatprep.subr.mxu0 0.0
    %554 = vmatpush1.msra.mxu0 0.0
    %555 = vmatprep.subr.mxu0 0.0
    %556 = vmatpush1.msra.mxu0 0.0
    %557 = vmatprep.subr.mxu0 0.0
    %558 = vmatpush1.msra.mxu0 0.0
    %559 = vmatprep.subr.mxu0 0.0
    %560 = vmatpush1.msra.mxu0 0.0
    %561 = vmatprep.subr.mxu0 0.0
    %562 = vmatpush1.msra.mxu0 0.0
    %563 = vmatprep.subr.mxu0 0.0
    %564 = vmatpush1.msra.mxu0 0.0
    %565 = vmatprep.subr.mxu0 0.0
    %566 = vmatpush1.msra.mxu0 0.0
    %567 = vmatprep.subr.mxu0 0.0
    %568 = vmatpush1.msra.mxu0 0.0
    %569 = vmatprep.subr.mxu0 0.0
    %570 = vmatpush1.msra.mxu0 0.0
    %571 = vmatprep.subr.mxu0 0.0
    %572 = vmatpush1.msra.mxu0 0.0
    %573 = vmatprep.subr.mxu0 0.0
    %574 = vmatpush1.msra.mxu0 0.0
    %575 = vmatprep.subr.mxu0 0.0
    %576 = vmatpush1.msra.mxu0 0.0
    %577 = vmatprep.subr.mxu0 0.0
    %578 = vmatpush1.msra.mxu0 0.0
    %579 = vmatprep.subr.mxu0 0.0
    %580 = vmatpush1.msra.mxu0 0.0
    %581 = vmatprep.subr.mxu0 0.0
    %582 = vmatpush1.msra.mxu0 0.0
    %583 = vmatprep.subr.mxu0 0.0
    %584 = vmatpush1.msra.mxu0 0.0
    %585 = vmatprep.subr.mxu0 0.0
    %586 = vmatpush1.msra.mxu0 0.0
    %587 = vmatprep.subr.mxu0 0.0
    %588 = vmatpush1.msra.mxu0 0.0
    %589 = vmatprep.subr.mxu0 0.0
    %590 = vmatpush1.msra.mxu0 0.0
    %591 = vmatprep.mubr.f32.mxu0 0.0
    %v592 = vand.u32 %v144, 4294901760
    %593 = vmatmul.mubr.f32.gmra.mrb[0].mxu0 %v592
    %v594 = vpop.f32.mrb[0].mxu0
    %v595 = vadd.f32 %v502, %v594
    %v596 = vpop.f32.mrb[0].mxu0
    %v597 = vadd.f32 %v504, %v596
    %598 = vmatprep.mubr.f32.mxu0 0.0
    %v599 = vand.u32 %v147, 4294901760
    %600 = vmatmul.mubr.f32.gmra.mrb[0].mxu0 %v599
    %v601 = vpop.f32.mrb[0].mxu0
    %v602 = vadd.f32 %v511, %v601
    %v603 = vpop.f32.mrb[0].mxu0
    %v604 = vadd.f32 %v513, %v603
    %605 = vdwg.mxu0
    %v606 = vand.u32 %v117, 4294901760
    %607 = vmatprep.subr.mxu0 %v606
    %v608 = vand.u32 %v116, 4294901760
    %609 = vmatpush1.msra.mxu0 %v608
    %v610 = vand.u32 %v120, 4294901760
    %611 = vmatprep.subr.mxu0 %v610
    %v612 = vand.u32 %v119, 4294901760
    %613 = vmatpush1.msra.mxu0 %v612
    %614 = vmatprep.subr.mxu0 0.0
    %615 = vmatpush1.msra.mxu0 0.0
    %616 = vmatprep.subr.mxu0 0.0
    %617 = vmatpush1.msra.mxu0 0.0
    %618 = vmatprep.subr.mxu0 0.0
    %619 = vmatpush1.msra.mxu0 0.0
    %620 = vmatprep.subr.mxu0 0.0
    %621 = vmatpush1.msra.mxu0 0.0
    %622 = vmatprep.subr.mxu0 0.0
    %623 = vmatpush1.msra.mxu0 0.0
    %624 = vmatprep.subr.mxu0 0.0
    %625 = vmatpush1.msra.mxu0 0.0
    %626 = vmatprep.subr.mxu0 0.0
    %627 = vmatpush1.msra.mxu0 0.0
    %628 = vmatprep.subr.mxu0 0.0
    %629 = vmatpush1.msra.mxu0 0.0
    %630 = vmatprep.subr.mxu0 0.0
    %631 = vmatpush1.msra.mxu0 0.0
    %632 = vmatprep.subr.mxu0 0.0
    %633 = vmatpush1.msra.mxu0 0.0
    %634 = vmatprep.subr.mxu0 0.0
    %635 = vmatpush1.msra.mxu0 0.0
    %636 = vmatprep.subr.mxu0 0.0
    %637 = vmatpush1.msra.mxu0 0.0
    %638 = vmatprep.subr.mxu0 0.0
    %639 = vmatpush1.msra.mxu0 0.0
    %640 = vmatprep.subr.mxu0 0.0
    %641 = vmatpush1.msra.mxu0 0.0
    %642 = vmatprep.subr.mxu0 0.0
    %643 = vmatpush1.msra.mxu0 0.0
    %644 = vmatprep.subr.mxu0 0.0
    %645 = vmatpush1.msra.mxu0 0.0
    %646 = vmatprep.subr.mxu0 0.0
    %647 = vmatpush1.msra.mxu0 0.0
    %648 = vmatprep.subr.mxu0 0.0
    %649 = vmatpush1.msra.mxu0 0.0
    %650 = vmatprep.subr.mxu0 0.0
    %651 = vmatpush1.msra.mxu0 0.0
    %652 = vmatprep.subr.mxu0 0.0
    %653 = vmatpush1.msra.mxu0 0.0
    %654 = vmatprep.subr.mxu0 0.0
    %655 = vmatpush1.msra.mxu0 0.0
    %656 = vmatprep.subr.mxu0 0.0
    %657 = vmatpush1.msra.mxu0 0.0
    %658 = vmatprep.subr.mxu0 0.0
    %659 = vmatpush1.msra.mxu0 0.0
    %660 = vmatprep.subr.mxu0 0.0
    %661 = vmatpush1.msra.mxu0 0.0
    %662 = vmatprep.subr.mxu0 0.0
    %663 = vmatpush1.msra.mxu0 0.0
    %664 = vmatprep.subr.mxu0 0.0
    %665 = vmatpush1.msra.mxu0 0.0
    %666 = vmatprep.subr.mxu0 0.0
    %667 = vmatpush1.msra.mxu0 0.0
    %668 = vmatprep.subr.mxu0 0.0
    %669 = vmatpush1.msra.mxu0 0.0
    %670 = vmatprep.subr.mxu0 0.0
    %671 = vmatpush1.msra.mxu0 0.0
    %672 = vmatprep.subr.mxu0 0.0
    %673 = vmatpush1.msra.mxu0 0.0
    %674 = vmatprep.mubr.f32.mxu0 0.0
    %v675 = vand.u32 %v144, 4294901760
    %676 = vmatmul.mubr.f32.gmra.mrb[0].mxu0 %v675
    %v677 = vpop.f32.mrb[0].mxu0
    %v678 = vadd.f32 %v595, %v677
    %v679 = vpop.f32.mrb[0].mxu0
    %v680 = vadd.f32 %v597, %v679
    %681 = vmatprep.mubr.f32.mxu0 0.0
    %v682 = vand.u32 %v147, 4294901760
    %683 = vmatmul.mubr.f32.gmra.mrb[0].mxu0 %v682
    %v684 = vpop.f32.mrb[0].mxu0
    %v685 = vadd.f32 %v602, %v684
    %v686 = vpop.f32.mrb[0].mxu0
    %v687 = vadd.f32 %v604, %v686
    %688 = vdwg.mxu0
    %689 = vmatprep.subr.mxu0 0.0
    %v690 = vand.u32 %v118, 4294901760
    %691 = vmatpush1.msra.mxu0 %v690
    %692 = vmatprep.subr.mxu0 0.0
    %v693 = vand.u32 %v121, 4294901760
    %694 = vmatpush1.msra.mxu0 %v693
    %695 = vmatprep.subr.mxu0 0.0
    %696 = vmatpush1.msra.mxu0 0.0
    %697 = vmatprep.subr.mxu0 0.0
    %698 = vmatpush1.msra.mxu0 0.0
    %699 = vmatprep.subr.mxu0 0.0
    %700 = vmatpush1.msra.mxu0 0.0
    %701 = vmatprep.subr.mxu0 0.0
    %702 = vmatpush1.msra.mxu0 0.0
    %703 = vmatprep.subr.mxu0 0.0
    %704 = vmatpush1.msra.mxu0 0.0
    %705 = vmatprep.subr.mxu0 0.0
    %706 = vmatpush1.msra.mxu0 0.0
    %707 = vmatprep.subr.mxu0 0.0
    %708 = vmatpush1.msra.mxu0 0.0
    %709 = vmatprep.subr.mxu0 0.0
    %710 = vmatpush1.msra.mxu0 0.0
    %711 = vmatprep.subr.mxu0 0.0
    %712 = vmatpush1.msra.mxu0 0.0
    %713 = vmatprep.subr.mxu0 0.0
    %714 = vmatpush1.msra.mxu0 0.0
    %715 = vmatprep.subr.mxu0 0.0
    %716 = vmatpush1.msra.mxu0 0.0
    %717 = vmatprep.subr.mxu0 0.0
    %718 = vmatpush1.msra.mxu0 0.0
    %719 = vmatprep.subr.mxu0 0.0
    %720 = vmatpush1.msra.mxu0 0.0
    %721 = vmatprep.subr.mxu0 0.0
    %722 = vmatpush1.msra.mxu0 0.0
    %723 = vmatprep.subr.mxu0 0.0
    %724 = vmatpush1.msra.mxu0 0.0
    %725 = vmatprep.subr.mxu0 0.0
    %726 = vmatpush1.msra.mxu0 0.0
    %727 = vmatprep.subr.mxu0 0.0
    %728 = vmatpush1.msra.mxu0 0.0
    %729 = vmatprep.subr.mxu0 0.0
    %730 = vmatpush1.msra.mxu0 0.0
    %731 = vmatprep.subr.mxu0 0.0
    %732 = vmatpush1.msra.mxu0 0.0
    %733 = vmatprep.subr.mxu0 0.0
    %734 = vmatpush1.msra.mxu0 0.0
    %735 = vmatprep.subr.mxu0 0.0
    %736 = vmatpush1.msra.mxu0 0.0
    %737 = vmatprep.subr.mxu0 0.0
    %738 = vmatpush1.msra.mxu0 0.0
    %739 = vmatprep.subr.mxu0 0.0
    %740 = vmatpush1.msra.mxu0 0.0
    %741 = vmatprep.subr.mxu0 0.0
    %742 = vmatpush1.msra.mxu0 0.0
    %743 = vmatprep.subr.mxu0 0.0
    %744 = vmatpush1.msra.mxu0 0.0
    %745 = vmatprep.subr.mxu0 0.0
    %746 = vmatpush1.msra.mxu0 0.0
    %747 = vmatprep.subr.mxu0 0.0
    %748 = vmatpush1.msra.mxu0 0.0
    %749 = vmatprep.subr.mxu0 0.0
    %750 = vmatpush1.msra.mxu0 0.0
    %751 = vmatprep.subr.mxu0 0.0
    %752 = vmatpush1.msra.mxu0 0.0
    %753 = vmatprep.subr.mxu0 0.0
    %754 = vmatpush1.msra.mxu0 0.0
    %755 = vmatprep.mubr.f32.mxu0 0.0
    %v756 = vand.u32 %v144, 4294901760
    %v757 = vsub.f32 %v144, %v756
    %v758 = vand.u32 %v757, 4294901760
    %v759 = vsub.f32 %v757, %v758
    %v760 = vand.u32 %v759, 4294901760
    %761 = vmatmul.mubr.f32.gmra.mrb[0].mxu0 %v760
    %v762 = vpop.f32.mrb[0].mxu0
    %v763 = vadd.f32 0.0, %v762
    %v764 = vpop.f32.mrb[0].mxu0
    %765 = vmatprep.mubr.f32.mxu0 0.0
    %v766 = vand.u32 %v147, 4294901760
    %v767 = vsub.f32 %v147, %v766
    %v768 = vand.u32 %v767, 4294901760
    %v769 = vsub.f32 %v767, %v768
    %v770 = vand.u32 %v769, 4294901760
    %771 = vmatmul.mubr.f32.gmra.mrb[0].mxu0 %v770
    %v772 = vpop.f32.mrb[0].mxu0
    %v773 = vadd.f32 0.0, %v772
    %v774 = vpop.f32.mrb[0].mxu0
    %775 = vdwg.mxu0
    %776 = vmatprep.subr.mxu0 0.0
    %v777 = vand.u32 %v118, 4294901760
    %v778 = vsub.f32 %v118, %v777
    %v779 = vand.u32 %v778, 4294901760
    %v780 = vsub.f32 %v778, %v779
    %v781 = vand.u32 %v780, 4294901760
    %782 = vmatpush1.msra.mxu0 %v781
    %783 = vmatprep.subr.mxu0 0.0
    %v784 = vand.u32 %v121, 4294901760
    %v785 = vsub.f32 %v121, %v784
    %v786 = vand.u32 %v785, 4294901760
    %v787 = vsub.f32 %v785, %v786
    %v788 = vand.u32 %v787, 4294901760
    %789 = vmatpush1.msra.mxu0 %v788
    %790 = vmatprep.subr.mxu0 0.0
    %791 = vmatpush1.msra.mxu0 0.0
    %792 = vmatprep.subr.mxu0 0.0
    %793 = vmatpush1.msra.mxu0 0.0
    %794 = vmatprep.subr.mxu0 0.0
    %795 = vmatpush1.msra.mxu0 0.0
    %796 = vmatprep.subr.mxu0 0.0
    %797 = vmatpush1.msra.mxu0 0.0
    %798 = vmatprep.subr.mxu0 0.0
    %799 = vmatpush1.msra.mxu0 0.0
    %800 = vmatprep.subr.mxu0 0.0
    %801 = vmatpush1.msra.mxu0 0.0
    %802 = vmatprep.subr.mxu0 0.0
    %803 = vmatpush1.msra.mxu0 0.0
    %804 = vmatprep.subr.mxu0 0.0
    %805 = vmatpush1.msra.mxu0 0.0
    %806 = vmatprep.subr.mxu0 0.0
    %807 = vmatpush1.msra.mxu0 0.0
    %808 = vmatprep.subr.mxu0 0.0
    %809 = vmatpush1.msra.mxu0 0.0
    %810 = vmatprep.subr.mxu0 0.0
    %811 = vmatpush1.msra.mxu0 0.0
    %812 = vmatprep.subr.mxu0 0.0
    %813 = vmatpush1.msra.mxu0 0.0
    %814 = vmatprep.subr.mxu0 0.0
    %815 = vmatpush1.msra.mxu0 0.0
    %816 = vmatprep.subr.mxu0 0.0
    %817 = vmatpush1.msra.mxu0 0.0
    %818 = vmatprep.subr.mxu0 0.0
    %819 = vmatpush1.msra.mxu0 0.0
    %820 = vmatprep.subr.mxu0 0.0
    %821 = vmatpush1.msra.mxu0 0.0
    %822 = vmatprep.subr.mxu0 0.0
    %823 = vmatpush1.msra.mxu0 0.0
    %824 = vmatprep.subr.mxu0 0.0
    %825 = vmatpush1.msra.mxu0 0.0
    %826 = vmatprep.subr.mxu0 0.0
    %827 = vmatpush1.msra.mxu0 0.0
    %828 = vmatprep.subr.mxu0 0.0
    %829 = vmatpush1.msra.mxu0 0.0
    %830 = vmatprep.subr.mxu0 0.0
    %831 = vmatpush1.msra.mxu0 0.0
    %832 = vmatprep.subr.mxu0 0.0
    %833 = vmatpush1.msra.mxu0 0.0
    %834 = vmatprep.subr.mxu0 0.0
    %835 = vmatpush1.msra.mxu0 0.0
    %836 = vmatprep.subr.mxu0 0.0
    %837 = vmatpush1.msra.mxu0 0.0
    %838 = vmatprep.subr.mxu0 0.0
    %839 = vmatpush1.msra.mxu0 0.0
    %840 = vmatprep.subr.mxu0 0.0
    %841 = vmatpush1.msra.mxu0 0.0
    %842 = vmatprep.subr.mxu0 0.0
    %843 = vmatpush1.msra.mxu0 0.0
    %844 = vmatprep.subr.mxu0 0.0
    %845 = vmatpush1.msra.mxu0 0.0
    %846 = vmatprep.subr.mxu0 0.0
    %847 = vmatpush1.msra.mxu0 0.0
    %848 = vmatprep.subr.mxu0 0.0
    %849 = vmatpush1.msra.mxu0 0.0
    %850 = vmatprep.mubr.f32.mxu0 0.0
    %v851 = vand.u32 %v144, 4294901760
    %852 = vmatmul.mubr.f32.gmra.mrb[0].mxu0 %v851
    %v853 = vpop.f32.mrb[0].mxu0
    %v854 = vadd.f32 %v763, %v853
    %v855 = vpop.f32.mrb[0].mxu0
    %856 = vmatprep.mubr.f32.mxu0 0.0
    %v857 = vand.u32 %v147, 4294901760
    %858 = vmatmul.mubr.f32.gmra.mrb[0].mxu0 %v857
    %v859 = vpop.f32.mrb[0].mxu0
    %v860 = vadd.f32 %v773, %v859
    %v861 = vpop.f32.mrb[0].mxu0
    %862 = vdwg.mxu0
    %863 = vmatprep.subr.mxu0 0.0
    %v864 = vand.u32 %v118, 4294901760
    %v865 = vsub.f32 %v118, %v864
    %866 = vmatpush1.msra.mxu0 %v865
    %867 = vmatprep.subr.mxu0 0.0
    %v868 = vand.u32 %v121, 4294901760
    %v869 = vsub.f32 %v121, %v868
    %870 = vmatpush1.msra.mxu0 %v869
    %871 = vmatprep.subr.mxu0 0.0
    %872 = vmatpush1.msra.mxu0 0.0
    %873 = vmatprep.subr.mxu0 0.0
    %874 = vmatpush1.msra.mxu0 0.0
    %875 = vmatprep.subr.mxu0 0.0
    %876 = vmatpush1.msra.mxu0 0.0
    %877 = vmatprep.subr.mxu0 0.0
    %878 = vmatpush1.msra.mxu0 0.0
    %879 = vmatprep.subr.mxu0 0.0
    %880 = vmatpush1.msra.mxu0 0.0
    %881 = vmatprep.subr.mxu0 0.0
    %882 = vmatpush1.msra.mxu0 0.0
    %883 = vmatprep.subr.mxu0 0.0
    %884 = vmatpush1.msra.mxu0 0.0
    %885 = vmatprep.subr.mxu0 0.0
    %886 = vmatpush1.msra.mxu0 0.0
    %887 = vmatprep.subr.mxu0 0.0
    %888 = vmatpush1.msra.mxu0 0.0
    %889 = vmatprep.subr.mxu0 0.0
    %890 = vmatpush1.msra.mxu0 0.0
    %891 = vmatprep.subr.mxu0 0.0
    %892 = vmatpush1.msra.mxu0 0.0
    %893 = vmatprep.subr.mxu0 0.0
    %894 = vmatpush1.msra.mxu0 0.0
    %895 = vmatprep.subr.mxu0 0.0
    %896 = vmatpush1.msra.mxu0 0.0
    %897 = vmatprep.subr.mxu0 0.0
    %898 = vmatpush1.msra.mxu0 0.0
    %899 = vmatprep.subr.mxu0 0.0
    %900 = vmatpush1.msra.mxu0 0.0
    %901 = vmatprep.subr.mxu0 0.0
    %902 = vmatpush1.msra.mxu0 0.0
    %903 = vmatprep.subr.mxu0 0.0
    %904 = vmatpush1.msra.mxu0 0.0
    %905 = vmatprep.subr.mxu0 0.0
    %906 = vmatpush1.msra.mxu0 0.0
    %907 = vmatprep.subr.mxu0 0.0
    %908 = vmatpush1.msra.mxu0 0.0
    %909 = vmatprep.subr.mxu0 0.0
    %910 = vmatpush1.msra.mxu0 0.0
    %911 = vmatprep.subr.mxu0 0.0
    %912 = vmatpush1.msra.mxu0 0.0
    %913 = vmatprep.subr.mxu0 0.0
    %914 = vmatpush1.msra.mxu0 0.0
    %915 = vmatprep.subr.mxu0 0.0
    %916 = vmatpush1.msra.mxu0 0.0
    %917 = vmatprep.subr.mxu0 0.0
    %918 = vmatpush1.msra.mxu0 0.0
    %919 = vmatprep.subr.mxu0 0.0
    %920 = vmatpush1.msra.mxu0 0.0
    %921 = vmatprep.subr.mxu0 0.0
    %922 = vmatpush1.msra.mxu0 0.0
    %923 = vmatprep.subr.mxu0 0.0
    %924 = vmatpush1.msra.mxu0 0.0
    %925 = vmatprep.subr.mxu0 0.0
    %926 = vmatpush1.msra.mxu0 0.0
    %927 = vmatprep.subr.mxu0 0.0
    %928 = vmatpush1.msra.mxu0 0.0
    %929 = vmatprep.subr.mxu0 0.0
    %930 = vmatpush1.msra.mxu0 0.0
    %931 = vmatprep.mubr.f32.mxu0 0.0
    %v932 = vand.u32 %v144, 4294901760
    %v933 = vsub.f32 %v144, %v932
    %934 = vmatmul.mubr.f32.gmra.mrb[0].mxu0 %v933
    %v935 = vpop.f32.mrb[0].mxu0
    %v936 = vadd.f32 %v854, %v935
    %v937 = vpop.f32.mrb[0].mxu0
    %938 = vmatprep.mubr.f32.mxu0 0.0
    %v939 = vand.u32 %v147, 4294901760
    %v940 = vsub.f32 %v147, %v939
    %941 = vmatmul.mubr.f32.gmra.mrb[0].mxu0 %v940
    %v942 = vpop.f32.mrb[0].mxu0
    %v943 = vadd.f32 %v860, %v942
    %v944 = vpop.f32.mrb[0].mxu0
    %945 = vdwg.mxu0
    %946 = vmatprep.subr.mxu0 0.0
    %v947 = vand.u32 %v118, 4294901760
    %948 = vmatpush1.msra.mxu0 %v947
    %949 = vmatprep.subr.mxu0 0.0
    %v950 = vand.u32 %v121, 4294901760
    %951 = vmatpush1.msra.mxu0 %v950
    %952 = vmatprep.subr.mxu0 0.0
    %953 = vmatpush1.msra.mxu0 0.0
    %954 = vmatprep.subr.mxu0 0.0
    %955 = vmatpush1.msra.mxu0 0.0
    %956 = vmatprep.subr.mxu0 0.0
    %957 = vmatpush1.msra.mxu0 0.0
    %958 = vmatprep.subr.mxu0 0.0
    %959 = vmatpush1.msra.mxu0 0.0
    %960 = vmatprep.subr.mxu0 0.0
    %961 = vmatpush1.msra.mxu0 0.0
    %962 = vmatprep.subr.mxu0 0.0
    %963 = vmatpush1.msra.mxu0 0.0
    %964 = vmatprep.subr.mxu0 0.0
    %965 = vmatpush1.msra.mxu0 0.0
    %966 = vmatprep.subr.mxu0 0.0
    %967 = vmatpush1.msra.mxu0 0.0
    %968 = vmatprep.subr.mxu0 0.0
    %969 = vmatpush1.msra.mxu0 0.0
    %970 = vmatprep.subr.mxu0 0.0
    %971 = vmatpush1.msra.mxu0 0.0
    %972 = vmatprep.subr.mxu0 0.0
    %973 = vmatpush1.msra.mxu0 0.0
    %974 = vmatprep.subr.mxu0 0.0
    %975 = vmatpush1.msra.mxu0 0.0
    %976 = vmatprep.subr.mxu0 0.0
    %977 = vmatpush1.msra.mxu0 0.0
    %978 = vmatprep.subr.mxu0 0.0
    %979 = vmatpush1.msra.mxu0 0.0
    %980 = vmatprep.subr.mxu0 0.0
    %981 = vmatpush1.msra.mxu0 0.0
    %982 = vmatprep.subr.mxu0 0.0
    %983 = vmatpush1.msra.mxu0 0.0
    %984 = vmatprep.subr.mxu0 0.0
    %985 = vmatpush1.msra.mxu0 0.0
    %986 = vmatprep.subr.mxu0 0.0
    %987 = vmatpush1.msra.mxu0 0.0
    %988 = vmatprep.subr.mxu0 0.0
    %989 = vmatpush1.msra.mxu0 0.0
    %990 = vmatprep.subr.mxu0 0.0
    %991 = vmatpush1.msra.mxu0 0.0
    %992 = vmatprep.subr.mxu0 0.0
    %993 = vmatpush1.msra.mxu0 0.0
    %994 = vmatprep.subr.mxu0 0.0
    %995 = vmatpush1.msra.mxu0 0.0
    %996 = vmatprep.subr.mxu0 0.0
    %997 = vmatpush1.msra.mxu0 0.0
    %998 = vmatprep.subr.mxu0 0.0
    %999 = vmatpush1.msra.mxu0 0.0
    %1000 = vmatprep.subr.mxu0 0.0
    %1001 = vmatpush1.msra.mxu0 0.0
    %1002 = vmatprep.subr.mxu0 0.0
    %1003 = vmatpush1.msra.mxu0 0.0
    %1004 = vmatprep.subr.mxu0 0.0
    %1005 = vmatpush1.msra.mxu0 0.0
    %1006 = vmatprep.subr.mxu0 0.0
    %1007 = vmatpush1.msra.mxu0 0.0
    %1008 = vmatprep.subr.mxu0 0.0
    %1009 = vmatpush1.msra.mxu0 0.0
    %1010 = vmatprep.subr.mxu0 0.0
    %1011 = vmatpush1.msra.mxu0 0.0
    %1012 = vmatprep.mubr.f32.mxu0 0.0
    %v1013 = vand.u32 %v144, 4294901760
    %v1014 = vsub.f32 %v144, %v1013
    %v1015 = vand.u32 %v1014, 4294901760
    %1016 = vmatmul.mubr.f32.gmra.mrb[0].mxu0 %v1015
    %v1017 = vpop.f32.mrb[0].mxu0
    %v1018 = vadd.f32 %v936, %v1017
    %v1019 = vpop.f32.mrb[0].mxu0
    %1020 = vmatprep.mubr.f32.mxu0 0.0
    %v1021 = vand.u32 %v147, 4294901760
    %v1022 = vsub.f32 %v147, %v1021
    %v1023 = vand.u32 %v1022, 4294901760
    %1024 = vmatmul.mubr.f32.gmra.mrb[0].mxu0 %v1023
    %v1025 = vpop.f32.mrb[0].mxu0
    %v1026 = vadd.f32 %v943, %v1025
    %v1027 = vpop.f32.mrb[0].mxu0
    %1028 = vdwg.mxu0
    %1029 = vmatprep.subr.mxu0 0.0
    %v1030 = vand.u32 %v118, 4294901760
    %v1031 = vsub.f32 %v118, %v1030
    %v1032 = vand.u32 %v1031, 4294901760
    %1033 = vmatpush1.msra.mxu0 %v1032
    %1034 = vmatprep.subr.mxu0 0.0
    %v1035 = vand.u32 %v121, 4294901760
    %v1036 = vsub.f32 %v121, %v1035
    %v1037 = vand.u32 %v1036, 4294901760
    %1038 = vmatpush1.msra.mxu0 %v1037
    %1039 = vmatprep.subr.mxu0 0.0
    %1040 = vmatpush1.msra.mxu0 0.0
    %1041 = vmatprep.subr.mxu0 0.0
    %1042 = vmatpush1.msra.mxu0 0.0
    %1043 = vmatprep.subr.mxu0 0.0
    %1044 = vmatpush1.msra.mxu0 0.0
    %1045 = vmatprep.subr.mxu0 0.0
    %1046 = vmatpush1.msra.mxu0 0.0
    %1047 = vmatprep.subr.mxu0 0.0
    %1048 = vmatpush1.msra.mxu0 0.0
    %1049 = vmatprep.subr.mxu0 0.0
    %1050 = vmatpush1.msra.mxu0 0.0
    %1051 = vmatprep.subr.mxu0 0.0
    %1052 = vmatpush1.msra.mxu0 0.0
    %1053 = vmatprep.subr.mxu0 0.0
    %1054 = vmatpush1.msra.mxu0 0.0
    %1055 = vmatprep.subr.mxu0 0.0
    %1056 = vmatpush1.msra.mxu0 0.0
    %1057 = vmatprep.subr.mxu0 0.0
    %1058 = vmatpush1.msra.mxu0 0.0
    %1059 = vmatprep.subr.mxu0 0.0
    %1060 = vmatpush1.msra.mxu0 0.0
    %1061 = vmatprep.subr.mxu0 0.0
    %1062 = vmatpush1.msra.mxu0 0.0
    %1063 = vmatprep.subr.mxu0 0.0
    %1064 = vmatpush1.msra.mxu0 0.0
    %1065 = vmatprep.subr.mxu0 0.0
    %1066 = vmatpush1.msra.mxu0 0.0
    %1067 = vmatprep.subr.mxu0 0.0
    %1068 = vmatpush1.msra.mxu0 0.0
    %1069 = vmatprep.subr.mxu0 0.0
    %1070 = vmatpush1.msra.mxu0 0.0
    %1071 = vmatprep.subr.mxu0 0.0
    %1072 = vmatpush1.msra.mxu0 0.0
    %1073 = vmatprep.subr.mxu0 0.0
    %1074 = vmatpush1.msra.mxu0 0.0
    %1075 = vmatprep.subr.mxu0 0.0
    %1076 = vmatpush1.msra.mxu0 0.0
    %1077 = vmatprep.subr.mxu0 0.0
    %1078 = vmatpush1.msra.mxu0 0.0
    %1079 = vmatprep.subr.mxu0 0.0
    %1080 = vmatpush1.msra.mxu0 0.0
    %1081 = vmatprep.subr.mxu0 0.0
    %1082 = vmatpush1.msra.mxu0 0.0
    %1083 = vmatprep.subr.mxu0 0.0
    %1084 = vmatpush1.msra.mxu0 0.0
    %1085 = vmatprep.subr.mxu0 0.0
    %1086 = vmatpush1.msra.mxu0 0.0
    %1087 = vmatprep.subr.mxu0 0.0
    %1088 = vmatpush1.msra.mxu0 0.0
    %1089 = vmatprep.subr.mxu0 0.0
    %1090 = vmatpush1.msra.mxu0 0.0
    %1091 = vmatprep.subr.mxu0 0.0
    %1092 = vmatpush1.msra.mxu0 0.0
    %1093 = vmatprep.subr.mxu0 0.0
    %1094 = vmatpush1.msra.mxu0 0.0
    %1095 = vmatprep.subr.mxu0 0.0
    %1096 = vmatpush1.msra.mxu0 0.0
    %1097 = vmatprep.subr.mxu0 0.0
    %1098 = vmatpush1.msra.mxu0 0.0
    %1099 = vmatprep.mubr.f32.mxu0 0.0
    %v1100 = vand.u32 %v144, 4294901760
    %1101 = vmatmul.mubr.f32.gmra.mrb[0].mxu0 %v1100
    %v1102 = vpop.f32.mrb[0].mxu0
    %v1103 = vadd.f32 %v1018, %v1102
    %v1104 = vpop.f32.mrb[0].mxu0
    %1105 = vmatprep.mubr.f32.mxu0 0.0
    %v1106 = vand.u32 %v147, 4294901760
    %1107 = vmatmul.mubr.f32.gmra.mrb[0].mxu0 %v1106
    %v1108 = vpop.f32.mrb[0].mxu0
    %v1109 = vadd.f32 %v1026, %v1108
    %v1110 = vpop.f32.mrb[0].mxu0
    %1111 = vdwg.mxu0
    %1112 = vmatprep.subr.mxu0 0.0
    %v1113 = vand.u32 %v118, 4294901760
    %1114 = vmatpush1.msra.mxu0 %v1113
    %1115 = vmatprep.subr.mxu0 0.0
    %v1116 = vand.u32 %v121, 4294901760
    %1117 = vmatpush1.msra.mxu0 %v1116
    %1118 = vmatprep.subr.mxu0 0.0
    %1119 = vmatpush1.msra.mxu0 0.0
    %1120 = vmatprep.subr.mxu0 0.0
    %1121 = vmatpush1.msra.mxu0 0.0
    %1122 = vmatprep.subr.mxu0 0.0
    %1123 = vmatpush1.msra.mxu0 0.0
    %1124 = vmatprep.subr.mxu0 0.0
    %1125 = vmatpush1.msra.mxu0 0.0
    %1126 = vmatprep.subr.mxu0 0.0
    %1127 = vmatpush1.msra.mxu0 0.0
    %1128 = vmatprep.subr.mxu0 0.0
    %1129 = vmatpush1.msra.mxu0 0.0
    %1130 = vmatprep.subr.mxu0 0.0
    %1131 = vmatpush1.msra.mxu0 0.0
    %1132 = vmatprep.subr.mxu0 0.0
    %1133 = vmatpush1.msra.mxu0 0.0
    %1134 = vmatprep.subr.mxu0 0.0
    %1135 = vmatpush1.msra.mxu0 0.0
    %1136 = vmatprep.subr.mxu0 0.0
    %1137 = vmatpush1.msra.mxu0 0.0
    %1138 = vmatprep.subr.mxu0 0.0
    %1139 = vmatpush1.msra.mxu0 0.0
    %1140 = vmatprep.subr.mxu0 0.0
    %1141 = vmatpush1.msra.mxu0 0.0
    %1142 = vmatprep.subr.mxu0 0.0
    %1143 = vmatpush1.msra.mxu0 0.0
    %1144 = vmatprep.subr.mxu0 0.0
    %1145 = vmatpush1.msra.mxu0 0.0
    %1146 = vmatprep.subr.mxu0 0.0
    %1147 = vmatpush1.msra.mxu0 0.0
    %1148 = vmatprep.subr.mxu0 0.0
    %1149 = vmatpush1.msra.mxu0 0.0
    %1150 = vmatprep.subr.mxu0 0.0
    %1151 = vmatpush1.msra.mxu0 0.0
    %1152 = vmatprep.subr.mxu0 0.0
    %1153 = vmatpush1.msra.mxu0 0.0
    %1154 = vmatprep.subr.mxu0 0.0
    %1155 = vmatpush1.msra.mxu0 0.0
    %1156 = vmatprep.subr.mxu0 0.0
    %1157 = vmatpush1.msra.mxu0 0.0
    %1158 = vmatprep.subr.mxu0 0.0
    %1159 = vmatpush1.msra.mxu0 0.0
    %1160 = vmatprep.subr.mxu0 0.0
    %1161 = vmatpush1.msra.mxu0 0.0
    %1162 = vmatprep.subr.mxu0 0.0
    %1163 = vmatpush1.msra.mxu0 0.0
    %1164 = vmatprep.subr.mxu0 0.0
    %1165 = vmatpush1.msra.mxu0 0.0
    %1166 = vmatprep.subr.mxu0 0.0
    %1167 = vmatpush1.msra.mxu0 0.0
    %1168 = vmatprep.subr.mxu0 0.0
    %1169 = vmatpush1.msra.mxu0 0.0
    %1170 = vmatprep.subr.mxu0 0.0
    %1171 = vmatpush1.msra.mxu0 0.0
    %1172 = vmatprep.subr.mxu0 0.0
    %1173 = vmatpush1.msra.mxu0 0.0
    %1174 = vmatprep.subr.mxu0 0.0
    %1175 = vmatpush1.msra.mxu0 0.0
    %1176 = vmatprep.subr.mxu0 0.0
    %1177 = vmatpush1.msra.mxu0 0.0
    %1178 = vmatprep.mubr.f32.mxu0 0.0
    %v1179 = vand.u32 %v144, 4294901760
    %1180 = vmatmul.mubr.f32.gmra.mrb[0].mxu0 %v1179
    %v1181 = vpop.f32.mrb[0].mxu0
    %v1182 = vadd.f32 %v1103, %v1181
    %v1183 = vpop.f32.mrb[0].mxu0
    %1184 = vmatprep.mubr.f32.mxu0 0.0
    %v1185 = vand.u32 %v147, 4294901760
    %1186 = vmatmul.mubr.f32.gmra.mrb[0].mxu0 %v1185
    %v1187 = vpop.f32.mrb[0].mxu0
    %v1188 = vadd.f32 %v1109, %v1187
    %v1189 = vpop.f32.mrb[0].mxu0
    %1190 = vdwg.mxu0
    %1192 = vset.pattern.permute.xlu0 0
    %1193 = vperm.xlu0 %1192, %v106
    %v1194 = vpop.permute.xlu0 %1193
    %1197 = vset.pattern.permute.xlu0 0
    %1198 = vperm.xlu0 %1197, %v107
    %v1199 = vpop.permute.xlu0 %1198
    %v1201 = vmul.f32 %v1194, %v678
    %v1202 = vmul.f32 %v1199, %v685
    %v1203 = vadd.f32 %v1201, 0.0
    %v1204 = vadd.f32 %v1202, 0.0
    %1205 = vset.pattern.permute.xlu0 1
    %1206 = vperm.xlu0 %1205, %v106
    %v1207 = vpop.permute.xlu0 %1206
    %1209 = vset.pattern.permute.xlu0 1
    %1210 = vperm.xlu0 %1209, %v107
    %v1211 = vpop.permute.xlu0 %1210
    %v1213 = vmul.f32 %v1207, %v678
    %v1214 = vmul.f32 %v1207, %v680
    %v1215 = vmul.f32 %v1211, %v685
    %v1216 = vmul.f32 %v1211, %v687
    %1221 = vrot.lane.b32.xlu0 %v1213, 32
    %v1222 = vpop.permute.xlu0 %1221
    %1223 = vrot.lane.b32.xlu0 %v1214, 32
    %v1224 = vpop.permute.xlu0 %1223
    %1225 = vrot.lane.b32.xlu0 %v1215, 32
    %v1226 = vpop.permute.xlu0 %1225
    %1227 = vrot.lane.b32.xlu0 %v1216, 32
    %v1228 = vpop.permute.xlu0 %1227
    %vm1229 = vcmask 261120
    %v1230 = vsel %vm1229, %v1222, %v1224
    %v1231 = vsel %vm1229, %v1226, %v1228
    %v1234 = vadd.f32 %v1203, %v1230
    %v1235 = vadd.f32 %v1204, %v1231
    %1236 = vset.pattern.permute.xlu0 2
    %1237 = vperm.xlu0 %1236, %v106
    %v1238 = vpop.permute.xlu0 %1237
    %1240 = vset.pattern.permute.xlu0 2
    %1241 = vperm.xlu0 %1240, %v107
    %v1242 = vpop.permute.xlu0 %1241
    %v1244 = vmul.f32 %v1238, %v680
    %v1245 = vmul.f32 %v1238, %v1182
    %v1246 = vmul.f32 %v1242, %v687
    %v1247 = vmul.f32 %v1242, %v1188
    %1252 = vrot.lane.b32.xlu0 %v1244, 64
    %v1253 = vpop.permute.xlu0 %1252
    %1254 = vrot.lane.b32.xlu0 %v1245, 64
    %v1255 = vpop.permute.xlu0 %1254
    %1256 = vrot.lane.b32.xlu0 %v1246, 64
    %v1257 = vpop.permute.xlu0 %1256
    %1258 = vrot.lane.b32.xlu0 %v1247, 64
    %v1259 = vpop.permute.xlu0 %1258
    %vm1260 = vcmask 523264
    %v1261 = vsel %vm1260, %v1253, %v1255
    %v1262 = vsel %vm1260, %v1257, %v1259
    %v1265 = vadd.f32 %v1234, %v1261
    %v1266 = vadd.f32 %v1235, %v1262
    %v1268 = vsel %vm142, %v94, 0
    %v1271 = vsel %vm142, %v95, 0
    %v1274 = vsel %vm142, %v96, 0
    %v1277 = vsel %vm142, %v97, 0
    %v1280 = vsel %vm142, %v98, 0
    %v1283 = vsel %vm142, %v99, 0
    %1285 = vmatprep.subr.mxu0 0.0
    %v1286 = vand.u32 %v1265, 4294901760
    %1287 = vmatpush1.msra.mxu0 %v1286
    %1288 = vmatprep.subr.mxu0 0.0
    %v1289 = vand.u32 %v1266, 4294901760
    %1290 = vmatpush1.msra.mxu0 %v1289
    %1291 = vmatprep.subr.mxu0 0.0
    %1292 = vmatpush1.msra.mxu0 0.0
    %1293 = vmatprep.subr.mxu0 0.0
    %1294 = vmatpush1.msra.mxu0 0.0
    %1295 = vmatprep.subr.mxu0 0.0
    %1296 = vmatpush1.msra.mxu0 0.0
    %1297 = vmatprep.subr.mxu0 0.0
    %1298 = vmatpush1.msra.mxu0 0.0
    %1299 = vmatprep.subr.mxu0 0.0
    %1300 = vmatpush1.msra.mxu0 0.0
    %1301 = vmatprep.subr.mxu0 0.0
    %1302 = vmatpush1.msra.mxu0 0.0
    %1303 = vmatprep.subr.mxu0 0.0
    %1304 = vmatpush1.msra.mxu0 0.0
    %1305 = vmatprep.subr.mxu0 0.0
    %1306 = vmatpush1.msra.mxu0 0.0
    %1307 = vmatprep.subr.mxu0 0.0
    %1308 = vmatpush1.msra.mxu0 0.0
    %1309 = vmatprep.subr.mxu0 0.0
    %1310 = vmatpush1.msra.mxu0 0.0
    %1311 = vmatprep.subr.mxu0 0.0
    %1312 = vmatpush1.msra.mxu0 0.0
    %1313 = vmatprep.subr.mxu0 0.0
    %1314 = vmatpush1.msra.mxu0 0.0
    %1315 = vmatprep.subr.mxu0 0.0
    %1316 = vmatpush1.msra.mxu0 0.0
    %1317 = vmatprep.subr.mxu0 0.0
    %1318 = vmatpush1.msra.mxu0 0.0
    %1319 = vmatprep.subr.mxu0 0.0
    %1320 = vmatpush1.msra.mxu0 0.0
    %1321 = vmatprep.subr.mxu0 0.0
    %1322 = vmatpush1.msra.mxu0 0.0
    %1323 = vmatprep.subr.mxu0 0.0
    %1324 = vmatpush1.msra.mxu0 0.0
    %1325 = vmatprep.subr.mxu0 0.0
    %1326 = vmatpush1.msra.mxu0 0.0
    %1327 = vmatprep.subr.mxu0 0.0
    %1328 = vmatpush1.msra.mxu0 0.0
    %1329 = vmatprep.subr.mxu0 0.0
    %1330 = vmatpush1.msra.mxu0 0.0
    %1331 = vmatprep.subr.mxu0 0.0
    %1332 = vmatpush1.msra.mxu0 0.0
    %1333 = vmatprep.subr.mxu0 0.0
    %1334 = vmatpush1.msra.mxu0 0.0
    %1335 = vmatprep.subr.mxu0 0.0
    %1336 = vmatpush1.msra.mxu0 0.0
    %1337 = vmatprep.subr.mxu0 0.0
    %1338 = vmatpush1.msra.mxu0 0.0
    %1339 = vmatprep.subr.mxu0 0.0
    %1340 = vmatpush1.msra.mxu0 0.0
    %1341 = vmatprep.subr.mxu0 0.0
    %1342 = vmatpush1.msra.mxu0 0.0
    %1343 = vmatprep.subr.mxu0 0.0
    %1344 = vmatpush1.msra.mxu0 0.0
    %1345 = vmatprep.subr.mxu0 0.0
    %1346 = vmatpush1.msra.mxu0 0.0
    %1347 = vmatprep.subr.mxu0 0.0
    %1348 = vmatpush1.msra.mxu0 0.0
    %1349 = vmatprep.subr.mxu0 0.0
    %1350 = vmatpush1.msra.mxu0 0.0
    %1351 = vmatprep.mubr.f32.mxu0 0.0
    %v1352 = vand.u32 %v1268, 4294901760
    %v1353 = vsub.f32 %v1268, %v1352
    %v1354 = vand.u32 %v1353, 4294901760
    %v1355 = vsub.f32 %v1353, %v1354
    %v1356 = vand.u32 %v1355, 4294901760
    %1357 = vmatmul.mubr.f32.gmra.mrb[0].mxu0 %v1356
    %v1358 = vpop.f32.mrb[0].mxu0
    %v1359 = vadd.f32 0.0, %v1358
    %v1360 = vpop.f32.mrb[0].mxu0
    %1361 = vmatprep.mubr.f32.mxu0 0.0
    %v1362 = vand.u32 %v1271, 4294901760
    %v1363 = vsub.f32 %v1271, %v1362
    %v1364 = vand.u32 %v1363, 4294901760
    %v1365 = vsub.f32 %v1363, %v1364
    %v1366 = vand.u32 %v1365, 4294901760
    %1367 = vmatmul.mubr.f32.gmra.mrb[0].mxu0 %v1366
    %v1368 = vpop.f32.mrb[0].mxu0
    %v1369 = vadd.f32 0.0, %v1368
    %v1370 = vpop.f32.mrb[0].mxu0
    %1371 = vmatprep.mubr.f32.mxu0 0.0
    %v1372 = vand.u32 %v1274, 4294901760
    %v1373 = vsub.f32 %v1274, %v1372
    %v1374 = vand.u32 %v1373, 4294901760
    %v1375 = vsub.f32 %v1373, %v1374
    %v1376 = vand.u32 %v1375, 4294901760
    %1377 = vmatmul.mubr.f32.gmra.mrb[0].mxu0 %v1376
    %v1378 = vpop.f32.mrb[0].mxu0
    %v1379 = vadd.f32 0.0, %v1378
    %v1380 = vpop.f32.mrb[0].mxu0
    %1381 = vmatprep.mubr.f32.mxu0 0.0
    %v1382 = vand.u32 %v1277, 4294901760
    %v1383 = vsub.f32 %v1277, %v1382
    %v1384 = vand.u32 %v1383, 4294901760
    %v1385 = vsub.f32 %v1383, %v1384
    %v1386 = vand.u32 %v1385, 4294901760
    %1387 = vmatmul.mubr.f32.gmra.mrb[0].mxu0 %v1386
    %v1388 = vpop.f32.mrb[0].mxu0
    %v1389 = vadd.f32 0.0, %v1388
    %v1390 = vpop.f32.mrb[0].mxu0
    %1391 = vmatprep.mubr.f32.mxu0 0.0
    %v1392 = vand.u32 %v1280, 4294901760
    %v1393 = vsub.f32 %v1280, %v1392
    %v1394 = vand.u32 %v1393, 4294901760
    %v1395 = vsub.f32 %v1393, %v1394
    %v1396 = vand.u32 %v1395, 4294901760
    %1397 = vmatmul.mubr.f32.gmra.mrb[0].mxu0 %v1396
    %v1398 = vpop.f32.mrb[0].mxu0
    %v1399 = vadd.f32 0.0, %v1398
    %v1400 = vpop.f32.mrb[0].mxu0
    %1401 = vmatprep.mubr.f32.mxu0 0.0
    %v1402 = vand.u32 %v1283, 4294901760
    %v1403 = vsub.f32 %v1283, %v1402
    %v1404 = vand.u32 %v1403, 4294901760
    %v1405 = vsub.f32 %v1403, %v1404
    %v1406 = vand.u32 %v1405, 4294901760
    %1407 = vmatmul.mubr.f32.gmra.mrb[0].mxu0 %v1406
    %v1408 = vpop.f32.mrb[0].mxu0
    %v1409 = vadd.f32 0.0, %v1408
    %v1410 = vpop.f32.mrb[0].mxu0
    %1411 = vdwg.mxu0
    %1412 = vmatprep.subr.mxu0 0.0
    %v1413 = vand.u32 %v1265, 4294901760
    %v1414 = vsub.f32 %v1265, %v1413
    %v1415 = vand.u32 %v1414, 4294901760
    %v1416 = vsub.f32 %v1414, %v1415
    %v1417 = vand.u32 %v1416, 4294901760
    %1418 = vmatpush1.msra.mxu0 %v1417
    %1419 = vmatprep.subr.mxu0 0.0
    %v1420 = vand.u32 %v1266, 4294901760
    %v1421 = vsub.f32 %v1266, %v1420
    %v1422 = vand.u32 %v1421, 4294901760
    %v1423 = vsub.f32 %v1421, %v1422
    %v1424 = vand.u32 %v1423, 4294901760
    %1425 = vmatpush1.msra.mxu0 %v1424
    %1426 = vmatprep.subr.mxu0 0.0
    %1427 = vmatpush1.msra.mxu0 0.0
    %1428 = vmatprep.subr.mxu0 0.0
    %1429 = vmatpush1.msra.mxu0 0.0
    %1430 = vmatprep.subr.mxu0 0.0
    %1431 = vmatpush1.msra.mxu0 0.0
    %1432 = vmatprep.subr.mxu0 0.0
    %1433 = vmatpush1.msra.mxu0 0.0
    %1434 = vmatprep.subr.mxu0 0.0
    %1435 = vmatpush1.msra.mxu0 0.0
    %1436 = vmatprep.subr.mxu0 0.0
    %1437 = vmatpush1.msra.mxu0 0.0
    %1438 = vmatprep.subr.mxu0 0.0
    %1439 = vmatpush1.msra.mxu0 0.0
    %1440 = vmatprep.subr.mxu0 0.0
    %1441 = vmatpush1.msra.mxu0 0.0
    %1442 = vmatprep.subr.mxu0 0.0
    %1443 = vmatpush1.msra.mxu0 0.0
    %1444 = vmatprep.subr.mxu0 0.0
    %1445 = vmatpush1.msra.mxu0 0.0
    %1446 = vmatprep.subr.mxu0 0.0
    %1447 = vmatpush1.msra.mxu0 0.0
    %1448 = vmatprep.subr.mxu0 0.0
    %1449 = vmatpush1.msra.mxu0 0.0
    %1450 = vmatprep.subr.mxu0 0.0
    %1451 = vmatpush1.msra.mxu0 0.0
    %1452 = vmatprep.subr.mxu0 0.0
    %1453 = vmatpush1.msra.mxu0 0.0
    %1454 = vmatprep.subr.mxu0 0.0
    %1455 = vmatpush1.msra.mxu0 0.0
    %1456 = vmatprep.subr.mxu0 0.0
    %1457 = vmatpush1.msra.mxu0 0.0
    %1458 = vmatprep.subr.mxu0 0.0
    %1459 = vmatpush1.msra.mxu0 0.0
    %1460 = vmatprep.subr.mxu0 0.0
    %1461 = vmatpush1.msra.mxu0 0.0
    %1462 = vmatprep.subr.mxu0 0.0
    %1463 = vmatpush1.msra.mxu0 0.0
    %1464 = vmatprep.subr.mxu0 0.0
    %1465 = vmatpush1.msra.mxu0 0.0
    %1466 = vmatprep.subr.mxu0 0.0
    %1467 = vmatpush1.msra.mxu0 0.0
    %1468 = vmatprep.subr.mxu0 0.0
    %1469 = vmatpush1.msra.mxu0 0.0
    %1470 = vmatprep.subr.mxu0 0.0
    %1471 = vmatpush1.msra.mxu0 0.0
    %1472 = vmatprep.subr.mxu0 0.0
    %1473 = vmatpush1.msra.mxu0 0.0
    %1474 = vmatprep.subr.mxu0 0.0
    %1475 = vmatpush1.msra.mxu0 0.0
    %1476 = vmatprep.subr.mxu0 0.0
    %1477 = vmatpush1.msra.mxu0 0.0
    %1478 = vmatprep.subr.mxu0 0.0
    %1479 = vmatpush1.msra.mxu0 0.0
    %1480 = vmatprep.subr.mxu0 0.0
    %1481 = vmatpush1.msra.mxu0 0.0
    %1482 = vmatprep.subr.mxu0 0.0
    %1483 = vmatpush1.msra.mxu0 0.0
    %1484 = vmatprep.subr.mxu0 0.0
    %1485 = vmatpush1.msra.mxu0 0.0
    %1486 = vmatprep.mubr.f32.mxu0 0.0
    %v1487 = vand.u32 %v1268, 4294901760
    %1488 = vmatmul.mubr.f32.gmra.mrb[0].mxu0 %v1487
    %v1489 = vpop.f32.mrb[0].mxu0
    %v1490 = vadd.f32 %v1359, %v1489
    %v1491 = vpop.f32.mrb[0].mxu0
    %1492 = vmatprep.mubr.f32.mxu0 0.0
    %v1493 = vand.u32 %v1271, 4294901760
    %1494 = vmatmul.mubr.f32.gmra.mrb[0].mxu0 %v1493
    %v1495 = vpop.f32.mrb[0].mxu0
    %v1496 = vadd.f32 %v1369, %v1495
    %v1497 = vpop.f32.mrb[0].mxu0
    %1498 = vmatprep.mubr.f32.mxu0 0.0
    %v1499 = vand.u32 %v1274, 4294901760
    %1500 = vmatmul.mubr.f32.gmra.mrb[0].mxu0 %v1499
    %v1501 = vpop.f32.mrb[0].mxu0
    %v1502 = vadd.f32 %v1379, %v1501
    %v1503 = vpop.f32.mrb[0].mxu0
    %1504 = vmatprep.mubr.f32.mxu0 0.0
    %v1505 = vand.u32 %v1277, 4294901760
    %1506 = vmatmul.mubr.f32.gmra.mrb[0].mxu0 %v1505
    %v1507 = vpop.f32.mrb[0].mxu0
    %v1508 = vadd.f32 %v1389, %v1507
    %v1509 = vpop.f32.mrb[0].mxu0
    %1510 = vmatprep.mubr.f32.mxu0 0.0
    %v1511 = vand.u32 %v1280, 4294901760
    %1512 = vmatmul.mubr.f32.gmra.mrb[0].mxu0 %v1511
    %v1513 = vpop.f32.mrb[0].mxu0
    %v1514 = vadd.f32 %v1399, %v1513
    %v1515 = vpop.f32.mrb[0].mxu0
    %1516 = vmatprep.mubr.f32.mxu0 0.0
    %v1517 = vand.u32 %v1283, 4294901760
    %1518 = vmatmul.mubr.f32.gmra.mrb[0].mxu0 %v1517
    %v1519 = vpop.f32.mrb[0].mxu0
    %v1520 = vadd.f32 %v1409, %v1519
    %v1521 = vpop.f32.mrb[0].mxu0
    %1522 = vdwg.mxu0
    %1523 = vmatprep.subr.mxu0 0.0
    %v1524 = vand.u32 %v1265, 4294901760
    %v1525 = vsub.f32 %v1265, %v1524
    %1526 = vmatpush1.msra.mxu0 %v1525
    %1527 = vmatprep.subr.mxu0 0.0
    %v1528 = vand.u32 %v1266, 4294901760
    %v1529 = vsub.f32 %v1266, %v1528
    %1530 = vmatpush1.msra.mxu0 %v1529
    %1531 = vmatprep.subr.mxu0 0.0
    %1532 = vmatpush1.msra.mxu0 0.0
    %1533 = vmatprep.subr.mxu0 0.0
    %1534 = vmatpush1.msra.mxu0 0.0
    %1535 = vmatprep.subr.mxu0 0.0
    %1536 = vmatpush1.msra.mxu0 0.0
    %1537 = vmatprep.subr.mxu0 0.0
    %1538 = vmatpush1.msra.mxu0 0.0
    %1539 = vmatprep.subr.mxu0 0.0
    %1540 = vmatpush1.msra.mxu0 0.0
    %1541 = vmatprep.subr.mxu0 0.0
    %1542 = vmatpush1.msra.mxu0 0.0
    %1543 = vmatprep.subr.mxu0 0.0
    %1544 = vmatpush1.msra.mxu0 0.0
    %1545 = vmatprep.subr.mxu0 0.0
    %1546 = vmatpush1.msra.mxu0 0.0
    %1547 = vmatprep.subr.mxu0 0.0
    %1548 = vmatpush1.msra.mxu0 0.0
    %1549 = vmatprep.subr.mxu0 0.0
    %1550 = vmatpush1.msra.mxu0 0.0
    %1551 = vmatprep.subr.mxu0 0.0
    %1552 = vmatpush1.msra.mxu0 0.0
    %1553 = vmatprep.subr.mxu0 0.0
    %1554 = vmatpush1.msra.mxu0 0.0
    %1555 = vmatprep.subr.mxu0 0.0
    %1556 = vmatpush1.msra.mxu0 0.0
    %1557 = vmatprep.subr.mxu0 0.0
    %1558 = vmatpush1.msra.mxu0 0.0
    %1559 = vmatprep.subr.mxu0 0.0
    %1560 = vmatpush1.msra.mxu0 0.0
    %1561 = vmatprep.subr.mxu0 0.0
    %1562 = vmatpush1.msra.mxu0 0.0
    %1563 = vmatprep.subr.mxu0 0.0
    %1564 = vmatpush1.msra.mxu0 0.0
    %1565 = vmatprep.subr.mxu0 0.0
    %1566 = vmatpush1.msra.mxu0 0.0
    %1567 = vmatprep.subr.mxu0 0.0
    %1568 = vmatpush1.msra.mxu0 0.0
    %1569 = vmatprep.subr.mxu0 0.0
    %1570 = vmatpush1.msra.mxu0 0.0
    %1571 = vmatprep.subr.mxu0 0.0
    %1572 = vmatpush1.msra.mxu0 0.0
    %1573 = vmatprep.subr.mxu0 0.0
    %1574 = vmatpush1.msra.mxu0 0.0
    %1575 = vmatprep.subr.mxu0 0.0
    %1576 = vmatpush1.msra.mxu0 0.0
    %1577 = vmatprep.subr.mxu0 0.0
    %1578 = vmatpush1.msra.mxu0 0.0
    %1579 = vmatprep.subr.mxu0 0.0
    %1580 = vmatpush1.msra.mxu0 0.0
    %1581 = vmatprep.subr.mxu0 0.0
    %1582 = vmatpush1.msra.mxu0 0.0
    %1583 = vmatprep.subr.mxu0 0.0
    %1584 = vmatpush1.msra.mxu0 0.0
    %1585 = vmatprep.subr.mxu0 0.0
    %1586 = vmatpush1.msra.mxu0 0.0
    %1587 = vmatprep.subr.mxu0 0.0
    %1588 = vmatpush1.msra.mxu0 0.0
    %1589 = vmatprep.subr.mxu0 0.0
    %1590 = vmatpush1.msra.mxu0 0.0
    %1591 = vmatprep.mubr.f32.mxu0 0.0
    %v1592 = vand.u32 %v1268, 4294901760
    %v1593 = vsub.f32 %v1268, %v1592
    %1594 = vmatmul.mubr.f32.gmra.mrb[0].mxu0 %v1593
    %v1595 = vpop.f32.mrb[0].mxu0
    %v1596 = vadd.f32 %v1490, %v1595
    %v1597 = vpop.f32.mrb[0].mxu0
    %1598 = vmatprep.mubr.f32.mxu0 0.0
    %v1599 = vand.u32 %v1271, 4294901760
    %v1600 = vsub.f32 %v1271, %v1599
    %1601 = vmatmul.mubr.f32.gmra.mrb[0].mxu0 %v1600
    %v1602 = vpop.f32.mrb[0].mxu0
    %v1603 = vadd.f32 %v1496, %v1602
    %v1604 = vpop.f32.mrb[0].mxu0
    %1605 = vmatprep.mubr.f32.mxu0 0.0
    %v1606 = vand.u32 %v1274, 4294901760
    %v1607 = vsub.f32 %v1274, %v1606
    %1608 = vmatmul.mubr.f32.gmra.mrb[0].mxu0 %v1607
    %v1609 = vpop.f32.mrb[0].mxu0
    %v1610 = vadd.f32 %v1502, %v1609
    %v1611 = vpop.f32.mrb[0].mxu0
    %1612 = vmatprep.mubr.f32.mxu0 0.0
    %v1613 = vand.u32 %v1277, 4294901760
    %v1614 = vsub.f32 %v1277, %v1613
    %1615 = vmatmul.mubr.f32.gmra.mrb[0].mxu0 %v1614
    %v1616 = vpop.f32.mrb[0].mxu0
    %v1617 = vadd.f32 %v1508, %v1616
    %v1618 = vpop.f32.mrb[0].mxu0
    %1619 = vmatprep.mubr.f32.mxu0 0.0
    %v1620 = vand.u32 %v1280, 4294901760
    %v1621 = vsub.f32 %v1280, %v1620
    %1622 = vmatmul.mubr.f32.gmra.mrb[0].mxu0 %v1621
    %v1623 = vpop.f32.mrb[0].mxu0
    %v1624 = vadd.f32 %v1514, %v1623
    %v1625 = vpop.f32.mrb[0].mxu0
    %1626 = vmatprep.mubr.f32.mxu0 0.0
    %v1627 = vand.u32 %v1283, 4294901760
    %v1628 = vsub.f32 %v1283, %v1627
    %1629 = vmatmul.mubr.f32.gmra.mrb[0].mxu0 %v1628
    %v1630 = vpop.f32.mrb[0].mxu0
    %v1631 = vadd.f32 %v1520, %v1630
    %v1632 = vpop.f32.mrb[0].mxu0
    %1633 = vdwg.mxu0
    %1634 = vmatprep.subr.mxu0 0.0
    %v1635 = vand.u32 %v1265, 4294901760
    %1636 = vmatpush1.msra.mxu0 %v1635
    %1637 = vmatprep.subr.mxu0 0.0
    %v1638 = vand.u32 %v1266, 4294901760
    %1639 = vmatpush1.msra.mxu0 %v1638
    %1640 = vmatprep.subr.mxu0 0.0
    %1641 = vmatpush1.msra.mxu0 0.0
    %1642 = vmatprep.subr.mxu0 0.0
    %1643 = vmatpush1.msra.mxu0 0.0
    %1644 = vmatprep.subr.mxu0 0.0
    %1645 = vmatpush1.msra.mxu0 0.0
    %1646 = vmatprep.subr.mxu0 0.0
    %1647 = vmatpush1.msra.mxu0 0.0
    %1648 = vmatprep.subr.mxu0 0.0
    %1649 = vmatpush1.msra.mxu0 0.0
    %1650 = vmatprep.subr.mxu0 0.0
    %1651 = vmatpush1.msra.mxu0 0.0
    %1652 = vmatprep.subr.mxu0 0.0
    %1653 = vmatpush1.msra.mxu0 0.0
    %1654 = vmatprep.subr.mxu0 0.0
    %1655 = vmatpush1.msra.mxu0 0.0
    %1656 = vmatprep.subr.mxu0 0.0
    %1657 = vmatpush1.msra.mxu0 0.0
    %1658 = vmatprep.subr.mxu0 0.0
    %1659 = vmatpush1.msra.mxu0 0.0
    %1660 = vmatprep.subr.mxu0 0.0
    %1661 = vmatpush1.msra.mxu0 0.0
    %1662 = vmatprep.subr.mxu0 0.0
    %1663 = vmatpush1.msra.mxu0 0.0
    %1664 = vmatprep.subr.mxu0 0.0
    %1665 = vmatpush1.msra.mxu0 0.0
    %1666 = vmatprep.subr.mxu0 0.0
    %1667 = vmatpush1.msra.mxu0 0.0
    %1668 = vmatprep.subr.mxu0 0.0
    %1669 = vmatpush1.msra.mxu0 0.0
    %1670 = vmatprep.subr.mxu0 0.0
    %1671 = vmatpush1.msra.mxu0 0.0
    %1672 = vmatprep.subr.mxu0 0.0
    %1673 = vmatpush1.msra.mxu0 0.0
    %1674 = vmatprep.subr.mxu0 0.0
    %1675 = vmatpush1.msra.mxu0 0.0
    %1676 = vmatprep.subr.mxu0 0.0
    %1677 = vmatpush1.msra.mxu0 0.0
    %1678 = vmatprep.subr.mxu0 0.0
    %1679 = vmatpush1.msra.mxu0 0.0
    %1680 = vmatprep.subr.mxu0 0.0
    %1681 = vmatpush1.msra.mxu0 0.0
    %1682 = vmatprep.subr.mxu0 0.0
    %1683 = vmatpush1.msra.mxu0 0.0
    %1684 = vmatprep.subr.mxu0 0.0
    %1685 = vmatpush1.msra.mxu0 0.0
    %1686 = vmatprep.subr.mxu0 0.0
    %1687 = vmatpush1.msra.mxu0 0.0
    %1688 = vmatprep.subr.mxu0 0.0
    %1689 = vmatpush1.msra.mxu0 0.0
    %1690 = vmatprep.subr.mxu0 0.0
    %1691 = vmatpush1.msra.mxu0 0.0
    %1692 = vmatprep.subr.mxu0 0.0
    %1693 = vmatpush1.msra.mxu0 0.0
    %1694 = vmatprep.subr.mxu0 0.0
    %1695 = vmatpush1.msra.mxu0 0.0
    %1696 = vmatprep.subr.mxu0 0.0
    %1697 = vmatpush1.msra.mxu0 0.0
    %1698 = vmatprep.subr.mxu0 0.0
    %1699 = vmatpush1.msra.mxu0 0.0
    %1700 = vmatprep.mubr.f32.mxu0 0.0
    %v1701 = vand.u32 %v1268, 4294901760
    %v1702 = vsub.f32 %v1268, %v1701
    %v1703 = vand.u32 %v1702, 4294901760
    %1704 = vmatmul.mubr.f32.gmra.mrb[0].mxu0 %v1703
    %v1705 = vpop.f32.mrb[0].mxu0
    %v1706 = vadd.f32 %v1596, %v1705
    %v1707 = vpop.f32.mrb[0].mxu0
    %1708 = vmatprep.mubr.f32.mxu0 0.0
    %v1709 = vand.u32 %v1271, 4294901760
    %v1710 = vsub.f32 %v1271, %v1709
    %v1711 = vand.u32 %v1710, 4294901760
    %1712 = vmatmul.mubr.f32.gmra.mrb[0].mxu0 %v1711
    %v1713 = vpop.f32.mrb[0].mxu0
    %v1714 = vadd.f32 %v1603, %v1713
    %v1715 = vpop.f32.mrb[0].mxu0
    %1716 = vmatprep.mubr.f32.mxu0 0.0
    %v1717 = vand.u32 %v1274, 4294901760
    %v1718 = vsub.f32 %v1274, %v1717
    %v1719 = vand.u32 %v1718, 4294901760
    %1720 = vmatmul.mubr.f32.gmra.mrb[0].mxu0 %v1719
    %v1721 = vpop.f32.mrb[0].mxu0
    %v1722 = vadd.f32 %v1610, %v1721
    %v1723 = vpop.f32.mrb[0].mxu0
    %1724 = vmatprep.mubr.f32.mxu0 0.0
    %v1725 = vand.u32 %v1277, 4294901760
    %v1726 = vsub.f32 %v1277, %v1725
    %v1727 = vand.u32 %v1726, 4294901760
    %1728 = vmatmul.mubr.f32.gmra.mrb[0].mxu0 %v1727
    %v1729 = vpop.f32.mrb[0].mxu0
    %v1730 = vadd.f32 %v1617, %v1729
    %v1731 = vpop.f32.mrb[0].mxu0
    %1732 = vmatprep.mubr.f32.mxu0 0.0
    %v1733 = vand.u32 %v1280, 4294901760
    %v1734 = vsub.f32 %v1280, %v1733
    %v1735 = vand.u32 %v1734, 4294901760
    %1736 = vmatmul.mubr.f32.gmra.mrb[0].mxu0 %v1735
    %v1737 = vpop.f32.mrb[0].mxu0
    %v1738 = vadd.f32 %v1624, %v1737
    %v1739 = vpop.f32.mrb[0].mxu0
    %1740 = vmatprep.mubr.f32.mxu0 0.0
    %v1741 = vand.u32 %v1283, 4294901760
    %v1742 = vsub.f32 %v1283, %v1741
    %v1743 = vand.u32 %v1742, 4294901760
    %1744 = vmatmul.mubr.f32.gmra.mrb[0].mxu0 %v1743
    %v1745 = vpop.f32.mrb[0].mxu0
    %v1746 = vadd.f32 %v1631, %v1745
    %v1747 = vpop.f32.mrb[0].mxu0
    %1748 = vdwg.mxu0
    %1749 = vmatprep.subr.mxu0 0.0
    %v1750 = vand.u32 %v1265, 4294901760
    %v1751 = vsub.f32 %v1265, %v1750
    %v1752 = vand.u32 %v1751, 4294901760
    %1753 = vmatpush1.msra.mxu0 %v1752
    %1754 = vmatprep.subr.mxu0 0.0
    %v1755 = vand.u32 %v1266, 4294901760
    %v1756 = vsub.f32 %v1266, %v1755
    %v1757 = vand.u32 %v1756, 4294901760
    %1758 = vmatpush1.msra.mxu0 %v1757
    %1759 = vmatprep.subr.mxu0 0.0
    %1760 = vmatpush1.msra.mxu0 0.0
    %1761 = vmatprep.subr.mxu0 0.0
    %1762 = vmatpush1.msra.mxu0 0.0
    %1763 = vmatprep.subr.mxu0 0.0
    %1764 = vmatpush1.msra.mxu0 0.0
    %1765 = vmatprep.subr.mxu0 0.0
    %1766 = vmatpush1.msra.mxu0 0.0
    %1767 = vmatprep.subr.mxu0 0.0
    %1768 = vmatpush1.msra.mxu0 0.0
    %1769 = vmatprep.subr.mxu0 0.0
    %1770 = vmatpush1.msra.mxu0 0.0
    %1771 = vmatprep.subr.mxu0 0.0
    %1772 = vmatpush1.msra.mxu0 0.0
    %1773 = vmatprep.subr.mxu0 0.0
    %1774 = vmatpush1.msra.mxu0 0.0
    %1775 = vmatprep.subr.mxu0 0.0
    %1776 = vmatpush1.msra.mxu0 0.0
    %1777 = vmatprep.subr.mxu0 0.0
    %1778 = vmatpush1.msra.mxu0 0.0
    %1779 = vmatprep.subr.mxu0 0.0
    %1780 = vmatpush1.msra.mxu0 0.0
    %1781 = vmatprep.subr.mxu0 0.0
    %1782 = vmatpush1.msra.mxu0 0.0
    %1783 = vmatprep.subr.mxu0 0.0
    %1784 = vmatpush1.msra.mxu0 0.0
    %1785 = vmatprep.subr.mxu0 0.0
    %1786 = vmatpush1.msra.mxu0 0.0
    %1787 = vmatprep.subr.mxu0 0.0
    %1788 = vmatpush1.msra.mxu0 0.0
    %1789 = vmatprep.subr.mxu0 0.0
    %1790 = vmatpush1.msra.mxu0 0.0
    %1791 = vmatprep.subr.mxu0 0.0
    %1792 = vmatpush1.msra.mxu0 0.0
    %1793 = vmatprep.subr.mxu0 0.0
    %1794 = vmatpush1.msra.mxu0 0.0
    %1795 = vmatprep.subr.mxu0 0.0
    %1796 = vmatpush1.msra.mxu0 0.0
    %1797 = vmatprep.subr.mxu0 0.0
    %1798 = vmatpush1.msra.mxu0 0.0
    %1799 = vmatprep.subr.mxu0 0.0
    %1800 = vmatpush1.msra.mxu0 0.0
    %1801 = vmatprep.subr.mxu0 0.0
    %1802 = vmatpush1.msra.mxu0 0.0
    %1803 = vmatprep.subr.mxu0 0.0
    %1804 = vmatpush1.msra.mxu0 0.0
    %1805 = vmatprep.subr.mxu0 0.0
    %1806 = vmatpush1.msra.mxu0 0.0
    %1807 = vmatprep.subr.mxu0 0.0
    %1808 = vmatpush1.msra.mxu0 0.0
    %1809 = vmatprep.subr.mxu0 0.0
    %1810 = vmatpush1.msra.mxu0 0.0
    %1811 = vmatprep.subr.mxu0 0.0
    %1812 = vmatpush1.msra.mxu0 0.0
    %1813 = vmatprep.subr.mxu0 0.0
    %1814 = vmatpush1.msra.mxu0 0.0
    %1815 = vmatprep.subr.mxu0 0.0
    %1816 = vmatpush1.msra.mxu0 0.0
    %1817 = vmatprep.subr.mxu0 0.0
    %1818 = vmatpush1.msra.mxu0 0.0
    %1819 = vmatprep.mubr.f32.mxu0 0.0
    %v1820 = vand.u32 %v1268, 4294901760
    %1821 = vmatmul.mubr.f32.gmra.mrb[0].mxu0 %v1820
    %v1822 = vpop.f32.mrb[0].mxu0
    %v1823 = vadd.f32 %v1706, %v1822
    %v1824 = vpop.f32.mrb[0].mxu0
    %1825 = vmatprep.mubr.f32.mxu0 0.0
    %v1826 = vand.u32 %v1271, 4294901760
    %1827 = vmatmul.mubr.f32.gmra.mrb[0].mxu0 %v1826
    %v1828 = vpop.f32.mrb[0].mxu0
    %v1829 = vadd.f32 %v1714, %v1828
    %v1830 = vpop.f32.mrb[0].mxu0
    %1831 = vmatprep.mubr.f32.mxu0 0.0
    %v1832 = vand.u32 %v1274, 4294901760
    %1833 = vmatmul.mubr.f32.gmra.mrb[0].mxu0 %v1832
    %v1834 = vpop.f32.mrb[0].mxu0
    %v1835 = vadd.f32 %v1722, %v1834
    %v1836 = vpop.f32.mrb[0].mxu0
    %1837 = vmatprep.mubr.f32.mxu0 0.0
    %v1838 = vand.u32 %v1277, 4294901760
    %1839 = vmatmul.mubr.f32.gmra.mrb[0].mxu0 %v1838
    %v1840 = vpop.f32.mrb[0].mxu0
    %v1841 = vadd.f32 %v1730, %v1840
    %v1842 = vpop.f32.mrb[0].mxu0
    %1843 = vmatprep.mubr.f32.mxu0 0.0
    %v1844 = vand.u32 %v1280, 4294901760
    %1845 = vmatmul.mubr.f32.gmra.mrb[0].mxu0 %v1844
    %v1846 = vpop.f32.mrb[0].mxu0
    %v1847 = vadd.f32 %v1738, %v1846
    %v1848 = vpop.f32.mrb[0].mxu0
    %1849 = vmatprep.mubr.f32.mxu0 0.0
    %v1850 = vand.u32 %v1283, 4294901760
    %1851 = vmatmul.mubr.f32.gmra.mrb[0].mxu0 %v1850
    %v1852 = vpop.f32.mrb[0].mxu0
    %v1853 = vadd.f32 %v1746, %v1852
    %v1854 = vpop.f32.mrb[0].mxu0
    %1855 = vdwg.mxu0
    %1856 = vmatprep.subr.mxu0 0.0
    %v1857 = vand.u32 %v1265, 4294901760
    %1858 = vmatpush1.msra.mxu0 %v1857
    %1859 = vmatprep.subr.mxu0 0.0
    %v1860 = vand.u32 %v1266, 4294901760
    %1861 = vmatpush1.msra.mxu0 %v1860
    %1862 = vmatprep.subr.mxu0 0.0
    %1863 = vmatpush1.msra.mxu0 0.0
    %1864 = vmatprep.subr.mxu0 0.0
    %1865 = vmatpush1.msra.mxu0 0.0
    %1866 = vmatprep.subr.mxu0 0.0
    %1867 = vmatpush1.msra.mxu0 0.0
    %1868 = vmatprep.subr.mxu0 0.0
    %1869 = vmatpush1.msra.mxu0 0.0
    %1870 = vmatprep.subr.mxu0 0.0
    %1871 = vmatpush1.msra.mxu0 0.0
    %1872 = vmatprep.subr.mxu0 0.0
    %1873 = vmatpush1.msra.mxu0 0.0
    %1874 = vmatprep.subr.mxu0 0.0
    %1875 = vmatpush1.msra.mxu0 0.0
    %1876 = vmatprep.subr.mxu0 0.0
    %1877 = vmatpush1.msra.mxu0 0.0
    %1878 = vmatprep.subr.mxu0 0.0
    %1879 = vmatpush1.msra.mxu0 0.0
    %1880 = vmatprep.subr.mxu0 0.0
    %1881 = vmatpush1.msra.mxu0 0.0
    %1882 = vmatprep.subr.mxu0 0.0
    %1883 = vmatpush1.msra.mxu0 0.0
    %1884 = vmatprep.subr.mxu0 0.0
    %1885 = vmatpush1.msra.mxu0 0.0
    %1886 = vmatprep.subr.mxu0 0.0
    %1887 = vmatpush1.msra.mxu0 0.0
    %1888 = vmatprep.subr.mxu0 0.0
    %1889 = vmatpush1.msra.mxu0 0.0
    %1890 = vmatprep.subr.mxu0 0.0
    %1891 = vmatpush1.msra.mxu0 0.0
    %1892 = vmatprep.subr.mxu0 0.0
    %1893 = vmatpush1.msra.mxu0 0.0
    %1894 = vmatprep.subr.mxu0 0.0
    %1895 = vmatpush1.msra.mxu0 0.0
    %1896 = vmatprep.subr.mxu0 0.0
    %1897 = vmatpush1.msra.mxu0 0.0
    %1898 = vmatprep.subr.mxu0 0.0
    %1899 = vmatpush1.msra.mxu0 0.0
    %1900 = vmatprep.subr.mxu0 0.0
    %1901 = vmatpush1.msra.mxu0 0.0
    %1902 = vmatprep.subr.mxu0 0.0
    %1903 = vmatpush1.msra.mxu0 0.0
    %1904 = vmatprep.subr.mxu0 0.0
    %1905 = vmatpush1.msra.mxu0 0.0
    %1906 = vmatprep.subr.mxu0 0.0
    %1907 = vmatpush1.msra.mxu0 0.0
    %1908 = vmatprep.subr.mxu0 0.0
    %1909 = vmatpush1.msra.mxu0 0.0
    %1910 = vmatprep.subr.mxu0 0.0
    %1911 = vmatpush1.msra.mxu0 0.0
    %1912 = vmatprep.subr.mxu0 0.0
    %1913 = vmatpush1.msra.mxu0 0.0
    %1914 = vmatprep.subr.mxu0 0.0
    %1915 = vmatpush1.msra.mxu0 0.0
    %1916 = vmatprep.subr.mxu0 0.0
    %1917 = vmatpush1.msra.mxu0 0.0
    %1918 = vmatprep.subr.mxu0 0.0
    %1919 = vmatpush1.msra.mxu0 0.0
    %1920 = vmatprep.subr.mxu0 0.0
    %1921 = vmatpush1.msra.mxu0 0.0
    %1922 = vmatprep.mubr.f32.mxu0 0.0
    %v1923 = vand.u32 %v1268, 4294901760
    %1924 = vmatmul.mubr.f32.gmra.mrb[0].mxu0 %v1923
    %v1925 = vpop.f32.mrb[0].mxu0
    %v1926 = vadd.f32 %v1823, %v1925
    %v1927 = vpop.f32.mrb[0].mxu0
    %1928 = vmatprep.mubr.f32.mxu0 0.0
    %v1929 = vand.u32 %v1271, 4294901760
    %1930 = vmatmul.mubr.f32.gmra.mrb[0].mxu0 %v1929
    %v1931 = vpop.f32.mrb[0].mxu0
    %v1932 = vadd.f32 %v1829, %v1931
    %v1933 = vpop.f32.mrb[0].mxu0
    %1934 = vmatprep.mubr.f32.mxu0 0.0
    %v1935 = vand.u32 %v1274, 4294901760
    %1936 = vmatmul.mubr.f32.gmra.mrb[0].mxu0 %v1935
    %v1937 = vpop.f32.mrb[0].mxu0
    %v1938 = vadd.f32 %v1835, %v1937
    %v1939 = vpop.f32.mrb[0].mxu0
    %1940 = vmatprep.mubr.f32.mxu0 0.0
    %v1941 = vand.u32 %v1277, 4294901760
    %1942 = vmatmul.mubr.f32.gmra.mrb[0].mxu0 %v1941
    %v1943 = vpop.f32.mrb[0].mxu0
    %v1944 = vadd.f32 %v1841, %v1943
    %v1945 = vpop.f32.mrb[0].mxu0
    %1946 = vmatprep.mubr.f32.mxu0 0.0
    %v1947 = vand.u32 %v1280, 4294901760
    %1948 = vmatmul.mubr.f32.gmra.mrb[0].mxu0 %v1947
    %v1949 = vpop.f32.mrb[0].mxu0
    %v1950 = vadd.f32 %v1847, %v1949
    %v1951 = vpop.f32.mrb[0].mxu0
    %1952 = vmatprep.mubr.f32.mxu0 0.0
    %v1953 = vand.u32 %v1283, 4294901760
    %1954 = vmatmul.mubr.f32.gmra.mrb[0].mxu0 %v1953
    %v1955 = vpop.f32.mrb[0].mxu0
    %v1956 = vadd.f32 %v1853, %v1955
    %v1957 = vpop.f32.mrb[0].mxu0
    %1958 = vdwg.mxu0
    %1961 = vrot.lane.b32.xlu0 %v1265, 64
    %v1962 = vpop.permute.xlu0 %1961
    %1963 = vrot.lane.b32.xlu0 %v1266, 64
    %v1964 = vpop.permute.xlu0 %1963
    %v1968 = vsel %vm142, %v100, 0
    %v1971 = vsel %vm142, %v101, 0
    %v1974 = vsel %vm142, %v102, 0
    %v1977 = vsel %vm142, %v103, 0
    %v1980 = vsel %vm142, %v104, 0
    %v1983 = vsel %vm142, %v105, 0
    %1985 = vmatprep.subr.mxu0 0.0
    %v1986 = vand.u32 %v1962, 4294901760
    %1987 = vmatpush1.msra.mxu0 %v1986
    %1988 = vmatprep.subr.mxu0 0.0
    %v1989 = vand.u32 %v1964, 4294901760
    %1990 = vmatpush1.msra.mxu0 %v1989
    %1991 = vmatprep.subr.mxu0 0.0
    %1992 = vmatpush1.msra.mxu0 0.0
    %1993 = vmatprep.subr.mxu0 0.0
    %1994 = vmatpush1.msra.mxu0 0.0
    %1995 = vmatprep.subr.mxu0 0.0
    %1996 = vmatpush1.msra.mxu0 0.0
    %1997 = vmatprep.subr.mxu0 0.0
    %1998 = vmatpush1.msra.mxu0 0.0
    %1999 = vmatprep.subr.mxu0 0.0
    %2000 = vmatpush1.msra.mxu0 0.0
    %2001 = vmatprep.subr.mxu0 0.0
    %2002 = vmatpush1.msra.mxu0 0.0
    %2003 = vmatprep.subr.mxu0 0.0
    %2004 = vmatpush1.msra.mxu0 0.0
    %2005 = vmatprep.subr.mxu0 0.0
    %2006 = vmatpush1.msra.mxu0 0.0
    %2007 = vmatprep.subr.mxu0 0.0
    %2008 = vmatpush1.msra.mxu0 0.0
    %2009 = vmatprep.subr.mxu0 0.0
    %2010 = vmatpush1.msra.mxu0 0.0
    %2011 = vmatprep.subr.mxu0 0.0
    %2012 = vmatpush1.msra.mxu0 0.0
    %2013 = vmatprep.subr.mxu0 0.0
    %2014 = vmatpush1.msra.mxu0 0.0
    %2015 = vmatprep.subr.mxu0 0.0
    %2016 = vmatpush1.msra.mxu0 0.0
    %2017 = vmatprep.subr.mxu0 0.0
    %2018 = vmatpush1.msra.mxu0 0.0
    %2019 = vmatprep.subr.mxu0 0.0
    %2020 = vmatpush1.msra.mxu0 0.0
    %2021 = vmatprep.subr.mxu0 0.0
    %2022 = vmatpush1.msra.mxu0 0.0
    %2023 = vmatprep.subr.mxu0 0.0
    %2024 = vmatpush1.msra.mxu0 0.0
    %2025 = vmatprep.subr.mxu0 0.0
    %2026 = vmatpush1.msra.mxu0 0.0
    %2027 = vmatprep.subr.mxu0 0.0
    %2028 = vmatpush1.msra.mxu0 0.0
    %2029 = vmatprep.subr.mxu0 0.0
    %2030 = vmatpush1.msra.mxu0 0.0
    %2031 = vmatprep.subr.mxu0 0.0
    %2032 = vmatpush1.msra.mxu0 0.0
    %2033 = vmatprep.subr.mxu0 0.0
    %2034 = vmatpush1.msra.mxu0 0.0
    %2035 = vmatprep.subr.mxu0 0.0
    %2036 = vmatpush1.msra.mxu0 0.0
    %2037 = vmatprep.subr.mxu0 0.0
    %2038 = vmatpush1.msra.mxu0 0.0
    %2039 = vmatprep.subr.mxu0 0.0
    %2040 = vmatpush1.msra.mxu0 0.0
    %2041 = vmatprep.subr.mxu0 0.0
    %2042 = vmatpush1.msra.mxu0 0.0
    %2043 = vmatprep.subr.mxu0 0.0
    %2044 = vmatpush1.msra.mxu0 0.0
    %2045 = vmatprep.subr.mxu0 0.0
    %2046 = vmatpush1.msra.mxu0 0.0
    %2047 = vmatprep.subr.mxu0 0.0
    %2048 = vmatpush1.msra.mxu0 0.0
    %2049 = vmatprep.subr.mxu0 0.0
    %2050 = vmatpush1.msra.mxu0 0.0
    %2051 = vmatprep.mubr.f32.mxu0 0.0
    %v2052 = vand.u32 %v1968, 4294901760
    %v2053 = vsub.f32 %v1968, %v2052
    %v2054 = vand.u32 %v2053, 4294901760
    %v2055 = vsub.f32 %v2053, %v2054
    %v2056 = vand.u32 %v2055, 4294901760
    %2057 = vmatmul.mubr.f32.gmra.mrb[0].mxu0 %v2056
    %v2058 = vpop.f32.mrb[0].mxu0
    %v2059 = vadd.f32 0.0, %v2058
    %v2060 = vpop.f32.mrb[0].mxu0
    %2061 = vmatprep.mubr.f32.mxu0 0.0
    %v2062 = vand.u32 %v1971, 4294901760
    %v2063 = vsub.f32 %v1971, %v2062
    %v2064 = vand.u32 %v2063, 4294901760
    %v2065 = vsub.f32 %v2063, %v2064
    %v2066 = vand.u32 %v2065, 4294901760
    %2067 = vmatmul.mubr.f32.gmra.mrb[0].mxu0 %v2066
    %v2068 = vpop.f32.mrb[0].mxu0
    %v2069 = vadd.f32 0.0, %v2068
    %v2070 = vpop.f32.mrb[0].mxu0
    %2071 = vmatprep.mubr.f32.mxu0 0.0
    %v2072 = vand.u32 %v1974, 4294901760
    %v2073 = vsub.f32 %v1974, %v2072
    %v2074 = vand.u32 %v2073, 4294901760
    %v2075 = vsub.f32 %v2073, %v2074
    %v2076 = vand.u32 %v2075, 4294901760
    %2077 = vmatmul.mubr.f32.gmra.mrb[0].mxu0 %v2076
    %v2078 = vpop.f32.mrb[0].mxu0
    %v2079 = vadd.f32 0.0, %v2078
    %v2080 = vpop.f32.mrb[0].mxu0
    %2081 = vmatprep.mubr.f32.mxu0 0.0
    %v2082 = vand.u32 %v1977, 4294901760
    %v2083 = vsub.f32 %v1977, %v2082
    %v2084 = vand.u32 %v2083, 4294901760
    %v2085 = vsub.f32 %v2083, %v2084
    %v2086 = vand.u32 %v2085, 4294901760
    %2087 = vmatmul.mubr.f32.gmra.mrb[0].mxu0 %v2086
    %v2088 = vpop.f32.mrb[0].mxu0
    %v2089 = vadd.f32 0.0, %v2088
    %v2090 = vpop.f32.mrb[0].mxu0
    %2091 = vmatprep.mubr.f32.mxu0 0.0
    %v2092 = vand.u32 %v1980, 4294901760
    %v2093 = vsub.f32 %v1980, %v2092
    %v2094 = vand.u32 %v2093, 4294901760
    %v2095 = vsub.f32 %v2093, %v2094
    %v2096 = vand.u32 %v2095, 4294901760
    %2097 = vmatmul.mubr.f32.gmra.mrb[0].mxu0 %v2096
    %v2098 = vpop.f32.mrb[0].mxu0
    %v2099 = vadd.f32 0.0, %v2098
    %v2100 = vpop.f32.mrb[0].mxu0
    %2101 = vmatprep.mubr.f32.mxu0 0.0
    %v2102 = vand.u32 %v1983, 4294901760
    %v2103 = vsub.f32 %v1983, %v2102
    %v2104 = vand.u32 %v2103, 4294901760
    %v2105 = vsub.f32 %v2103, %v2104
    %v2106 = vand.u32 %v2105, 4294901760
    %2107 = vmatmul.mubr.f32.gmra.mrb[0].mxu0 %v2106
    %v2108 = vpop.f32.mrb[0].mxu0
    %v2109 = vadd.f32 0.0, %v2108
    %v2110 = vpop.f32.mrb[0].mxu0
    %2111 = vdwg.mxu0
    %2112 = vmatprep.subr.mxu0 0.0
    %v2113 = vand.u32 %v1962, 4294901760
    %v2114 = vsub.f32 %v1962, %v2113
    %v2115 = vand.u32 %v2114, 4294901760
    %v2116 = vsub.f32 %v2114, %v2115
    %v2117 = vand.u32 %v2116, 4294901760
    %2118 = vmatpush1.msra.mxu0 %v2117
    %2119 = vmatprep.subr.mxu0 0.0
    %v2120 = vand.u32 %v1964, 4294901760
    %v2121 = vsub.f32 %v1964, %v2120
    %v2122 = vand.u32 %v2121, 4294901760
    %v2123 = vsub.f32 %v2121, %v2122
    %v2124 = vand.u32 %v2123, 4294901760
    %2125 = vmatpush1.msra.mxu0 %v2124
    %2126 = vmatprep.subr.mxu0 0.0
    %2127 = vmatpush1.msra.mxu0 0.0
    %2128 = vmatprep.subr.mxu0 0.0
    %2129 = vmatpush1.msra.mxu0 0.0
    %2130 = vmatprep.subr.mxu0 0.0
    %2131 = vmatpush1.msra.mxu0 0.0
    %2132 = vmatprep.subr.mxu0 0.0
    %2133 = vmatpush1.msra.mxu0 0.0
    %2134 = vmatprep.subr.mxu0 0.0
    %2135 = vmatpush1.msra.mxu0 0.0
    %2136 = vmatprep.subr.mxu0 0.0
    %2137 = vmatpush1.msra.mxu0 0.0
    %2138 = vmatprep.subr.mxu0 0.0
    %2139 = vmatpush1.msra.mxu0 0.0
    %2140 = vmatprep.subr.mxu0 0.0
    %2141 = vmatpush1.msra.mxu0 0.0
    %2142 = vmatprep.subr.mxu0 0.0
    %2143 = vmatpush1.msra.mxu0 0.0
    %2144 = vmatprep.subr.mxu0 0.0
    %2145 = vmatpush1.msra.mxu0 0.0
    %2146 = vmatprep.subr.mxu0 0.0
    %2147 = vmatpush1.msra.mxu0 0.0
    %2148 = vmatprep.subr.mxu0 0.0
    %2149 = vmatpush1.msra.mxu0 0.0
    %2150 = vmatprep.subr.mxu0 0.0
    %2151 = vmatpush1.msra.mxu0 0.0
    %2152 = vmatprep.subr.mxu0 0.0
    %2153 = vmatpush1.msra.mxu0 0.0
    %2154 = vmatprep.subr.mxu0 0.0
    %2155 = vmatpush1.msra.mxu0 0.0
    %2156 = vmatprep.subr.mxu0 0.0
    %2157 = vmatpush1.msra.mxu0 0.0
    %2158 = vmatprep.subr.mxu0 0.0
    %2159 = vmatpush1.msra.mxu0 0.0
    %2160 = vmatprep.subr.mxu0 0.0
    %2161 = vmatpush1.msra.mxu0 0.0
    %2162 = vmatprep.subr.mxu0 0.0
    %2163 = vmatpush1.msra.mxu0 0.0
    %2164 = vmatprep.subr.mxu0 0.0
    %2165 = vmatpush1.msra.mxu0 0.0
    %2166 = vmatprep.subr.mxu0 0.0
    %2167 = vmatpush1.msra.mxu0 0.0
    %2168 = vmatprep.subr.mxu0 0.0
    %2169 = vmatpush1.msra.mxu0 0.0
    %2170 = vmatprep.subr.mxu0 0.0
    %2171 = vmatpush1.msra.mxu0 0.0
    %2172 = vmatprep.subr.mxu0 0.0
    %2173 = vmatpush1.msra.mxu0 0.0
    %2174 = vmatprep.subr.mxu0 0.0
    %2175 = vmatpush1.msra.mxu0 0.0
    %2176 = vmatprep.subr.mxu0 0.0
    %2177 = vmatpush1.msra.mxu0 0.0
    %2178 = vmatprep.subr.mxu0 0.0
    %2179 = vmatpush1.msra.mxu0 0.0
    %2180 = vmatprep.subr.mxu0 0.0
    %2181 = vmatpush1.msra.mxu0 0.0
    %2182 = vmatprep.subr.mxu0 0.0
    %2183 = vmatpush1.msra.mxu0 0.0
    %2184 = vmatprep.subr.mxu0 0.0
    %2185 = vmatpush1.msra.mxu0 0.0
    %2186 = vmatprep.mubr.f32.mxu0 0.0
    %v2187 = vand.u32 %v1968, 4294901760
    %2188 = vmatmul.mubr.f32.gmra.mrb[0].mxu0 %v2187
    %v2189 = vpop.f32.mrb[0].mxu0
    %v2190 = vadd.f32 %v2059, %v2189
    %v2191 = vpop.f32.mrb[0].mxu0
    %2192 = vmatprep.mubr.f32.mxu0 0.0
    %v2193 = vand.u32 %v1971, 4294901760
    %2194 = vmatmul.mubr.f32.gmra.mrb[0].mxu0 %v2193
    %v2195 = vpop.f32.mrb[0].mxu0
    %v2196 = vadd.f32 %v2069, %v2195
    %v2197 = vpop.f32.mrb[0].mxu0
    %2198 = vmatprep.mubr.f32.mxu0 0.0
    %v2199 = vand.u32 %v1974, 4294901760
    %2200 = vmatmul.mubr.f32.gmra.mrb[0].mxu0 %v2199
    %v2201 = vpop.f32.mrb[0].mxu0
    %v2202 = vadd.f32 %v2079, %v2201
    %v2203 = vpop.f32.mrb[0].mxu0
    %2204 = vmatprep.mubr.f32.mxu0 0.0
    %v2205 = vand.u32 %v1977, 4294901760
    %2206 = vmatmul.mubr.f32.gmra.mrb[0].mxu0 %v2205
    %v2207 = vpop.f32.mrb[0].mxu0
    %v2208 = vadd.f32 %v2089, %v2207
    %v2209 = vpop.f32.mrb[0].mxu0
    %2210 = vmatprep.mubr.f32.mxu0 0.0
    %v2211 = vand.u32 %v1980, 4294901760
    %2212 = vmatmul.mubr.f32.gmra.mrb[0].mxu0 %v2211
    %v2213 = vpop.f32.mrb[0].mxu0
    %v2214 = vadd.f32 %v2099, %v2213
    %v2215 = vpop.f32.mrb[0].mxu0
    %2216 = vmatprep.mubr.f32.mxu0 0.0
    %v2217 = vand.u32 %v1983, 4294901760
    %2218 = vmatmul.mubr.f32.gmra.mrb[0].mxu0 %v2217
    %v2219 = vpop.f32.mrb[0].mxu0
    %v2220 = vadd.f32 %v2109, %v2219
    %v2221 = vpop.f32.mrb[0].mxu0
    %2222 = vdwg.mxu0
    %2223 = vmatprep.subr.mxu0 0.0
    %v2224 = vand.u32 %v1962, 4294901760
    %v2225 = vsub.f32 %v1962, %v2224
    %2226 = vmatpush1.msra.mxu0 %v2225
    %2227 = vmatprep.subr.mxu0 0.0
    %v2228 = vand.u32 %v1964, 4294901760
    %v2229 = vsub.f32 %v1964, %v2228
    %2230 = vmatpush1.msra.mxu0 %v2229
    %2231 = vmatprep.subr.mxu0 0.0
    %2232 = vmatpush1.msra.mxu0 0.0
    %2233 = vmatprep.subr.mxu0 0.0
    %2234 = vmatpush1.msra.mxu0 0.0
    %2235 = vmatprep.subr.mxu0 0.0
    %2236 = vmatpush1.msra.mxu0 0.0
    %2237 = vmatprep.subr.mxu0 0.0
    %2238 = vmatpush1.msra.mxu0 0.0
    %2239 = vmatprep.subr.mxu0 0.0
    %2240 = vmatpush1.msra.mxu0 0.0
    %2241 = vmatprep.subr.mxu0 0.0
    %2242 = vmatpush1.msra.mxu0 0.0
    %2243 = vmatprep.subr.mxu0 0.0
    %2244 = vmatpush1.msra.mxu0 0.0
    %2245 = vmatprep.subr.mxu0 0.0
    %2246 = vmatpush1.msra.mxu0 0.0
    %2247 = vmatprep.subr.mxu0 0.0
    %2248 = vmatpush1.msra.mxu0 0.0
    %2249 = vmatprep.subr.mxu0 0.0
    %2250 = vmatpush1.msra.mxu0 0.0
    %2251 = vmatprep.subr.mxu0 0.0
    %2252 = vmatpush1.msra.mxu0 0.0
    %2253 = vmatprep.subr.mxu0 0.0
    %2254 = vmatpush1.msra.mxu0 0.0
    %2255 = vmatprep.subr.mxu0 0.0
    %2256 = vmatpush1.msra.mxu0 0.0
    %2257 = vmatprep.subr.mxu0 0.0
    %2258 = vmatpush1.msra.mxu0 0.0
    %2259 = vmatprep.subr.mxu0 0.0
    %2260 = vmatpush1.msra.mxu0 0.0
    %2261 = vmatprep.subr.mxu0 0.0
    %2262 = vmatpush1.msra.mxu0 0.0
    %2263 = vmatprep.subr.mxu0 0.0
    %2264 = vmatpush1.msra.mxu0 0.0
    %2265 = vmatprep.subr.mxu0 0.0
    %2266 = vmatpush1.msra.mxu0 0.0
    %2267 = vmatprep.subr.mxu0 0.0
    %2268 = vmatpush1.msra.mxu0 0.0
    %2269 = vmatprep.subr.mxu0 0.0
    %2270 = vmatpush1.msra.mxu0 0.0
    %2271 = vmatprep.subr.mxu0 0.0
    %2272 = vmatpush1.msra.mxu0 0.0
    %2273 = vmatprep.subr.mxu0 0.0
    %2274 = vmatpush1.msra.mxu0 0.0
    %2275 = vmatprep.subr.mxu0 0.0
    %2276 = vmatpush1.msra.mxu0 0.0
    %2277 = vmatprep.subr.mxu0 0.0
    %2278 = vmatpush1.msra.mxu0 0.0
    %2279 = vmatprep.subr.mxu0 0.0
    %2280 = vmatpush1.msra.mxu0 0.0
    %2281 = vmatprep.subr.mxu0 0.0
    %2282 = vmatpush1.msra.mxu0 0.0
    %2283 = vmatprep.subr.mxu0 0.0
    %2284 = vmatpush1.msra.mxu0 0.0
    %2285 = vmatprep.subr.mxu0 0.0
    %2286 = vmatpush1.msra.mxu0 0.0
    %2287 = vmatprep.subr.mxu0 0.0
    %2288 = vmatpush1.msra.mxu0 0.0
    %2289 = vmatprep.subr.mxu0 0.0
    %2290 = vmatpush1.msra.mxu0 0.0
    %2291 = vmatprep.mubr.f32.mxu0 0.0
    %v2292 = vand.u32 %v1968, 4294901760
    %v2293 = vsub.f32 %v1968, %v2292
    %2294 = vmatmul.mubr.f32.gmra.mrb[0].mxu0 %v2293
    %v2295 = vpop.f32.mrb[0].mxu0
    %v2296 = vadd.f32 %v2190, %v2295
    %v2297 = vpop.f32.mrb[0].mxu0
    %2298 = vmatprep.mubr.f32.mxu0 0.0
    %v2299 = vand.u32 %v1971, 4294901760
    %v2300 = vsub.f32 %v1971, %v2299
    %2301 = vmatmul.mubr.f32.gmra.mrb[0].mxu0 %v2300
    %v2302 = vpop.f32.mrb[0].mxu0
    %v2303 = vadd.f32 %v2196, %v2302
    %v2304 = vpop.f32.mrb[0].mxu0
    %2305 = vmatprep.mubr.f32.mxu0 0.0
    %v2306 = vand.u32 %v1974, 4294901760
    %v2307 = vsub.f32 %v1974, %v2306
    %2308 = vmatmul.mubr.f32.gmra.mrb[0].mxu0 %v2307
    %v2309 = vpop.f32.mrb[0].mxu0
    %v2310 = vadd.f32 %v2202, %v2309
    %v2311 = vpop.f32.mrb[0].mxu0
    %2312 = vmatprep.mubr.f32.mxu0 0.0
    %v2313 = vand.u32 %v1977, 4294901760
    %v2314 = vsub.f32 %v1977, %v2313
    %2315 = vmatmul.mubr.f32.gmra.mrb[0].mxu0 %v2314
    %v2316 = vpop.f32.mrb[0].mxu0
    %v2317 = vadd.f32 %v2208, %v2316
    %v2318 = vpop.f32.mrb[0].mxu0
    %2319 = vmatprep.mubr.f32.mxu0 0.0
    %v2320 = vand.u32 %v1980, 4294901760
    %v2321 = vsub.f32 %v1980, %v2320
    %2322 = vmatmul.mubr.f32.gmra.mrb[0].mxu0 %v2321
    %v2323 = vpop.f32.mrb[0].mxu0
    %v2324 = vadd.f32 %v2214, %v2323
    %v2325 = vpop.f32.mrb[0].mxu0
    %2326 = vmatprep.mubr.f32.mxu0 0.0
    %v2327 = vand.u32 %v1983, 4294901760
    %v2328 = vsub.f32 %v1983, %v2327
    %2329 = vmatmul.mubr.f32.gmra.mrb[0].mxu0 %v2328
    %v2330 = vpop.f32.mrb[0].mxu0
    %v2331 = vadd.f32 %v2220, %v2330
    %v2332 = vpop.f32.mrb[0].mxu0
    %2333 = vdwg.mxu0
    %2334 = vmatprep.subr.mxu0 0.0
    %v2335 = vand.u32 %v1962, 4294901760
    %2336 = vmatpush1.msra.mxu0 %v2335
    %2337 = vmatprep.subr.mxu0 0.0
    %v2338 = vand.u32 %v1964, 4294901760
    %2339 = vmatpush1.msra.mxu0 %v2338
    %2340 = vmatprep.subr.mxu0 0.0
    %2341 = vmatpush1.msra.mxu0 0.0
    %2342 = vmatprep.subr.mxu0 0.0
    %2343 = vmatpush1.msra.mxu0 0.0
    %2344 = vmatprep.subr.mxu0 0.0
    %2345 = vmatpush1.msra.mxu0 0.0
    %2346 = vmatprep.subr.mxu0 0.0
    %2347 = vmatpush1.msra.mxu0 0.0
    %2348 = vmatprep.subr.mxu0 0.0
    %2349 = vmatpush1.msra.mxu0 0.0
    %2350 = vmatprep.subr.mxu0 0.0
    %2351 = vmatpush1.msra.mxu0 0.0
    %2352 = vmatprep.subr.mxu0 0.0
    %2353 = vmatpush1.msra.mxu0 0.0
    %2354 = vmatprep.subr.mxu0 0.0
    %2355 = vmatpush1.msra.mxu0 0.0
    %2356 = vmatprep.subr.mxu0 0.0
    %2357 = vmatpush1.msra.mxu0 0.0
    %2358 = vmatprep.subr.mxu0 0.0
    %2359 = vmatpush1.msra.mxu0 0.0
    %2360 = vmatprep.subr.mxu0 0.0
    %2361 = vmatpush1.msra.mxu0 0.0
    %2362 = vmatprep.subr.mxu0 0.0
    %2363 = vmatpush1.msra.mxu0 0.0
    %2364 = vmatprep.subr.mxu0 0.0
    %2365 = vmatpush1.msra.mxu0 0.0
    %2366 = vmatprep.subr.mxu0 0.0
    %2367 = vmatpush1.msra.mxu0 0.0
    %2368 = vmatprep.subr.mxu0 0.0
    %2369 = vmatpush1.msra.mxu0 0.0
    %2370 = vmatprep.subr.mxu0 0.0
    %2371 = vmatpush1.msra.mxu0 0.0
    %2372 = vmatprep.subr.mxu0 0.0
    %2373 = vmatpush1.msra.mxu0 0.0
    %2374 = vmatprep.subr.mxu0 0.0
    %2375 = vmatpush1.msra.mxu0 0.0
    %2376 = vmatprep.subr.mxu0 0.0
    %2377 = vmatpush1.msra.mxu0 0.0
    %2378 = vmatprep.subr.mxu0 0.0
    %2379 = vmatpush1.msra.mxu0 0.0
    %2380 = vmatprep.subr.mxu0 0.0
    %2381 = vmatpush1.msra.mxu0 0.0
    %2382 = vmatprep.subr.mxu0 0.0
    %2383 = vmatpush1.msra.mxu0 0.0
    %2384 = vmatprep.subr.mxu0 0.0
    %2385 = vmatpush1.msra.mxu0 0.0
    %2386 = vmatprep.subr.mxu0 0.0
    %2387 = vmatpush1.msra.mxu0 0.0
    %2388 = vmatprep.subr.mxu0 0.0
    %2389 = vmatpush1.msra.mxu0 0.0
    %2390 = vmatprep.subr.mxu0 0.0
    %2391 = vmatpush1.msra.mxu0 0.0
    %2392 = vmatprep.subr.mxu0 0.0
    %2393 = vmatpush1.msra.mxu0 0.0
    %2394 = vmatprep.subr.mxu0 0.0
    %2395 = vmatpush1.msra.mxu0 0.0
    %2396 = vmatprep.subr.mxu0 0.0
    %2397 = vmatpush1.msra.mxu0 0.0
    %2398 = vmatprep.subr.mxu0 0.0
    %2399 = vmatpush1.msra.mxu0 0.0
    %2400 = vmatprep.mubr.f32.mxu0 0.0
    %v2401 = vand.u32 %v1968, 4294901760
    %v2402 = vsub.f32 %v1968, %v2401
    %v2403 = vand.u32 %v2402, 4294901760
    %2404 = vmatmul.mubr.f32.gmra.mrb[0].mxu0 %v2403
    %v2405 = vpop.f32.mrb[0].mxu0
    %v2406 = vadd.f32 %v2296, %v2405
    %v2407 = vpop.f32.mrb[0].mxu0
    %2408 = vmatprep.mubr.f32.mxu0 0.0
    %v2409 = vand.u32 %v1971, 4294901760
    %v2410 = vsub.f32 %v1971, %v2409
    %v2411 = vand.u32 %v2410, 4294901760
    %2412 = vmatmul.mubr.f32.gmra.mrb[0].mxu0 %v2411
    %v2413 = vpop.f32.mrb[0].mxu0
    %v2414 = vadd.f32 %v2303, %v2413
    %v2415 = vpop.f32.mrb[0].mxu0
    %2416 = vmatprep.mubr.f32.mxu0 0.0
    %v2417 = vand.u32 %v1974, 4294901760
    %v2418 = vsub.f32 %v1974, %v2417
    %v2419 = vand.u32 %v2418, 4294901760
    %2420 = vmatmul.mubr.f32.gmra.mrb[0].mxu0 %v2419
    %v2421 = vpop.f32.mrb[0].mxu0
    %v2422 = vadd.f32 %v2310, %v2421
    %v2423 = vpop.f32.mrb[0].mxu0
    %2424 = vmatprep.mubr.f32.mxu0 0.0
    %v2425 = vand.u32 %v1977, 4294901760
    %v2426 = vsub.f32 %v1977, %v2425
    %v2427 = vand.u32 %v2426, 4294901760
    %2428 = vmatmul.mubr.f32.gmra.mrb[0].mxu0 %v2427
    %v2429 = vpop.f32.mrb[0].mxu0
    %v2430 = vadd.f32 %v2317, %v2429
    %v2431 = vpop.f32.mrb[0].mxu0
    %2432 = vmatprep.mubr.f32.mxu0 0.0
    %v2433 = vand.u32 %v1980, 4294901760
    %v2434 = vsub.f32 %v1980, %v2433
    %v2435 = vand.u32 %v2434, 4294901760
    %2436 = vmatmul.mubr.f32.gmra.mrb[0].mxu0 %v2435
    %v2437 = vpop.f32.mrb[0].mxu0
    %v2438 = vadd.f32 %v2324, %v2437
    %v2439 = vpop.f32.mrb[0].mxu0
    %2440 = vmatprep.mubr.f32.mxu0 0.0
    %v2441 = vand.u32 %v1983, 4294901760
    %v2442 = vsub.f32 %v1983, %v2441
    %v2443 = vand.u32 %v2442, 4294901760
    %2444 = vmatmul.mubr.f32.gmra.mrb[0].mxu0 %v2443
    %v2445 = vpop.f32.mrb[0].mxu0
    %v2446 = vadd.f32 %v2331, %v2445
    %v2447 = vpop.f32.mrb[0].mxu0
    %2448 = vdwg.mxu0
    %2449 = vmatprep.subr.mxu0 0.0
    %v2450 = vand.u32 %v1962, 4294901760
    %v2451 = vsub.f32 %v1962, %v2450
    %v2452 = vand.u32 %v2451, 4294901760
    %2453 = vmatpush1.msra.mxu0 %v2452
    %2454 = vmatprep.subr.mxu0 0.0
    %v2455 = vand.u32 %v1964, 4294901760
    %v2456 = vsub.f32 %v1964, %v2455
    %v2457 = vand.u32 %v2456, 4294901760
    %2458 = vmatpush1.msra.mxu0 %v2457
    %2459 = vmatprep.subr.mxu0 0.0
    %2460 = vmatpush1.msra.mxu0 0.0
    %2461 = vmatprep.subr.mxu0 0.0
    %2462 = vmatpush1.msra.mxu0 0.0
    %2463 = vmatprep.subr.mxu0 0.0
    %2464 = vmatpush1.msra.mxu0 0.0
    %2465 = vmatprep.subr.mxu0 0.0
    %2466 = vmatpush1.msra.mxu0 0.0
    %2467 = vmatprep.subr.mxu0 0.0
    %2468 = vmatpush1.msra.mxu0 0.0
    %2469 = vmatprep.subr.mxu0 0.0
    %2470 = vmatpush1.msra.mxu0 0.0
    %2471 = vmatprep.subr.mxu0 0.0
    %2472 = vmatpush1.msra.mxu0 0.0
    %2473 = vmatprep.subr.mxu0 0.0
    %2474 = vmatpush1.msra.mxu0 0.0
    %2475 = vmatprep.subr.mxu0 0.0
    %2476 = vmatpush1.msra.mxu0 0.0
    %2477 = vmatprep.subr.mxu0 0.0
    %2478 = vmatpush1.msra.mxu0 0.0
    %2479 = vmatprep.subr.mxu0 0.0
    %2480 = vmatpush1.msra.mxu0 0.0
    %2481 = vmatprep.subr.mxu0 0.0
    %2482 = vmatpush1.msra.mxu0 0.0
    %2483 = vmatprep.subr.mxu0 0.0
    %2484 = vmatpush1.msra.mxu0 0.0
    %2485 = vmatprep.subr.mxu0 0.0
    %2486 = vmatpush1.msra.mxu0 0.0
    %2487 = vmatprep.subr.mxu0 0.0
    %2488 = vmatpush1.msra.mxu0 0.0
    %2489 = vmatprep.subr.mxu0 0.0
    %2490 = vmatpush1.msra.mxu0 0.0
    %2491 = vmatprep.subr.mxu0 0.0
    %2492 = vmatpush1.msra.mxu0 0.0
    %2493 = vmatprep.subr.mxu0 0.0
    %2494 = vmatpush1.msra.mxu0 0.0
    %2495 = vmatprep.subr.mxu0 0.0
    %2496 = vmatpush1.msra.mxu0 0.0
    %2497 = vmatprep.subr.mxu0 0.0
    %2498 = vmatpush1.msra.mxu0 0.0
    %2499 = vmatprep.subr.mxu0 0.0
    %2500 = vmatpush1.msra.mxu0 0.0
    %2501 = vmatprep.subr.mxu0 0.0
    %2502 = vmatpush1.msra.mxu0 0.0
    %2503 = vmatprep.subr.mxu0 0.0
    %2504 = vmatpush1.msra.mxu0 0.0
    %2505 = vmatprep.subr.mxu0 0.0
    %2506 = vmatpush1.msra.mxu0 0.0
    %2507 = vmatprep.subr.mxu0 0.0
    %2508 = vmatpush1.msra.mxu0 0.0
    %2509 = vmatprep.subr.mxu0 0.0
    %2510 = vmatpush1.msra.mxu0 0.0
    %2511 = vmatprep.subr.mxu0 0.0
    %2512 = vmatpush1.msra.mxu0 0.0
    %2513 = vmatprep.subr.mxu0 0.0
    %2514 = vmatpush1.msra.mxu0 0.0
    %2515 = vmatprep.subr.mxu0 0.0
    %2516 = vmatpush1.msra.mxu0 0.0
    %2517 = vmatprep.subr.mxu0 0.0
    %2518 = vmatpush1.msra.mxu0 0.0
    %2519 = vmatprep.mubr.f32.mxu0 0.0
    %v2520 = vand.u32 %v1968, 4294901760
    %2521 = vmatmul.mubr.f32.gmra.mrb[0].mxu0 %v2520
    %v2522 = vpop.f32.mrb[0].mxu0
    %v2523 = vadd.f32 %v2406, %v2522
    %v2524 = vpop.f32.mrb[0].mxu0
    %2525 = vmatprep.mubr.f32.mxu0 0.0
    %v2526 = vand.u32 %v1971, 4294901760
    %2527 = vmatmul.mubr.f32.gmra.mrb[0].mxu0 %v2526
    %v2528 = vpop.f32.mrb[0].mxu0
    %v2529 = vadd.f32 %v2414, %v2528
    %v2530 = vpop.f32.mrb[0].mxu0
    %2531 = vmatprep.mubr.f32.mxu0 0.0
    %v2532 = vand.u32 %v1974, 4294901760
    %2533 = vmatmul.mubr.f32.gmra.mrb[0].mxu0 %v2532
    %v2534 = vpop.f32.mrb[0].mxu0
    %v2535 = vadd.f32 %v2422, %v2534
    %v2536 = vpop.f32.mrb[0].mxu0
    %2537 = vmatprep.mubr.f32.mxu0 0.0
    %v2538 = vand.u32 %v1977, 4294901760
    %2539 = vmatmul.mubr.f32.gmra.mrb[0].mxu0 %v2538
    %v2540 = vpop.f32.mrb[0].mxu0
    %v2541 = vadd.f32 %v2430, %v2540
    %v2542 = vpop.f32.mrb[0].mxu0
    %2543 = vmatprep.mubr.f32.mxu0 0.0
    %v2544 = vand.u32 %v1980, 4294901760
    %2545 = vmatmul.mubr.f32.gmra.mrb[0].mxu0 %v2544
    %v2546 = vpop.f32.mrb[0].mxu0
    %v2547 = vadd.f32 %v2438, %v2546
    %v2548 = vpop.f32.mrb[0].mxu0
    %2549 = vmatprep.mubr.f32.mxu0 0.0
    %v2550 = vand.u32 %v1983, 4294901760
    %2551 = vmatmul.mubr.f32.gmra.mrb[0].mxu0 %v2550
    %v2552 = vpop.f32.mrb[0].mxu0
    %v2553 = vadd.f32 %v2446, %v2552
    %v2554 = vpop.f32.mrb[0].mxu0
    %2555 = vdwg.mxu0
    %2556 = vmatprep.subr.mxu0 0.0
    %v2557 = vand.u32 %v1962, 4294901760
    %2558 = vmatpush1.msra.mxu0 %v2557
    %2559 = vmatprep.subr.mxu0 0.0
    %v2560 = vand.u32 %v1964, 4294901760
    %2561 = vmatpush1.msra.mxu0 %v2560
    %2562 = vmatprep.subr.mxu0 0.0
    %2563 = vmatpush1.msra.mxu0 0.0
    %2564 = vmatprep.subr.mxu0 0.0
    %2565 = vmatpush1.msra.mxu0 0.0
    %2566 = vmatprep.subr.mxu0 0.0
    %2567 = vmatpush1.msra.mxu0 0.0
    %2568 = vmatprep.subr.mxu0 0.0
    %2569 = vmatpush1.msra.mxu0 0.0
    %2570 = vmatprep.subr.mxu0 0.0
    %2571 = vmatpush1.msra.mxu0 0.0
    %2572 = vmatprep.subr.mxu0 0.0
    %2573 = vmatpush1.msra.mxu0 0.0
    %2574 = vmatprep.subr.mxu0 0.0
    %2575 = vmatpush1.msra.mxu0 0.0
    %2576 = vmatprep.subr.mxu0 0.0
    %2577 = vmatpush1.msra.mxu0 0.0
    %2578 = vmatprep.subr.mxu0 0.0
    %2579 = vmatpush1.msra.mxu0 0.0
    %2580 = vmatprep.subr.mxu0 0.0
    %2581 = vmatpush1.msra.mxu0 0.0
    %2582 = vmatprep.subr.mxu0 0.0
    %2583 = vmatpush1.msra.mxu0 0.0
    %2584 = vmatprep.subr.mxu0 0.0
    %2585 = vmatpush1.msra.mxu0 0.0
    %2586 = vmatprep.subr.mxu0 0.0
    %2587 = vmatpush1.msra.mxu0 0.0
    %2588 = vmatprep.subr.mxu0 0.0
    %2589 = vmatpush1.msra.mxu0 0.0
    %2590 = vmatprep.subr.mxu0 0.0
    %2591 = vmatpush1.msra.mxu0 0.0
    %2592 = vmatprep.subr.mxu0 0.0
    %2593 = vmatpush1.msra.mxu0 0.0
    %2594 = vmatprep.subr.mxu0 0.0
    %2595 = vmatpush1.msra.mxu0 0.0
    %2596 = vmatprep.subr.mxu0 0.0
    %2597 = vmatpush1.msra.mxu0 0.0
    %2598 = vmatprep.subr.mxu0 0.0
    %2599 = vmatpush1.msra.mxu0 0.0
    %2600 = vmatprep.subr.mxu0 0.0
    %2601 = vmatpush1.msra.mxu0 0.0
    %2602 = vmatprep.subr.mxu0 0.0
    %2603 = vmatpush1.msra.mxu0 0.0
    %2604 = vmatprep.subr.mxu0 0.0
    %2605 = vmatpush1.msra.mxu0 0.0
    %2606 = vmatprep.subr.mxu0 0.0
    %2607 = vmatpush1.msra.mxu0 0.0
    %2608 = vmatprep.subr.mxu0 0.0
    %2609 = vmatpush1.msra.mxu0 0.0
    %2610 = vmatprep.subr.mxu0 0.0
    %2611 = vmatpush1.msra.mxu0 0.0
    %2612 = vmatprep.subr.mxu0 0.0
    %2613 = vmatpush1.msra.mxu0 0.0
    %2614 = vmatprep.subr.mxu0 0.0
    %2615 = vmatpush1.msra.mxu0 0.0
    %2616 = vmatprep.subr.mxu0 0.0
    %2617 = vmatpush1.msra.mxu0 0.0
    %2618 = vmatprep.subr.mxu0 0.0
    %2619 = vmatpush1.msra.mxu0 0.0
    %2620 = vmatprep.subr.mxu0 0.0
    %2621 = vmatpush1.msra.mxu0 0.0
    %2622 = vmatprep.mubr.f32.mxu0 0.0
    %v2623 = vand.u32 %v1968, 4294901760
    %2624 = vmatmul.mubr.f32.gmra.mrb[0].mxu0 %v2623
    %v2625 = vpop.f32.mrb[0].mxu0
    %v2626 = vadd.f32 %v2523, %v2625
    %v2627 = vpop.f32.mrb[0].mxu0
    %2628 = vmatprep.mubr.f32.mxu0 0.0
    %v2629 = vand.u32 %v1971, 4294901760
    %2630 = vmatmul.mubr.f32.gmra.mrb[0].mxu0 %v2629
    %v2631 = vpop.f32.mrb[0].mxu0
    %v2632 = vadd.f32 %v2529, %v2631
    %v2633 = vpop.f32.mrb[0].mxu0
    %2634 = vmatprep.mubr.f32.mxu0 0.0
    %v2635 = vand.u32 %v1974, 4294901760
    %2636 = vmatmul.mubr.f32.gmra.mrb[0].mxu0 %v2635
    %v2637 = vpop.f32.mrb[0].mxu0
    %v2638 = vadd.f32 %v2535, %v2637
    %v2639 = vpop.f32.mrb[0].mxu0
    %2640 = vmatprep.mubr.f32.mxu0 0.0
    %v2641 = vand.u32 %v1977, 4294901760
    %2642 = vmatmul.mubr.f32.gmra.mrb[0].mxu0 %v2641
    %v2643 = vpop.f32.mrb[0].mxu0
    %v2644 = vadd.f32 %v2541, %v2643
    %v2645 = vpop.f32.mrb[0].mxu0
    %2646 = vmatprep.mubr.f32.mxu0 0.0
    %v2647 = vand.u32 %v1980, 4294901760
    %2648 = vmatmul.mubr.f32.gmra.mrb[0].mxu0 %v2647
    %v2649 = vpop.f32.mrb[0].mxu0
    %v2650 = vadd.f32 %v2547, %v2649
    %v2651 = vpop.f32.mrb[0].mxu0
    %2652 = vmatprep.mubr.f32.mxu0 0.0
    %v2653 = vand.u32 %v1983, 4294901760
    %2654 = vmatmul.mubr.f32.gmra.mrb[0].mxu0 %v2653
    %v2655 = vpop.f32.mrb[0].mxu0
    %v2656 = vadd.f32 %v2553, %v2655
    %v2657 = vpop.f32.mrb[0].mxu0
    %2658 = vdwg.mxu0
    %v2660 = vsel %vm1260, %v1926, 0
    %v2663 = vsel %vm1260, %v1932, 0
    %v2666 = vsel %vm1260, %v1938, 0
    %v2669 = vsel %vm1260, %v1944, 0
    %v2672 = vsel %vm1260, %v1950, 0
    %v2675 = vsel %vm1260, %v1956, 0
    %v2677 = vand.u32 %v123, 4294901760
    %2678 = vmatprep.subr.mxu0 %v2677
    %v2679 = vand.u32 %v122, 4294901760
    %2680 = vmatpush1.msra.mxu0 %v2679
    %v2681 = vand.u32 %v125, 4294901760
    %2682 = vmatprep.subr.mxu0 %v2681
    %v2683 = vand.u32 %v124, 4294901760
    %2684 = vmatpush1.msra.mxu0 %v2683
    %v2685 = vand.u32 %v127, 4294901760
    %2686 = vmatprep.subr.mxu0 %v2685
    %v2687 = vand.u32 %v126, 4294901760
    %2688 = vmatpush1.msra.mxu0 %v2687
    %v2689 = vand.u32 %v129, 4294901760
    %2690 = vmatprep.subr.mxu0 %v2689
    %v2691 = vand.u32 %v128, 4294901760
    %2692 = vmatpush1.msra.mxu0 %v2691
    %v2693 = vand.u32 %v131, 4294901760
    %2694 = vmatprep.subr.mxu0 %v2693
    %v2695 = vand.u32 %v130, 4294901760
    %2696 = vmatpush1.msra.mxu0 %v2695
    %v2697 = vand.u32 %v133, 4294901760
    %2698 = vmatprep.subr.mxu0 %v2697
    %v2699 = vand.u32 %v132, 4294901760
    %2700 = vmatpush1.msra.mxu0 %v2699
    %v2701 = vand.u32 %v135, 4294901760
    %2702 = vmatprep.subr.mxu0 %v2701
    %v2703 = vand.u32 %v134, 4294901760
    %2704 = vmatpush1.msra.mxu0 %v2703
    %v2705 = vand.u32 %v137, 4294901760
    %2706 = vmatprep.subr.mxu0 %v2705
    %v2707 = vand.u32 %v136, 4294901760
    %2708 = vmatpush1.msra.mxu0 %v2707
    %2709 = vmatprep.subr.mxu0 0.0
    %2710 = vmatpush1.msra.mxu0 0.0
    %2711 = vmatprep.subr.mxu0 0.0
    %2712 = vmatpush1.msra.mxu0 0.0
    %2713 = vmatprep.subr.mxu0 0.0
    %2714 = vmatpush1.msra.mxu0 0.0
    %2715 = vmatprep.subr.mxu0 0.0
    %2716 = vmatpush1.msra.mxu0 0.0
    %2717 = vmatprep.subr.mxu0 0.0
    %2718 = vmatpush1.msra.mxu0 0.0
    %2719 = vmatprep.subr.mxu0 0.0
    %2720 = vmatpush1.msra.mxu0 0.0
    %2721 = vmatprep.subr.mxu0 0.0
    %2722 = vmatpush1.msra.mxu0 0.0
    %2723 = vmatprep.subr.mxu0 0.0
    %2724 = vmatpush1.msra.mxu0 0.0
    %2725 = vmatprep.subr.mxu0 0.0
    %2726 = vmatpush1.msra.mxu0 0.0
    %2727 = vmatprep.subr.mxu0 0.0
    %2728 = vmatpush1.msra.mxu0 0.0
    %2729 = vmatprep.subr.mxu0 0.0
    %2730 = vmatpush1.msra.mxu0 0.0
    %2731 = vmatprep.subr.mxu0 0.0
    %2732 = vmatpush1.msra.mxu0 0.0
    %2733 = vmatprep.subr.mxu0 0.0
    %2734 = vmatpush1.msra.mxu0 0.0
    %2735 = vmatprep.subr.mxu0 0.0
    %2736 = vmatpush1.msra.mxu0 0.0
    %2737 = vmatprep.subr.mxu0 0.0
    %2738 = vmatpush1.msra.mxu0 0.0
    %2739 = vmatprep.subr.mxu0 0.0
    %2740 = vmatpush1.msra.mxu0 0.0
    %2741 = vmatprep.subr.mxu0 0.0
    %2742 = vmatpush1.msra.mxu0 0.0
    %2743 = vmatprep.subr.mxu0 0.0
    %2744 = vmatpush1.msra.mxu0 0.0
    %2745 = vmatprep.subr.mxu0 0.0
    %2746 = vmatpush1.msra.mxu0 0.0
    %2747 = vmatprep.subr.mxu0 0.0
    %2748 = vmatpush1.msra.mxu0 0.0
    %2749 = vmatprep.subr.mxu0 0.0
    %2750 = vmatpush1.msra.mxu0 0.0
    %2751 = vmatprep.subr.mxu0 0.0
    %2752 = vmatpush1.msra.mxu0 0.0
    %2753 = vmatprep.subr.mxu0 0.0
    %2754 = vmatpush1.msra.mxu0 0.0
    %2755 = vmatprep.subr.mxu0 0.0
    %2756 = vmatpush1.msra.mxu0 0.0
    %2757 = vmatprep.mubr.f32.mxu0 0.0
    %v2758 = vand.u32 %v2660, 4294901760
    %v2759 = vsub.f32 %v2660, %v2758
    %v2760 = vand.u32 %v2759, 4294901760
    %v2761 = vsub.f32 %v2759, %v2760
    %v2762 = vand.u32 %v2761, 4294901760
    %2763 = vmatmul.mubr.f32.gmra.mrb[0].mxu0 %v2762
    %v2764 = vpop.f32.mrb[0].mxu0
    %v2765 = vadd.f32 0.0, %v2764
    %v2766 = vpop.f32.mrb[0].mxu0
    %v2767 = vadd.f32 0.0, %v2766
    %2768 = vmatprep.mubr.f32.mxu0 0.0
    %v2769 = vand.u32 %v2663, 4294901760
    %v2770 = vsub.f32 %v2663, %v2769
    %v2771 = vand.u32 %v2770, 4294901760
    %v2772 = vsub.f32 %v2770, %v2771
    %v2773 = vand.u32 %v2772, 4294901760
    %2774 = vmatmul.mubr.f32.gmra.mrb[0].mxu0 %v2773
    %v2775 = vpop.f32.mrb[0].mxu0
    %v2776 = vadd.f32 0.0, %v2775
    %v2777 = vpop.f32.mrb[0].mxu0
    %v2778 = vadd.f32 0.0, %v2777
    %2779 = vmatprep.mubr.f32.mxu0 0.0
    %v2780 = vand.u32 %v2666, 4294901760
    %v2781 = vsub.f32 %v2666, %v2780
    %v2782 = vand.u32 %v2781, 4294901760
    %v2783 = vsub.f32 %v2781, %v2782
    %v2784 = vand.u32 %v2783, 4294901760
    %2785 = vmatmul.mubr.f32.gmra.mrb[0].mxu0 %v2784
    %v2786 = vpop.f32.mrb[0].mxu0
    %v2787 = vadd.f32 0.0, %v2786
    %v2788 = vpop.f32.mrb[0].mxu0
    %v2789 = vadd.f32 0.0, %v2788
    %2790 = vmatprep.mubr.f32.mxu0 0.0
    %v2791 = vand.u32 %v2669, 4294901760
    %v2792 = vsub.f32 %v2669, %v2791
    %v2793 = vand.u32 %v2792, 4294901760
    %v2794 = vsub.f32 %v2792, %v2793
    %v2795 = vand.u32 %v2794, 4294901760
    %2796 = vmatmul.mubr.f32.gmra.mrb[0].mxu0 %v2795
    %v2797 = vpop.f32.mrb[0].mxu0
    %v2798 = vadd.f32 0.0, %v2797
    %v2799 = vpop.f32.mrb[0].mxu0
    %v2800 = vadd.f32 0.0, %v2799
    %2801 = vmatprep.mubr.f32.mxu0 0.0
    %v2802 = vand.u32 %v2672, 4294901760
    %v2803 = vsub.f32 %v2672, %v2802
    %v2804 = vand.u32 %v2803, 4294901760
    %v2805 = vsub.f32 %v2803, %v2804
    %v2806 = vand.u32 %v2805, 4294901760
    %2807 = vmatmul.mubr.f32.gmra.mrb[0].mxu0 %v2806
    %v2808 = vpop.f32.mrb[0].mxu0
    %v2809 = vadd.f32 0.0, %v2808
    %v2810 = vpop.f32.mrb[0].mxu0
    %v2811 = vadd.f32 0.0, %v2810
    %2812 = vmatprep.mubr.f32.mxu0 0.0
    %v2813 = vand.u32 %v2675, 4294901760
    %v2814 = vsub.f32 %v2675, %v2813
    %v2815 = vand.u32 %v2814, 4294901760
    %v2816 = vsub.f32 %v2814, %v2815
    %v2817 = vand.u32 %v2816, 4294901760
    %2818 = vmatmul.mubr.f32.gmra.mrb[0].mxu0 %v2817
    %v2819 = vpop.f32.mrb[0].mxu0
    %v2820 = vadd.f32 0.0, %v2819
    %v2821 = vpop.f32.mrb[0].mxu0
    %v2822 = vadd.f32 0.0, %v2821
    %2823 = vdwg.mxu0
    %v2824 = vand.u32 %v123, 4294901760
    %v2825 = vsub.f32 %v123, %v2824
    %v2826 = vand.u32 %v2825, 4294901760
    %v2827 = vsub.f32 %v2825, %v2826
    %v2828 = vand.u32 %v2827, 4294901760
    %2829 = vmatprep.subr.mxu0 %v2828
    %v2830 = vand.u32 %v122, 4294901760
    %v2831 = vsub.f32 %v122, %v2830
    %v2832 = vand.u32 %v2831, 4294901760
    %v2833 = vsub.f32 %v2831, %v2832
    %v2834 = vand.u32 %v2833, 4294901760
    %2835 = vmatpush1.msra.mxu0 %v2834
    %v2836 = vand.u32 %v125, 4294901760
    %v2837 = vsub.f32 %v125, %v2836
    %v2838 = vand.u32 %v2837, 4294901760
    %v2839 = vsub.f32 %v2837, %v2838
    %v2840 = vand.u32 %v2839, 4294901760
    %2841 = vmatprep.subr.mxu0 %v2840
    %v2842 = vand.u32 %v124, 4294901760
    %v2843 = vsub.f32 %v124, %v2842
    %v2844 = vand.u32 %v2843, 4294901760
    %v2845 = vsub.f32 %v2843, %v2844
    %v2846 = vand.u32 %v2845, 4294901760
    %2847 = vmatpush1.msra.mxu0 %v2846
    %v2848 = vand.u32 %v127, 4294901760
    %v2849 = vsub.f32 %v127, %v2848
    %v2850 = vand.u32 %v2849, 4294901760
    %v2851 = vsub.f32 %v2849, %v2850
    %v2852 = vand.u32 %v2851, 4294901760
    %2853 = vmatprep.subr.mxu0 %v2852
    %v2854 = vand.u32 %v126, 4294901760
    %v2855 = vsub.f32 %v126, %v2854
    %v2856 = vand.u32 %v2855, 4294901760
    %v2857 = vsub.f32 %v2855, %v2856
    %v2858 = vand.u32 %v2857, 4294901760
    %2859 = vmatpush1.msra.mxu0 %v2858
    %v2860 = vand.u32 %v129, 4294901760
    %v2861 = vsub.f32 %v129, %v2860
    %v2862 = vand.u32 %v2861, 4294901760
    %v2863 = vsub.f32 %v2861, %v2862
    %v2864 = vand.u32 %v2863, 4294901760
    %2865 = vmatprep.subr.mxu0 %v2864
    %v2866 = vand.u32 %v128, 4294901760
    %v2867 = vsub.f32 %v128, %v2866
    %v2868 = vand.u32 %v2867, 4294901760
    %v2869 = vsub.f32 %v2867, %v2868
    %v2870 = vand.u32 %v2869, 4294901760
    %2871 = vmatpush1.msra.mxu0 %v2870
    %v2872 = vand.u32 %v131, 4294901760
    %v2873 = vsub.f32 %v131, %v2872
    %v2874 = vand.u32 %v2873, 4294901760
    %v2875 = vsub.f32 %v2873, %v2874
    %v2876 = vand.u32 %v2875, 4294901760
    %2877 = vmatprep.subr.mxu0 %v2876
    %v2878 = vand.u32 %v130, 4294901760
    %v2879 = vsub.f32 %v130, %v2878
    %v2880 = vand.u32 %v2879, 4294901760
    %v2881 = vsub.f32 %v2879, %v2880
    %v2882 = vand.u32 %v2881, 4294901760
    %2883 = vmatpush1.msra.mxu0 %v2882
    %v2884 = vand.u32 %v133, 4294901760
    %v2885 = vsub.f32 %v133, %v2884
    %v2886 = vand.u32 %v2885, 4294901760
    %v2887 = vsub.f32 %v2885, %v2886
    %v2888 = vand.u32 %v2887, 4294901760
    %2889 = vmatprep.subr.mxu0 %v2888
    %v2890 = vand.u32 %v132, 4294901760
    %v2891 = vsub.f32 %v132, %v2890
    %v2892 = vand.u32 %v2891, 4294901760
    %v2893 = vsub.f32 %v2891, %v2892
    %v2894 = vand.u32 %v2893, 4294901760
    %2895 = vmatpush1.msra.mxu0 %v2894
    %v2896 = vand.u32 %v135, 4294901760
    %v2897 = vsub.f32 %v135, %v2896
    %v2898 = vand.u32 %v2897, 4294901760
    %v2899 = vsub.f32 %v2897, %v2898
    %v2900 = vand.u32 %v2899, 4294901760
    %2901 = vmatprep.subr.mxu0 %v2900
    %v2902 = vand.u32 %v134, 4294901760
    %v2903 = vsub.f32 %v134, %v2902
    %v2904 = vand.u32 %v2903, 4294901760
    %v2905 = vsub.f32 %v2903, %v2904
    %v2906 = vand.u32 %v2905, 4294901760
    %2907 = vmatpush1.msra.mxu0 %v2906
    %v2908 = vand.u32 %v137, 4294901760
    %v2909 = vsub.f32 %v137, %v2908
    %v2910 = vand.u32 %v2909, 4294901760
    %v2911 = vsub.f32 %v2909, %v2910
    %v2912 = vand.u32 %v2911, 4294901760
    %2913 = vmatprep.subr.mxu0 %v2912
    %v2914 = vand.u32 %v136, 4294901760
    %v2915 = vsub.f32 %v136, %v2914
    %v2916 = vand.u32 %v2915, 4294901760
    %v2917 = vsub.f32 %v2915, %v2916
    %v2918 = vand.u32 %v2917, 4294901760
    %2919 = vmatpush1.msra.mxu0 %v2918
    %2920 = vmatprep.subr.mxu0 0.0
    %2921 = vmatpush1.msra.mxu0 0.0
    %2922 = vmatprep.subr.mxu0 0.0
    %2923 = vmatpush1.msra.mxu0 0.0
    %2924 = vmatprep.subr.mxu0 0.0
    %2925 = vmatpush1.msra.mxu0 0.0
    %2926 = vmatprep.subr.mxu0 0.0
    %2927 = vmatpush1.msra.mxu0 0.0
    %2928 = vmatprep.subr.mxu0 0.0
    %2929 = vmatpush1.msra.mxu0 0.0
    %2930 = vmatprep.subr.mxu0 0.0
    %2931 = vmatpush1.msra.mxu0 0.0
    %2932 = vmatprep.subr.mxu0 0.0
    %2933 = vmatpush1.msra.mxu0 0.0
    %2934 = vmatprep.subr.mxu0 0.0
    %2935 = vmatpush1.msra.mxu0 0.0
    %2936 = vmatprep.subr.mxu0 0.0
    %2937 = vmatpush1.msra.mxu0 0.0
    %2938 = vmatprep.subr.mxu0 0.0
    %2939 = vmatpush1.msra.mxu0 0.0
    %2940 = vmatprep.subr.mxu0 0.0
    %2941 = vmatpush1.msra.mxu0 0.0
    %2942 = vmatprep.subr.mxu0 0.0
    %2943 = vmatpush1.msra.mxu0 0.0
    %2944 = vmatprep.subr.mxu0 0.0
    %2945 = vmatpush1.msra.mxu0 0.0
    %2946 = vmatprep.subr.mxu0 0.0
    %2947 = vmatpush1.msra.mxu0 0.0
    %2948 = vmatprep.subr.mxu0 0.0
    %2949 = vmatpush1.msra.mxu0 0.0
    %2950 = vmatprep.subr.mxu0 0.0
    %2951 = vmatpush1.msra.mxu0 0.0
    %2952 = vmatprep.subr.mxu0 0.0
    %2953 = vmatpush1.msra.mxu0 0.0
    %2954 = vmatprep.subr.mxu0 0.0
    %2955 = vmatpush1.msra.mxu0 0.0
    %2956 = vmatprep.subr.mxu0 0.0
    %2957 = vmatpush1.msra.mxu0 0.0
    %2958 = vmatprep.subr.mxu0 0.0
    %2959 = vmatpush1.msra.mxu0 0.0
    %2960 = vmatprep.subr.mxu0 0.0
    %2961 = vmatpush1.msra.mxu0 0.0
    %2962 = vmatprep.subr.mxu0 0.0
    %2963 = vmatpush1.msra.mxu0 0.0
    %2964 = vmatprep.subr.mxu0 0.0
    %2965 = vmatpush1.msra.mxu0 0.0
    %2966 = vmatprep.subr.mxu0 0.0
    %2967 = vmatpush1.msra.mxu0 0.0
    %2968 = vmatprep.mubr.f32.mxu0 0.0
    %v2969 = vand.u32 %v2660, 4294901760
    %2970 = vmatmul.mubr.f32.gmra.mrb[0].mxu0 %v2969
    %v2971 = vpop.f32.mrb[0].mxu0
    %v2972 = vadd.f32 %v2765, %v2971
    %v2973 = vpop.f32.mrb[0].mxu0
    %v2974 = vadd.f32 %v2767, %v2973
    %2975 = vmatprep.mubr.f32.mxu0 0.0
    %v2976 = vand.u32 %v2663, 4294901760
    %2977 = vmatmul.mubr.f32.gmra.mrb[0].mxu0 %v2976
    %v2978 = vpop.f32.mrb[0].mxu0
    %v2979 = vadd.f32 %v2776, %v2978
    %v2980 = vpop.f32.mrb[0].mxu0
    %v2981 = vadd.f32 %v2778, %v2980
    %2982 = vmatprep.mubr.f32.mxu0 0.0
    %v2983 = vand.u32 %v2666, 4294901760
    %2984 = vmatmul.mubr.f32.gmra.mrb[0].mxu0 %v2983
    %v2985 = vpop.f32.mrb[0].mxu0
    %v2986 = vadd.f32 %v2787, %v2985
    %v2987 = vpop.f32.mrb[0].mxu0
    %v2988 = vadd.f32 %v2789, %v2987
    %2989 = vmatprep.mubr.f32.mxu0 0.0
    %v2990 = vand.u32 %v2669, 4294901760
    %2991 = vmatmul.mubr.f32.gmra.mrb[0].mxu0 %v2990
    %v2992 = vpop.f32.mrb[0].mxu0
    %v2993 = vadd.f32 %v2798, %v2992
    %v2994 = vpop.f32.mrb[0].mxu0
    %v2995 = vadd.f32 %v2800, %v2994
    %2996 = vmatprep.mubr.f32.mxu0 0.0
    %v2997 = vand.u32 %v2672, 4294901760
    %2998 = vmatmul.mubr.f32.gmra.mrb[0].mxu0 %v2997
    %v2999 = vpop.f32.mrb[0].mxu0
    %v3000 = vadd.f32 %v2809, %v2999
    %v3001 = vpop.f32.mrb[0].mxu0
    %v3002 = vadd.f32 %v2811, %v3001
    %3003 = vmatprep.mubr.f32.mxu0 0.0
    %v3004 = vand.u32 %v2675, 4294901760
    %3005 = vmatmul.mubr.f32.gmra.mrb[0].mxu0 %v3004
    %v3006 = vpop.f32.mrb[0].mxu0
    %v3007 = vadd.f32 %v2820, %v3006
    %v3008 = vpop.f32.mrb[0].mxu0
    %v3009 = vadd.f32 %v2822, %v3008
    %3010 = vdwg.mxu0
    %v3011 = vand.u32 %v123, 4294901760
    %v3012 = vsub.f32 %v123, %v3011
    %3013 = vmatprep.subr.mxu0 %v3012
    %v3014 = vand.u32 %v122, 4294901760
    %v3015 = vsub.f32 %v122, %v3014
    %3016 = vmatpush1.msra.mxu0 %v3015
    %v3017 = vand.u32 %v125, 4294901760
    %v3018 = vsub.f32 %v125, %v3017
    %3019 = vmatprep.subr.mxu0 %v3018
    %v3020 = vand.u32 %v124, 4294901760
    %v3021 = vsub.f32 %v124, %v3020
    %3022 = vmatpush1.msra.mxu0 %v3021
    %v3023 = vand.u32 %v127, 4294901760
    %v3024 = vsub.f32 %v127, %v3023
    %3025 = vmatprep.subr.mxu0 %v3024
    %v3026 = vand.u32 %v126, 4294901760
    %v3027 = vsub.f32 %v126, %v3026
    %3028 = vmatpush1.msra.mxu0 %v3027
    %v3029 = vand.u32 %v129, 4294901760
    %v3030 = vsub.f32 %v129, %v3029
    %3031 = vmatprep.subr.mxu0 %v3030
    %v3032 = vand.u32 %v128, 4294901760
    %v3033 = vsub.f32 %v128, %v3032
    %3034 = vmatpush1.msra.mxu0 %v3033
    %v3035 = vand.u32 %v131, 4294901760
    %v3036 = vsub.f32 %v131, %v3035
    %3037 = vmatprep.subr.mxu0 %v3036
    %v3038 = vand.u32 %v130, 4294901760
    %v3039 = vsub.f32 %v130, %v3038
    %3040 = vmatpush1.msra.mxu0 %v3039
    %v3041 = vand.u32 %v133, 4294901760
    %v3042 = vsub.f32 %v133, %v3041
    %3043 = vmatprep.subr.mxu0 %v3042
    %v3044 = vand.u32 %v132, 4294901760
    %v3045 = vsub.f32 %v132, %v3044
    %3046 = vmatpush1.msra.mxu0 %v3045
    %v3047 = vand.u32 %v135, 4294901760
    %v3048 = vsub.f32 %v135, %v3047
    %3049 = vmatprep.subr.mxu0 %v3048
    %v3050 = vand.u32 %v134, 4294901760
    %v3051 = vsub.f32 %v134, %v3050
    %3052 = vmatpush1.msra.mxu0 %v3051
    %v3053 = vand.u32 %v137, 4294901760
    %v3054 = vsub.f32 %v137, %v3053
    %3055 = vmatprep.subr.mxu0 %v3054
    %v3056 = vand.u32 %v136, 4294901760
    %v3057 = vsub.f32 %v136, %v3056
    %3058 = vmatpush1.msra.mxu0 %v3057
    %3059 = vmatprep.subr.mxu0 0.0
    %3060 = vmatpush1.msra.mxu0 0.0
    %3061 = vmatprep.subr.mxu0 0.0
    %3062 = vmatpush1.msra.mxu0 0.0
    %3063 = vmatprep.subr.mxu0 0.0
    %3064 = vmatpush1.msra.mxu0 0.0
    %3065 = vmatprep.subr.mxu0 0.0
    %3066 = vmatpush1.msra.mxu0 0.0
    %3067 = vmatprep.subr.mxu0 0.0
    %3068 = vmatpush1.msra.mxu0 0.0
    %3069 = vmatprep.subr.mxu0 0.0
    %3070 = vmatpush1.msra.mxu0 0.0
    %3071 = vmatprep.subr.mxu0 0.0
    %3072 = vmatpush1.msra.mxu0 0.0
    %3073 = vmatprep.subr.mxu0 0.0
    %3074 = vmatpush1.msra.mxu0 0.0
    %3075 = vmatprep.subr.mxu0 0.0
    %3076 = vmatpush1.msra.mxu0 0.0
    %3077 = vmatprep.subr.mxu0 0.0
    %3078 = vmatpush1.msra.mxu0 0.0
    %3079 = vmatprep.subr.mxu0 0.0
    %3080 = vmatpush1.msra.mxu0 0.0
    %3081 = vmatprep.subr.mxu0 0.0
    %3082 = vmatpush1.msra.mxu0 0.0
    %3083 = vmatprep.subr.mxu0 0.0
    %3084 = vmatpush1.msra.mxu0 0.0
    %3085 = vmatprep.subr.mxu0 0.0
    %3086 = vmatpush1.msra.mxu0 0.0
    %3087 = vmatprep.subr.mxu0 0.0
    %3088 = vmatpush1.msra.mxu0 0.0
    %3089 = vmatprep.subr.mxu0 0.0
    %3090 = vmatpush1.msra.mxu0 0.0
    %3091 = vmatprep.subr.mxu0 0.0
    %3092 = vmatpush1.msra.mxu0 0.0
    %3093 = vmatprep.subr.mxu0 0.0
    %3094 = vmatpush1.msra.mxu0 0.0
    %3095 = vmatprep.subr.mxu0 0.0
    %3096 = vmatpush1.msra.mxu0 0.0
    %3097 = vmatprep.subr.mxu0 0.0
    %3098 = vmatpush1.msra.mxu0 0.0
    %3099 = vmatprep.subr.mxu0 0.0
    %3100 = vmatpush1.msra.mxu0 0.0
    %3101 = vmatprep.subr.mxu0 0.0
    %3102 = vmatpush1.msra.mxu0 0.0
    %3103 = vmatprep.subr.mxu0 0.0
    %3104 = vmatpush1.msra.mxu0 0.0
    %3105 = vmatprep.subr.mxu0 0.0
    %3106 = vmatpush1.msra.mxu0 0.0
    %3107 = vmatprep.mubr.f32.mxu0 0.0
    %v3108 = vand.u32 %v2660, 4294901760
    %v3109 = vsub.f32 %v2660, %v3108
    %3110 = vmatmul.mubr.f32.gmra.mrb[0].mxu0 %v3109
    %v3111 = vpop.f32.mrb[0].mxu0
    %v3112 = vadd.f32 %v2972, %v3111
    %v3113 = vpop.f32.mrb[0].mxu0
    %v3114 = vadd.f32 %v2974, %v3113
    %3115 = vmatprep.mubr.f32.mxu0 0.0
    %v3116 = vand.u32 %v2663, 4294901760
    %v3117 = vsub.f32 %v2663, %v3116
    %3118 = vmatmul.mubr.f32.gmra.mrb[0].mxu0 %v3117
    %v3119 = vpop.f32.mrb[0].mxu0
    %v3120 = vadd.f32 %v2979, %v3119
    %v3121 = vpop.f32.mrb[0].mxu0
    %v3122 = vadd.f32 %v2981, %v3121
    %3123 = vmatprep.mubr.f32.mxu0 0.0
    %v3124 = vand.u32 %v2666, 4294901760
    %v3125 = vsub.f32 %v2666, %v3124
    %3126 = vmatmul.mubr.f32.gmra.mrb[0].mxu0 %v3125
    %v3127 = vpop.f32.mrb[0].mxu0
    %v3128 = vadd.f32 %v2986, %v3127
    %v3129 = vpop.f32.mrb[0].mxu0
    %v3130 = vadd.f32 %v2988, %v3129
    %3131 = vmatprep.mubr.f32.mxu0 0.0
    %v3132 = vand.u32 %v2669, 4294901760
    %v3133 = vsub.f32 %v2669, %v3132
    %3134 = vmatmul.mubr.f32.gmra.mrb[0].mxu0 %v3133
    %v3135 = vpop.f32.mrb[0].mxu0
    %v3136 = vadd.f32 %v2993, %v3135
    %v3137 = vpop.f32.mrb[0].mxu0
    %v3138 = vadd.f32 %v2995, %v3137
    %3139 = vmatprep.mubr.f32.mxu0 0.0
    %v3140 = vand.u32 %v2672, 4294901760
    %v3141 = vsub.f32 %v2672, %v3140
    %3142 = vmatmul.mubr.f32.gmra.mrb[0].mxu0 %v3141
    %v3143 = vpop.f32.mrb[0].mxu0
    %v3144 = vadd.f32 %v3000, %v3143
    %v3145 = vpop.f32.mrb[0].mxu0
    %v3146 = vadd.f32 %v3002, %v3145
    %3147 = vmatprep.mubr.f32.mxu0 0.0
    %v3148 = vand.u32 %v2675, 4294901760
    %v3149 = vsub.f32 %v2675, %v3148
    %3150 = vmatmul.mubr.f32.gmra.mrb[0].mxu0 %v3149
    %v3151 = vpop.f32.mrb[0].mxu0
    %v3152 = vadd.f32 %v3007, %v3151
    %v3153 = vpop.f32.mrb[0].mxu0
    %v3154 = vadd.f32 %v3009, %v3153
    %3155 = vdwg.mxu0
    %v3156 = vand.u32 %v123, 4294901760
    %3157 = vmatprep.subr.mxu0 %v3156
    %v3158 = vand.u32 %v122, 4294901760
    %3159 = vmatpush1.msra.mxu0 %v3158
    %v3160 = vand.u32 %v125, 4294901760
    %3161 = vmatprep.subr.mxu0 %v3160
    %v3162 = vand.u32 %v124, 4294901760
    %3163 = vmatpush1.msra.mxu0 %v3162
    %v3164 = vand.u32 %v127, 4294901760
    %3165 = vmatprep.subr.mxu0 %v3164
    %v3166 = vand.u32 %v126, 4294901760
    %3167 = vmatpush1.msra.mxu0 %v3166
    %v3168 = vand.u32 %v129, 4294901760
    %3169 = vmatprep.subr.mxu0 %v3168
    %v3170 = vand.u32 %v128, 4294901760
    %3171 = vmatpush1.msra.mxu0 %v3170
    %v3172 = vand.u32 %v131, 4294901760
    %3173 = vmatprep.subr.mxu0 %v3172
    %v3174 = vand.u32 %v130, 4294901760
    %3175 = vmatpush1.msra.mxu0 %v3174
    %v3176 = vand.u32 %v133, 4294901760
    %3177 = vmatprep.subr.mxu0 %v3176
    %v3178 = vand.u32 %v132, 4294901760
    %3179 = vmatpush1.msra.mxu0 %v3178
    %v3180 = vand.u32 %v135, 4294901760
    %3181 = vmatprep.subr.mxu0 %v3180
    %v3182 = vand.u32 %v134, 4294901760
    %3183 = vmatpush1.msra.mxu0 %v3182
    %v3184 = vand.u32 %v137, 4294901760
    %3185 = vmatprep.subr.mxu0 %v3184
    %v3186 = vand.u32 %v136, 4294901760
    %3187 = vmatpush1.msra.mxu0 %v3186
    %3188 = vmatprep.subr.mxu0 0.0
    %3189 = vmatpush1.msra.mxu0 0.0
    %3190 = vmatprep.subr.mxu0 0.0
    %3191 = vmatpush1.msra.mxu0 0.0
    %3192 = vmatprep.subr.mxu0 0.0
    %3193 = vmatpush1.msra.mxu0 0.0
    %3194 = vmatprep.subr.mxu0 0.0
    %3195 = vmatpush1.msra.mxu0 0.0
    %3196 = vmatprep.subr.mxu0 0.0
    %3197 = vmatpush1.msra.mxu0 0.0
    %3198 = vmatprep.subr.mxu0 0.0
    %3199 = vmatpush1.msra.mxu0 0.0
    %3200 = vmatprep.subr.mxu0 0.0
    %3201 = vmatpush1.msra.mxu0 0.0
    %3202 = vmatprep.subr.mxu0 0.0
    %3203 = vmatpush1.msra.mxu0 0.0
    %3204 = vmatprep.subr.mxu0 0.0
    %3205 = vmatpush1.msra.mxu0 0.0
    %3206 = vmatprep.subr.mxu0 0.0
    %3207 = vmatpush1.msra.mxu0 0.0
    %3208 = vmatprep.subr.mxu0 0.0
    %3209 = vmatpush1.msra.mxu0 0.0
    %3210 = vmatprep.subr.mxu0 0.0
    %3211 = vmatpush1.msra.mxu0 0.0
    %3212 = vmatprep.subr.mxu0 0.0
    %3213 = vmatpush1.msra.mxu0 0.0
    %3214 = vmatprep.subr.mxu0 0.0
    %3215 = vmatpush1.msra.mxu0 0.0
    %3216 = vmatprep.subr.mxu0 0.0
    %3217 = vmatpush1.msra.mxu0 0.0
    %3218 = vmatprep.subr.mxu0 0.0
    %3219 = vmatpush1.msra.mxu0 0.0
    %3220 = vmatprep.subr.mxu0 0.0
    %3221 = vmatpush1.msra.mxu0 0.0
    %3222 = vmatprep.subr.mxu0 0.0
    %3223 = vmatpush1.msra.mxu0 0.0
    %3224 = vmatprep.subr.mxu0 0.0
    %3225 = vmatpush1.msra.mxu0 0.0
    %3226 = vmatprep.subr.mxu0 0.0
    %3227 = vmatpush1.msra.mxu0 0.0
    %3228 = vmatprep.subr.mxu0 0.0
    %3229 = vmatpush1.msra.mxu0 0.0
    %3230 = vmatprep.subr.mxu0 0.0
    %3231 = vmatpush1.msra.mxu0 0.0
    %3232 = vmatprep.subr.mxu0 0.0
    %3233 = vmatpush1.msra.mxu0 0.0
    %3234 = vmatprep.subr.mxu0 0.0
    %3235 = vmatpush1.msra.mxu0 0.0
    %3236 = vmatprep.mubr.f32.mxu0 0.0
    %v3237 = vand.u32 %v2660, 4294901760
    %v3238 = vsub.f32 %v2660, %v3237
    %v3239 = vand.u32 %v3238, 4294901760
    %3240 = vmatmul.mubr.f32.gmra.mrb[0].mxu0 %v3239
    %v3241 = vpop.f32.mrb[0].mxu0
    %v3242 = vadd.f32 %v3112, %v3241
    %v3243 = vpop.f32.mrb[0].mxu0
    %v3244 = vadd.f32 %v3114, %v3243
    %3245 = vmatprep.mubr.f32.mxu0 0.0
    %v3246 = vand.u32 %v2663, 4294901760
    %v3247 = vsub.f32 %v2663, %v3246
    %v3248 = vand.u32 %v3247, 4294901760
    %3249 = vmatmul.mubr.f32.gmra.mrb[0].mxu0 %v3248
    %v3250 = vpop.f32.mrb[0].mxu0
    %v3251 = vadd.f32 %v3120, %v3250
    %v3252 = vpop.f32.mrb[0].mxu0
    %v3253 = vadd.f32 %v3122, %v3252
    %3254 = vmatprep.mubr.f32.mxu0 0.0
    %v3255 = vand.u32 %v2666, 4294901760
    %v3256 = vsub.f32 %v2666, %v3255
    %v3257 = vand.u32 %v3256, 4294901760
    %3258 = vmatmul.mubr.f32.gmra.mrb[0].mxu0 %v3257
    %v3259 = vpop.f32.mrb[0].mxu0
    %v3260 = vadd.f32 %v3128, %v3259
    %v3261 = vpop.f32.mrb[0].mxu0
    %v3262 = vadd.f32 %v3130, %v3261
    %3263 = vmatprep.mubr.f32.mxu0 0.0
    %v3264 = vand.u32 %v2669, 4294901760
    %v3265 = vsub.f32 %v2669, %v3264
    %v3266 = vand.u32 %v3265, 4294901760
    %3267 = vmatmul.mubr.f32.gmra.mrb[0].mxu0 %v3266
    %v3268 = vpop.f32.mrb[0].mxu0
    %v3269 = vadd.f32 %v3136, %v3268
    %v3270 = vpop.f32.mrb[0].mxu0
    %v3271 = vadd.f32 %v3138, %v3270
    %3272 = vmatprep.mubr.f32.mxu0 0.0
    %v3273 = vand.u32 %v2672, 4294901760
    %v3274 = vsub.f32 %v2672, %v3273
    %v3275 = vand.u32 %v3274, 4294901760
    %3276 = vmatmul.mubr.f32.gmra.mrb[0].mxu0 %v3275
    %v3277 = vpop.f32.mrb[0].mxu0
    %v3278 = vadd.f32 %v3144, %v3277
    %v3279 = vpop.f32.mrb[0].mxu0
    %v3280 = vadd.f32 %v3146, %v3279
    %3281 = vmatprep.mubr.f32.mxu0 0.0
    %v3282 = vand.u32 %v2675, 4294901760
    %v3283 = vsub.f32 %v2675, %v3282
    %v3284 = vand.u32 %v3283, 4294901760
    %3285 = vmatmul.mubr.f32.gmra.mrb[0].mxu0 %v3284
    %v3286 = vpop.f32.mrb[0].mxu0
    %v3287 = vadd.f32 %v3152, %v3286
    %v3288 = vpop.f32.mrb[0].mxu0
    %v3289 = vadd.f32 %v3154, %v3288
    %3290 = vdwg.mxu0
    %v3291 = vand.u32 %v123, 4294901760
    %v3292 = vsub.f32 %v123, %v3291
    %v3293 = vand.u32 %v3292, 4294901760
    %3294 = vmatprep.subr.mxu0 %v3293
    %v3295 = vand.u32 %v122, 4294901760
    %v3296 = vsub.f32 %v122, %v3295
    %v3297 = vand.u32 %v3296, 4294901760
    %3298 = vmatpush1.msra.mxu0 %v3297
    %v3299 = vand.u32 %v125, 4294901760
    %v3300 = vsub.f32 %v125, %v3299
    %v3301 = vand.u32 %v3300, 4294901760
    %3302 = vmatprep.subr.mxu0 %v3301
    %v3303 = vand.u32 %v124, 4294901760
    %v3304 = vsub.f32 %v124, %v3303
    %v3305 = vand.u32 %v3304, 4294901760
    %3306 = vmatpush1.msra.mxu0 %v3305
    %v3307 = vand.u32 %v127, 4294901760
    %v3308 = vsub.f32 %v127, %v3307
    %v3309 = vand.u32 %v3308, 4294901760
    %3310 = vmatprep.subr.mxu0 %v3309
    %v3311 = vand.u32 %v126, 4294901760
    %v3312 = vsub.f32 %v126, %v3311
    %v3313 = vand.u32 %v3312, 4294901760
    %3314 = vmatpush1.msra.mxu0 %v3313
    %v3315 = vand.u32 %v129, 4294901760
    %v3316 = vsub.f32 %v129, %v3315
    %v3317 = vand.u32 %v3316, 4294901760
    %3318 = vmatprep.subr.mxu0 %v3317
    %v3319 = vand.u32 %v128, 4294901760
    %v3320 = vsub.f32 %v128, %v3319
    %v3321 = vand.u32 %v3320, 4294901760
    %3322 = vmatpush1.msra.mxu0 %v3321
    %v3323 = vand.u32 %v131, 4294901760
    %v3324 = vsub.f32 %v131, %v3323
    %v3325 = vand.u32 %v3324, 4294901760
    %3326 = vmatprep.subr.mxu0 %v3325
    %v3327 = vand.u32 %v130, 4294901760
    %v3328 = vsub.f32 %v130, %v3327
    %v3329 = vand.u32 %v3328, 4294901760
    %3330 = vmatpush1.msra.mxu0 %v3329
    %v3331 = vand.u32 %v133, 4294901760
    %v3332 = vsub.f32 %v133, %v3331
    %v3333 = vand.u32 %v3332, 4294901760
    %3334 = vmatprep.subr.mxu0 %v3333
    %v3335 = vand.u32 %v132, 4294901760
    %v3336 = vsub.f32 %v132, %v3335
    %v3337 = vand.u32 %v3336, 4294901760
    %3338 = vmatpush1.msra.mxu0 %v3337
    %v3339 = vand.u32 %v135, 4294901760
    %v3340 = vsub.f32 %v135, %v3339
    %v3341 = vand.u32 %v3340, 4294901760
    %3342 = vmatprep.subr.mxu0 %v3341
    %v3343 = vand.u32 %v134, 4294901760
    %v3344 = vsub.f32 %v134, %v3343
    %v3345 = vand.u32 %v3344, 4294901760
    %3346 = vmatpush1.msra.mxu0 %v3345
    %v3347 = vand.u32 %v137, 4294901760
    %v3348 = vsub.f32 %v137, %v3347
    %v3349 = vand.u32 %v3348, 4294901760
    %3350 = vmatprep.subr.mxu0 %v3349
    %v3351 = vand.u32 %v136, 4294901760
    %v3352 = vsub.f32 %v136, %v3351
    %v3353 = vand.u32 %v3352, 4294901760
    %3354 = vmatpush1.msra.mxu0 %v3353
    %3355 = vmatprep.subr.mxu0 0.0
    %3356 = vmatpush1.msra.mxu0 0.0
    %3357 = vmatprep.subr.mxu0 0.0
    %3358 = vmatpush1.msra.mxu0 0.0
    %3359 = vmatprep.subr.mxu0 0.0
    %3360 = vmatpush1.msra.mxu0 0.0
    %3361 = vmatprep.subr.mxu0 0.0
    %3362 = vmatpush1.msra.mxu0 0.0
    %3363 = vmatprep.subr.mxu0 0.0
    %3364 = vmatpush1.msra.mxu0 0.0
    %3365 = vmatprep.subr.mxu0 0.0
    %3366 = vmatpush1.msra.mxu0 0.0
    %3367 = vmatprep.subr.mxu0 0.0
    %3368 = vmatpush1.msra.mxu0 0.0
    %3369 = vmatprep.subr.mxu0 0.0
    %3370 = vmatpush1.msra.mxu0 0.0
    %3371 = vmatprep.subr.mxu0 0.0
    %3372 = vmatpush1.msra.mxu0 0.0
    %3373 = vmatprep.subr.mxu0 0.0
    %3374 = vmatpush1.msra.mxu0 0.0
    %3375 = vmatprep.subr.mxu0 0.0
    %3376 = vmatpush1.msra.mxu0 0.0
    %3377 = vmatprep.subr.mxu0 0.0
    %3378 = vmatpush1.msra.mxu0 0.0
    %3379 = vmatprep.subr.mxu0 0.0
    %3380 = vmatpush1.msra.mxu0 0.0
    %3381 = vmatprep.subr.mxu0 0.0
    %3382 = vmatpush1.msra.mxu0 0.0
    %3383 = vmatprep.subr.mxu0 0.0
    %3384 = vmatpush1.msra.mxu0 0.0
    %3385 = vmatprep.subr.mxu0 0.0
    %3386 = vmatpush1.msra.mxu0 0.0
    %3387 = vmatprep.subr.mxu0 0.0
    %3388 = vmatpush1.msra.mxu0 0.0
    %3389 = vmatprep.subr.mxu0 0.0
    %3390 = vmatpush1.msra.mxu0 0.0
    %3391 = vmatprep.subr.mxu0 0.0
    %3392 = vmatpush1.msra.mxu0 0.0
    %3393 = vmatprep.subr.mxu0 0.0
    %3394 = vmatpush1.msra.mxu0 0.0
    %3395 = vmatprep.subr.mxu0 0.0
    %3396 = vmatpush1.msra.mxu0 0.0
    %3397 = vmatprep.subr.mxu0 0.0
    %3398 = vmatpush1.msra.mxu0 0.0
    %3399 = vmatprep.subr.mxu0 0.0
    %3400 = vmatpush1.msra.mxu0 0.0
    %3401 = vmatprep.subr.mxu0 0.0
    %3402 = vmatpush1.msra.mxu0 0.0
    %3403 = vmatprep.mubr.f32.mxu0 0.0
    %v3404 = vand.u32 %v2660, 4294901760
    %3405 = vmatmul.mubr.f32.gmra.mrb[0].mxu0 %v3404
    %v3406 = vpop.f32.mrb[0].mxu0
    %v3407 = vadd.f32 %v3242, %v3406
    %v3408 = vpop.f32.mrb[0].mxu0
    %v3409 = vadd.f32 %v3244, %v3408
    %3410 = vmatprep.mubr.f32.mxu0 0.0
    %v3411 = vand.u32 %v2663, 4294901760
    %3412 = vmatmul.mubr.f32.gmra.mrb[0].mxu0 %v3411
    %v3413 = vpop.f32.mrb[0].mxu0
    %v3414 = vadd.f32 %v3251, %v3413
    %v3415 = vpop.f32.mrb[0].mxu0
    %v3416 = vadd.f32 %v3253, %v3415
    %3417 = vmatprep.mubr.f32.mxu0 0.0
    %v3418 = vand.u32 %v2666, 4294901760
    %3419 = vmatmul.mubr.f32.gmra.mrb[0].mxu0 %v3418
    %v3420 = vpop.f32.mrb[0].mxu0
    %v3421 = vadd.f32 %v3260, %v3420
    %v3422 = vpop.f32.mrb[0].mxu0
    %v3423 = vadd.f32 %v3262, %v3422
    %3424 = vmatprep.mubr.f32.mxu0 0.0
    %v3425 = vand.u32 %v2669, 4294901760
    %3426 = vmatmul.mubr.f32.gmra.mrb[0].mxu0 %v3425
    %v3427 = vpop.f32.mrb[0].mxu0
    %v3428 = vadd.f32 %v3269, %v3427
    %v3429 = vpop.f32.mrb[0].mxu0
    %v3430 = vadd.f32 %v3271, %v3429
    %3431 = vmatprep.mubr.f32.mxu0 0.0
    %v3432 = vand.u32 %v2672, 4294901760
    %3433 = vmatmul.mubr.f32.gmra.mrb[0].mxu0 %v3432
    %v3434 = vpop.f32.mrb[0].mxu0
    %v3435 = vadd.f32 %v3278, %v3434
    %v3436 = vpop.f32.mrb[0].mxu0
    %v3437 = vadd.f32 %v3280, %v3436
    %3438 = vmatprep.mubr.f32.mxu0 0.0
    %v3439 = vand.u32 %v2675, 4294901760
    %3440 = vmatmul.mubr.f32.gmra.mrb[0].mxu0 %v3439
    %v3441 = vpop.f32.mrb[0].mxu0
    %v3442 = vadd.f32 %v3287, %v3441
    %v3443 = vpop.f32.mrb[0].mxu0
    %v3444 = vadd.f32 %v3289, %v3443
    %3445 = vdwg.mxu0
    %v3446 = vand.u32 %v123, 4294901760
    %3447 = vmatprep.subr.mxu0 %v3446
    %v3448 = vand.u32 %v122, 4294901760
    %3449 = vmatpush1.msra.mxu0 %v3448
    %v3450 = vand.u32 %v125, 4294901760
    %3451 = vmatprep.subr.mxu0 %v3450
    %v3452 = vand.u32 %v124, 4294901760
    %3453 = vmatpush1.msra.mxu0 %v3452
    %v3454 = vand.u32 %v127, 4294901760
    %3455 = vmatprep.subr.mxu0 %v3454
    %v3456 = vand.u32 %v126, 4294901760
    %3457 = vmatpush1.msra.mxu0 %v3456
    %v3458 = vand.u32 %v129, 4294901760
    %3459 = vmatprep.subr.mxu0 %v3458
    %v3460 = vand.u32 %v128, 4294901760
    %3461 = vmatpush1.msra.mxu0 %v3460
    %v3462 = vand.u32 %v131, 4294901760
    %3463 = vmatprep.subr.mxu0 %v3462
    %v3464 = vand.u32 %v130, 4294901760
    %3465 = vmatpush1.msra.mxu0 %v3464
    %v3466 = vand.u32 %v133, 4294901760
    %3467 = vmatprep.subr.mxu0 %v3466
    %v3468 = vand.u32 %v132, 4294901760
    %3469 = vmatpush1.msra.mxu0 %v3468
    %v3470 = vand.u32 %v135, 4294901760
    %3471 = vmatprep.subr.mxu0 %v3470
    %v3472 = vand.u32 %v134, 4294901760
    %3473 = vmatpush1.msra.mxu0 %v3472
    %v3474 = vand.u32 %v137, 4294901760
    %3475 = vmatprep.subr.mxu0 %v3474
    %v3476 = vand.u32 %v136, 4294901760
    %3477 = vmatpush1.msra.mxu0 %v3476
    %3478 = vmatprep.subr.mxu0 0.0
    %3479 = vmatpush1.msra.mxu0 0.0
    %3480 = vmatprep.subr.mxu0 0.0
    %3481 = vmatpush1.msra.mxu0 0.0
    %3482 = vmatprep.subr.mxu0 0.0
    %3483 = vmatpush1.msra.mxu0 0.0
    %3484 = vmatprep.subr.mxu0 0.0
    %3485 = vmatpush1.msra.mxu0 0.0
    %3486 = vmatprep.subr.mxu0 0.0
    %3487 = vmatpush1.msra.mxu0 0.0
    %3488 = vmatprep.subr.mxu0 0.0
    %3489 = vmatpush1.msra.mxu0 0.0
    %3490 = vmatprep.subr.mxu0 0.0
    %3491 = vmatpush1.msra.mxu0 0.0
    %3492 = vmatprep.subr.mxu0 0.0
    %3493 = vmatpush1.msra.mxu0 0.0
    %3494 = vmatprep.subr.mxu0 0.0
    %3495 = vmatpush1.msra.mxu0 0.0
    %3496 = vmatprep.subr.mxu0 0.0
    %3497 = vmatpush1.msra.mxu0 0.0
    %3498 = vmatprep.subr.mxu0 0.0
    %3499 = vmatpush1.msra.mxu0 0.0
    %3500 = vmatprep.subr.mxu0 0.0
    %3501 = vmatpush1.msra.mxu0 0.0
    %3502 = vmatprep.subr.mxu0 0.0
    %3503 = vmatpush1.msra.mxu0 0.0
    %3504 = vmatprep.subr.mxu0 0.0
    %3505 = vmatpush1.msra.mxu0 0.0
    %3506 = vmatprep.subr.mxu0 0.0
    %3507 = vmatpush1.msra.mxu0 0.0
    %3508 = vmatprep.subr.mxu0 0.0
    %3509 = vmatpush1.msra.mxu0 0.0
    %3510 = vmatprep.subr.mxu0 0.0
    %3511 = vmatpush1.msra.mxu0 0.0
    %3512 = vmatprep.subr.mxu0 0.0
    %3513 = vmatpush1.msra.mxu0 0.0
    %3514 = vmatprep.subr.mxu0 0.0
    %3515 = vmatpush1.msra.mxu0 0.0
    %3516 = vmatprep.subr.mxu0 0.0
    %3517 = vmatpush1.msra.mxu0 0.0
    %3518 = vmatprep.subr.mxu0 0.0
    %3519 = vmatpush1.msra.mxu0 0.0
    %3520 = vmatprep.subr.mxu0 0.0
    %3521 = vmatpush1.msra.mxu0 0.0
    %3522 = vmatprep.subr.mxu0 0.0
    %3523 = vmatpush1.msra.mxu0 0.0
    %3524 = vmatprep.subr.mxu0 0.0
    %3525 = vmatpush1.msra.mxu0 0.0
    %3526 = vmatprep.mubr.f32.mxu0 0.0
    %v3527 = vand.u32 %v2660, 4294901760
    %3528 = vmatmul.mubr.f32.gmra.mrb[0].mxu0 %v3527
    %v3529 = vpop.f32.mrb[0].mxu0
    %v3530 = vadd.f32 %v3407, %v3529
    %v3531 = vpop.f32.mrb[0].mxu0
    %v3532 = vadd.f32 %v3409, %v3531
    %3533 = vmatprep.mubr.f32.mxu0 0.0
    %v3534 = vand.u32 %v2663, 4294901760
    %3535 = vmatmul.mubr.f32.gmra.mrb[0].mxu0 %v3534
    %v3536 = vpop.f32.mrb[0].mxu0
    %v3537 = vadd.f32 %v3414, %v3536
    %v3538 = vpop.f32.mrb[0].mxu0
    %v3539 = vadd.f32 %v3416, %v3538
    %3540 = vmatprep.mubr.f32.mxu0 0.0
    %v3541 = vand.u32 %v2666, 4294901760
    %3542 = vmatmul.mubr.f32.gmra.mrb[0].mxu0 %v3541
    %v3543 = vpop.f32.mrb[0].mxu0
    %v3544 = vadd.f32 %v3421, %v3543
    %v3545 = vpop.f32.mrb[0].mxu0
    %v3546 = vadd.f32 %v3423, %v3545
    %3547 = vmatprep.mubr.f32.mxu0 0.0
    %v3548 = vand.u32 %v2669, 4294901760
    %3549 = vmatmul.mubr.f32.gmra.mrb[0].mxu0 %v3548
    %v3550 = vpop.f32.mrb[0].mxu0
    %v3551 = vadd.f32 %v3428, %v3550
    %v3552 = vpop.f32.mrb[0].mxu0
    %v3553 = vadd.f32 %v3430, %v3552
    %3554 = vmatprep.mubr.f32.mxu0 0.0
    %v3555 = vand.u32 %v2672, 4294901760
    %3556 = vmatmul.mubr.f32.gmra.mrb[0].mxu0 %v3555
    %v3557 = vpop.f32.mrb[0].mxu0
    %v3558 = vadd.f32 %v3435, %v3557
    %v3559 = vpop.f32.mrb[0].mxu0
    %v3560 = vadd.f32 %v3437, %v3559
    %3561 = vmatprep.mubr.f32.mxu0 0.0
    %v3562 = vand.u32 %v2675, 4294901760
    %3563 = vmatmul.mubr.f32.gmra.mrb[0].mxu0 %v3562
    %v3564 = vpop.f32.mrb[0].mxu0
    %v3565 = vadd.f32 %v3442, %v3564
    %v3566 = vpop.f32.mrb[0].mxu0
    %v3567 = vadd.f32 %v3444, %v3566
    %3568 = vdwg.mxu0
    %3570 = vset.pattern.permute.xlu0 0
    %3571 = vperm.xlu0 %3570, %v108
    %v3572 = vpop.permute.xlu0 %3571
    %3575 = vset.pattern.permute.xlu0 0
    %3576 = vperm.xlu0 %3575, %v109
    %v3577 = vpop.permute.xlu0 %3576
    %3580 = vset.pattern.permute.xlu0 0
    %3581 = vperm.xlu0 %3580, %v110
    %v3582 = vpop.permute.xlu0 %3581
    %3585 = vset.pattern.permute.xlu0 0
    %3586 = vperm.xlu0 %3585, %v111
    %v3587 = vpop.permute.xlu0 %3586
    %3590 = vset.pattern.permute.xlu0 0
    %3591 = vperm.xlu0 %3590, %v112
    %v3592 = vpop.permute.xlu0 %3591
    %3595 = vset.pattern.permute.xlu0 0
    %3596 = vperm.xlu0 %3595, %v113
    %v3597 = vpop.permute.xlu0 %3596
    %v3599 = vmul.f32 %v3572, %v3530
    %v3600 = vmul.f32 %v3577, %v3537
    %v3601 = vmul.f32 %v3582, %v3544
    %v3602 = vmul.f32 %v3587, %v3551
    %v3603 = vmul.f32 %v3592, %v3558
    %v3604 = vmul.f32 %v3597, %v3565
    %v3605 = vadd.f32 %v3599, 0.0
    %v3606 = vadd.f32 %v3600, 0.0
    %v3607 = vadd.f32 %v3601, 0.0
    %v3608 = vadd.f32 %v3602, 0.0
    %v3609 = vadd.f32 %v3603, 0.0
    %v3610 = vadd.f32 %v3604, 0.0
    %3611 = vset.pattern.permute.xlu0 1
    %3612 = vperm.xlu0 %3611, %v108
    %v3613 = vpop.permute.xlu0 %3612
    %3615 = vset.pattern.permute.xlu0 1
    %3616 = vperm.xlu0 %3615, %v109
    %v3617 = vpop.permute.xlu0 %3616
    %3619 = vset.pattern.permute.xlu0 1
    %3620 = vperm.xlu0 %3619, %v110
    %v3621 = vpop.permute.xlu0 %3620
    %3623 = vset.pattern.permute.xlu0 1
    %3624 = vperm.xlu0 %3623, %v111
    %v3625 = vpop.permute.xlu0 %3624
    %3627 = vset.pattern.permute.xlu0 1
    %3628 = vperm.xlu0 %3627, %v112
    %v3629 = vpop.permute.xlu0 %3628
    %3631 = vset.pattern.permute.xlu0 1
    %3632 = vperm.xlu0 %3631, %v113
    %v3633 = vpop.permute.xlu0 %3632
    %v3635 = vmul.f32 %v3613, %v3530
    %v3636 = vmul.f32 %v3617, %v3537
    %v3637 = vmul.f32 %v3621, %v3544
    %v3638 = vmul.f32 %v3625, %v3551
    %v3639 = vmul.f32 %v3629, %v3558
    %v3640 = vmul.f32 %v3633, %v3565
    %3647 = vrot.lane.b32.xlu0 %v3635, 64
    %v3648 = vpop.permute.xlu0 %3647
    %3649 = vrot.lane.b32.xlu0 %v3636, 64
    %v3650 = vpop.permute.xlu0 %3649
    %3651 = vrot.lane.b32.xlu0 %v3637, 64
    %v3652 = vpop.permute.xlu0 %3651
    %3653 = vrot.lane.b32.xlu0 %v3638, 64
    %v3654 = vpop.permute.xlu0 %3653
    %3655 = vrot.lane.b32.xlu0 %v3639, 64
    %v3656 = vpop.permute.xlu0 %3655
    %3657 = vrot.lane.b32.xlu0 %v3640, 64
    %v3658 = vpop.permute.xlu0 %3657
    %v3665 = vadd.f32 %v3605, %v3648
    %v3666 = vadd.f32 %v3606, %v3650
    %v3667 = vadd.f32 %v3607, %v3652
    %v3668 = vadd.f32 %v3608, %v3654
    %v3669 = vadd.f32 %v3609, %v3656
    %v3670 = vadd.f32 %v3610, %v3658
    %3671 = vset.pattern.permute.xlu0 2
    %3672 = vperm.xlu0 %3671, %v108
    %v3673 = vpop.permute.xlu0 %3672
    %3675 = vset.pattern.permute.xlu0 2
    %3676 = vperm.xlu0 %3675, %v109
    %v3677 = vpop.permute.xlu0 %3676
    %3679 = vset.pattern.permute.xlu0 2
    %3680 = vperm.xlu0 %3679, %v110
    %v3681 = vpop.permute.xlu0 %3680
    %3683 = vset.pattern.permute.xlu0 2
    %3684 = vperm.xlu0 %3683, %v111
    %v3685 = vpop.permute.xlu0 %3684
    %3687 = vset.pattern.permute.xlu0 2
    %3688 = vperm.xlu0 %3687, %v112
    %v3689 = vpop.permute.xlu0 %3688
    %3691 = vset.pattern.permute.xlu0 2
    %3692 = vperm.xlu0 %3691, %v113
    %v3693 = vpop.permute.xlu0 %3692
    %v3695 = vmul.f32 %v3673, %v3532
    %v3696 = vmul.f32 %v3677, %v3539
    %v3697 = vmul.f32 %v3681, %v3546
    %v3698 = vmul.f32 %v3685, %v3553
    %v3699 = vmul.f32 %v3689, %v3560
    %v3700 = vmul.f32 %v3693, %v3567
    %v3701 = vadd.f32 %v3665, %v3695
    %v3702 = vadd.f32 %v3666, %v3696
    %v3703 = vadd.f32 %v3667, %v3697
    %v3704 = vadd.f32 %v3668, %v3698
    %v3705 = vadd.f32 %v3669, %v3699
    %v3706 = vadd.f32 %v3670, %v3700
    %3707 = vset.pattern.permute.xlu0 3
    %3708 = vperm.xlu0 %3707, %v108
    %v3709 = vpop.permute.xlu0 %3708
    %3711 = vset.pattern.permute.xlu0 3
    %3712 = vperm.xlu0 %3711, %v109
    %v3713 = vpop.permute.xlu0 %3712
    %3715 = vset.pattern.permute.xlu0 3
    %3716 = vperm.xlu0 %3715, %v110
    %v3717 = vpop.permute.xlu0 %3716
    %3719 = vset.pattern.permute.xlu0 3
    %3720 = vperm.xlu0 %3719, %v111
    %v3721 = vpop.permute.xlu0 %3720
    %3723 = vset.pattern.permute.xlu0 3
    %3724 = vperm.xlu0 %3723, %v112
    %v3725 = vpop.permute.xlu0 %3724
    %3727 = vset.pattern.permute.xlu0 3
    %3728 = vperm.xlu0 %3727, %v113
    %v3729 = vpop.permute.xlu0 %3728
    %v3731 = vmul.f32 %v3709, %v3532
    %v3732 = vmul.f32 %v3713, %v3539
    %v3733 = vmul.f32 %v3717, %v3546
    %v3734 = vmul.f32 %v3721, %v3553
    %v3735 = vmul.f32 %v3725, %v3560
    %v3736 = vmul.f32 %v3729, %v3567
    %3743 = vrot.lane.b32.xlu0 %v3731, 64
    %v3744 = vpop.permute.xlu0 %3743
    %3745 = vrot.lane.b32.xlu0 %v3732, 64
    %v3746 = vpop.permute.xlu0 %3745
    %3747 = vrot.lane.b32.xlu0 %v3733, 64
    %v3748 = vpop.permute.xlu0 %3747
    %3749 = vrot.lane.b32.xlu0 %v3734, 64
    %v3750 = vpop.permute.xlu0 %3749
    %3751 = vrot.lane.b32.xlu0 %v3735, 64
    %v3752 = vpop.permute.xlu0 %3751
    %3753 = vrot.lane.b32.xlu0 %v3736, 64
    %v3754 = vpop.permute.xlu0 %3753
    %v3761 = vadd.f32 %v3701, %v3744
    %v3762 = vadd.f32 %v3702, %v3746
    %v3763 = vadd.f32 %v3703, %v3748
    %v3764 = vadd.f32 %v3704, %v3750
    %v3765 = vadd.f32 %v3705, %v3752
    %v3766 = vadd.f32 %v3706, %v3754
    %v3767 = vmul.f32 %v3761, %v2626
    %v3768 = vmul.f32 %v3762, %v2632
    %v3769 = vmul.f32 %v3763, %v2638
    %v3770 = vmul.f32 %v3764, %v2644
    %v3771 = vmul.f32 %v3765, %v2650
    %v3772 = vmul.f32 %v3766, %v2656
    %v3773 = vsel %vm1229, %v3767, 0.0
    %3774 = vadd.xlane.f32.xlu0 %v3773
    %v3775 = vpop.xlane.xlu0 %3774
    %v3776 = vsel %vm1229, %v3768, 0.0
    %3777 = vadd.xlane.f32.xlu0 %v3776
    %v3778 = vpop.xlane.xlu0 %3777
    %v3779 = vsel %vm1229, %v3769, 0.0
    %3780 = vadd.xlane.f32.xlu0 %v3779
    %v3781 = vpop.xlane.xlu0 %3780
    %v3782 = vsel %vm1229, %v3770, 0.0
    %3783 = vadd.xlane.f32.xlu0 %v3782
    %v3784 = vpop.xlane.xlu0 %3783
    %v3785 = vsel %vm1229, %v3771, 0.0
    %3786 = vadd.xlane.f32.xlu0 %v3785
    %v3787 = vpop.xlane.xlu0 %3786
    %v3788 = vsel %vm1229, %v3772, 0.0
    %3789 = vadd.xlane.f32.xlu0 %v3788
    %v3790 = vpop.xlane.xlu0 %3789
    %vm3791 = vcmp.gt.f32.partialorder %v100, 0.5
    %vm3792 = vcmp.gt.f32.partialorder %v101, 0.5
    %vm3793 = vcmp.gt.f32.partialorder %v102, 0.5
    %vm3794 = vcmp.gt.f32.partialorder %v103, 0.5
    %vm3795 = vcmp.gt.f32.partialorder %v104, 0.5
    %vm3796 = vcmp.gt.f32.partialorder %v105, 0.5
    %v3797 = vsel %vm3791, %v3775, -1e+30
    %v3798 = vsel %vm3792, %v3778, -1e+30
    %v3799 = vsel %vm3793, %v3781, -1e+30
    %v3800 = vsel %vm3794, %v3784, -1e+30
    %v3801 = vsel %vm3795, %v3787, -1e+30
    %v3802 = vsel %vm3796, %v3790, -1e+30
    %v3803 = vsel %vm142, %v3797, -inf
    %v3804 = vsel %vm142, %v3798, -inf
    %v3805 = vsel %vm142, %v3799, -inf
    %v3806 = vsel %vm142, %v3800, -inf
    %v3807 = vsel %vm142, %v3801, -inf
    %v3808 = vmax.f32 %v3803, %v3807
    %v3809 = vsel %vm142, %v3802, -inf
    %v3810 = vmax.f32 %v3804, %v3809
    %v3811 = vmax.f32 %v3808, %v3810
    %v3812 = vmax.f32 %v3805, %v3806
    %v3813 = vmax.f32 %v3811, %v3812
    %v3814 = vrot.slane %v3813, 4
    %v3815 = vmax.f32 %v3813, %v3814
    %v3816 = vrot.slane %v3815, 2
    %v3817 = vmax.f32 %v3815, %v3816
    %v3818 = vrot.slane %v3817, 1
    %v3819 = vmax.f32 %v3817, %v3818
    %v3820 = vmul.f32 %v100, %v3819
    %v3821 = vmul.f32 %v101, %v3819
    %v3822 = vmul.f32 %v102, %v3819
    %v3823 = vmul.f32 %v103, %v3819
    %v3824 = vmul.f32 %v104, %v3819
    %v3825 = vmul.f32 %v105, %v3819
    %v3826 = vsel %vm142, %v3820, 0.0
    %3827 = vadd.xlane.f32.xlu0 %v3826
    %v3828 = vpop.xlane.xlu0 %3827
    %v3829 = vsel %vm142, %v3821, 0.0
    %3830 = vadd.xlane.f32.xlu0 %v3829
    %v3831 = vpop.xlane.xlu0 %3830
    %v3832 = vsel %vm142, %v3822, 0.0
    %3833 = vadd.xlane.f32.xlu0 %v3832
    %v3834 = vpop.xlane.xlu0 %3833
    %v3835 = vsel %vm142, %v3823, 0.0
    %3836 = vadd.xlane.f32.xlu0 %v3835
    %v3837 = vpop.xlane.xlu0 %3836
    %v3838 = vsel %vm142, %v3824, 0.0
    %3839 = vadd.xlane.f32.xlu0 %v3838
    %v3840 = vpop.xlane.xlu0 %3839
    %v3841 = vsel %vm142, %v3825, 0.0
    %3842 = vadd.xlane.f32.xlu0 %v3841
    %v3843 = vpop.xlane.xlu0 %3842
    %v3844 = vsub.f32 %v3775, %v3828
    %v3845 = vsub.f32 %v3778, %v3831
    %v3846 = vsub.f32 %v3781, %v3834
    %v3847 = vsub.f32 %v3784, %v3837
    %v3848 = vsub.f32 %v3787, %v3840
    %v3849 = vsub.f32 %v3790, %v3843
    %v3850 = vmul.f32 %v3844, 1.442695
    %v3851 = vpow.pop %v3850
    %v3852 = vmul.f32 %v3845, 1.442695
    %v3853 = vpow.pop %v3852
    %v3854 = vmul.f32 %v3846, 1.442695
    %v3855 = vpow.pop %v3854
    %v3856 = vmul.f32 %v3847, 1.442695
    %v3857 = vpow.pop %v3856
    %v3858 = vmul.f32 %v3848, 1.442695
    %v3859 = vpow.pop %v3858
    %v3860 = vmul.f32 %v3849, 1.442695
    %v3861 = vpow.pop %v3860
    %v3862 = vmul.f32 %v3761, %v3851
    %v3863 = vmul.f32 %v3762, %v3853
    %v3864 = vmul.f32 %v3763, %v3855
    %v3865 = vmul.f32 %v3764, %v3857
    %v3866 = vmul.f32 %v3765, %v3859
    %v3867 = vmul.f32 %v3766, %v3861
    %3874 = vrot.lane.b32.xlu0 %v3862, 96
    %v3875 = vpop.permute.xlu0 %3874
    %3876 = vrot.lane.b32.xlu0 %v3863, 96
    %v3877 = vpop.permute.xlu0 %3876
    %3878 = vrot.lane.b32.xlu0 %v3864, 96
    %v3879 = vpop.permute.xlu0 %3878
    %3880 = vrot.lane.b32.xlu0 %v3865, 96
    %v3881 = vpop.permute.xlu0 %3880
    %3882 = vrot.lane.b32.xlu0 %v3866, 96
    %v3883 = vpop.permute.xlu0 %3882
    %3884 = vrot.lane.b32.xlu0 %v3867, 96
    %v3885 = vpop.permute.xlu0 %3884
    %v3892 = vsel %vm1229, %v3875, %v3851
    %v3893 = vsel %vm1229, %v3877, %v3853
    %v3894 = vsel %vm1229, %v3879, %v3855
    %v3895 = vsel %vm1229, %v3881, %v3857
    %v3896 = vsel %vm1229, %v3883, %v3859
    %v3897 = vsel %vm1229, %v3885, %v3861
    %3898 = vxpose.xlu0.b32.start [1/16] %v100, 128
    %3899 = vxpose.xlu0.b32.cont [2/16] %v101, 128
    %3900 = vxpose.xlu0.b32.cont [3/16] %v102, 128
    %3901 = vxpose.xlu0.b32.cont [4/16] %v103, 128
    %3902 = vxpose.xlu0.b32.cont [5/16] %v104, 128
    %3903 = vxpose.xlu0.b32.cont [6/16] %v105, 128
    %3904 = vxpose.xlu0.b32.cont [7/16] 0.0, 128
    %3905 = vxpose.xlu0.b32.cont [8/16] 0.0, 128
    %3906 = vxpose.xlu0.b32.cont [9/16] 0.0, 128
    %3907 = vxpose.xlu0.b32.cont [10/16] 0.0, 128
    %3908 = vxpose.xlu0.b32.cont [11/16] 0.0, 128
    %3909 = vxpose.xlu0.b32.cont [12/16] 0.0, 128
    %3910 = vxpose.xlu0.b32.cont [13/16] 0.0, 128
    %3911 = vxpose.xlu0.b32.cont [14/16] 0.0, 128
    %3912 = vxpose.xlu0.b32.cont [15/16] 0.0, 128
    %3913 = vxpose.xlu0.b32.end [16/16] 0.0, 128
    %v3914 = vpop.trf.xlu0
    %v3915 = vpop.trf.xlu0
    %v3916 = vpop.trf.xlu0
    %v3917 = vpop.trf.xlu0
    %v3918 = vpop.trf.xlu0
    %v3919 = vpop.trf.xlu0
    %v3920 = vpop.trf.xlu0
    %v3921 = vpop.trf.xlu0
    %v3922 = vpop.trf.xlu0
    %v3923 = vpop.trf.xlu0
    %v3924 = vpop.trf.xlu0
    %v3925 = vpop.trf.xlu0
    %v3926 = vpop.trf.xlu0
    %v3927 = vpop.trf.xlu0
    %v3928 = vpop.trf.xlu0
    %v3929 = vpop.trf.xlu0
    %vm3930 = vcmask 392192
    %v3932 = vsel %vm3930, %v3914, 0
    %v3935 = vsel %vm3930, %v3915, 0
    %3937 = vmatprep.subr.mxu0 0.0
    %v3938 = vand.u32 %v3892, 4294901760
    %3939 = vmatpush1.msra.mxu0 %v3938
    %3940 = vmatprep.subr.mxu0 0.0
    %v3941 = vand.u32 %v3893, 4294901760
    %3942 = vmatpush1.msra.mxu0 %v3941
    %3943 = vmatprep.subr.mxu0 0.0
    %v3944 = vand.u32 %v3894, 4294901760
    %3945 = vmatpush1.msra.mxu0 %v3944
    %3946 = vmatprep.subr.mxu0 0.0
    %v3947 = vand.u32 %v3895, 4294901760
    %3948 = vmatpush1.msra.mxu0 %v3947
    %3949 = vmatprep.subr.mxu0 0.0
    %v3950 = vand.u32 %v3896, 4294901760
    %3951 = vmatpush1.msra.mxu0 %v3950
    %3952 = vmatprep.subr.mxu0 0.0
    %v3953 = vand.u32 %v3897, 4294901760
    %3954 = vmatpush1.msra.mxu0 %v3953
    %3955 = vmatprep.subr.mxu0 0.0
    %3956 = vmatpush1.msra.mxu0 0.0
    %3957 = vmatprep.subr.mxu0 0.0
    %3958 = vmatpush1.msra.mxu0 0.0
    %3959 = vmatprep.subr.mxu0 0.0
    %3960 = vmatpush1.msra.mxu0 0.0
    %3961 = vmatprep.subr.mxu0 0.0
    %3962 = vmatpush1.msra.mxu0 0.0
    %3963 = vmatprep.subr.mxu0 0.0
    %3964 = vmatpush1.msra.mxu0 0.0
    %3965 = vmatprep.subr.mxu0 0.0
    %3966 = vmatpush1.msra.mxu0 0.0
    %3967 = vmatprep.subr.mxu0 0.0
    %3968 = vmatpush1.msra.mxu0 0.0
    %3969 = vmatprep.subr.mxu0 0.0
    %3970 = vmatpush1.msra.mxu0 0.0
    %3971 = vmatprep.subr.mxu0 0.0
    %3972 = vmatpush1.msra.mxu0 0.0
    %3973 = vmatprep.subr.mxu0 0.0
    %3974 = vmatpush1.msra.mxu0 0.0
    %3975 = vmatprep.subr.mxu0 0.0
    %3976 = vmatpush1.msra.mxu0 0.0
    %3977 = vmatprep.subr.mxu0 0.0
    %3978 = vmatpush1.msra.mxu0 0.0
    %3979 = vmatprep.subr.mxu0 0.0
    %3980 = vmatpush1.msra.mxu0 0.0
    %3981 = vmatprep.subr.mxu0 0.0
    %3982 = vmatpush1.msra.mxu0 0.0
    %3983 = vmatprep.subr.mxu0 0.0
    %3984 = vmatpush1.msra.mxu0 0.0
    %3985 = vmatprep.subr.mxu0 0.0
    %3986 = vmatpush1.msra.mxu0 0.0
    %3987 = vmatprep.subr.mxu0 0.0
    %3988 = vmatpush1.msra.mxu0 0.0
    %3989 = vmatprep.subr.mxu0 0.0
    %3990 = vmatpush1.msra.mxu0 0.0
    %3991 = vmatprep.subr.mxu0 0.0
    %3992 = vmatpush1.msra.mxu0 0.0
    %3993 = vmatprep.subr.mxu0 0.0
    %3994 = vmatpush1.msra.mxu0 0.0
    %3995 = vmatprep.subr.mxu0 0.0
    %3996 = vmatpush1.msra.mxu0 0.0
    %3997 = vmatprep.subr.mxu0 0.0
    %3998 = vmatpush1.msra.mxu0 0.0
    %3999 = vmatprep.subr.mxu0 0.0
    %4000 = vmatpush1.msra.mxu0 0.0
    %4001 = vmatprep.subr.mxu0 0.0
    %4002 = vmatpush1.msra.mxu0 0.0
    %4003 = vmatprep.subr.mxu0 0.0
    %4004 = vmatpush1.msra.mxu0 0.0
    %4005 = vmatprep.subr.mxu0 0.0
    %4006 = vmatpush1.msra.mxu0 0.0
    %4007 = vmatprep.mubr.f32.mxu0 0.0
    %v4008 = vand.u32 %v3932, 4294901760
    %v4009 = vsub.f32 %v3932, %v4008
    %v4010 = vand.u32 %v4009, 4294901760
    %v4011 = vsub.f32 %v4009, %v4010
    %v4012 = vand.u32 %v4011, 4294901760
    %4013 = vmatmul.mubr.f32.gmra.mrb[0].mxu0 %v4012
    %v4014 = vpop.f32.mrb[0].mxu0
    %v4015 = vadd.f32 0.0, %v4014
    %v4016 = vpop.f32.mrb[0].mxu0
    %4017 = vmatprep.mubr.f32.mxu0 0.0
    %v4018 = vand.u32 %v3935, 4294901760
    %v4019 = vsub.f32 %v3935, %v4018
    %v4020 = vand.u32 %v4019, 4294901760
    %v4021 = vsub.f32 %v4019, %v4020
    %v4022 = vand.u32 %v4021, 4294901760
    %4023 = vmatmul.mubr.f32.gmra.mrb[0].mxu0 %v4022
    %v4024 = vpop.f32.mrb[0].mxu0
    %v4025 = vadd.f32 0.0, %v4024
    %v4026 = vpop.f32.mrb[0].mxu0
    %4027 = vdwg.mxu0
    %4028 = vmatprep.subr.mxu0 0.0
    %v4029 = vand.u32 %v3892, 4294901760
    %v4030 = vsub.f32 %v3892, %v4029
    %v4031 = vand.u32 %v4030, 4294901760
    %v4032 = vsub.f32 %v4030, %v4031
    %v4033 = vand.u32 %v4032, 4294901760
    %4034 = vmatpush1.msra.mxu0 %v4033
    %4035 = vmatprep.subr.mxu0 0.0
    %v4036 = vand.u32 %v3893, 4294901760
    %v4037 = vsub.f32 %v3893, %v4036
    %v4038 = vand.u32 %v4037, 4294901760
    %v4039 = vsub.f32 %v4037, %v4038
    %v4040 = vand.u32 %v4039, 4294901760
    %4041 = vmatpush1.msra.mxu0 %v4040
    %4042 = vmatprep.subr.mxu0 0.0
    %v4043 = vand.u32 %v3894, 4294901760
    %v4044 = vsub.f32 %v3894, %v4043
    %v4045 = vand.u32 %v4044, 4294901760
    %v4046 = vsub.f32 %v4044, %v4045
    %v4047 = vand.u32 %v4046, 4294901760
    %4048 = vmatpush1.msra.mxu0 %v4047
    %4049 = vmatprep.subr.mxu0 0.0
    %v4050 = vand.u32 %v3895, 4294901760
    %v4051 = vsub.f32 %v3895, %v4050
    %v4052 = vand.u32 %v4051, 4294901760
    %v4053 = vsub.f32 %v4051, %v4052
    %v4054 = vand.u32 %v4053, 4294901760
    %4055 = vmatpush1.msra.mxu0 %v4054
    %4056 = vmatprep.subr.mxu0 0.0
    %v4057 = vand.u32 %v3896, 4294901760
    %v4058 = vsub.f32 %v3896, %v4057
    %v4059 = vand.u32 %v4058, 4294901760
    %v4060 = vsub.f32 %v4058, %v4059
    %v4061 = vand.u32 %v4060, 4294901760
    %4062 = vmatpush1.msra.mxu0 %v4061
    %4063 = vmatprep.subr.mxu0 0.0
    %v4064 = vand.u32 %v3897, 4294901760
    %v4065 = vsub.f32 %v3897, %v4064
    %v4066 = vand.u32 %v4065, 4294901760
    %v4067 = vsub.f32 %v4065, %v4066
    %v4068 = vand.u32 %v4067, 4294901760
    %4069 = vmatpush1.msra.mxu0 %v4068
    %4070 = vmatprep.subr.mxu0 0.0
    %4071 = vmatpush1.msra.mxu0 0.0
    %4072 = vmatprep.subr.mxu0 0.0
    %4073 = vmatpush1.msra.mxu0 0.0
    %4074 = vmatprep.subr.mxu0 0.0
    %4075 = vmatpush1.msra.mxu0 0.0
    %4076 = vmatprep.subr.mxu0 0.0
    %4077 = vmatpush1.msra.mxu0 0.0
    %4078 = vmatprep.subr.mxu0 0.0
    %4079 = vmatpush1.msra.mxu0 0.0
    %4080 = vmatprep.subr.mxu0 0.0
    %4081 = vmatpush1.msra.mxu0 0.0
    %4082 = vmatprep.subr.mxu0 0.0
    %4083 = vmatpush1.msra.mxu0 0.0
    %4084 = vmatprep.subr.mxu0 0.0
    %4085 = vmatpush1.msra.mxu0 0.0
    %4086 = vmatprep.subr.mxu0 0.0
    %4087 = vmatpush1.msra.mxu0 0.0
    %4088 = vmatprep.subr.mxu0 0.0
    %4089 = vmatpush1.msra.mxu0 0.0
    %4090 = vmatprep.subr.mxu0 0.0
    %4091 = vmatpush1.msra.mxu0 0.0
    %4092 = vmatprep.subr.mxu0 0.0
    %4093 = vmatpush1.msra.mxu0 0.0
    %4094 = vmatprep.subr.mxu0 0.0
    %4095 = vmatpush1.msra.mxu0 0.0
    %4096 = vmatprep.subr.mxu0 0.0
    %4097 = vmatpush1.msra.mxu0 0.0
    %4098 = vmatprep.subr.mxu0 0.0
    %4099 = vmatpush1.msra.mxu0 0.0
    %4100 = vmatprep.subr.mxu0 0.0
    %4101 = vmatpush1.msra.mxu0 0.0
    %4102 = vmatprep.subr.mxu0 0.0
    %4103 = vmatpush1.msra.mxu0 0.0
    %4104 = vmatprep.subr.mxu0 0.0
    %4105 = vmatpush1.msra.mxu0 0.0
    %4106 = vmatprep.subr.mxu0 0.0
    %4107 = vmatpush1.msra.mxu0 0.0
    %4108 = vmatprep.subr.mxu0 0.0
    %4109 = vmatpush1.msra.mxu0 0.0
    %4110 = vmatprep.subr.mxu0 0.0
    %4111 = vmatpush1.msra.mxu0 0.0
    %4112 = vmatprep.subr.mxu0 0.0
    %4113 = vmatpush1.msra.mxu0 0.0
    %4114 = vmatprep.subr.mxu0 0.0
    %4115 = vmatpush1.msra.mxu0 0.0
    %4116 = vmatprep.subr.mxu0 0.0
    %4117 = vmatpush1.msra.mxu0 0.0
    %4118 = vmatprep.subr.mxu0 0.0
    %4119 = vmatpush1.msra.mxu0 0.0
    %4120 = vmatprep.subr.mxu0 0.0
    %4121 = vmatpush1.msra.mxu0 0.0
    %4122 = vmatprep.mubr.f32.mxu0 0.0
    %v4123 = vand.u32 %v3932, 4294901760
    %4124 = vmatmul.mubr.f32.gmra.mrb[0].mxu0 %v4123
    %v4125 = vpop.f32.mrb[0].mxu0
    %v4126 = vadd.f32 %v4015, %v4125
    %v4127 = vpop.f32.mrb[0].mxu0
    %4128 = vmatprep.mubr.f32.mxu0 0.0
    %v4129 = vand.u32 %v3935, 4294901760
    %4130 = vmatmul.mubr.f32.gmra.mrb[0].mxu0 %v4129
    %v4131 = vpop.f32.mrb[0].mxu0
    %v4132 = vadd.f32 %v4025, %v4131
    %v4133 = vpop.f32.mrb[0].mxu0
    %4134 = vdwg.mxu0
    %4135 = vmatprep.subr.mxu0 0.0
    %v4136 = vand.u32 %v3892, 4294901760
    %v4137 = vsub.f32 %v3892, %v4136
    %4138 = vmatpush1.msra.mxu0 %v4137
    %4139 = vmatprep.subr.mxu0 0.0
    %v4140 = vand.u32 %v3893, 4294901760
    %v4141 = vsub.f32 %v3893, %v4140
    %4142 = vmatpush1.msra.mxu0 %v4141
    %4143 = vmatprep.subr.mxu0 0.0
    %v4144 = vand.u32 %v3894, 4294901760
    %v4145 = vsub.f32 %v3894, %v4144
    %4146 = vmatpush1.msra.mxu0 %v4145
    %4147 = vmatprep.subr.mxu0 0.0
    %v4148 = vand.u32 %v3895, 4294901760
    %v4149 = vsub.f32 %v3895, %v4148
    %4150 = vmatpush1.msra.mxu0 %v4149
    %4151 = vmatprep.subr.mxu0 0.0
    %v4152 = vand.u32 %v3896, 4294901760
    %v4153 = vsub.f32 %v3896, %v4152
    %4154 = vmatpush1.msra.mxu0 %v4153
    %4155 = vmatprep.subr.mxu0 0.0
    %v4156 = vand.u32 %v3897, 4294901760
    %v4157 = vsub.f32 %v3897, %v4156
    %4158 = vmatpush1.msra.mxu0 %v4157
    %4159 = vmatprep.subr.mxu0 0.0
    %4160 = vmatpush1.msra.mxu0 0.0
    %4161 = vmatprep.subr.mxu0 0.0
    %4162 = vmatpush1.msra.mxu0 0.0
    %4163 = vmatprep.subr.mxu0 0.0
    %4164 = vmatpush1.msra.mxu0 0.0
    %4165 = vmatprep.subr.mxu0 0.0
    %4166 = vmatpush1.msra.mxu0 0.0
    %4167 = vmatprep.subr.mxu0 0.0
    %4168 = vmatpush1.msra.mxu0 0.0
    %4169 = vmatprep.subr.mxu0 0.0
    %4170 = vmatpush1.msra.mxu0 0.0
    %4171 = vmatprep.subr.mxu0 0.0
    %4172 = vmatpush1.msra.mxu0 0.0
    %4173 = vmatprep.subr.mxu0 0.0
    %4174 = vmatpush1.msra.mxu0 0.0
    %4175 = vmatprep.subr.mxu0 0.0
    %4176 = vmatpush1.msra.mxu0 0.0
    %4177 = vmatprep.subr.mxu0 0.0
    %4178 = vmatpush1.msra.mxu0 0.0
    %4179 = vmatprep.subr.mxu0 0.0
    %4180 = vmatpush1.msra.mxu0 0.0
    %4181 = vmatprep.subr.mxu0 0.0
    %4182 = vmatpush1.msra.mxu0 0.0
    %4183 = vmatprep.subr.mxu0 0.0
    %4184 = vmatpush1.msra.mxu0 0.0
    %4185 = vmatprep.subr.mxu0 0.0
    %4186 = vmatpush1.msra.mxu0 0.0
    %4187 = vmatprep.subr.mxu0 0.0
    %4188 = vmatpush1.msra.mxu0 0.0
    %4189 = vmatprep.subr.mxu0 0.0
    %4190 = vmatpush1.msra.mxu0 0.0
    %4191 = vmatprep.subr.mxu0 0.0
    %4192 = vmatpush1.msra.mxu0 0.0
    %4193 = vmatprep.subr.mxu0 0.0
    %4194 = vmatpush1.msra.mxu0 0.0
    %4195 = vmatprep.subr.mxu0 0.0
    %4196 = vmatpush1.msra.mxu0 0.0
    %4197 = vmatprep.subr.mxu0 0.0
    %4198 = vmatpush1.msra.mxu0 0.0
    %4199 = vmatprep.subr.mxu0 0.0
    %4200 = vmatpush1.msra.mxu0 0.0
    %4201 = vmatprep.subr.mxu0 0.0
    %4202 = vmatpush1.msra.mxu0 0.0
    %4203 = vmatprep.subr.mxu0 0.0
    %4204 = vmatpush1.msra.mxu0 0.0
    %4205 = vmatprep.subr.mxu0 0.0
    %4206 = vmatpush1.msra.mxu0 0.0
    %4207 = vmatprep.subr.mxu0 0.0
    %4208 = vmatpush1.msra.mxu0 0.0
    %4209 = vmatprep.subr.mxu0 0.0
    %4210 = vmatpush1.msra.mxu0 0.0
    %4211 = vmatprep.mubr.f32.mxu0 0.0
    %v4212 = vand.u32 %v3932, 4294901760
    %v4213 = vsub.f32 %v3932, %v4212
    %4214 = vmatmul.mubr.f32.gmra.mrb[0].mxu0 %v4213
    %v4215 = vpop.f32.mrb[0].mxu0
    %v4216 = vadd.f32 %v4126, %v4215
    %v4217 = vpop.f32.mrb[0].mxu0
    %4218 = vmatprep.mubr.f32.mxu0 0.0
    %v4219 = vand.u32 %v3935, 4294901760
    %v4220 = vsub.f32 %v3935, %v4219
    %4221 = vmatmul.mubr.f32.gmra.mrb[0].mxu0 %v4220
    %v4222 = vpop.f32.mrb[0].mxu0
    %v4223 = vadd.f32 %v4132, %v4222
    %v4224 = vpop.f32.mrb[0].mxu0
    %4225 = vdwg.mxu0
    %4226 = vmatprep.subr.mxu0 0.0
    %v4227 = vand.u32 %v3892, 4294901760
    %4228 = vmatpush1.msra.mxu0 %v4227
    %4229 = vmatprep.subr.mxu0 0.0
    %v4230 = vand.u32 %v3893, 4294901760
    %4231 = vmatpush1.msra.mxu0 %v4230
    %4232 = vmatprep.subr.mxu0 0.0
    %v4233 = vand.u32 %v3894, 4294901760
    %4234 = vmatpush1.msra.mxu0 %v4233
    %4235 = vmatprep.subr.mxu0 0.0
    %v4236 = vand.u32 %v3895, 4294901760
    %4237 = vmatpush1.msra.mxu0 %v4236
    %4238 = vmatprep.subr.mxu0 0.0
    %v4239 = vand.u32 %v3896, 4294901760
    %4240 = vmatpush1.msra.mxu0 %v4239
    %4241 = vmatprep.subr.mxu0 0.0
    %v4242 = vand.u32 %v3897, 4294901760
    %4243 = vmatpush1.msra.mxu0 %v4242
    %4244 = vmatprep.subr.mxu0 0.0
    %4245 = vmatpush1.msra.mxu0 0.0
    %4246 = vmatprep.subr.mxu0 0.0
    %4247 = vmatpush1.msra.mxu0 0.0
    %4248 = vmatprep.subr.mxu0 0.0
    %4249 = vmatpush1.msra.mxu0 0.0
    %4250 = vmatprep.subr.mxu0 0.0
    %4251 = vmatpush1.msra.mxu0 0.0
    %4252 = vmatprep.subr.mxu0 0.0
    %4253 = vmatpush1.msra.mxu0 0.0
    %4254 = vmatprep.subr.mxu0 0.0
    %4255 = vmatpush1.msra.mxu0 0.0
    %4256 = vmatprep.subr.mxu0 0.0
    %4257 = vmatpush1.msra.mxu0 0.0
    %4258 = vmatprep.subr.mxu0 0.0
    %4259 = vmatpush1.msra.mxu0 0.0
    %4260 = vmatprep.subr.mxu0 0.0
    %4261 = vmatpush1.msra.mxu0 0.0
    %4262 = vmatprep.subr.mxu0 0.0
    %4263 = vmatpush1.msra.mxu0 0.0
    %4264 = vmatprep.subr.mxu0 0.0
    %4265 = vmatpush1.msra.mxu0 0.0
    %4266 = vmatprep.subr.mxu0 0.0
    %4267 = vmatpush1.msra.mxu0 0.0
    %4268 = vmatprep.subr.mxu0 0.0
    %4269 = vmatpush1.msra.mxu0 0.0
    %4270 = vmatprep.subr.mxu0 0.0
    %4271 = vmatpush1.msra.mxu0 0.0
    %4272 = vmatprep.subr.mxu0 0.0
    %4273 = vmatpush1.msra.mxu0 0.0
    %4274 = vmatprep.subr.mxu0 0.0
    %4275 = vmatpush1.msra.mxu0 0.0
    %4276 = vmatprep.subr.mxu0 0.0
    %4277 = vmatpush1.msra.mxu0 0.0
    %4278 = vmatprep.subr.mxu0 0.0
    %4279 = vmatpush1.msra.mxu0 0.0
    %4280 = vmatprep.subr.mxu0 0.0
    %4281 = vmatpush1.msra.mxu0 0.0
    %4282 = vmatprep.subr.mxu0 0.0
    %4283 = vmatpush1.msra.mxu0 0.0
    %4284 = vmatprep.subr.mxu0 0.0
    %4285 = vmatpush1.msra.mxu0 0.0
    %4286 = vmatprep.subr.mxu0 0.0
    %4287 = vmatpush1.msra.mxu0 0.0
    %4288 = vmatprep.subr.mxu0 0.0
    %4289 = vmatpush1.msra.mxu0 0.0
    %4290 = vmatprep.subr.mxu0 0.0
    %4291 = vmatpush1.msra.mxu0 0.0
    %4292 = vmatprep.subr.mxu0 0.0
    %4293 = vmatpush1.msra.mxu0 0.0
    %4294 = vmatprep.subr.mxu0 0.0
    %4295 = vmatpush1.msra.mxu0 0.0
    %4296 = vmatprep.mubr.f32.mxu0 0.0
    %v4297 = vand.u32 %v3932, 4294901760
    %v4298 = vsub.f32 %v3932, %v4297
    %v4299 = vand.u32 %v4298, 4294901760
    %4300 = vmatmul.mubr.f32.gmra.mrb[0].mxu0 %v4299
    %v4301 = vpop.f32.mrb[0].mxu0
    %v4302 = vadd.f32 %v4216, %v4301
    %v4303 = vpop.f32.mrb[0].mxu0
    %4304 = vmatprep.mubr.f32.mxu0 0.0
    %v4305 = vand.u32 %v3935, 4294901760
    %v4306 = vsub.f32 %v3935, %v4305
    %v4307 = vand.u32 %v4306, 4294901760
    %4308 = vmatmul.mubr.f32.gmra.mrb[0].mxu0 %v4307
    %v4309 = vpop.f32.mrb[0].mxu0
    %v4310 = vadd.f32 %v4223, %v4309
    %v4311 = vpop.f32.mrb[0].mxu0
    %4312 = vdwg.mxu0
    %4313 = vmatprep.subr.mxu0 0.0
    %v4314 = vand.u32 %v3892, 4294901760
    %v4315 = vsub.f32 %v3892, %v4314
    %v4316 = vand.u32 %v4315, 4294901760
    %4317 = vmatpush1.msra.mxu0 %v4316
    %4318 = vmatprep.subr.mxu0 0.0
    %v4319 = vand.u32 %v3893, 4294901760
    %v4320 = vsub.f32 %v3893, %v4319
    %v4321 = vand.u32 %v4320, 4294901760
    %4322 = vmatpush1.msra.mxu0 %v4321
    %4323 = vmatprep.subr.mxu0 0.0
    %v4324 = vand.u32 %v3894, 4294901760
    %v4325 = vsub.f32 %v3894, %v4324
    %v4326 = vand.u32 %v4325, 4294901760
    %4327 = vmatpush1.msra.mxu0 %v4326
    %4328 = vmatprep.subr.mxu0 0.0
    %v4329 = vand.u32 %v3895, 4294901760
    %v4330 = vsub.f32 %v3895, %v4329
    %v4331 = vand.u32 %v4330, 4294901760
    %4332 = vmatpush1.msra.mxu0 %v4331
    %4333 = vmatprep.subr.mxu0 0.0
    %v4334 = vand.u32 %v3896, 4294901760
    %v4335 = vsub.f32 %v3896, %v4334
    %v4336 = vand.u32 %v4335, 4294901760
    %4337 = vmatpush1.msra.mxu0 %v4336
    %4338 = vmatprep.subr.mxu0 0.0
    %v4339 = vand.u32 %v3897, 4294901760
    %v4340 = vsub.f32 %v3897, %v4339
    %v4341 = vand.u32 %v4340, 4294901760
    %4342 = vmatpush1.msra.mxu0 %v4341
    %4343 = vmatprep.subr.mxu0 0.0
    %4344 = vmatpush1.msra.mxu0 0.0
    %4345 = vmatprep.subr.mxu0 0.0
    %4346 = vmatpush1.msra.mxu0 0.0
    %4347 = vmatprep.subr.mxu0 0.0
    %4348 = vmatpush1.msra.mxu0 0.0
    %4349 = vmatprep.subr.mxu0 0.0
    %4350 = vmatpush1.msra.mxu0 0.0
    %4351 = vmatprep.subr.mxu0 0.0
    %4352 = vmatpush1.msra.mxu0 0.0
    %4353 = vmatprep.subr.mxu0 0.0
    %4354 = vmatpush1.msra.mxu0 0.0
    %4355 = vmatprep.subr.mxu0 0.0
    %4356 = vmatpush1.msra.mxu0 0.0
    %4357 = vmatprep.subr.mxu0 0.0
    %4358 = vmatpush1.msra.mxu0 0.0
    %4359 = vmatprep.subr.mxu0 0.0
    %4360 = vmatpush1.msra.mxu0 0.0
    %4361 = vmatprep.subr.mxu0 0.0
    %4362 = vmatpush1.msra.mxu0 0.0
    %4363 = vmatprep.subr.mxu0 0.0
    %4364 = vmatpush1.msra.mxu0 0.0
    %4365 = vmatprep.subr.mxu0 0.0
    %4366 = vmatpush1.msra.mxu0 0.0
    %4367 = vmatprep.subr.mxu0 0.0
    %4368 = vmatpush1.msra.mxu0 0.0
    %4369 = vmatprep.subr.mxu0 0.0
    %4370 = vmatpush1.msra.mxu0 0.0
    %4371 = vmatprep.subr.mxu0 0.0
    %4372 = vmatpush1.msra.mxu0 0.0
    %4373 = vmatprep.subr.mxu0 0.0
    %4374 = vmatpush1.msra.mxu0 0.0
    %4375 = vmatprep.subr.mxu0 0.0
    %4376 = vmatpush1.msra.mxu0 0.0
    %4377 = vmatprep.subr.mxu0 0.0
    %4378 = vmatpush1.msra.mxu0 0.0
    %4379 = vmatprep.subr.mxu0 0.0
    %4380 = vmatpush1.msra.mxu0 0.0
    %4381 = vmatprep.subr.mxu0 0.0
    %4382 = vmatpush1.msra.mxu0 0.0
    %4383 = vmatprep.subr.mxu0 0.0
    %4384 = vmatpush1.msra.mxu0 0.0
    %4385 = vmatprep.subr.mxu0 0.0
    %4386 = vmatpush1.msra.mxu0 0.0
    %4387 = vmatprep.subr.mxu0 0.0
    %4388 = vmatpush1.msra.mxu0 0.0
    %4389 = vmatprep.subr.mxu0 0.0
    %4390 = vmatpush1.msra.mxu0 0.0
    %4391 = vmatprep.subr.mxu0 0.0
    %4392 = vmatpush1.msra.mxu0 0.0
    %4393 = vmatprep.subr.mxu0 0.0
    %4394 = vmatpush1.msra.mxu0 0.0
    %4395 = vmatprep.mubr.f32.mxu0 0.0
    %v4396 = vand.u32 %v3932, 4294901760
    %4397 = vmatmul.mubr.f32.gmra.mrb[0].mxu0 %v4396
    %v4398 = vpop.f32.mrb[0].mxu0
    %v4399 = vadd.f32 %v4302, %v4398
    %v4400 = vpop.f32.mrb[0].mxu0
    %4401 = vmatprep.mubr.f32.mxu0 0.0
    %v4402 = vand.u32 %v3935, 4294901760
    %4403 = vmatmul.mubr.f32.gmra.mrb[0].mxu0 %v4402
    %v4404 = vpop.f32.mrb[0].mxu0
    %v4405 = vadd.f32 %v4310, %v4404
    %v4406 = vpop.f32.mrb[0].mxu0
    %4407 = vdwg.mxu0
    %4408 = vmatprep.subr.mxu0 0.0
    %v4409 = vand.u32 %v3892, 4294901760
    %4410 = vmatpush1.msra.mxu0 %v4409
    %4411 = vmatprep.subr.mxu0 0.0
    %v4412 = vand.u32 %v3893, 4294901760
    %4413 = vmatpush1.msra.mxu0 %v4412
    %4414 = vmatprep.subr.mxu0 0.0
    %v4415 = vand.u32 %v3894, 4294901760
    %4416 = vmatpush1.msra.mxu0 %v4415
    %4417 = vmatprep.subr.mxu0 0.0
    %v4418 = vand.u32 %v3895, 4294901760
    %4419 = vmatpush1.msra.mxu0 %v4418
    %4420 = vmatprep.subr.mxu0 0.0
    %v4421 = vand.u32 %v3896, 4294901760
    %4422 = vmatpush1.msra.mxu0 %v4421
    %4423 = vmatprep.subr.mxu0 0.0
    %v4424 = vand.u32 %v3897, 4294901760
    %4425 = vmatpush1.msra.mxu0 %v4424
    %4426 = vmatprep.subr.mxu0 0.0
    %4427 = vmatpush1.msra.mxu0 0.0
    %4428 = vmatprep.subr.mxu0 0.0
    %4429 = vmatpush1.msra.mxu0 0.0
    %4430 = vmatprep.subr.mxu0 0.0
    %4431 = vmatpush1.msra.mxu0 0.0
    %4432 = vmatprep.subr.mxu0 0.0
    %4433 = vmatpush1.msra.mxu0 0.0
    %4434 = vmatprep.subr.mxu0 0.0
    %4435 = vmatpush1.msra.mxu0 0.0
    %4436 = vmatprep.subr.mxu0 0.0
    %4437 = vmatpush1.msra.mxu0 0.0
    %4438 = vmatprep.subr.mxu0 0.0
    %4439 = vmatpush1.msra.mxu0 0.0
    %4440 = vmatprep.subr.mxu0 0.0
    %4441 = vmatpush1.msra.mxu0 0.0
    %4442 = vmatprep.subr.mxu0 0.0
    %4443 = vmatpush1.msra.mxu0 0.0
    %4444 = vmatprep.subr.mxu0 0.0
    %4445 = vmatpush1.msra.mxu0 0.0
    %4446 = vmatprep.subr.mxu0 0.0
    %4447 = vmatpush1.msra.mxu0 0.0
    %4448 = vmatprep.subr.mxu0 0.0
    %4449 = vmatpush1.msra.mxu0 0.0
    %4450 = vmatprep.subr.mxu0 0.0
    %4451 = vmatpush1.msra.mxu0 0.0
    %4452 = vmatprep.subr.mxu0 0.0
    %4453 = vmatpush1.msra.mxu0 0.0
    %4454 = vmatprep.subr.mxu0 0.0
    %4455 = vmatpush1.msra.mxu0 0.0
    %4456 = vmatprep.subr.mxu0 0.0
    %4457 = vmatpush1.msra.mxu0 0.0
    %4458 = vmatprep.subr.mxu0 0.0
    %4459 = vmatpush1.msra.mxu0 0.0
    %4460 = vmatprep.subr.mxu0 0.0
    %4461 = vmatpush1.msra.mxu0 0.0
    %4462 = vmatprep.subr.mxu0 0.0
    %4463 = vmatpush1.msra.mxu0 0.0
    %4464 = vmatprep.subr.mxu0 0.0
    %4465 = vmatpush1.msra.mxu0 0.0
    %4466 = vmatprep.subr.mxu0 0.0
    %4467 = vmatpush1.msra.mxu0 0.0
    %4468 = vmatprep.subr.mxu0 0.0
    %4469 = vmatpush1.msra.mxu0 0.0
    %4470 = vmatprep.subr.mxu0 0.0
    %4471 = vmatpush1.msra.mxu0 0.0
    %4472 = vmatprep.subr.mxu0 0.0
    %4473 = vmatpush1.msra.mxu0 0.0
    %4474 = vmatprep.subr.mxu0 0.0
    %4475 = vmatpush1.msra.mxu0 0.0
    %4476 = vmatprep.subr.mxu0 0.0
    %4477 = vmatpush1.msra.mxu0 0.0
    %4478 = vmatprep.mubr.f32.mxu0 0.0
    %v4479 = vand.u32 %v3932, 4294901760
    %4480 = vmatmul.mubr.f32.gmra.mrb[0].mxu0 %v4479
    %v4481 = vpop.f32.mrb[0].mxu0
    %v4482 = vadd.f32 %v4399, %v4481
    %v4483 = vpop.f32.mrb[0].mxu0
    %4484 = vmatprep.mubr.f32.mxu0 0.0
    %v4485 = vand.u32 %v3935, 4294901760
    %4486 = vmatmul.mubr.f32.gmra.mrb[0].mxu0 %v4485
    %v4487 = vpop.f32.mrb[0].mxu0
    %v4488 = vadd.f32 %v4405, %v4487
    %v4489 = vpop.f32.mrb[0].mxu0
    %4490 = vdwg.mxu0
    %v4491 = vadd.f32 %v4482, 1e-16
    %v4492 = vadd.f32 %v4488, 1e-16
    %4494 = vset.pattern.permute.xlu0 32
    %4495 = vperm.xlu0 %4494, %v4491
    %v4496 = vpop.permute.xlu0 %4495
    %4499 = vset.pattern.permute.xlu0 32
    %4500 = vperm.xlu0 %4499, %v4492
    %v4501 = vpop.permute.xlu0 %4500
    %v4503 = vrcp.pop %v4496
    %v4504 = vmul.f32 %v4482, %v4503
    %v4505 = vrcp.pop %v4501
    %v4506 = vmul.f32 %v4488, %v4505
    %v4508 = vsel %vm1229, %v4504, 0
    %v4511 = vsel %vm1229, %v4506, 0
    %4513 = vmatprep.subr.mxu0 0.0
    %v4514 = vand.u32 %v138, 4294901760
    %4515 = vmatpush1.msra.mxu0 %v4514
    %4516 = vmatprep.subr.mxu0 0.0
    %v4517 = vand.u32 %v139, 4294901760
    %4518 = vmatpush1.msra.mxu0 %v4517
    %4519 = vmatprep.subr.mxu0 0.0
    %v4520 = vand.u32 %v140, 4294901760
    %4521 = vmatpush1.msra.mxu0 %v4520
    %4522 = vmatprep.subr.mxu0 0.0
    %v4523 = vand.u32 %v141, 4294901760
    %4524 = vmatpush1.msra.mxu0 %v4523
    %4525 = vmatprep.subr.mxu0 0.0
    %4526 = vmatpush1.msra.mxu0 0.0
    %4527 = vmatprep.subr.mxu0 0.0
    %4528 = vmatpush1.msra.mxu0 0.0
    %4529 = vmatprep.subr.mxu0 0.0
    %4530 = vmatpush1.msra.mxu0 0.0
    %4531 = vmatprep.subr.mxu0 0.0
    %4532 = vmatpush1.msra.mxu0 0.0
    %4533 = vmatprep.subr.mxu0 0.0
    %4534 = vmatpush1.msra.mxu0 0.0
    %4535 = vmatprep.subr.mxu0 0.0
    %4536 = vmatpush1.msra.mxu0 0.0
    %4537 = vmatprep.subr.mxu0 0.0
    %4538 = vmatpush1.msra.mxu0 0.0
    %4539 = vmatprep.subr.mxu0 0.0
    %4540 = vmatpush1.msra.mxu0 0.0
    %4541 = vmatprep.subr.mxu0 0.0
    %4542 = vmatpush1.msra.mxu0 0.0
    %4543 = vmatprep.subr.mxu0 0.0
    %4544 = vmatpush1.msra.mxu0 0.0
    %4545 = vmatprep.subr.mxu0 0.0
    %4546 = vmatpush1.msra.mxu0 0.0
    %4547 = vmatprep.subr.mxu0 0.0
    %4548 = vmatpush1.msra.mxu0 0.0
    %4549 = vmatprep.subr.mxu0 0.0
    %4550 = vmatpush1.msra.mxu0 0.0
    %4551 = vmatprep.subr.mxu0 0.0
    %4552 = vmatpush1.msra.mxu0 0.0
    %4553 = vmatprep.subr.mxu0 0.0
    %4554 = vmatpush1.msra.mxu0 0.0
    %4555 = vmatprep.subr.mxu0 0.0
    %4556 = vmatpush1.msra.mxu0 0.0
    %4557 = vmatprep.subr.mxu0 0.0
    %4558 = vmatpush1.msra.mxu0 0.0
    %4559 = vmatprep.subr.mxu0 0.0
    %4560 = vmatpush1.msra.mxu0 0.0
    %4561 = vmatprep.subr.mxu0 0.0
    %4562 = vmatpush1.msra.mxu0 0.0
    %4563 = vmatprep.subr.mxu0 0.0
    %4564 = vmatpush1.msra.mxu0 0.0
    %4565 = vmatprep.subr.mxu0 0.0
    %4566 = vmatpush1.msra.mxu0 0.0
    %4567 = vmatprep.subr.mxu0 0.0
    %4568 = vmatpush1.msra.mxu0 0.0
    %4569 = vmatprep.subr.mxu0 0.0
    %4570 = vmatpush1.msra.mxu0 0.0
    %4571 = vmatprep.subr.mxu0 0.0
    %4572 = vmatpush1.msra.mxu0 0.0
    %4573 = vmatprep.subr.mxu0 0.0
    %4574 = vmatpush1.msra.mxu0 0.0
    %4575 = vmatprep.subr.mxu0 0.0
    %4576 = vmatpush1.msra.mxu0 0.0
    %4577 = vmatprep.subr.mxu0 0.0
    %4578 = vmatpush1.msra.mxu0 0.0
    %4579 = vmatprep.subr.mxu0 0.0
    %4580 = vmatpush1.msra.mxu0 0.0
    %4581 = vmatprep.mubr.f32.mxu0 0.0
    %v4582 = vand.u32 %v4508, 4294901760
    %v4583 = vsub.f32 %v4508, %v4582
    %v4584 = vand.u32 %v4583, 4294901760
    %v4585 = vsub.f32 %v4583, %v4584
    %v4586 = vand.u32 %v4585, 4294901760
    %4587 = vmatmul.mubr.f32.gmra.mrb[0].mxu0 %v4586
    %v4588 = vpop.f32.mrb[0].mxu0
    %v4589 = vadd.f32 0.0, %v4588
    %v4590 = vpop.f32.mrb[0].mxu0
    %4591 = vmatprep.mubr.f32.mxu0 0.0
    %v4592 = vand.u32 %v4511, 4294901760
    %v4593 = vsub.f32 %v4511, %v4592
    %v4594 = vand.u32 %v4593, 4294901760
    %v4595 = vsub.f32 %v4593, %v4594
    %v4596 = vand.u32 %v4595, 4294901760
    %4597 = vmatmul.mubr.f32.gmra.mrb[0].mxu0 %v4596
    %v4598 = vpop.f32.mrb[0].mxu0
    %v4599 = vadd.f32 0.0, %v4598
    %v4600 = vpop.f32.mrb[0].mxu0
    %4601 = vdwg.mxu0
    %4602 = vmatprep.subr.mxu0 0.0
    %v4603 = vand.u32 %v138, 4294901760
    %v4604 = vsub.f32 %v138, %v4603
    %v4605 = vand.u32 %v4604, 4294901760
    %v4606 = vsub.f32 %v4604, %v4605
    %v4607 = vand.u32 %v4606, 4294901760
    %4608 = vmatpush1.msra.mxu0 %v4607
    %4609 = vmatprep.subr.mxu0 0.0
    %v4610 = vand.u32 %v139, 4294901760
    %v4611 = vsub.f32 %v139, %v4610
    %v4612 = vand.u32 %v4611, 4294901760
    %v4613 = vsub.f32 %v4611, %v4612
    %v4614 = vand.u32 %v4613, 4294901760
    %4615 = vmatpush1.msra.mxu0 %v4614
    %4616 = vmatprep.subr.mxu0 0.0
    %v4617 = vand.u32 %v140, 4294901760
    %v4618 = vsub.f32 %v140, %v4617
    %v4619 = vand.u32 %v4618, 4294901760
    %v4620 = vsub.f32 %v4618, %v4619
    %v4621 = vand.u32 %v4620, 4294901760
    %4622 = vmatpush1.msra.mxu0 %v4621
    %4623 = vmatprep.subr.mxu0 0.0
    %v4624 = vand.u32 %v141, 4294901760
    %v4625 = vsub.f32 %v141, %v4624
    %v4626 = vand.u32 %v4625, 4294901760
    %v4627 = vsub.f32 %v4625, %v4626
    %v4628 = vand.u32 %v4627, 4294901760
    %4629 = vmatpush1.msra.mxu0 %v4628
    %4630 = vmatprep.subr.mxu0 0.0
    %4631 = vmatpush1.msra.mxu0 0.0
    %4632 = vmatprep.subr.mxu0 0.0
    %4633 = vmatpush1.msra.mxu0 0.0
    %4634 = vmatprep.subr.mxu0 0.0
    %4635 = vmatpush1.msra.mxu0 0.0
    %4636 = vmatprep.subr.mxu0 0.0
    %4637 = vmatpush1.msra.mxu0 0.0
    %4638 = vmatprep.subr.mxu0 0.0
    %4639 = vmatpush1.msra.mxu0 0.0
    %4640 = vmatprep.subr.mxu0 0.0
    %4641 = vmatpush1.msra.mxu0 0.0
    %4642 = vmatprep.subr.mxu0 0.0
    %4643 = vmatpush1.msra.mxu0 0.0
    %4644 = vmatprep.subr.mxu0 0.0
    %4645 = vmatpush1.msra.mxu0 0.0
    %4646 = vmatprep.subr.mxu0 0.0
    %4647 = vmatpush1.msra.mxu0 0.0
    %4648 = vmatprep.subr.mxu0 0.0
    %4649 = vmatpush1.msra.mxu0 0.0
    %4650 = vmatprep.subr.mxu0 0.0
    %4651 = vmatpush1.msra.mxu0 0.0
    %4652 = vmatprep.subr.mxu0 0.0
    %4653 = vmatpush1.msra.mxu0 0.0
    %4654 = vmatprep.subr.mxu0 0.0
    %4655 = vmatpush1.msra.mxu0 0.0
    %4656 = vmatprep.subr.mxu0 0.0
    %4657 = vmatpush1.msra.mxu0 0.0
    %4658 = vmatprep.subr.mxu0 0.0
    %4659 = vmatpush1.msra.mxu0 0.0
    %4660 = vmatprep.subr.mxu0 0.0
    %4661 = vmatpush1.msra.mxu0 0.0
    %4662 = vmatprep.subr.mxu0 0.0
    %4663 = vmatpush1.msra.mxu0 0.0
    %4664 = vmatprep.subr.mxu0 0.0
    %4665 = vmatpush1.msra.mxu0 0.0
    %4666 = vmatprep.subr.mxu0 0.0
    %4667 = vmatpush1.msra.mxu0 0.0
    %4668 = vmatprep.subr.mxu0 0.0
    %4669 = vmatpush1.msra.mxu0 0.0
    %4670 = vmatprep.subr.mxu0 0.0
    %4671 = vmatpush1.msra.mxu0 0.0
    %4672 = vmatprep.subr.mxu0 0.0
    %4673 = vmatpush1.msra.mxu0 0.0
    %4674 = vmatprep.subr.mxu0 0.0
    %4675 = vmatpush1.msra.mxu0 0.0
    %4676 = vmatprep.subr.mxu0 0.0
    %4677 = vmatpush1.msra.mxu0 0.0
    %4678 = vmatprep.subr.mxu0 0.0
    %4679 = vmatpush1.msra.mxu0 0.0
    %4680 = vmatprep.subr.mxu0 0.0
    %4681 = vmatpush1.msra.mxu0 0.0
    %4682 = vmatprep.subr.mxu0 0.0
    %4683 = vmatpush1.msra.mxu0 0.0
    %4684 = vmatprep.subr.mxu0 0.0
    %4685 = vmatpush1.msra.mxu0 0.0
    %4686 = vmatprep.mubr.f32.mxu0 0.0
    %v4687 = vand.u32 %v4508, 4294901760
    %4688 = vmatmul.mubr.f32.gmra.mrb[0].mxu0 %v4687
    %v4689 = vpop.f32.mrb[0].mxu0
    %v4690 = vadd.f32 %v4589, %v4689
    %v4691 = vpop.f32.mrb[0].mxu0
    %4692 = vmatprep.mubr.f32.mxu0 0.0
    %v4693 = vand.u32 %v4511, 4294901760
    %4694 = vmatmul.mubr.f32.gmra.mrb[0].mxu0 %v4693
    %v4695 = vpop.f32.mrb[0].mxu0
    %v4696 = vadd.f32 %v4599, %v4695
    %v4697 = vpop.f32.mrb[0].mxu0
    %4698 = vdwg.mxu0
    %4699 = vmatprep.subr.mxu0 0.0
    %v4700 = vand.u32 %v138, 4294901760
    %v4701 = vsub.f32 %v138, %v4700
    %4702 = vmatpush1.msra.mxu0 %v4701
    %4703 = vmatprep.subr.mxu0 0.0
    %v4704 = vand.u32 %v139, 4294901760
    %v4705 = vsub.f32 %v139, %v4704
    %4706 = vmatpush1.msra.mxu0 %v4705
    %4707 = vmatprep.subr.mxu0 0.0
    %v4708 = vand.u32 %v140, 4294901760
    %v4709 = vsub.f32 %v140, %v4708
    %4710 = vmatpush1.msra.mxu0 %v4709
    %4711 = vmatprep.subr.mxu0 0.0
    %v4712 = vand.u32 %v141, 4294901760
    %v4713 = vsub.f32 %v141, %v4712
    %4714 = vmatpush1.msra.mxu0 %v4713
    %4715 = vmatprep.subr.mxu0 0.0
    %4716 = vmatpush1.msra.mxu0 0.0
    %4717 = vmatprep.subr.mxu0 0.0
    %4718 = vmatpush1.msra.mxu0 0.0
    %4719 = vmatprep.subr.mxu0 0.0
    %4720 = vmatpush1.msra.mxu0 0.0
    %4721 = vmatprep.subr.mxu0 0.0
    %4722 = vmatpush1.msra.mxu0 0.0
    %4723 = vmatprep.subr.mxu0 0.0
    %4724 = vmatpush1.msra.mxu0 0.0
    %4725 = vmatprep.subr.mxu0 0.0
    %4726 = vmatpush1.msra.mxu0 0.0
    %4727 = vmatprep.subr.mxu0 0.0
    %4728 = vmatpush1.msra.mxu0 0.0
    %4729 = vmatprep.subr.mxu0 0.0
    %4730 = vmatpush1.msra.mxu0 0.0
    %4731 = vmatprep.subr.mxu0 0.0
    %4732 = vmatpush1.msra.mxu0 0.0
    %4733 = vmatprep.subr.mxu0 0.0
    %4734 = vmatpush1.msra.mxu0 0.0
    %4735 = vmatprep.subr.mxu0 0.0
    %4736 = vmatpush1.msra.mxu0 0.0
    %4737 = vmatprep.subr.mxu0 0.0
    %4738 = vmatpush1.msra.mxu0 0.0
    %4739 = vmatprep.subr.mxu0 0.0
    %4740 = vmatpush1.msra.mxu0 0.0
    %4741 = vmatprep.subr.mxu0 0.0
    %4742 = vmatpush1.msra.mxu0 0.0
    %4743 = vmatprep.subr.mxu0 0.0
    %4744 = vmatpush1.msra.mxu0 0.0
    %4745 = vmatprep.subr.mxu0 0.0
    %4746 = vmatpush1.msra.mxu0 0.0
    %4747 = vmatprep.subr.mxu0 0.0
    %4748 = vmatpush1.msra.mxu0 0.0
    %4749 = vmatprep.subr.mxu0 0.0
    %4750 = vmatpush1.msra.mxu0 0.0
    %4751 = vmatprep.subr.mxu0 0.0
    %4752 = vmatpush1.msra.mxu0 0.0
    %4753 = vmatprep.subr.mxu0 0.0
    %4754 = vmatpush1.msra.mxu0 0.0
    %4755 = vmatprep.subr.mxu0 0.0
    %4756 = vmatpush1.msra.mxu0 0.0
    %4757 = vmatprep.subr.mxu0 0.0
    %4758 = vmatpush1.msra.mxu0 0.0
    %4759 = vmatprep.subr.mxu0 0.0
    %4760 = vmatpush1.msra.mxu0 0.0
    %4761 = vmatprep.subr.mxu0 0.0
    %4762 = vmatpush1.msra.mxu0 0.0
    %4763 = vmatprep.subr.mxu0 0.0
    %4764 = vmatpush1.msra.mxu0 0.0
    %4765 = vmatprep.subr.mxu0 0.0
    %4766 = vmatpush1.msra.mxu0 0.0
    %4767 = vmatprep.subr.mxu0 0.0
    %4768 = vmatpush1.msra.mxu0 0.0
    %4769 = vmatprep.subr.mxu0 0.0
    %4770 = vmatpush1.msra.mxu0 0.0
    %4771 = vmatprep.mubr.f32.mxu0 0.0
    %v4772 = vand.u32 %v4508, 4294901760
    %v4773 = vsub.f32 %v4508, %v4772
    %4774 = vmatmul.mubr.f32.gmra.mrb[0].mxu0 %v4773
    %v4775 = vpop.f32.mrb[0].mxu0
    %v4776 = vadd.f32 %v4690, %v4775
    %v4777 = vpop.f32.mrb[0].mxu0
    %4778 = vmatprep.mubr.f32.mxu0 0.0
    %v4779 = vand.u32 %v4511, 4294901760
    %v4780 = vsub.f32 %v4511, %v4779
    %4781 = vmatmul.mubr.f32.gmra.mrb[0].mxu0 %v4780
    %v4782 = vpop.f32.mrb[0].mxu0
    %v4783 = vadd.f32 %v4696, %v4782
    %v4784 = vpop.f32.mrb[0].mxu0
    %4785 = vdwg.mxu0
    %4786 = vmatprep.subr.mxu0 0.0
    %v4787 = vand.u32 %v138, 4294901760
    %4788 = vmatpush1.msra.mxu0 %v4787
    %4789 = vmatprep.subr.mxu0 0.0
    %v4790 = vand.u32 %v139, 4294901760
    %4791 = vmatpush1.msra.mxu0 %v4790
    %4792 = vmatprep.subr.mxu0 0.0
    %v4793 = vand.u32 %v140, 4294901760
    %4794 = vmatpush1.msra.mxu0 %v4793
    %4795 = vmatprep.subr.mxu0 0.0
    %v4796 = vand.u32 %v141, 4294901760
    %4797 = vmatpush1.msra.mxu0 %v4796
    %4798 = vmatprep.subr.mxu0 0.0
    %4799 = vmatpush1.msra.mxu0 0.0
    %4800 = vmatprep.subr.mxu0 0.0
    %4801 = vmatpush1.msra.mxu0 0.0
    %4802 = vmatprep.subr.mxu0 0.0
    %4803 = vmatpush1.msra.mxu0 0.0
    %4804 = vmatprep.subr.mxu0 0.0
    %4805 = vmatpush1.msra.mxu0 0.0
    %4806 = vmatprep.subr.mxu0 0.0
    %4807 = vmatpush1.msra.mxu0 0.0
    %4808 = vmatprep.subr.mxu0 0.0
    %4809 = vmatpush1.msra.mxu0 0.0
    %4810 = vmatprep.subr.mxu0 0.0
    %4811 = vmatpush1.msra.mxu0 0.0
    %4812 = vmatprep.subr.mxu0 0.0
    %4813 = vmatpush1.msra.mxu0 0.0
    %4814 = vmatprep.subr.mxu0 0.0
    %4815 = vmatpush1.msra.mxu0 0.0
    %4816 = vmatprep.subr.mxu0 0.0
    %4817 = vmatpush1.msra.mxu0 0.0
    %4818 = vmatprep.subr.mxu0 0.0
    %4819 = vmatpush1.msra.mxu0 0.0
    %4820 = vmatprep.subr.mxu0 0.0
    %4821 = vmatpush1.msra.mxu0 0.0
    %4822 = vmatprep.subr.mxu0 0.0
    %4823 = vmatpush1.msra.mxu0 0.0
    %4824 = vmatprep.subr.mxu0 0.0
    %4825 = vmatpush1.msra.mxu0 0.0
    %4826 = vmatprep.subr.mxu0 0.0
    %4827 = vmatpush1.msra.mxu0 0.0
    %4828 = vmatprep.subr.mxu0 0.0
    %4829 = vmatpush1.msra.mxu0 0.0
    %4830 = vmatprep.subr.mxu0 0.0
    %4831 = vmatpush1.msra.mxu0 0.0
    %4832 = vmatprep.subr.mxu0 0.0
    %4833 = vmatpush1.msra.mxu0 0.0
    %4834 = vmatprep.subr.mxu0 0.0
    %4835 = vmatpush1.msra.mxu0 0.0
    %4836 = vmatprep.subr.mxu0 0.0
    %4837 = vmatpush1.msra.mxu0 0.0
    %4838 = vmatprep.subr.mxu0 0.0
    %4839 = vmatpush1.msra.mxu0 0.0
    %4840 = vmatprep.subr.mxu0 0.0
    %4841 = vmatpush1.msra.mxu0 0.0
    %4842 = vmatprep.subr.mxu0 0.0
    %4843 = vmatpush1.msra.mxu0 0.0
    %4844 = vmatprep.subr.mxu0 0.0
    %4845 = vmatpush1.msra.mxu0 0.0
    %4846 = vmatprep.subr.mxu0 0.0
    %4847 = vmatpush1.msra.mxu0 0.0
    %4848 = vmatprep.subr.mxu0 0.0
    %4849 = vmatpush1.msra.mxu0 0.0
    %4850 = vmatprep.subr.mxu0 0.0
    %4851 = vmatpush1.msra.mxu0 0.0
    %4852 = vmatprep.subr.mxu0 0.0
    %4853 = vmatpush1.msra.mxu0 0.0
    %4854 = vmatprep.mubr.f32.mxu0 0.0
    %v4855 = vand.u32 %v4508, 4294901760
    %v4856 = vsub.f32 %v4508, %v4855
    %v4857 = vand.u32 %v4856, 4294901760
    %4858 = vmatmul.mubr.f32.gmra.mrb[0].mxu0 %v4857
    %v4859 = vpop.f32.mrb[0].mxu0
    %v4860 = vadd.f32 %v4776, %v4859
    %v4861 = vpop.f32.mrb[0].mxu0
    %4862 = vmatprep.mubr.f32.mxu0 0.0
    %v4863 = vand.u32 %v4511, 4294901760
    %v4864 = vsub.f32 %v4511, %v4863
    %v4865 = vand.u32 %v4864, 4294901760
    %4866 = vmatmul.mubr.f32.gmra.mrb[0].mxu0 %v4865
    %v4867 = vpop.f32.mrb[0].mxu0
    %v4868 = vadd.f32 %v4783, %v4867
    %v4869 = vpop.f32.mrb[0].mxu0
    %4870 = vdwg.mxu0
    %4871 = vmatprep.subr.mxu0 0.0
    %v4872 = vand.u32 %v138, 4294901760
    %v4873 = vsub.f32 %v138, %v4872
    %v4874 = vand.u32 %v4873, 4294901760
    %4875 = vmatpush1.msra.mxu0 %v4874
    %4876 = vmatprep.subr.mxu0 0.0
    %v4877 = vand.u32 %v139, 4294901760
    %v4878 = vsub.f32 %v139, %v4877
    %v4879 = vand.u32 %v4878, 4294901760
    %4880 = vmatpush1.msra.mxu0 %v4879
    %4881 = vmatprep.subr.mxu0 0.0
    %v4882 = vand.u32 %v140, 4294901760
    %v4883 = vsub.f32 %v140, %v4882
    %v4884 = vand.u32 %v4883, 4294901760
    %4885 = vmatpush1.msra.mxu0 %v4884
    %4886 = vmatprep.subr.mxu0 0.0
    %v4887 = vand.u32 %v141, 4294901760
    %v4888 = vsub.f32 %v141, %v4887
    %v4889 = vand.u32 %v4888, 4294901760
    %4890 = vmatpush1.msra.mxu0 %v4889
    %4891 = vmatprep.subr.mxu0 0.0
    %4892 = vmatpush1.msra.mxu0 0.0
    %4893 = vmatprep.subr.mxu0 0.0
    %4894 = vmatpush1.msra.mxu0 0.0
    %4895 = vmatprep.subr.mxu0 0.0
    %4896 = vmatpush1.msra.mxu0 0.0
    %4897 = vmatprep.subr.mxu0 0.0
    %4898 = vmatpush1.msra.mxu0 0.0
    %4899 = vmatprep.subr.mxu0 0.0
    %4900 = vmatpush1.msra.mxu0 0.0
    %4901 = vmatprep.subr.mxu0 0.0
    %4902 = vmatpush1.msra.mxu0 0.0
    %4903 = vmatprep.subr.mxu0 0.0
    %4904 = vmatpush1.msra.mxu0 0.0
    %4905 = vmatprep.subr.mxu0 0.0
    %4906 = vmatpush1.msra.mxu0 0.0
    %4907 = vmatprep.subr.mxu0 0.0
    %4908 = vmatpush1.msra.mxu0 0.0
    %4909 = vmatprep.subr.mxu0 0.0
    %4910 = vmatpush1.msra.mxu0 0.0
    %4911 = vmatprep.subr.mxu0 0.0
    %4912 = vmatpush1.msra.mxu0 0.0
    %4913 = vmatprep.subr.mxu0 0.0
    %4914 = vmatpush1.msra.mxu0 0.0
    %4915 = vmatprep.subr.mxu0 0.0
    %4916 = vmatpush1.msra.mxu0 0.0
    %4917 = vmatprep.subr.mxu0 0.0
    %4918 = vmatpush1.msra.mxu0 0.0
    %4919 = vmatprep.subr.mxu0 0.0
    %4920 = vmatpush1.msra.mxu0 0.0
    %4921 = vmatprep.subr.mxu0 0.0
    %4922 = vmatpush1.msra.mxu0 0.0
    %4923 = vmatprep.subr.mxu0 0.0
    %4924 = vmatpush1.msra.mxu0 0.0
    %4925 = vmatprep.subr.mxu0 0.0
    %4926 = vmatpush1.msra.mxu0 0.0
    %4927 = vmatprep.subr.mxu0 0.0
    %4928 = vmatpush1.msra.mxu0 0.0
    %4929 = vmatprep.subr.mxu0 0.0
    %4930 = vmatpush1.msra.mxu0 0.0
    %4931 = vmatprep.subr.mxu0 0.0
    %4932 = vmatpush1.msra.mxu0 0.0
    %4933 = vmatprep.subr.mxu0 0.0
    %4934 = vmatpush1.msra.mxu0 0.0
    %4935 = vmatprep.subr.mxu0 0.0
    %4936 = vmatpush1.msra.mxu0 0.0
    %4937 = vmatprep.subr.mxu0 0.0
    %4938 = vmatpush1.msra.mxu0 0.0
    %4939 = vmatprep.subr.mxu0 0.0
    %4940 = vmatpush1.msra.mxu0 0.0
    %4941 = vmatprep.subr.mxu0 0.0
    %4942 = vmatpush1.msra.mxu0 0.0
    %4943 = vmatprep.subr.mxu0 0.0
    %4944 = vmatpush1.msra.mxu0 0.0
    %4945 = vmatprep.subr.mxu0 0.0
    %4946 = vmatpush1.msra.mxu0 0.0
    %4947 = vmatprep.mubr.f32.mxu0 0.0
    %v4948 = vand.u32 %v4508, 4294901760
    %4949 = vmatmul.mubr.f32.gmra.mrb[0].mxu0 %v4948
    %v4950 = vpop.f32.mrb[0].mxu0
    %v4951 = vadd.f32 %v4860, %v4950
    %v4952 = vpop.f32.mrb[0].mxu0
    %4953 = vmatprep.mubr.f32.mxu0 0.0
    %v4954 = vand.u32 %v4511, 4294901760
    %4955 = vmatmul.mubr.f32.gmra.mrb[0].mxu0 %v4954
    %v4956 = vpop.f32.mrb[0].mxu0
    %v4957 = vadd.f32 %v4868, %v4956
    %v4958 = vpop.f32.mrb[0].mxu0
    %4959 = vdwg.mxu0
    %4960 = vmatprep.subr.mxu0 0.0
    %v4961 = vand.u32 %v138, 4294901760
    %4962 = vmatpush1.msra.mxu0 %v4961
    %4963 = vmatprep.subr.mxu0 0.0
    %v4964 = vand.u32 %v139, 4294901760
    %4965 = vmatpush1.msra.mxu0 %v4964
    %4966 = vmatprep.subr.mxu0 0.0
    %v4967 = vand.u32 %v140, 4294901760
    %4968 = vmatpush1.msra.mxu0 %v4967
    %4969 = vmatprep.subr.mxu0 0.0
    %v4970 = vand.u32 %v141, 4294901760
    %4971 = vmatpush1.msra.mxu0 %v4970
    %4972 = vmatprep.subr.mxu0 0.0
    %4973 = vmatpush1.msra.mxu0 0.0
    %4974 = vmatprep.subr.mxu0 0.0
    %4975 = vmatpush1.msra.mxu0 0.0
    %4976 = vmatprep.subr.mxu0 0.0
    %4977 = vmatpush1.msra.mxu0 0.0
    %4978 = vmatprep.subr.mxu0 0.0
    %4979 = vmatpush1.msra.mxu0 0.0
    %4980 = vmatprep.subr.mxu0 0.0
    %4981 = vmatpush1.msra.mxu0 0.0
    %4982 = vmatprep.subr.mxu0 0.0
    %4983 = vmatpush1.msra.mxu0 0.0
    %4984 = vmatprep.subr.mxu0 0.0
    %4985 = vmatpush1.msra.mxu0 0.0
    %4986 = vmatprep.subr.mxu0 0.0
    %4987 = vmatpush1.msra.mxu0 0.0
    %4988 = vmatprep.subr.mxu0 0.0
    %4989 = vmatpush1.msra.mxu0 0.0
    %4990 = vmatprep.subr.mxu0 0.0
    %4991 = vmatpush1.msra.mxu0 0.0
    %4992 = vmatprep.subr.mxu0 0.0
    %4993 = vmatpush1.msra.mxu0 0.0
    %4994 = vmatprep.subr.mxu0 0.0
    %4995 = vmatpush1.msra.mxu0 0.0
    %4996 = vmatprep.subr.mxu0 0.0
    %4997 = vmatpush1.msra.mxu0 0.0
    %4998 = vmatprep.subr.mxu0 0.0
    %4999 = vmatpush1.msra.mxu0 0.0
    %5000 = vmatprep.subr.mxu0 0.0
    %5001 = vmatpush1.msra.mxu0 0.0
    %5002 = vmatprep.subr.mxu0 0.0
    %5003 = vmatpush1.msra.mxu0 0.0
    %5004 = vmatprep.subr.mxu0 0.0
    %5005 = vmatpush1.msra.mxu0 0.0
    %5006 = vmatprep.subr.mxu0 0.0
    %5007 = vmatpush1.msra.mxu0 0.0
    %5008 = vmatprep.subr.mxu0 0.0
    %5009 = vmatpush1.msra.mxu0 0.0
    %5010 = vmatprep.subr.mxu0 0.0
    %5011 = vmatpush1.msra.mxu0 0.0
    %5012 = vmatprep.subr.mxu0 0.0
    %5013 = vmatpush1.msra.mxu0 0.0
    %5014 = vmatprep.subr.mxu0 0.0
    %5015 = vmatpush1.msra.mxu0 0.0
    %5016 = vmatprep.subr.mxu0 0.0
    %5017 = vmatpush1.msra.mxu0 0.0
    %5018 = vmatprep.subr.mxu0 0.0
    %5019 = vmatpush1.msra.mxu0 0.0
    %5020 = vmatprep.subr.mxu0 0.0
    %5021 = vmatpush1.msra.mxu0 0.0
    %5022 = vmatprep.subr.mxu0 0.0
    %5023 = vmatpush1.msra.mxu0 0.0
    %5024 = vmatprep.subr.mxu0 0.0
    %5025 = vmatpush1.msra.mxu0 0.0
    %5026 = vmatprep.subr.mxu0 0.0
    %5027 = vmatpush1.msra.mxu0 0.0
    %5028 = vmatprep.mubr.f32.mxu0 0.0
    %v5029 = vand.u32 %v4508, 4294901760
    %5030 = vmatmul.mubr.f32.gmra.mrb[0].mxu0 %v5029
    %v5031 = vpop.f32.mrb[0].mxu0
    %v5032 = vadd.f32 %v4951, %v5031
    %v5033 = vpop.f32.mrb[0].mxu0
    %5034 = vmatprep.mubr.f32.mxu0 0.0
    %v5035 = vand.u32 %v4511, 4294901760
    %5036 = vmatmul.mubr.f32.gmra.mrb[0].mxu0 %v5035
    %v5037 = vpop.f32.mrb[0].mxu0
    %v5038 = vadd.f32 %v4957, %v5037
    %v5039 = vpop.f32.mrb[0].mxu0
    %5040 = vdwg.mxu0
    %v5041 = vmul.f32 %v1194, %v5032
    %v5042 = vmul.f32 %v1199, %v5038
    %v5043 = vadd.f32 %v5041, 0.0
    %v5044 = vadd.f32 %v5042, 0.0
    %v5045 = vmul.f32 %v1207, %v5032
    %v5046 = vmul.f32 %v1211, %v5038
    %5049 = vrot.lane.b32.xlu0 %v5045, 96
    %v5050 = vpop.permute.xlu0 %5049
    %5051 = vrot.lane.b32.xlu0 %v5046, 96
    %v5052 = vpop.permute.xlu0 %5051
    %v5055 = vadd.f32 %v5043, %v5050
    %v5056 = vadd.f32 %v5044, %v5052
    %v5057 = vmul.f32 %v1238, %v5032
    %v5058 = vmul.f32 %v1242, %v5038
    %5061 = vrot.lane.b32.xlu0 %v5057, 64
    %v5062 = vpop.permute.xlu0 %5061
    %5063 = vrot.lane.b32.xlu0 %v5058, 64
    %v5064 = vpop.permute.xlu0 %5063
    %v5067 = vadd.f32 %v5055, %v5062
    %v5068 = vadd.f32 %v5056, %v5064
    %v5069 = vld [vmem:[%s8] sm:$0xff]
    %v5070 = vld [vmem:[%s8 + $0x8] sm:$0xff]
    %v5071 = vld [vmem:[%s8 + $0x10] sm:$0xff]
    %v5072 = vld [vmem:[%s8 + $0x18] sm:$0xff]
    %v5073 = vld [vmem:[%s8 + $0x20] sm:$0xff]
    %v5074 = vld [vmem:[%s8 + $0x28] sm:$0xff]
    %v5075 = vld [vmem:[%s8 + $0x30] sm:$0xff]
    %v5076 = vld [vmem:[%s8 + $0x38] sm:$0xff]
    %v5077 = vld [vmem:[#allocation7] sm:$0xff]
    %v5078 = vld [vmem:[#allocation7 + $0x8] sm:$0xff]
    %v5079 = vld [vmem:[#allocation7 + $0x10] sm:$0xff]
    %v5080 = vld [vmem:[#allocation7 + $0x18] sm:$0xff]
    %v5081 = vld [vmem:[#allocation8] sm:$0xff]
    %v5082 = vld [vmem:[#allocation8 + $0x8] sm:$0xff]
    %v5084 = vsel %vm1229, %v5067, 0
    %v5087 = vsel %vm1229, %v5068, 0
    %v5089 = vand.u32 %v5070, 4294901760
    %5090 = vmatprep.subr.mxu0 %v5089
    %v5091 = vand.u32 %v5069, 4294901760
    %5092 = vmatpush1.msra.mxu0 %v5091
    %v5093 = vand.u32 %v5072, 4294901760
    %5094 = vmatprep.subr.mxu0 %v5093
    %v5095 = vand.u32 %v5071, 4294901760
    %5096 = vmatpush1.msra.mxu0 %v5095
    %v5097 = vand.u32 %v5074, 4294901760
    %5098 = vmatprep.subr.mxu0 %v5097
    %v5099 = vand.u32 %v5073, 4294901760
    %5100 = vmatpush1.msra.mxu0 %v5099
    %v5101 = vand.u32 %v5076, 4294901760
    %5102 = vmatprep.subr.mxu0 %v5101
    %v5103 = vand.u32 %v5075, 4294901760
    %5104 = vmatpush1.msra.mxu0 %v5103
    %5105 = vmatprep.subr.mxu0 0.0
    %5106 = vmatpush1.msra.mxu0 0.0
    %5107 = vmatprep.subr.mxu0 0.0
    %5108 = vmatpush1.msra.mxu0 0.0
    %5109 = vmatprep.subr.mxu0 0.0
    %5110 = vmatpush1.msra.mxu0 0.0
    %5111 = vmatprep.subr.mxu0 0.0
    %5112 = vmatpush1.msra.mxu0 0.0
    %5113 = vmatprep.subr.mxu0 0.0
    %5114 = vmatpush1.msra.mxu0 0.0
    %5115 = vmatprep.subr.mxu0 0.0
    %5116 = vmatpush1.msra.mxu0 0.0
    %5117 = vmatprep.subr.mxu0 0.0
    %5118 = vmatpush1.msra.mxu0 0.0
    %5119 = vmatprep.subr.mxu0 0.0
    %5120 = vmatpush1.msra.mxu0 0.0
    %5121 = vmatprep.subr.mxu0 0.0
    %5122 = vmatpush1.msra.mxu0 0.0
    %5123 = vmatprep.subr.mxu0 0.0
    %5124 = vmatpush1.msra.mxu0 0.0
    %5125 = vmatprep.subr.mxu0 0.0
    %5126 = vmatpush1.msra.mxu0 0.0
    %5127 = vmatprep.subr.mxu0 0.0
    %5128 = vmatpush1.msra.mxu0 0.0
    %5129 = vmatprep.subr.mxu0 0.0
    %5130 = vmatpush1.msra.mxu0 0.0
    %5131 = vmatprep.subr.mxu0 0.0
    %5132 = vmatpush1.msra.mxu0 0.0
    %5133 = vmatprep.subr.mxu0 0.0
    %5134 = vmatpush1.msra.mxu0 0.0
    %5135 = vmatprep.subr.mxu0 0.0
    %5136 = vmatpush1.msra.mxu0 0.0
    %5137 = vmatprep.subr.mxu0 0.0
    %5138 = vmatpush1.msra.mxu0 0.0
    %5139 = vmatprep.subr.mxu0 0.0
    %5140 = vmatpush1.msra.mxu0 0.0
    %5141 = vmatprep.subr.mxu0 0.0
    %5142 = vmatpush1.msra.mxu0 0.0
    %5143 = vmatprep.subr.mxu0 0.0
    %5144 = vmatpush1.msra.mxu0 0.0
    %5145 = vmatprep.subr.mxu0 0.0
    %5146 = vmatpush1.msra.mxu0 0.0
    %5147 = vmatprep.subr.mxu0 0.0
    %5148 = vmatpush1.msra.mxu0 0.0
    %5149 = vmatprep.subr.mxu0 0.0
    %5150 = vmatpush1.msra.mxu0 0.0
    %5151 = vmatprep.subr.mxu0 0.0
    %5152 = vmatpush1.msra.mxu0 0.0
    %5153 = vmatprep.subr.mxu0 0.0
    %5154 = vmatpush1.msra.mxu0 0.0
    %5155 = vmatprep.subr.mxu0 0.0
    %5156 = vmatpush1.msra.mxu0 0.0
    %5157 = vmatprep.subr.mxu0 0.0
    %5158 = vmatpush1.msra.mxu0 0.0
    %5159 = vmatprep.subr.mxu0 0.0
    %5160 = vmatpush1.msra.mxu0 0.0
    %5161 = vmatprep.mubr.f32.mxu0 0.0
    %v5162 = vand.u32 %v5084, 4294901760
    %v5163 = vsub.f32 %v5084, %v5162
    %v5164 = vand.u32 %v5163, 4294901760
    %v5165 = vsub.f32 %v5163, %v5164
    %v5166 = vand.u32 %v5165, 4294901760
    %5167 = vmatmul.mubr.f32.gmra.mrb[0].mxu0 %v5166
    %v5168 = vpop.f32.mrb[0].mxu0
    %v5169 = vadd.f32 0.0, %v5168
    %v5170 = vpop.f32.mrb[0].mxu0
    %v5171 = vadd.f32 0.0, %v5170
    %5172 = vmatprep.mubr.f32.mxu0 0.0
    %v5173 = vand.u32 %v5087, 4294901760
    %v5174 = vsub.f32 %v5087, %v5173
    %v5175 = vand.u32 %v5174, 4294901760
    %v5176 = vsub.f32 %v5174, %v5175
    %v5177 = vand.u32 %v5176, 4294901760
    %5178 = vmatmul.mubr.f32.gmra.mrb[0].mxu0 %v5177
    %v5179 = vpop.f32.mrb[0].mxu0
    %v5180 = vadd.f32 0.0, %v5179
    %v5181 = vpop.f32.mrb[0].mxu0
    %v5182 = vadd.f32 0.0, %v5181
    %5183 = vdwg.mxu0
    %v5184 = vand.u32 %v5070, 4294901760
    %v5185 = vsub.f32 %v5070, %v5184
    %v5186 = vand.u32 %v5185, 4294901760
    %v5187 = vsub.f32 %v5185, %v5186
    %v5188 = vand.u32 %v5187, 4294901760
    %5189 = vmatprep.subr.mxu0 %v5188
    %v5190 = vand.u32 %v5069, 4294901760
    %v5191 = vsub.f32 %v5069, %v5190
    %v5192 = vand.u32 %v5191, 4294901760
    %v5193 = vsub.f32 %v5191, %v5192
    %v5194 = vand.u32 %v5193, 4294901760
    %5195 = vmatpush1.msra.mxu0 %v5194
    %v5196 = vand.u32 %v5072, 4294901760
    %v5197 = vsub.f32 %v5072, %v5196
    %v5198 = vand.u32 %v5197, 4294901760
    %v5199 = vsub.f32 %v5197, %v5198
    %v5200 = vand.u32 %v5199, 4294901760
    %5201 = vmatprep.subr.mxu0 %v5200
    %v5202 = vand.u32 %v5071, 4294901760
    %v5203 = vsub.f32 %v5071, %v5202
    %v5204 = vand.u32 %v5203, 4294901760
    %v5205 = vsub.f32 %v5203, %v5204
    %v5206 = vand.u32 %v5205, 4294901760
    %5207 = vmatpush1.msra.mxu0 %v5206
    %v5208 = vand.u32 %v5074, 4294901760
    %v5209 = vsub.f32 %v5074, %v5208
    %v5210 = vand.u32 %v5209, 4294901760
    %v5211 = vsub.f32 %v5209, %v5210
    %v5212 = vand.u32 %v5211, 4294901760
    %5213 = vmatprep.subr.mxu0 %v5212
    %v5214 = vand.u32 %v5073, 4294901760
    %v5215 = vsub.f32 %v5073, %v5214
    %v5216 = vand.u32 %v5215, 4294901760
    %v5217 = vsub.f32 %v5215, %v5216
    %v5218 = vand.u32 %v5217, 4294901760
    %5219 = vmatpush1.msra.mxu0 %v5218
    %v5220 = vand.u32 %v5076, 4294901760
    %v5221 = vsub.f32 %v5076, %v5220
    %v5222 = vand.u32 %v5221, 4294901760
    %v5223 = vsub.f32 %v5221, %v5222
    %v5224 = vand.u32 %v5223, 4294901760
    %5225 = vmatprep.subr.mxu0 %v5224
    %v5226 = vand.u32 %v5075, 4294901760
    %v5227 = vsub.f32 %v5075, %v5226
    %v5228 = vand.u32 %v5227, 4294901760
    %v5229 = vsub.f32 %v5227, %v5228
    %v5230 = vand.u32 %v5229, 4294901760
    %5231 = vmatpush1.msra.mxu0 %v5230
    %5232 = vmatprep.subr.mxu0 0.0
    %5233 = vmatpush1.msra.mxu0 0.0
    %5234 = vmatprep.subr.mxu0 0.0
    %5235 = vmatpush1.msra.mxu0 0.0
    %5236 = vmatprep.subr.mxu0 0.0
    %5237 = vmatpush1.msra.mxu0 0.0
    %5238 = vmatprep.subr.mxu0 0.0
    %5239 = vmatpush1.msra.mxu0 0.0
    %5240 = vmatprep.subr.mxu0 0.0
    %5241 = vmatpush1.msra.mxu0 0.0
    %5242 = vmatprep.subr.mxu0 0.0
    %5243 = vmatpush1.msra.mxu0 0.0
    %5244 = vmatprep.subr.mxu0 0.0
    %5245 = vmatpush1.msra.mxu0 0.0
    %5246 = vmatprep.subr.mxu0 0.0
    %5247 = vmatpush1.msra.mxu0 0.0
    %5248 = vmatprep.subr.mxu0 0.0
    %5249 = vmatpush1.msra.mxu0 0.0
    %5250 = vmatprep.subr.mxu0 0.0
    %5251 = vmatpush1.msra.mxu0 0.0
    %5252 = vmatprep.subr.mxu0 0.0
    %5253 = vmatpush1.msra.mxu0 0.0
    %5254 = vmatprep.subr.mxu0 0.0
    %5255 = vmatpush1.msra.mxu0 0.0
    %5256 = vmatprep.subr.mxu0 0.0
    %5257 = vmatpush1.msra.mxu0 0.0
    %5258 = vmatprep.subr.mxu0 0.0
    %5259 = vmatpush1.msra.mxu0 0.0
    %5260 = vmatprep.subr.mxu0 0.0
    %5261 = vmatpush1.msra.mxu0 0.0
    %5262 = vmatprep.subr.mxu0 0.0
    %5263 = vmatpush1.msra.mxu0 0.0
    %5264 = vmatprep.subr.mxu0 0.0
    %5265 = vmatpush1.msra.mxu0 0.0
    %5266 = vmatprep.subr.mxu0 0.0
    %5267 = vmatpush1.msra.mxu0 0.0
    %5268 = vmatprep.subr.mxu0 0.0
    %5269 = vmatpush1.msra.mxu0 0.0
    %5270 = vmatprep.subr.mxu0 0.0
    %5271 = vmatpush1.msra.mxu0 0.0
    %5272 = vmatprep.subr.mxu0 0.0
    %5273 = vmatpush1.msra.mxu0 0.0
    %5274 = vmatprep.subr.mxu0 0.0
    %5275 = vmatpush1.msra.mxu0 0.0
    %5276 = vmatprep.subr.mxu0 0.0
    %5277 = vmatpush1.msra.mxu0 0.0
    %5278 = vmatprep.subr.mxu0 0.0
    %5279 = vmatpush1.msra.mxu0 0.0
    %5280 = vmatprep.subr.mxu0 0.0
    %5281 = vmatpush1.msra.mxu0 0.0
    %5282 = vmatprep.subr.mxu0 0.0
    %5283 = vmatpush1.msra.mxu0 0.0
    %5284 = vmatprep.subr.mxu0 0.0
    %5285 = vmatpush1.msra.mxu0 0.0
    %5286 = vmatprep.subr.mxu0 0.0
    %5287 = vmatpush1.msra.mxu0 0.0
    %5288 = vmatprep.mubr.f32.mxu0 0.0
    %v5289 = vand.u32 %v5084, 4294901760
    %5290 = vmatmul.mubr.f32.gmra.mrb[0].mxu0 %v5289
    %v5291 = vpop.f32.mrb[0].mxu0
    %v5292 = vadd.f32 %v5169, %v5291
    %v5293 = vpop.f32.mrb[0].mxu0
    %v5294 = vadd.f32 %v5171, %v5293
    %5295 = vmatprep.mubr.f32.mxu0 0.0
    %v5296 = vand.u32 %v5087, 4294901760
    %5297 = vmatmul.mubr.f32.gmra.mrb[0].mxu0 %v5296
    %v5298 = vpop.f32.mrb[0].mxu0
    %v5299 = vadd.f32 %v5180, %v5298
    %v5300 = vpop.f32.mrb[0].mxu0
    %v5301 = vadd.f32 %v5182, %v5300
    %5302 = vdwg.mxu0
    %v5303 = vand.u32 %v5070, 4294901760
    %v5304 = vsub.f32 %v5070, %v5303
    %5305 = vmatprep.subr.mxu0 %v5304
    %v5306 = vand.u32 %v5069, 4294901760
    %v5307 = vsub.f32 %v5069, %v5306
    %5308 = vmatpush1.msra.mxu0 %v5307
    %v5309 = vand.u32 %v5072, 4294901760
    %v5310 = vsub.f32 %v5072, %v5309
    %5311 = vmatprep.subr.mxu0 %v5310
    %v5312 = vand.u32 %v5071, 4294901760
    %v5313 = vsub.f32 %v5071, %v5312
    %5314 = vmatpush1.msra.mxu0 %v5313
    %v5315 = vand.u32 %v5074, 4294901760
    %v5316 = vsub.f32 %v5074, %v5315
    %5317 = vmatprep.subr.mxu0 %v5316
    %v5318 = vand.u32 %v5073, 4294901760
    %v5319 = vsub.f32 %v5073, %v5318
    %5320 = vmatpush1.msra.mxu0 %v5319
    %v5321 = vand.u32 %v5076, 4294901760
    %v5322 = vsub.f32 %v5076, %v5321
    %5323 = vmatprep.subr.mxu0 %v5322
    %v5324 = vand.u32 %v5075, 4294901760
    %v5325 = vsub.f32 %v5075, %v5324
    %5326 = vmatpush1.msra.mxu0 %v5325
    %5327 = vmatprep.subr.mxu0 0.0
    %5328 = vmatpush1.msra.mxu0 0.0
    %5329 = vmatprep.subr.mxu0 0.0
    %5330 = vmatpush1.msra.mxu0 0.0
    %5331 = vmatprep.subr.mxu0 0.0
    %5332 = vmatpush1.msra.mxu0 0.0
    %5333 = vmatprep.subr.mxu0 0.0
    %5334 = vmatpush1.msra.mxu0 0.0
    %5335 = vmatprep.subr.mxu0 0.0
    %5336 = vmatpush1.msra.mxu0 0.0
    %5337 = vmatprep.subr.mxu0 0.0
    %5338 = vmatpush1.msra.mxu0 0.0
    %5339 = vmatprep.subr.mxu0 0.0
    %5340 = vmatpush1.msra.mxu0 0.0
    %5341 = vmatprep.subr.mxu0 0.0
    %5342 = vmatpush1.msra.mxu0 0.0
    %5343 = vmatprep.subr.mxu0 0.0
    %5344 = vmatpush1.msra.mxu0 0.0
    %5345 = vmatprep.subr.mxu0 0.0
    %5346 = vmatpush1.msra.mxu0 0.0
    %5347 = vmatprep.subr.mxu0 0.0
    %5348 = vmatpush1.msra.mxu0 0.0
    %5349 = vmatprep.subr.mxu0 0.0
    %5350 = vmatpush1.msra.mxu0 0.0
    %5351 = vmatprep.subr.mxu0 0.0
    %5352 = vmatpush1.msra.mxu0 0.0
    %5353 = vmatprep.subr.mxu0 0.0
    %5354 = vmatpush1.msra.mxu0 0.0
    %5355 = vmatprep.subr.mxu0 0.0
    %5356 = vmatpush1.msra.mxu0 0.0
    %5357 = vmatprep.subr.mxu0 0.0
    %5358 = vmatpush1.msra.mxu0 0.0
    %5359 = vmatprep.subr.mxu0 0.0
    %5360 = vmatpush1.msra.mxu0 0.0
    %5361 = vmatprep.subr.mxu0 0.0
    %5362 = vmatpush1.msra.mxu0 0.0
    %5363 = vmatprep.subr.mxu0 0.0
    %5364 = vmatpush1.msra.mxu0 0.0
    %5365 = vmatprep.subr.mxu0 0.0
    %5366 = vmatpush1.msra.mxu0 0.0
    %5367 = vmatprep.subr.mxu0 0.0
    %5368 = vmatpush1.msra.mxu0 0.0
    %5369 = vmatprep.subr.mxu0 0.0
    %5370 = vmatpush1.msra.mxu0 0.0
    %5371 = vmatprep.subr.mxu0 0.0
    %5372 = vmatpush1.msra.mxu0 0.0
    %5373 = vmatprep.subr.mxu0 0.0
    %5374 = vmatpush1.msra.mxu0 0.0
    %5375 = vmatprep.subr.mxu0 0.0
    %5376 = vmatpush1.msra.mxu0 0.0
    %5377 = vmatprep.subr.mxu0 0.0
    %5378 = vmatpush1.msra.mxu0 0.0
    %5379 = vmatprep.subr.mxu0 0.0
    %5380 = vmatpush1.msra.mxu0 0.0
    %5381 = vmatprep.subr.mxu0 0.0
    %5382 = vmatpush1.msra.mxu0 0.0
    %5383 = vmatprep.mubr.f32.mxu0 0.0
    %v5384 = vand.u32 %v5084, 4294901760
    %v5385 = vsub.f32 %v5084, %v5384
    %5386 = vmatmul.mubr.f32.gmra.mrb[0].mxu0 %v5385
    %v5387 = vpop.f32.mrb[0].mxu0
    %v5388 = vadd.f32 %v5292, %v5387
    %v5389 = vpop.f32.mrb[0].mxu0
    %v5390 = vadd.f32 %v5294, %v5389
    %5391 = vmatprep.mubr.f32.mxu0 0.0
    %v5392 = vand.u32 %v5087, 4294901760
    %v5393 = vsub.f32 %v5087, %v5392
    %5394 = vmatmul.mubr.f32.gmra.mrb[0].mxu0 %v5393
    %v5395 = vpop.f32.mrb[0].mxu0
    %v5396 = vadd.f32 %v5299, %v5395
    %v5397 = vpop.f32.mrb[0].mxu0
    %v5398 = vadd.f32 %v5301, %v5397
    %5399 = vdwg.mxu0
    %v5400 = vand.u32 %v5070, 4294901760
    %5401 = vmatprep.subr.mxu0 %v5400
    %v5402 = vand.u32 %v5069, 4294901760
    %5403 = vmatpush1.msra.mxu0 %v5402
    %v5404 = vand.u32 %v5072, 4294901760
    %5405 = vmatprep.subr.mxu0 %v5404
    %v5406 = vand.u32 %v5071, 4294901760
    %5407 = vmatpush1.msra.mxu0 %v5406
    %v5408 = vand.u32 %v5074, 4294901760
    %5409 = vmatprep.subr.mxu0 %v5408
    %v5410 = vand.u32 %v5073, 4294901760
    %5411 = vmatpush1.msra.mxu0 %v5410
    %v5412 = vand.u32 %v5076, 4294901760
    %5413 = vmatprep.subr.mxu0 %v5412
    %v5414 = vand.u32 %v5075, 4294901760
    %5415 = vmatpush1.msra.mxu0 %v5414
    %5416 = vmatprep.subr.mxu0 0.0
    %5417 = vmatpush1.msra.mxu0 0.0
    %5418 = vmatprep.subr.mxu0 0.0
    %5419 = vmatpush1.msra.mxu0 0.0
    %5420 = vmatprep.subr.mxu0 0.0
    %5421 = vmatpush1.msra.mxu0 0.0
    %5422 = vmatprep.subr.mxu0 0.0
    %5423 = vmatpush1.msra.mxu0 0.0
    %5424 = vmatprep.subr.mxu0 0.0
    %5425 = vmatpush1.msra.mxu0 0.0
    %5426 = vmatprep.subr.mxu0 0.0
    %5427 = vmatpush1.msra.mxu0 0.0
    %5428 = vmatprep.subr.mxu0 0.0
    %5429 = vmatpush1.msra.mxu0 0.0
    %5430 = vmatprep.subr.mxu0 0.0
    %5431 = vmatpush1.msra.mxu0 0.0
    %5432 = vmatprep.subr.mxu0 0.0
    %5433 = vmatpush1.msra.mxu0 0.0
    %5434 = vmatprep.subr.mxu0 0.0
    %5435 = vmatpush1.msra.mxu0 0.0
    %5436 = vmatprep.subr.mxu0 0.0
    %5437 = vmatpush1.msra.mxu0 0.0
    %5438 = vmatprep.subr.mxu0 0.0
    %5439 = vmatpush1.msra.mxu0 0.0
    %5440 = vmatprep.subr.mxu0 0.0
    %5441 = vmatpush1.msra.mxu0 0.0
    %5442 = vmatprep.subr.mxu0 0.0
    %5443 = vmatpush1.msra.mxu0 0.0
    %5444 = vmatprep.subr.mxu0 0.0
    %5445 = vmatpush1.msra.mxu0 0.0
    %5446 = vmatprep.subr.mxu0 0.0
    %5447 = vmatpush1.msra.mxu0 0.0
    %5448 = vmatprep.subr.mxu0 0.0
    %5449 = vmatpush1.msra.mxu0 0.0
    %5450 = vmatprep.subr.mxu0 0.0
    %5451 = vmatpush1.msra.mxu0 0.0
    %5452 = vmatprep.subr.mxu0 0.0
    %5453 = vmatpush1.msra.mxu0 0.0
    %5454 = vmatprep.subr.mxu0 0.0
    %5455 = vmatpush1.msra.mxu0 0.0
    %5456 = vmatprep.subr.mxu0 0.0
    %5457 = vmatpush1.msra.mxu0 0.0
    %5458 = vmatprep.subr.mxu0 0.0
    %5459 = vmatpush1.msra.mxu0 0.0
    %5460 = vmatprep.subr.mxu0 0.0
    %5461 = vmatpush1.msra.mxu0 0.0
    %5462 = vmatprep.subr.mxu0 0.0
    %5463 = vmatpush1.msra.mxu0 0.0
    %5464 = vmatprep.subr.mxu0 0.0
    %5465 = vmatpush1.msra.mxu0 0.0
    %5466 = vmatprep.subr.mxu0 0.0
    %5467 = vmatpush1.msra.mxu0 0.0
    %5468 = vmatprep.subr.mxu0 0.0
    %5469 = vmatpush1.msra.mxu0 0.0
    %5470 = vmatprep.subr.mxu0 0.0
    %5471 = vmatpush1.msra.mxu0 0.0
    %5472 = vmatprep.mubr.f32.mxu0 0.0
    %v5473 = vand.u32 %v5084, 4294901760
    %v5474 = vsub.f32 %v5084, %v5473
    %v5475 = vand.u32 %v5474, 4294901760
    %5476 = vmatmul.mubr.f32.gmra.mrb[0].mxu0 %v5475
    %v5477 = vpop.f32.mrb[0].mxu0
    %v5478 = vadd.f32 %v5388, %v5477
    %v5479 = vpop.f32.mrb[0].mxu0
    %v5480 = vadd.f32 %v5390, %v5479
    %5481 = vmatprep.mubr.f32.mxu0 0.0
    %v5482 = vand.u32 %v5087, 4294901760
    %v5483 = vsub.f32 %v5087, %v5482
    %v5484 = vand.u32 %v5483, 4294901760
    %5485 = vmatmul.mubr.f32.gmra.mrb[0].mxu0 %v5484
    %v5486 = vpop.f32.mrb[0].mxu0
    %v5487 = vadd.f32 %v5396, %v5486
    %v5488 = vpop.f32.mrb[0].mxu0
    %v5489 = vadd.f32 %v5398, %v5488
    %5490 = vdwg.mxu0
    %v5491 = vand.u32 %v5070, 4294901760
    %v5492 = vsub.f32 %v5070, %v5491
    %v5493 = vand.u32 %v5492, 4294901760
    %5494 = vmatprep.subr.mxu0 %v5493
    %v5495 = vand.u32 %v5069, 4294901760
    %v5496 = vsub.f32 %v5069, %v5495
    %v5497 = vand.u32 %v5496, 4294901760
    %5498 = vmatpush1.msra.mxu0 %v5497
    %v5499 = vand.u32 %v5072, 4294901760
    %v5500 = vsub.f32 %v5072, %v5499
    %v5501 = vand.u32 %v5500, 4294901760
    %5502 = vmatprep.subr.mxu0 %v5501
    %v5503 = vand.u32 %v5071, 4294901760
    %v5504 = vsub.f32 %v5071, %v5503
    %v5505 = vand.u32 %v5504, 4294901760
    %5506 = vmatpush1.msra.mxu0 %v5505
    %v5507 = vand.u32 %v5074, 4294901760
    %v5508 = vsub.f32 %v5074, %v5507
    %v5509 = vand.u32 %v5508, 4294901760
    %5510 = vmatprep.subr.mxu0 %v5509
    %v5511 = vand.u32 %v5073, 4294901760
    %v5512 = vsub.f32 %v5073, %v5511
    %v5513 = vand.u32 %v5512, 4294901760
    %5514 = vmatpush1.msra.mxu0 %v5513
    %v5515 = vand.u32 %v5076, 4294901760
    %v5516 = vsub.f32 %v5076, %v5515
    %v5517 = vand.u32 %v5516, 4294901760
    %5518 = vmatprep.subr.mxu0 %v5517
    %v5519 = vand.u32 %v5075, 4294901760
    %v5520 = vsub.f32 %v5075, %v5519
    %v5521 = vand.u32 %v5520, 4294901760
    %5522 = vmatpush1.msra.mxu0 %v5521
    %5523 = vmatprep.subr.mxu0 0.0
    %5524 = vmatpush1.msra.mxu0 0.0
    %5525 = vmatprep.subr.mxu0 0.0
    %5526 = vmatpush1.msra.mxu0 0.0
    %5527 = vmatprep.subr.mxu0 0.0
    %5528 = vmatpush1.msra.mxu0 0.0
    %5529 = vmatprep.subr.mxu0 0.0
    %5530 = vmatpush1.msra.mxu0 0.0
    %5531 = vmatprep.subr.mxu0 0.0
    %5532 = vmatpush1.msra.mxu0 0.0
    %5533 = vmatprep.subr.mxu0 0.0
    %5534 = vmatpush1.msra.mxu0 0.0
    %5535 = vmatprep.subr.mxu0 0.0
    %5536 = vmatpush1.msra.mxu0 0.0
    %5537 = vmatprep.subr.mxu0 0.0
    %5538 = vmatpush1.msra.mxu0 0.0
    %5539 = vmatprep.subr.mxu0 0.0
    %5540 = vmatpush1.msra.mxu0 0.0
    %5541 = vmatprep.subr.mxu0 0.0
    %5542 = vmatpush1.msra.mxu0 0.0
    %5543 = vmatprep.subr.mxu0 0.0
    %5544 = vmatpush1.msra.mxu0 0.0
    %5545 = vmatprep.subr.mxu0 0.0
    %5546 = vmatpush1.msra.mxu0 0.0
    %5547 = vmatprep.subr.mxu0 0.0
    %5548 = vmatpush1.msra.mxu0 0.0
    %5549 = vmatprep.subr.mxu0 0.0
    %5550 = vmatpush1.msra.mxu0 0.0
    %5551 = vmatprep.subr.mxu0 0.0
    %5552 = vmatpush1.msra.mxu0 0.0
    %5553 = vmatprep.subr.mxu0 0.0
    %5554 = vmatpush1.msra.mxu0 0.0
    %5555 = vmatprep.subr.mxu0 0.0
    %5556 = vmatpush1.msra.mxu0 0.0
    %5557 = vmatprep.subr.mxu0 0.0
    %5558 = vmatpush1.msra.mxu0 0.0
    %5559 = vmatprep.subr.mxu0 0.0
    %5560 = vmatpush1.msra.mxu0 0.0
    %5561 = vmatprep.subr.mxu0 0.0
    %5562 = vmatpush1.msra.mxu0 0.0
    %5563 = vmatprep.subr.mxu0 0.0
    %5564 = vmatpush1.msra.mxu0 0.0
    %5565 = vmatprep.subr.mxu0 0.0
    %5566 = vmatpush1.msra.mxu0 0.0
    %5567 = vmatprep.subr.mxu0 0.0
    %5568 = vmatpush1.msra.mxu0 0.0
    %5569 = vmatprep.subr.mxu0 0.0
    %5570 = vmatpush1.msra.mxu0 0.0
    %5571 = vmatprep.subr.mxu0 0.0
    %5572 = vmatpush1.msra.mxu0 0.0
    %5573 = vmatprep.subr.mxu0 0.0
    %5574 = vmatpush1.msra.mxu0 0.0
    %5575 = vmatprep.subr.mxu0 0.0
    %5576 = vmatpush1.msra.mxu0 0.0
    %5577 = vmatprep.subr.mxu0 0.0
    %5578 = vmatpush1.msra.mxu0 0.0
    %5579 = vmatprep.mubr.f32.mxu0 0.0
    %v5580 = vand.u32 %v5084, 4294901760
    %5581 = vmatmul.mubr.f32.gmra.mrb[0].mxu0 %v5580
    %v5582 = vpop.f32.mrb[0].mxu0
    %v5583 = vadd.f32 %v5478, %v5582
    %v5584 = vpop.f32.mrb[0].mxu0
    %v5585 = vadd.f32 %v5480, %v5584
    %5586 = vmatprep.mubr.f32.mxu0 0.0
    %v5587 = vand.u32 %v5087, 4294901760
    %5588 = vmatmul.mubr.f32.gmra.mrb[0].mxu0 %v5587
    %v5589 = vpop.f32.mrb[0].mxu0
    %v5590 = vadd.f32 %v5487, %v5589
    %v5591 = vpop.f32.mrb[0].mxu0
    %v5592 = vadd.f32 %v5489, %v5591
    %5593 = vdwg.mxu0
    %v5594 = vand.u32 %v5070, 4294901760
    %5595 = vmatprep.subr.mxu0 %v5594
    %v5596 = vand.u32 %v5069, 4294901760
    %5597 = vmatpush1.msra.mxu0 %v5596
    %v5598 = vand.u32 %v5072, 4294901760
    %5599 = vmatprep.subr.mxu0 %v5598
    %v5600 = vand.u32 %v5071, 4294901760
    %5601 = vmatpush1.msra.mxu0 %v5600
    %v5602 = vand.u32 %v5074, 4294901760
    %5603 = vmatprep.subr.mxu0 %v5602
    %v5604 = vand.u32 %v5073, 4294901760
    %5605 = vmatpush1.msra.mxu0 %v5604
    %v5606 = vand.u32 %v5076, 4294901760
    %5607 = vmatprep.subr.mxu0 %v5606
    %v5608 = vand.u32 %v5075, 4294901760
    %5609 = vmatpush1.msra.mxu0 %v5608
    %5610 = vmatprep.subr.mxu0 0.0
    %5611 = vmatpush1.msra.mxu0 0.0
    %5612 = vmatprep.subr.mxu0 0.0
    %5613 = vmatpush1.msra.mxu0 0.0
    %5614 = vmatprep.subr.mxu0 0.0
    %5615 = vmatpush1.msra.mxu0 0.0
    %5616 = vmatprep.subr.mxu0 0.0
    %5617 = vmatpush1.msra.mxu0 0.0
    %5618 = vmatprep.subr.mxu0 0.0
    %5619 = vmatpush1.msra.mxu0 0.0
    %5620 = vmatprep.subr.mxu0 0.0
    %5621 = vmatpush1.msra.mxu0 0.0
    %5622 = vmatprep.subr.mxu0 0.0
    %5623 = vmatpush1.msra.mxu0 0.0
    %5624 = vmatprep.subr.mxu0 0.0
    %5625 = vmatpush1.msra.mxu0 0.0
    %5626 = vmatprep.subr.mxu0 0.0
    %5627 = vmatpush1.msra.mxu0 0.0
    %5628 = vmatprep.subr.mxu0 0.0
    %5629 = vmatpush1.msra.mxu0 0.0
    %5630 = vmatprep.subr.mxu0 0.0
    %5631 = vmatpush1.msra.mxu0 0.0
    %5632 = vmatprep.subr.mxu0 0.0
    %5633 = vmatpush1.msra.mxu0 0.0
    %5634 = vmatprep.subr.mxu0 0.0
    %5635 = vmatpush1.msra.mxu0 0.0
    %5636 = vmatprep.subr.mxu0 0.0
    %5637 = vmatpush1.msra.mxu0 0.0
    %5638 = vmatprep.subr.mxu0 0.0
    %5639 = vmatpush1.msra.mxu0 0.0
    %5640 = vmatprep.subr.mxu0 0.0
    %5641 = vmatpush1.msra.mxu0 0.0
    %5642 = vmatprep.subr.mxu0 0.0
    %5643 = vmatpush1.msra.mxu0 0.0
    %5644 = vmatprep.subr.mxu0 0.0
    %5645 = vmatpush1.msra.mxu0 0.0
    %5646 = vmatprep.subr.mxu0 0.0
    %5647 = vmatpush1.msra.mxu0 0.0
    %5648 = vmatprep.subr.mxu0 0.0
    %5649 = vmatpush1.msra.mxu0 0.0
    %5650 = vmatprep.subr.mxu0 0.0
    %5651 = vmatpush1.msra.mxu0 0.0
    %5652 = vmatprep.subr.mxu0 0.0
    %5653 = vmatpush1.msra.mxu0 0.0
    %5654 = vmatprep.subr.mxu0 0.0
    %5655 = vmatpush1.msra.mxu0 0.0
    %5656 = vmatprep.subr.mxu0 0.0
    %5657 = vmatpush1.msra.mxu0 0.0
    %5658 = vmatprep.subr.mxu0 0.0
    %5659 = vmatpush1.msra.mxu0 0.0
    %5660 = vmatprep.subr.mxu0 0.0
    %5661 = vmatpush1.msra.mxu0 0.0
    %5662 = vmatprep.subr.mxu0 0.0
    %5663 = vmatpush1.msra.mxu0 0.0
    %5664 = vmatprep.subr.mxu0 0.0
    %5665 = vmatpush1.msra.mxu0 0.0
    %5666 = vmatprep.mubr.f32.mxu0 0.0
    %v5667 = vand.u32 %v5084, 4294901760
    %5668 = vmatmul.mubr.f32.gmra.mrb[0].mxu0 %v5667
    %v5669 = vpop.f32.mrb[0].mxu0
    %v5670 = vadd.f32 %v5583, %v5669
    %v5671 = vpop.f32.mrb[0].mxu0
    %v5672 = vadd.f32 %v5585, %v5671
    %5673 = vmatprep.mubr.f32.mxu0 0.0
    %v5674 = vand.u32 %v5087, 4294901760
    %5675 = vmatmul.mubr.f32.gmra.mrb[0].mxu0 %v5674
    %v5676 = vpop.f32.mrb[0].mxu0
    %v5677 = vadd.f32 %v5590, %v5676
    %v5678 = vpop.f32.mrb[0].mxu0
    %v5679 = vadd.f32 %v5592, %v5678
    %5680 = vdwg.mxu0
    %v5681 = vmul.f32 %v1194, %v5670
    %v5682 = vmul.f32 %v1199, %v5677
    %v5683 = vadd.f32 %v5681, 0.0
    %v5684 = vadd.f32 %v5682, 0.0
    %v5685 = vmul.f32 %v1207, %v5670
    %v5686 = vmul.f32 %v1211, %v5677
    %5689 = vrot.lane.b32.xlu0 %v5685, 80
    %v5690 = vpop.permute.xlu0 %5689
    %5691 = vrot.lane.b32.xlu0 %v5686, 80
    %v5692 = vpop.permute.xlu0 %5691
    %v5695 = vadd.f32 %v5683, %v5690
    %v5696 = vadd.f32 %v5684, %v5692
    %v5697 = vmul.f32 %v1238, %v5670
    %v5698 = vmul.f32 %v1238, %v5672
    %v5699 = vmul.f32 %v1242, %v5677
    %v5700 = vmul.f32 %v1242, %v5679
    %5705 = vrot.lane.b32.xlu0 %v5697, 32
    %v5706 = vpop.permute.xlu0 %5705
    %5707 = vrot.lane.b32.xlu0 %v5698, 32
    %v5708 = vpop.permute.xlu0 %5707
    %5709 = vrot.lane.b32.xlu0 %v5699, 32
    %v5710 = vpop.permute.xlu0 %5709
    %5711 = vrot.lane.b32.xlu0 %v5700, 32
    %v5712 = vpop.permute.xlu0 %5711
    %v5713 = vsel %vm1229, %v5706, %v5708
    %v5714 = vsel %vm1229, %v5710, %v5712
    %v5717 = vadd.f32 %v5695, %v5713
    %v5718 = vadd.f32 %v5696, %v5714
    %5719 = vmatprep.subr.mxu0 0.0
    %v5720 = vand.u32 %v5717, 4294901760
    %5721 = vmatpush1.msra.mxu0 %v5720
    %5722 = vmatprep.subr.mxu0 0.0
    %v5723 = vand.u32 %v5718, 4294901760
    %5724 = vmatpush1.msra.mxu0 %v5723
    %5725 = vmatprep.subr.mxu0 0.0
    %5726 = vmatpush1.msra.mxu0 0.0
    %5727 = vmatprep.subr.mxu0 0.0
    %5728 = vmatpush1.msra.mxu0 0.0
    %5729 = vmatprep.subr.mxu0 0.0
    %5730 = vmatpush1.msra.mxu0 0.0
    %5731 = vmatprep.subr.mxu0 0.0
    %5732 = vmatpush1.msra.mxu0 0.0
    %5733 = vmatprep.subr.mxu0 0.0
    %5734 = vmatpush1.msra.mxu0 0.0
    %5735 = vmatprep.subr.mxu0 0.0
    %5736 = vmatpush1.msra.mxu0 0.0
    %5737 = vmatprep.subr.mxu0 0.0
    %5738 = vmatpush1.msra.mxu0 0.0
    %5739 = vmatprep.subr.mxu0 0.0
    %5740 = vmatpush1.msra.mxu0 0.0
    %5741 = vmatprep.subr.mxu0 0.0
    %5742 = vmatpush1.msra.mxu0 0.0
    %5743 = vmatprep.subr.mxu0 0.0
    %5744 = vmatpush1.msra.mxu0 0.0
    %5745 = vmatprep.subr.mxu0 0.0
    %5746 = vmatpush1.msra.mxu0 0.0
    %5747 = vmatprep.subr.mxu0 0.0
    %5748 = vmatpush1.msra.mxu0 0.0
    %5749 = vmatprep.subr.mxu0 0.0
    %5750 = vmatpush1.msra.mxu0 0.0
    %5751 = vmatprep.subr.mxu0 0.0
    %5752 = vmatpush1.msra.mxu0 0.0
    %5753 = vmatprep.subr.mxu0 0.0
    %5754 = vmatpush1.msra.mxu0 0.0
    %5755 = vmatprep.subr.mxu0 0.0
    %5756 = vmatpush1.msra.mxu0 0.0
    %5757 = vmatprep.subr.mxu0 0.0
    %5758 = vmatpush1.msra.mxu0 0.0
    %5759 = vmatprep.subr.mxu0 0.0
    %5760 = vmatpush1.msra.mxu0 0.0
    %5761 = vmatprep.subr.mxu0 0.0
    %5762 = vmatpush1.msra.mxu0 0.0
    %5763 = vmatprep.subr.mxu0 0.0
    %5764 = vmatpush1.msra.mxu0 0.0
    %5765 = vmatprep.subr.mxu0 0.0
    %5766 = vmatpush1.msra.mxu0 0.0
    %5767 = vmatprep.subr.mxu0 0.0
    %5768 = vmatpush1.msra.mxu0 0.0
    %5769 = vmatprep.subr.mxu0 0.0
    %5770 = vmatpush1.msra.mxu0 0.0
    %5771 = vmatprep.subr.mxu0 0.0
    %5772 = vmatpush1.msra.mxu0 0.0
    %5773 = vmatprep.subr.mxu0 0.0
    %5774 = vmatpush1.msra.mxu0 0.0
    %5775 = vmatprep.subr.mxu0 0.0
    %5776 = vmatpush1.msra.mxu0 0.0
    %5777 = vmatprep.subr.mxu0 0.0
    %5778 = vmatpush1.msra.mxu0 0.0
    %5779 = vmatprep.subr.mxu0 0.0
    %5780 = vmatpush1.msra.mxu0 0.0
    %5781 = vmatprep.subr.mxu0 0.0
    %5782 = vmatpush1.msra.mxu0 0.0
    %5783 = vmatprep.subr.mxu0 0.0
    %5784 = vmatpush1.msra.mxu0 0.0
    %5785 = vmatprep.mubr.f32.mxu0 0.0
    %v5786 = vand.u32 %v1268, 4294901760
    %v5787 = vsub.f32 %v1268, %v5786
    %v5788 = vand.u32 %v5787, 4294901760
    %v5789 = vsub.f32 %v5787, %v5788
    %v5790 = vand.u32 %v5789, 4294901760
    %5791 = vmatmul.mubr.f32.gmra.mrb[0].mxu0 %v5790
    %v5792 = vpop.f32.mrb[0].mxu0
    %v5793 = vadd.f32 0.0, %v5792
    %v5794 = vpop.f32.mrb[0].mxu0
    %5795 = vmatprep.mubr.f32.mxu0 0.0
    %v5796 = vand.u32 %v1271, 4294901760
    %v5797 = vsub.f32 %v1271, %v5796
    %v5798 = vand.u32 %v5797, 4294901760
    %v5799 = vsub.f32 %v5797, %v5798
    %v5800 = vand.u32 %v5799, 4294901760
    %5801 = vmatmul.mubr.f32.gmra.mrb[0].mxu0 %v5800
    %v5802 = vpop.f32.mrb[0].mxu0
    %v5803 = vadd.f32 0.0, %v5802
    %v5804 = vpop.f32.mrb[0].mxu0
    %5805 = vmatprep.mubr.f32.mxu0 0.0
    %v5806 = vand.u32 %v1274, 4294901760
    %v5807 = vsub.f32 %v1274, %v5806
    %v5808 = vand.u32 %v5807, 4294901760
    %v5809 = vsub.f32 %v5807, %v5808
    %v5810 = vand.u32 %v5809, 4294901760
    %5811 = vmatmul.mubr.f32.gmra.mrb[0].mxu0 %v5810
    %v5812 = vpop.f32.mrb[0].mxu0
    %v5813 = vadd.f32 0.0, %v5812
    %v5814 = vpop.f32.mrb[0].mxu0
    %5815 = vmatprep.mubr.f32.mxu0 0.0
    %v5816 = vand.u32 %v1277, 4294901760
    %v5817 = vsub.f32 %v1277, %v5816
    %v5818 = vand.u32 %v5817, 4294901760
    %v5819 = vsub.f32 %v5817, %v5818
    %v5820 = vand.u32 %v5819, 4294901760
    %5821 = vmatmul.mubr.f32.gmra.mrb[0].mxu0 %v5820
    %v5822 = vpop.f32.mrb[0].mxu0
    %v5823 = vadd.f32 0.0, %v5822
    %v5824 = vpop.f32.mrb[0].mxu0
    %5825 = vmatprep.mubr.f32.mxu0 0.0
    %v5826 = vand.u32 %v1280, 4294901760
    %v5827 = vsub.f32 %v1280, %v5826
    %v5828 = vand.u32 %v5827, 4294901760
    %v5829 = vsub.f32 %v5827, %v5828
    %v5830 = vand.u32 %v5829, 4294901760
    %5831 = vmatmul.mubr.f32.gmra.mrb[0].mxu0 %v5830
    %v5832 = vpop.f32.mrb[0].mxu0
    %v5833 = vadd.f32 0.0, %v5832
    %v5834 = vpop.f32.mrb[0].mxu0
    %5835 = vmatprep.mubr.f32.mxu0 0.0
    %v5836 = vand.u32 %v1283, 4294901760
    %v5837 = vsub.f32 %v1283, %v5836
    %v5838 = vand.u32 %v5837, 4294901760
    %v5839 = vsub.f32 %v5837, %v5838
    %v5840 = vand.u32 %v5839, 4294901760
    %5841 = vmatmul.mubr.f32.gmra.mrb[0].mxu0 %v5840
    %v5842 = vpop.f32.mrb[0].mxu0
    %v5843 = vadd.f32 0.0, %v5842
    %v5844 = vpop.f32.mrb[0].mxu0
    %5845 = vdwg.mxu0
    %5846 = vmatprep.subr.mxu0 0.0
    %v5847 = vand.u32 %v5717, 4294901760
    %v5848 = vsub.f32 %v5717, %v5847
    %v5849 = vand.u32 %v5848, 4294901760
    %v5850 = vsub.f32 %v5848, %v5849
    %v5851 = vand.u32 %v5850, 4294901760
    %5852 = vmatpush1.msra.mxu0 %v5851
    %5853 = vmatprep.subr.mxu0 0.0
    %v5854 = vand.u32 %v5718, 4294901760
    %v5855 = vsub.f32 %v5718, %v5854
    %v5856 = vand.u32 %v5855, 4294901760
    %v5857 = vsub.f32 %v5855, %v5856
    %v5858 = vand.u32 %v5857, 4294901760
    %5859 = vmatpush1.msra.mxu0 %v5858
    %5860 = vmatprep.subr.mxu0 0.0
    %5861 = vmatpush1.msra.mxu0 0.0
    %5862 = vmatprep.subr.mxu0 0.0
    %5863 = vmatpush1.msra.mxu0 0.0
    %5864 = vmatprep.subr.mxu0 0.0
    %5865 = vmatpush1.msra.mxu0 0.0
    %5866 = vmatprep.subr.mxu0 0.0
    %5867 = vmatpush1.msra.mxu0 0.0
    %5868 = vmatprep.subr.mxu0 0.0
    %5869 = vmatpush1.msra.mxu0 0.0
    %5870 = vmatprep.subr.mxu0 0.0
    %5871 = vmatpush1.msra.mxu0 0.0
    %5872 = vmatprep.subr.mxu0 0.0
    %5873 = vmatpush1.msra.mxu0 0.0
    %5874 = vmatprep.subr.mxu0 0.0
    %5875 = vmatpush1.msra.mxu0 0.0
    %5876 = vmatprep.subr.mxu0 0.0
    %5877 = vmatpush1.msra.mxu0 0.0
    %5878 = vmatprep.subr.mxu0 0.0
    %5879 = vmatpush1.msra.mxu0 0.0
    %5880 = vmatprep.subr.mxu0 0.0
    %5881 = vmatpush1.msra.mxu0 0.0
    %5882 = vmatprep.subr.mxu0 0.0
    %5883 = vmatpush1.msra.mxu0 0.0
    %5884 = vmatprep.subr.mxu0 0.0
    %5885 = vmatpush1.msra.mxu0 0.0
    %5886 = vmatprep.subr.mxu0 0.0
    %5887 = vmatpush1.msra.mxu0 0.0
    %5888 = vmatprep.subr.mxu0 0.0
    %5889 = vmatpush1.msra.mxu0 0.0
    %5890 = vmatprep.subr.mxu0 0.0
    %5891 = vmatpush1.msra.mxu0 0.0
    %5892 = vmatprep.subr.mxu0 0.0
    %5893 = vmatpush1.msra.mxu0 0.0
    %5894 = vmatprep.subr.mxu0 0.0
    %5895 = vmatpush1.msra.mxu0 0.0
    %5896 = vmatprep.subr.mxu0 0.0
    %5897 = vmatpush1.msra.mxu0 0.0
    %5898 = vmatprep.subr.mxu0 0.0
    %5899 = vmatpush1.msra.mxu0 0.0
    %5900 = vmatprep.subr.mxu0 0.0
    %5901 = vmatpush1.msra.mxu0 0.0
    %5902 = vmatprep.subr.mxu0 0.0
    %5903 = vmatpush1.msra.mxu0 0.0
    %5904 = vmatprep.subr.mxu0 0.0
    %5905 = vmatpush1.msra.mxu0 0.0
    %5906 = vmatprep.subr.mxu0 0.0
    %5907 = vmatpush1.msra.mxu0 0.0
    %5908 = vmatprep.subr.mxu0 0.0
    %5909 = vmatpush1.msra.mxu0 0.0
    %5910 = vmatprep.subr.mxu0 0.0
    %5911 = vmatpush1.msra.mxu0 0.0
    %5912 = vmatprep.subr.mxu0 0.0
    %5913 = vmatpush1.msra.mxu0 0.0
    %5914 = vmatprep.subr.mxu0 0.0
    %5915 = vmatpush1.msra.mxu0 0.0
    %5916 = vmatprep.subr.mxu0 0.0
    %5917 = vmatpush1.msra.mxu0 0.0
    %5918 = vmatprep.subr.mxu0 0.0
    %5919 = vmatpush1.msra.mxu0 0.0
    %5920 = vmatprep.mubr.f32.mxu0 0.0
    %v5921 = vand.u32 %v1268, 4294901760
    %5922 = vmatmul.mubr.f32.gmra.mrb[0].mxu0 %v5921
    %v5923 = vpop.f32.mrb[0].mxu0
    %v5924 = vadd.f32 %v5793, %v5923
    %v5925 = vpop.f32.mrb[0].mxu0
    %5926 = vmatprep.mubr.f32.mxu0 0.0
    %v5927 = vand.u32 %v1271, 4294901760
    %5928 = vmatmul.mubr.f32.gmra.mrb[0].mxu0 %v5927
    %v5929 = vpop.f32.mrb[0].mxu0
    %v5930 = vadd.f32 %v5803, %v5929
    %v5931 = vpop.f32.mrb[0].mxu0
    %5932 = vmatprep.mubr.f32.mxu0 0.0
    %v5933 = vand.u32 %v1274, 4294901760
    %5934 = vmatmul.mubr.f32.gmra.mrb[0].mxu0 %v5933
    %v5935 = vpop.f32.mrb[0].mxu0
    %v5936 = vadd.f32 %v5813, %v5935
    %v5937 = vpop.f32.mrb[0].mxu0
    %5938 = vmatprep.mubr.f32.mxu0 0.0
    %v5939 = vand.u32 %v1277, 4294901760
    %5940 = vmatmul.mubr.f32.gmra.mrb[0].mxu0 %v5939
    %v5941 = vpop.f32.mrb[0].mxu0
    %v5942 = vadd.f32 %v5823, %v5941
    %v5943 = vpop.f32.mrb[0].mxu0
    %5944 = vmatprep.mubr.f32.mxu0 0.0
    %v5945 = vand.u32 %v1280, 4294901760
    %5946 = vmatmul.mubr.f32.gmra.mrb[0].mxu0 %v5945
    %v5947 = vpop.f32.mrb[0].mxu0
    %v5948 = vadd.f32 %v5833, %v5947
    %v5949 = vpop.f32.mrb[0].mxu0
    %5950 = vmatprep.mubr.f32.mxu0 0.0
    %v5951 = vand.u32 %v1283, 4294901760
    %5952 = vmatmul.mubr.f32.gmra.mrb[0].mxu0 %v5951
    %v5953 = vpop.f32.mrb[0].mxu0
    %v5954 = vadd.f32 %v5843, %v5953
    %v5955 = vpop.f32.mrb[0].mxu0
    %5956 = vdwg.mxu0
    %5957 = vmatprep.subr.mxu0 0.0
    %v5958 = vand.u32 %v5717, 4294901760
    %v5959 = vsub.f32 %v5717, %v5958
    %5960 = vmatpush1.msra.mxu0 %v5959
    %5961 = vmatprep.subr.mxu0 0.0
    %v5962 = vand.u32 %v5718, 4294901760
    %v5963 = vsub.f32 %v5718, %v5962
    %5964 = vmatpush1.msra.mxu0 %v5963
    %5965 = vmatprep.subr.mxu0 0.0
    %5966 = vmatpush1.msra.mxu0 0.0
    %5967 = vmatprep.subr.mxu0 0.0
    %5968 = vmatpush1.msra.mxu0 0.0
    %5969 = vmatprep.subr.mxu0 0.0
    %5970 = vmatpush1.msra.mxu0 0.0
    %5971 = vmatprep.subr.mxu0 0.0
    %5972 = vmatpush1.msra.mxu0 0.0
    %5973 = vmatprep.subr.mxu0 0.0
    %5974 = vmatpush1.msra.mxu0 0.0
    %5975 = vmatprep.subr.mxu0 0.0
    %5976 = vmatpush1.msra.mxu0 0.0
    %5977 = vmatprep.subr.mxu0 0.0
    %5978 = vmatpush1.msra.mxu0 0.0
    %5979 = vmatprep.subr.mxu0 0.0
    %5980 = vmatpush1.msra.mxu0 0.0
    %5981 = vmatprep.subr.mxu0 0.0
    %5982 = vmatpush1.msra.mxu0 0.0
    %5983 = vmatprep.subr.mxu0 0.0
    %5984 = vmatpush1.msra.mxu0 0.0
    %5985 = vmatprep.subr.mxu0 0.0
    %5986 = vmatpush1.msra.mxu0 0.0
    %5987 = vmatprep.subr.mxu0 0.0
    %5988 = vmatpush1.msra.mxu0 0.0
    %5989 = vmatprep.subr.mxu0 0.0
    %5990 = vmatpush1.msra.mxu0 0.0
    %5991 = vmatprep.subr.mxu0 0.0
    %5992 = vmatpush1.msra.mxu0 0.0
    %5993 = vmatprep.subr.mxu0 0.0
    %5994 = vmatpush1.msra.mxu0 0.0
    %5995 = vmatprep.subr.mxu0 0.0
    %5996 = vmatpush1.msra.mxu0 0.0
    %5997 = vmatprep.subr.mxu0 0.0
    %5998 = vmatpush1.msra.mxu0 0.0
    %5999 = vmatprep.subr.mxu0 0.0
    %6000 = vmatpush1.msra.mxu0 0.0
    %6001 = vmatprep.subr.mxu0 0.0
    %6002 = vmatpush1.msra.mxu0 0.0
    %6003 = vmatprep.subr.mxu0 0.0
    %6004 = vmatpush1.msra.mxu0 0.0
    %6005 = vmatprep.subr.mxu0 0.0
    %6006 = vmatpush1.msra.mxu0 0.0
    %6007 = vmatprep.subr.mxu0 0.0
    %6008 = vmatpush1.msra.mxu0 0.0
    %6009 = vmatprep.subr.mxu0 0.0
    %6010 = vmatpush1.msra.mxu0 0.0
    %6011 = vmatprep.subr.mxu0 0.0
    %6012 = vmatpush1.msra.mxu0 0.0
    %6013 = vmatprep.subr.mxu0 0.0
    %6014 = vmatpush1.msra.mxu0 0.0
    %6015 = vmatprep.subr.mxu0 0.0
    %6016 = vmatpush1.msra.mxu0 0.0
    %6017 = vmatprep.subr.mxu0 0.0
    %6018 = vmatpush1.msra.mxu0 0.0
    %6019 = vmatprep.subr.mxu0 0.0
    %6020 = vmatpush1.msra.mxu0 0.0
    %6021 = vmatprep.subr.mxu0 0.0
    %6022 = vmatpush1.msra.mxu0 0.0
    %6023 = vmatprep.subr.mxu0 0.0
    %6024 = vmatpush1.msra.mxu0 0.0
    %6025 = vmatprep.mubr.f32.mxu0 0.0
    %v6026 = vand.u32 %v1268, 4294901760
    %v6027 = vsub.f32 %v1268, %v6026
    %6028 = vmatmul.mubr.f32.gmra.mrb[0].mxu0 %v6027
    %v6029 = vpop.f32.mrb[0].mxu0
    %v6030 = vadd.f32 %v5924, %v6029
    %v6031 = vpop.f32.mrb[0].mxu0
    %6032 = vmatprep.mubr.f32.mxu0 0.0
    %v6033 = vand.u32 %v1271, 4294901760
    %v6034 = vsub.f32 %v1271, %v6033
    %6035 = vmatmul.mubr.f32.gmra.mrb[0].mxu0 %v6034
    %v6036 = vpop.f32.mrb[0].mxu0
    %v6037 = vadd.f32 %v5930, %v6036
    %v6038 = vpop.f32.mrb[0].mxu0
    %6039 = vmatprep.mubr.f32.mxu0 0.0
    %v6040 = vand.u32 %v1274, 4294901760
    %v6041 = vsub.f32 %v1274, %v6040
    %6042 = vmatmul.mubr.f32.gmra.mrb[0].mxu0 %v6041
    %v6043 = vpop.f32.mrb[0].mxu0
    %v6044 = vadd.f32 %v5936, %v6043
    %v6045 = vpop.f32.mrb[0].mxu0
    %6046 = vmatprep.mubr.f32.mxu0 0.0
    %v6047 = vand.u32 %v1277, 4294901760
    %v6048 = vsub.f32 %v1277, %v6047
    %6049 = vmatmul.mubr.f32.gmra.mrb[0].mxu0 %v6048
    %v6050 = vpop.f32.mrb[0].mxu0
    %v6051 = vadd.f32 %v5942, %v6050
    %v6052 = vpop.f32.mrb[0].mxu0
    %6053 = vmatprep.mubr.f32.mxu0 0.0
    %v6054 = vand.u32 %v1280, 4294901760
    %v6055 = vsub.f32 %v1280, %v6054
    %6056 = vmatmul.mubr.f32.gmra.mrb[0].mxu0 %v6055
    %v6057 = vpop.f32.mrb[0].mxu0
    %v6058 = vadd.f32 %v5948, %v6057
    %v6059 = vpop.f32.mrb[0].mxu0
    %6060 = vmatprep.mubr.f32.mxu0 0.0
    %v6061 = vand.u32 %v1283, 4294901760
    %v6062 = vsub.f32 %v1283, %v6061
    %6063 = vmatmul.mubr.f32.gmra.mrb[0].mxu0 %v6062
    %v6064 = vpop.f32.mrb[0].mxu0
    %v6065 = vadd.f32 %v5954, %v6064
    %v6066 = vpop.f32.mrb[0].mxu0
    %6067 = vdwg.mxu0
    %6068 = vmatprep.subr.mxu0 0.0
    %v6069 = vand.u32 %v5717, 4294901760
    %6070 = vmatpush1.msra.mxu0 %v6069
    %6071 = vmatprep.subr.mxu0 0.0
    %v6072 = vand.u32 %v5718, 4294901760
    %6073 = vmatpush1.msra.mxu0 %v6072
    %6074 = vmatprep.subr.mxu0 0.0
    %6075 = vmatpush1.msra.mxu0 0.0
    %6076 = vmatprep.subr.mxu0 0.0
    %6077 = vmatpush1.msra.mxu0 0.0
    %6078 = vmatprep.subr.mxu0 0.0
    %6079 = vmatpush1.msra.mxu0 0.0
    %6080 = vmatprep.subr.mxu0 0.0
    %6081 = vmatpush1.msra.mxu0 0.0
    %6082 = vmatprep.subr.mxu0 0.0
    %6083 = vmatpush1.msra.mxu0 0.0
    %6084 = vmatprep.subr.mxu0 0.0
    %6085 = vmatpush1.msra.mxu0 0.0
    %6086 = vmatprep.subr.mxu0 0.0
    %6087 = vmatpush1.msra.mxu0 0.0
    %6088 = vmatprep.subr.mxu0 0.0
    %6089 = vmatpush1.msra.mxu0 0.0
    %6090 = vmatprep.subr.mxu0 0.0
    %6091 = vmatpush1.msra.mxu0 0.0
    %6092 = vmatprep.subr.mxu0 0.0
    %6093 = vmatpush1.msra.mxu0 0.0
    %6094 = vmatprep.subr.mxu0 0.0
    %6095 = vmatpush1.msra.mxu0 0.0
    %6096 = vmatprep.subr.mxu0 0.0
    %6097 = vmatpush1.msra.mxu0 0.0
    %6098 = vmatprep.subr.mxu0 0.0
    %6099 = vmatpush1.msra.mxu0 0.0
    %6100 = vmatprep.subr.mxu0 0.0
    %6101 = vmatpush1.msra.mxu0 0.0
    %6102 = vmatprep.subr.mxu0 0.0
    %6103 = vmatpush1.msra.mxu0 0.0
    %6104 = vmatprep.subr.mxu0 0.0
    %6105 = vmatpush1.msra.mxu0 0.0
    %6106 = vmatprep.subr.mxu0 0.0
    %6107 = vmatpush1.msra.mxu0 0.0
    %6108 = vmatprep.subr.mxu0 0.0
    %6109 = vmatpush1.msra.mxu0 0.0
    %6110 = vmatprep.subr.mxu0 0.0
    %6111 = vmatpush1.msra.mxu0 0.0
    %6112 = vmatprep.subr.mxu0 0.0
    %6113 = vmatpush1.msra.mxu0 0.0
    %6114 = vmatprep.subr.mxu0 0.0
    %6115 = vmatpush1.msra.mxu0 0.0
    %6116 = vmatprep.subr.mxu0 0.0
    %6117 = vmatpush1.msra.mxu0 0.0
    %6118 = vmatprep.subr.mxu0 0.0
    %6119 = vmatpush1.msra.mxu0 0.0
    %6120 = vmatprep.subr.mxu0 0.0
    %6121 = vmatpush1.msra.mxu0 0.0
    %6122 = vmatprep.subr.mxu0 0.0
    %6123 = vmatpush1.msra.mxu0 0.0
    %6124 = vmatprep.subr.mxu0 0.0
    %6125 = vmatpush1.msra.mxu0 0.0
    %6126 = vmatprep.subr.mxu0 0.0
    %6127 = vmatpush1.msra.mxu0 0.0
    %6128 = vmatprep.subr.mxu0 0.0
    %6129 = vmatpush1.msra.mxu0 0.0
    %6130 = vmatprep.subr.mxu0 0.0
    %6131 = vmatpush1.msra.mxu0 0.0
    %6132 = vmatprep.subr.mxu0 0.0
    %6133 = vmatpush1.msra.mxu0 0.0
    %6134 = vmatprep.mubr.f32.mxu0 0.0
    %v6135 = vand.u32 %v1268, 4294901760
    %v6136 = vsub.f32 %v1268, %v6135
    %v6137 = vand.u32 %v6136, 4294901760
    %6138 = vmatmul.mubr.f32.gmra.mrb[0].mxu0 %v6137
    %v6139 = vpop.f32.mrb[0].mxu0
    %v6140 = vadd.f32 %v6030, %v6139
    %v6141 = vpop.f32.mrb[0].mxu0
    %6142 = vmatprep.mubr.f32.mxu0 0.0
    %v6143 = vand.u32 %v1271, 4294901760
    %v6144 = vsub.f32 %v1271, %v6143
    %v6145 = vand.u32 %v6144, 4294901760
    %6146 = vmatmul.mubr.f32.gmra.mrb[0].mxu0 %v6145
    %v6147 = vpop.f32.mrb[0].mxu0
    %v6148 = vadd.f32 %v6037, %v6147
    %v6149 = vpop.f32.mrb[0].mxu0
    %6150 = vmatprep.mubr.f32.mxu0 0.0
    %v6151 = vand.u32 %v1274, 4294901760
    %v6152 = vsub.f32 %v1274, %v6151
    %v6153 = vand.u32 %v6152, 4294901760
    %6154 = vmatmul.mubr.f32.gmra.mrb[0].mxu0 %v6153
    %v6155 = vpop.f32.mrb[0].mxu0
    %v6156 = vadd.f32 %v6044, %v6155
    %v6157 = vpop.f32.mrb[0].mxu0
    %6158 = vmatprep.mubr.f32.mxu0 0.0
    %v6159 = vand.u32 %v1277, 4294901760
    %v6160 = vsub.f32 %v1277, %v6159
    %v6161 = vand.u32 %v6160, 4294901760
    %6162 = vmatmul.mubr.f32.gmra.mrb[0].mxu0 %v6161
    %v6163 = vpop.f32.mrb[0].mxu0
    %v6164 = vadd.f32 %v6051, %v6163
    %v6165 = vpop.f32.mrb[0].mxu0
    %6166 = vmatprep.mubr.f32.mxu0 0.0
    %v6167 = vand.u32 %v1280, 4294901760
    %v6168 = vsub.f32 %v1280, %v6167
    %v6169 = vand.u32 %v6168, 4294901760
    %6170 = vmatmul.mubr.f32.gmra.mrb[0].mxu0 %v6169
    %v6171 = vpop.f32.mrb[0].mxu0
    %v6172 = vadd.f32 %v6058, %v6171
    %v6173 = vpop.f32.mrb[0].mxu0
    %6174 = vmatprep.mubr.f32.mxu0 0.0
    %v6175 = vand.u32 %v1283, 4294901760
    %v6176 = vsub.f32 %v1283, %v6175
    %v6177 = vand.u32 %v6176, 4294901760
    %6178 = vmatmul.mubr.f32.gmra.mrb[0].mxu0 %v6177
    %v6179 = vpop.f32.mrb[0].mxu0
    %v6180 = vadd.f32 %v6065, %v6179
    %v6181 = vpop.f32.mrb[0].mxu0
    %6182 = vdwg.mxu0
    %6183 = vmatprep.subr.mxu0 0.0
    %v6184 = vand.u32 %v5717, 4294901760
    %v6185 = vsub.f32 %v5717, %v6184
    %v6186 = vand.u32 %v6185, 4294901760
    %6187 = vmatpush1.msra.mxu0 %v6186
    %6188 = vmatprep.subr.mxu0 0.0
    %v6189 = vand.u32 %v5718, 4294901760
    %v6190 = vsub.f32 %v5718, %v6189
    %v6191 = vand.u32 %v6190, 4294901760
    %6192 = vmatpush1.msra.mxu0 %v6191
    %6193 = vmatprep.subr.mxu0 0.0
    %6194 = vmatpush1.msra.mxu0 0.0
    %6195 = vmatprep.subr.mxu0 0.0
    %6196 = vmatpush1.msra.mxu0 0.0
    %6197 = vmatprep.subr.mxu0 0.0
    %6198 = vmatpush1.msra.mxu0 0.0
    %6199 = vmatprep.subr.mxu0 0.0
    %6200 = vmatpush1.msra.mxu0 0.0
    %6201 = vmatprep.subr.mxu0 0.0
    %6202 = vmatpush1.msra.mxu0 0.0
    %6203 = vmatprep.subr.mxu0 0.0
    %6204 = vmatpush1.msra.mxu0 0.0
    %6205 = vmatprep.subr.mxu0 0.0
    %6206 = vmatpush1.msra.mxu0 0.0
    %6207 = vmatprep.subr.mxu0 0.0
    %6208 = vmatpush1.msra.mxu0 0.0
    %6209 = vmatprep.subr.mxu0 0.0
    %6210 = vmatpush1.msra.mxu0 0.0
    %6211 = vmatprep.subr.mxu0 0.0
    %6212 = vmatpush1.msra.mxu0 0.0
    %6213 = vmatprep.subr.mxu0 0.0
    %6214 = vmatpush1.msra.mxu0 0.0
    %6215 = vmatprep.subr.mxu0 0.0
    %6216 = vmatpush1.msra.mxu0 0.0
    %6217 = vmatprep.subr.mxu0 0.0
    %6218 = vmatpush1.msra.mxu0 0.0
    %6219 = vmatprep.subr.mxu0 0.0
    %6220 = vmatpush1.msra.mxu0 0.0
    %6221 = vmatprep.subr.mxu0 0.0
    %6222 = vmatpush1.msra.mxu0 0.0
    %6223 = vmatprep.subr.mxu0 0.0
    %6224 = vmatpush1.msra.mxu0 0.0
    %6225 = vmatprep.subr.mxu0 0.0
    %6226 = vmatpush1.msra.mxu0 0.0
    %6227 = vmatprep.subr.mxu0 0.0
    %6228 = vmatpush1.msra.mxu0 0.0
    %6229 = vmatprep.subr.mxu0 0.0
    %6230 = vmatpush1.msra.mxu0 0.0
    %6231 = vmatprep.subr.mxu0 0.0
    %6232 = vmatpush1.msra.mxu0 0.0
    %6233 = vmatprep.subr.mxu0 0.0
    %6234 = vmatpush1.msra.mxu0 0.0
    %6235 = vmatprep.subr.mxu0 0.0
    %6236 = vmatpush1.msra.mxu0 0.0
    %6237 = vmatprep.subr.mxu0 0.0
    %6238 = vmatpush1.msra.mxu0 0.0
    %6239 = vmatprep.subr.mxu0 0.0
    %6240 = vmatpush1.msra.mxu0 0.0
    %6241 = vmatprep.subr.mxu0 0.0
    %6242 = vmatpush1.msra.mxu0 0.0
    %6243 = vmatprep.subr.mxu0 0.0
    %6244 = vmatpush1.msra.mxu0 0.0
    %6245 = vmatprep.subr.mxu0 0.0
    %6246 = vmatpush1.msra.mxu0 0.0
    %6247 = vmatprep.subr.mxu0 0.0
    %6248 = vmatpush1.msra.mxu0 0.0
    %6249 = vmatprep.subr.mxu0 0.0
    %6250 = vmatpush1.msra.mxu0 0.0
    %6251 = vmatprep.subr.mxu0 0.0
    %6252 = vmatpush1.msra.mxu0 0.0
    %6253 = vmatprep.mubr.f32.mxu0 0.0
    %v6254 = vand.u32 %v1268, 4294901760
    %6255 = vmatmul.mubr.f32.gmra.mrb[0].mxu0 %v6254
    %v6256 = vpop.f32.mrb[0].mxu0
    %v6257 = vadd.f32 %v6140, %v6256
    %v6258 = vpop.f32.mrb[0].mxu0
    %6259 = vmatprep.mubr.f32.mxu0 0.0
    %v6260 = vand.u32 %v1271, 4294901760
    %6261 = vmatmul.mubr.f32.gmra.mrb[0].mxu0 %v6260
    %v6262 = vpop.f32.mrb[0].mxu0
    %v6263 = vadd.f32 %v6148, %v6262
    %v6264 = vpop.f32.mrb[0].mxu0
    %6265 = vmatprep.mubr.f32.mxu0 0.0
    %v6266 = vand.u32 %v1274, 4294901760
    %6267 = vmatmul.mubr.f32.gmra.mrb[0].mxu0 %v6266
    %v6268 = vpop.f32.mrb[0].mxu0
    %v6269 = vadd.f32 %v6156, %v6268
    %v6270 = vpop.f32.mrb[0].mxu0
    %6271 = vmatprep.mubr.f32.mxu0 0.0
    %v6272 = vand.u32 %v1277, 4294901760
    %6273 = vmatmul.mubr.f32.gmra.mrb[0].mxu0 %v6272
    %v6274 = vpop.f32.mrb[0].mxu0
    %v6275 = vadd.f32 %v6164, %v6274
    %v6276 = vpop.f32.mrb[0].mxu0
    %6277 = vmatprep.mubr.f32.mxu0 0.0
    %v6278 = vand.u32 %v1280, 4294901760
    %6279 = vmatmul.mubr.f32.gmra.mrb[0].mxu0 %v6278
    %v6280 = vpop.f32.mrb[0].mxu0
    %v6281 = vadd.f32 %v6172, %v6280
    %v6282 = vpop.f32.mrb[0].mxu0
    %6283 = vmatprep.mubr.f32.mxu0 0.0
    %v6284 = vand.u32 %v1283, 4294901760
    %6285 = vmatmul.mubr.f32.gmra.mrb[0].mxu0 %v6284
    %v6286 = vpop.f32.mrb[0].mxu0
    %v6287 = vadd.f32 %v6180, %v6286
    %v6288 = vpop.f32.mrb[0].mxu0
    %6289 = vdwg.mxu0
    %6290 = vmatprep.subr.mxu0 0.0
    %v6291 = vand.u32 %v5717, 4294901760
    %6292 = vmatpush1.msra.mxu0 %v6291
    %6293 = vmatprep.subr.mxu0 0.0
    %v6294 = vand.u32 %v5718, 4294901760
    %6295 = vmatpush1.msra.mxu0 %v6294
    %6296 = vmatprep.subr.mxu0 0.0
    %6297 = vmatpush1.msra.mxu0 0.0
    %6298 = vmatprep.subr.mxu0 0.0
    %6299 = vmatpush1.msra.mxu0 0.0
    %6300 = vmatprep.subr.mxu0 0.0
    %6301 = vmatpush1.msra.mxu0 0.0
    %6302 = vmatprep.subr.mxu0 0.0
    %6303 = vmatpush1.msra.mxu0 0.0
    %6304 = vmatprep.subr.mxu0 0.0
    %6305 = vmatpush1.msra.mxu0 0.0
    %6306 = vmatprep.subr.mxu0 0.0
    %6307 = vmatpush1.msra.mxu0 0.0
    %6308 = vmatprep.subr.mxu0 0.0
    %6309 = vmatpush1.msra.mxu0 0.0
    %6310 = vmatprep.subr.mxu0 0.0
    %6311 = vmatpush1.msra.mxu0 0.0
    %6312 = vmatprep.subr.mxu0 0.0
    %6313 = vmatpush1.msra.mxu0 0.0
    %6314 = vmatprep.subr.mxu0 0.0
    %6315 = vmatpush1.msra.mxu0 0.0
    %6316 = vmatprep.subr.mxu0 0.0
    %6317 = vmatpush1.msra.mxu0 0.0
    %6318 = vmatprep.subr.mxu0 0.0
    %6319 = vmatpush1.msra.mxu0 0.0
    %6320 = vmatprep.subr.mxu0 0.0
    %6321 = vmatpush1.msra.mxu0 0.0
    %6322 = vmatprep.subr.mxu0 0.0
    %6323 = vmatpush1.msra.mxu0 0.0
    %6324 = vmatprep.subr.mxu0 0.0
    %6325 = vmatpush1.msra.mxu0 0.0
    %6326 = vmatprep.subr.mxu0 0.0
    %6327 = vmatpush1.msra.mxu0 0.0
    %6328 = vmatprep.subr.mxu0 0.0
    %6329 = vmatpush1.msra.mxu0 0.0
    %6330 = vmatprep.subr.mxu0 0.0
    %6331 = vmatpush1.msra.mxu0 0.0
    %6332 = vmatprep.subr.mxu0 0.0
    %6333 = vmatpush1.msra.mxu0 0.0
    %6334 = vmatprep.subr.mxu0 0.0
    %6335 = vmatpush1.msra.mxu0 0.0
    %6336 = vmatprep.subr.mxu0 0.0
    %6337 = vmatpush1.msra.mxu0 0.0
    %6338 = vmatprep.subr.mxu0 0.0
    %6339 = vmatpush1.msra.mxu0 0.0
    %6340 = vmatprep.subr.mxu0 0.0
    %6341 = vmatpush1.msra.mxu0 0.0
    %6342 = vmatprep.subr.mxu0 0.0
    %6343 = vmatpush1.msra.mxu0 0.0
    %6344 = vmatprep.subr.mxu0 0.0
    %6345 = vmatpush1.msra.mxu0 0.0
    %6346 = vmatprep.subr.mxu0 0.0
    %6347 = vmatpush1.msra.mxu0 0.0
    %6348 = vmatprep.subr.mxu0 0.0
    %6349 = vmatpush1.msra.mxu0 0.0
    %6350 = vmatprep.subr.mxu0 0.0
    %6351 = vmatpush1.msra.mxu0 0.0
    %6352 = vmatprep.subr.mxu0 0.0
    %6353 = vmatpush1.msra.mxu0 0.0
    %6354 = vmatprep.subr.mxu0 0.0
    %6355 = vmatpush1.msra.mxu0 0.0
    %6356 = vmatprep.mubr.f32.mxu0 0.0
    %v6357 = vand.u32 %v1268, 4294901760
    %6358 = vmatmul.mubr.f32.gmra.mrb[0].mxu0 %v6357
    %v6359 = vpop.f32.mrb[0].mxu0
    %v6360 = vadd.f32 %v6257, %v6359
    %v6361 = vpop.f32.mrb[0].mxu0
    %6362 = vmatprep.mubr.f32.mxu0 0.0
    %v6363 = vand.u32 %v1271, 4294901760
    %6364 = vmatmul.mubr.f32.gmra.mrb[0].mxu0 %v6363
    %v6365 = vpop.f32.mrb[0].mxu0
    %v6366 = vadd.f32 %v6263, %v6365
    %v6367 = vpop.f32.mrb[0].mxu0
    %6368 = vmatprep.mubr.f32.mxu0 0.0
    %v6369 = vand.u32 %v1274, 4294901760
    %6370 = vmatmul.mubr.f32.gmra.mrb[0].mxu0 %v6369
    %v6371 = vpop.f32.mrb[0].mxu0
    %v6372 = vadd.f32 %v6269, %v6371
    %v6373 = vpop.f32.mrb[0].mxu0
    %6374 = vmatprep.mubr.f32.mxu0 0.0
    %v6375 = vand.u32 %v1277, 4294901760
    %6376 = vmatmul.mubr.f32.gmra.mrb[0].mxu0 %v6375
    %v6377 = vpop.f32.mrb[0].mxu0
    %v6378 = vadd.f32 %v6275, %v6377
    %v6379 = vpop.f32.mrb[0].mxu0
    %6380 = vmatprep.mubr.f32.mxu0 0.0
    %v6381 = vand.u32 %v1280, 4294901760
    %6382 = vmatmul.mubr.f32.gmra.mrb[0].mxu0 %v6381
    %v6383 = vpop.f32.mrb[0].mxu0
    %v6384 = vadd.f32 %v6281, %v6383
    %v6385 = vpop.f32.mrb[0].mxu0
    %6386 = vmatprep.mubr.f32.mxu0 0.0
    %v6387 = vand.u32 %v1283, 4294901760
    %6388 = vmatmul.mubr.f32.gmra.mrb[0].mxu0 %v6387
    %v6389 = vpop.f32.mrb[0].mxu0
    %v6390 = vadd.f32 %v6287, %v6389
    %v6391 = vpop.f32.mrb[0].mxu0
    %6392 = vdwg.mxu0
    %6395 = vrot.lane.b32.xlu0 %v5717, 96
    %v6396 = vpop.permute.xlu0 %6395
    %6397 = vrot.lane.b32.xlu0 %v5718, 96
    %v6398 = vpop.permute.xlu0 %6397
    %6401 = vmatprep.subr.mxu0 0.0
    %v6402 = vand.u32 %v6396, 4294901760
    %6403 = vmatpush1.msra.mxu0 %v6402
    %6404 = vmatprep.subr.mxu0 0.0
    %v6405 = vand.u32 %v6398, 4294901760
    %6406 = vmatpush1.msra.mxu0 %v6405
    %6407 = vmatprep.subr.mxu0 0.0
    %6408 = vmatpush1.msra.mxu0 0.0
    %6409 = vmatprep.subr.mxu0 0.0
    %6410 = vmatpush1.msra.mxu0 0.0
    %6411 = vmatprep.subr.mxu0 0.0
    %6412 = vmatpush1.msra.mxu0 0.0
    %6413 = vmatprep.subr.mxu0 0.0
    %6414 = vmatpush1.msra.mxu0 0.0
    %6415 = vmatprep.subr.mxu0 0.0
    %6416 = vmatpush1.msra.mxu0 0.0
    %6417 = vmatprep.subr.mxu0 0.0
    %6418 = vmatpush1.msra.mxu0 0.0
    %6419 = vmatprep.subr.mxu0 0.0
    %6420 = vmatpush1.msra.mxu0 0.0
    %6421 = vmatprep.subr.mxu0 0.0
    %6422 = vmatpush1.msra.mxu0 0.0
    %6423 = vmatprep.subr.mxu0 0.0
    %6424 = vmatpush1.msra.mxu0 0.0
    %6425 = vmatprep.subr.mxu0 0.0
    %6426 = vmatpush1.msra.mxu0 0.0
    %6427 = vmatprep.subr.mxu0 0.0
    %6428 = vmatpush1.msra.mxu0 0.0
    %6429 = vmatprep.subr.mxu0 0.0
    %6430 = vmatpush1.msra.mxu0 0.0
    %6431 = vmatprep.subr.mxu0 0.0
    %6432 = vmatpush1.msra.mxu0 0.0
    %6433 = vmatprep.subr.mxu0 0.0
    %6434 = vmatpush1.msra.mxu0 0.0
    %6435 = vmatprep.subr.mxu0 0.0
    %6436 = vmatpush1.msra.mxu0 0.0
    %6437 = vmatprep.subr.mxu0 0.0
    %6438 = vmatpush1.msra.mxu0 0.0
    %6439 = vmatprep.subr.mxu0 0.0
    %6440 = vmatpush1.msra.mxu0 0.0
    %6441 = vmatprep.subr.mxu0 0.0
    %6442 = vmatpush1.msra.mxu0 0.0
    %6443 = vmatprep.subr.mxu0 0.0
    %6444 = vmatpush1.msra.mxu0 0.0
    %6445 = vmatprep.subr.mxu0 0.0
    %6446 = vmatpush1.msra.mxu0 0.0
    %6447 = vmatprep.subr.mxu0 0.0
    %6448 = vmatpush1.msra.mxu0 0.0
    %6449 = vmatprep.subr.mxu0 0.0
    %6450 = vmatpush1.msra.mxu0 0.0
    %6451 = vmatprep.subr.mxu0 0.0
    %6452 = vmatpush1.msra.mxu0 0.0
    %6453 = vmatprep.subr.mxu0 0.0
    %6454 = vmatpush1.msra.mxu0 0.0
    %6455 = vmatprep.subr.mxu0 0.0
    %6456 = vmatpush1.msra.mxu0 0.0
    %6457 = vmatprep.subr.mxu0 0.0
    %6458 = vmatpush1.msra.mxu0 0.0
    %6459 = vmatprep.subr.mxu0 0.0
    %6460 = vmatpush1.msra.mxu0 0.0
    %6461 = vmatprep.subr.mxu0 0.0
    %6462 = vmatpush1.msra.mxu0 0.0
    %6463 = vmatprep.subr.mxu0 0.0
    %6464 = vmatpush1.msra.mxu0 0.0
    %6465 = vmatprep.subr.mxu0 0.0
    %6466 = vmatpush1.msra.mxu0 0.0
    %6467 = vmatprep.mubr.f32.mxu0 0.0
    %v6468 = vand.u32 %v1968, 4294901760
    %v6469 = vsub.f32 %v1968, %v6468
    %v6470 = vand.u32 %v6469, 4294901760
    %v6471 = vsub.f32 %v6469, %v6470
    %v6472 = vand.u32 %v6471, 4294901760
    %6473 = vmatmul.mubr.f32.gmra.mrb[0].mxu0 %v6472
    %v6474 = vpop.f32.mrb[0].mxu0
    %v6475 = vadd.f32 0.0, %v6474
    %v6476 = vpop.f32.mrb[0].mxu0
    %6477 = vmatprep.mubr.f32.mxu0 0.0
    %v6478 = vand.u32 %v1971, 4294901760
    %v6479 = vsub.f32 %v1971, %v6478
    %v6480 = vand.u32 %v6479, 4294901760
    %v6481 = vsub.f32 %v6479, %v6480
    %v6482 = vand.u32 %v6481, 4294901760
    %6483 = vmatmul.mubr.f32.gmra.mrb[0].mxu0 %v6482
    %v6484 = vpop.f32.mrb[0].mxu0
    %v6485 = vadd.f32 0.0, %v6484
    %v6486 = vpop.f32.mrb[0].mxu0
    %6487 = vmatprep.mubr.f32.mxu0 0.0
    %v6488 = vand.u32 %v1974, 4294901760
    %v6489 = vsub.f32 %v1974, %v6488
    %v6490 = vand.u32 %v6489, 4294901760
    %v6491 = vsub.f32 %v6489, %v6490
    %v6492 = vand.u32 %v6491, 4294901760
    %6493 = vmatmul.mubr.f32.gmra.mrb[0].mxu0 %v6492
    %v6494 = vpop.f32.mrb[0].mxu0
    %v6495 = vadd.f32 0.0, %v6494
    %v6496 = vpop.f32.mrb[0].mxu0
    %6497 = vmatprep.mubr.f32.mxu0 0.0
    %v6498 = vand.u32 %v1977, 4294901760
    %v6499 = vsub.f32 %v1977, %v6498
    %v6500 = vand.u32 %v6499, 4294901760
    %v6501 = vsub.f32 %v6499, %v6500
    %v6502 = vand.u32 %v6501, 4294901760
    %6503 = vmatmul.mubr.f32.gmra.mrb[0].mxu0 %v6502
    %v6504 = vpop.f32.mrb[0].mxu0
    %v6505 = vadd.f32 0.0, %v6504
    %v6506 = vpop.f32.mrb[0].mxu0
    %6507 = vmatprep.mubr.f32.mxu0 0.0
    %v6508 = vand.u32 %v1980, 4294901760
    %v6509 = vsub.f32 %v1980, %v6508
    %v6510 = vand.u32 %v6509, 4294901760
    %v6511 = vsub.f32 %v6509, %v6510
    %v6512 = vand.u32 %v6511, 4294901760
    %6513 = vmatmul.mubr.f32.gmra.mrb[0].mxu0 %v6512
    %v6514 = vpop.f32.mrb[0].mxu0
    %v6515 = vadd.f32 0.0, %v6514
    %v6516 = vpop.f32.mrb[0].mxu0
    %6517 = vmatprep.mubr.f32.mxu0 0.0
    %v6518 = vand.u32 %v1983, 4294901760
    %v6519 = vsub.f32 %v1983, %v6518
    %v6520 = vand.u32 %v6519, 4294901760
    %v6521 = vsub.f32 %v6519, %v6520
    %v6522 = vand.u32 %v6521, 4294901760
    %6523 = vmatmul.mubr.f32.gmra.mrb[0].mxu0 %v6522
    %v6524 = vpop.f32.mrb[0].mxu0
    %v6525 = vadd.f32 0.0, %v6524
    %v6526 = vpop.f32.mrb[0].mxu0
    %6527 = vdwg.mxu0
    %6528 = vmatprep.subr.mxu0 0.0
    %v6529 = vand.u32 %v6396, 4294901760
    %v6530 = vsub.f32 %v6396, %v6529
    %v6531 = vand.u32 %v6530, 4294901760
    %v6532 = vsub.f32 %v6530, %v6531
    %v6533 = vand.u32 %v6532, 4294901760
    %6534 = vmatpush1.msra.mxu0 %v6533
    %6535 = vmatprep.subr.mxu0 0.0
    %v6536 = vand.u32 %v6398, 4294901760
    %v6537 = vsub.f32 %v6398, %v6536
    %v6538 = vand.u32 %v6537, 4294901760
    %v6539 = vsub.f32 %v6537, %v6538
    %v6540 = vand.u32 %v6539, 4294901760
    %6541 = vmatpush1.msra.mxu0 %v6540
    %6542 = vmatprep.subr.mxu0 0.0
    %6543 = vmatpush1.msra.mxu0 0.0
    %6544 = vmatprep.subr.mxu0 0.0
    %6545 = vmatpush1.msra.mxu0 0.0
    %6546 = vmatprep.subr.mxu0 0.0
    %6547 = vmatpush1.msra.mxu0 0.0
    %6548 = vmatprep.subr.mxu0 0.0
    %6549 = vmatpush1.msra.mxu0 0.0
    %6550 = vmatprep.subr.mxu0 0.0
    %6551 = vmatpush1.msra.mxu0 0.0
    %6552 = vmatprep.subr.mxu0 0.0
    %6553 = vmatpush1.msra.mxu0 0.0
    %6554 = vmatprep.subr.mxu0 0.0
    %6555 = vmatpush1.msra.mxu0 0.0
    %6556 = vmatprep.subr.mxu0 0.0
    %6557 = vmatpush1.msra.mxu0 0.0
    %6558 = vmatprep.subr.mxu0 0.0
    %6559 = vmatpush1.msra.mxu0 0.0
    %6560 = vmatprep.subr.mxu0 0.0
    %6561 = vmatpush1.msra.mxu0 0.0
    %6562 = vmatprep.subr.mxu0 0.0
    %6563 = vmatpush1.msra.mxu0 0.0
    %6564 = vmatprep.subr.mxu0 0.0
    %6565 = vmatpush1.msra.mxu0 0.0
    %6566 = vmatprep.subr.mxu0 0.0
    %6567 = vmatpush1.msra.mxu0 0.0
    %6568 = vmatprep.subr.mxu0 0.0
    %6569 = vmatpush1.msra.mxu0 0.0
    %6570 = vmatprep.subr.mxu0 0.0
    %6571 = vmatpush1.msra.mxu0 0.0
    %6572 = vmatprep.subr.mxu0 0.0
    %6573 = vmatpush1.msra.mxu0 0.0
    %6574 = vmatprep.subr.mxu0 0.0
    %6575 = vmatpush1.msra.mxu0 0.0
    %6576 = vmatprep.subr.mxu0 0.0
    %6577 = vmatpush1.msra.mxu0 0.0
    %6578 = vmatprep.subr.mxu0 0.0
    %6579 = vmatpush1.msra.mxu0 0.0
    %6580 = vmatprep.subr.mxu0 0.0
    %6581 = vmatpush1.msra.mxu0 0.0
    %6582 = vmatprep.subr.mxu0 0.0
    %6583 = vmatpush1.msra.mxu0 0.0
    %6584 = vmatprep.subr.mxu0 0.0
    %6585 = vmatpush1.msra.mxu0 0.0
    %6586 = vmatprep.subr.mxu0 0.0
    %6587 = vmatpush1.msra.mxu0 0.0
    %6588 = vmatprep.subr.mxu0 0.0
    %6589 = vmatpush1.msra.mxu0 0.0
    %6590 = vmatprep.subr.mxu0 0.0
    %6591 = vmatpush1.msra.mxu0 0.0
    %6592 = vmatprep.subr.mxu0 0.0
    %6593 = vmatpush1.msra.mxu0 0.0
    %6594 = vmatprep.subr.mxu0 0.0
    %6595 = vmatpush1.msra.mxu0 0.0
    %6596 = vmatprep.subr.mxu0 0.0
    %6597 = vmatpush1.msra.mxu0 0.0
    %6598 = vmatprep.subr.mxu0 0.0
    %6599 = vmatpush1.msra.mxu0 0.0
    %6600 = vmatprep.subr.mxu0 0.0
    %6601 = vmatpush1.msra.mxu0 0.0
    %6602 = vmatprep.mubr.f32.mxu0 0.0
    %v6603 = vand.u32 %v1968, 4294901760
    %6604 = vmatmul.mubr.f32.gmra.mrb[0].mxu0 %v6603
    %v6605 = vpop.f32.mrb[0].mxu0
    %v6606 = vadd.f32 %v6475, %v6605
    %v6607 = vpop.f32.mrb[0].mxu0
    %6608 = vmatprep.mubr.f32.mxu0 0.0
    %v6609 = vand.u32 %v1971, 4294901760
    %6610 = vmatmul.mubr.f32.gmra.mrb[0].mxu0 %v6609
    %v6611 = vpop.f32.mrb[0].mxu0
    %v6612 = vadd.f32 %v6485, %v6611
    %v6613 = vpop.f32.mrb[0].mxu0
    %6614 = vmatprep.mubr.f32.mxu0 0.0
    %v6615 = vand.u32 %v1974, 4294901760
    %6616 = vmatmul.mubr.f32.gmra.mrb[0].mxu0 %v6615
    %v6617 = vpop.f32.mrb[0].mxu0
    %v6618 = vadd.f32 %v6495, %v6617
    %v6619 = vpop.f32.mrb[0].mxu0
    %6620 = vmatprep.mubr.f32.mxu0 0.0
    %v6621 = vand.u32 %v1977, 4294901760
    %6622 = vmatmul.mubr.f32.gmra.mrb[0].mxu0 %v6621
    %v6623 = vpop.f32.mrb[0].mxu0
    %v6624 = vadd.f32 %v6505, %v6623
    %v6625 = vpop.f32.mrb[0].mxu0
    %6626 = vmatprep.mubr.f32.mxu0 0.0
    %v6627 = vand.u32 %v1980, 4294901760
    %6628 = vmatmul.mubr.f32.gmra.mrb[0].mxu0 %v6627
    %v6629 = vpop.f32.mrb[0].mxu0
    %v6630 = vadd.f32 %v6515, %v6629
    %v6631 = vpop.f32.mrb[0].mxu0
    %6632 = vmatprep.mubr.f32.mxu0 0.0
    %v6633 = vand.u32 %v1983, 4294901760
    %6634 = vmatmul.mubr.f32.gmra.mrb[0].mxu0 %v6633
    %v6635 = vpop.f32.mrb[0].mxu0
    %v6636 = vadd.f32 %v6525, %v6635
    %v6637 = vpop.f32.mrb[0].mxu0
    %6638 = vdwg.mxu0
    %6639 = vmatprep.subr.mxu0 0.0
    %v6640 = vand.u32 %v6396, 4294901760
    %v6641 = vsub.f32 %v6396, %v6640
    %6642 = vmatpush1.msra.mxu0 %v6641
    %6643 = vmatprep.subr.mxu0 0.0
    %v6644 = vand.u32 %v6398, 4294901760
    %v6645 = vsub.f32 %v6398, %v6644
    %6646 = vmatpush1.msra.mxu0 %v6645
    %6647 = vmatprep.subr.mxu0 0.0
    %6648 = vmatpush1.msra.mxu0 0.0
    %6649 = vmatprep.subr.mxu0 0.0
    %6650 = vmatpush1.msra.mxu0 0.0
    %6651 = vmatprep.subr.mxu0 0.0
    %6652 = vmatpush1.msra.mxu0 0.0
    %6653 = vmatprep.subr.mxu0 0.0
    %6654 = vmatpush1.msra.mxu0 0.0
    %6655 = vmatprep.subr.mxu0 0.0
    %6656 = vmatpush1.msra.mxu0 0.0
    %6657 = vmatprep.subr.mxu0 0.0
    %6658 = vmatpush1.msra.mxu0 0.0
    %6659 = vmatprep.subr.mxu0 0.0
    %6660 = vmatpush1.msra.mxu0 0.0
    %6661 = vmatprep.subr.mxu0 0.0
    %6662 = vmatpush1.msra.mxu0 0.0
    %6663 = vmatprep.subr.mxu0 0.0
    %6664 = vmatpush1.msra.mxu0 0.0
    %6665 = vmatprep.subr.mxu0 0.0
    %6666 = vmatpush1.msra.mxu0 0.0
    %6667 = vmatprep.subr.mxu0 0.0
    %6668 = vmatpush1.msra.mxu0 0.0
    %6669 = vmatprep.subr.mxu0 0.0
    %6670 = vmatpush1.msra.mxu0 0.0
    %6671 = vmatprep.subr.mxu0 0.0
    %6672 = vmatpush1.msra.mxu0 0.0
    %6673 = vmatprep.subr.mxu0 0.0
    %6674 = vmatpush1.msra.mxu0 0.0
    %6675 = vmatprep.subr.mxu0 0.0
    %6676 = vmatpush1.msra.mxu0 0.0
    %6677 = vmatprep.subr.mxu0 0.0
    %6678 = vmatpush1.msra.mxu0 0.0
    %6679 = vmatprep.subr.mxu0 0.0
    %6680 = vmatpush1.msra.mxu0 0.0
    %6681 = vmatprep.subr.mxu0 0.0
    %6682 = vmatpush1.msra.mxu0 0.0
    %6683 = vmatprep.subr.mxu0 0.0
    %6684 = vmatpush1.msra.mxu0 0.0
    %6685 = vmatprep.subr.mxu0 0.0
    %6686 = vmatpush1.msra.mxu0 0.0
    %6687 = vmatprep.subr.mxu0 0.0
    %6688 = vmatpush1.msra.mxu0 0.0
    %6689 = vmatprep.subr.mxu0 0.0
    %6690 = vmatpush1.msra.mxu0 0.0
    %6691 = vmatprep.subr.mxu0 0.0
    %6692 = vmatpush1.msra.mxu0 0.0
    %6693 = vmatprep.subr.mxu0 0.0
    %6694 = vmatpush1.msra.mxu0 0.0
    %6695 = vmatprep.subr.mxu0 0.0
    %6696 = vmatpush1.msra.mxu0 0.0
    %6697 = vmatprep.subr.mxu0 0.0
    %6698 = vmatpush1.msra.mxu0 0.0
    %6699 = vmatprep.subr.mxu0 0.0
    %6700 = vmatpush1.msra.mxu0 0.0
    %6701 = vmatprep.subr.mxu0 0.0
    %6702 = vmatpush1.msra.mxu0 0.0
    %6703 = vmatprep.subr.mxu0 0.0
    %6704 = vmatpush1.msra.mxu0 0.0
    %6705 = vmatprep.subr.mxu0 0.0
    %6706 = vmatpush1.msra.mxu0 0.0
    %6707 = vmatprep.mubr.f32.mxu0 0.0
    %v6708 = vand.u32 %v1968, 4294901760
    %v6709 = vsub.f32 %v1968, %v6708
    %6710 = vmatmul.mubr.f32.gmra.mrb[0].mxu0 %v6709
    %v6711 = vpop.f32.mrb[0].mxu0
    %v6712 = vadd.f32 %v6606, %v6711
    %v6713 = vpop.f32.mrb[0].mxu0
    %6714 = vmatprep.mubr.f32.mxu0 0.0
    %v6715 = vand.u32 %v1971, 4294901760
    %v6716 = vsub.f32 %v1971, %v6715
    %6717 = vmatmul.mubr.f32.gmra.mrb[0].mxu0 %v6716
    %v6718 = vpop.f32.mrb[0].mxu0
    %v6719 = vadd.f32 %v6612, %v6718
    %v6720 = vpop.f32.mrb[0].mxu0
    %6721 = vmatprep.mubr.f32.mxu0 0.0
    %v6722 = vand.u32 %v1974, 4294901760
    %v6723 = vsub.f32 %v1974, %v6722
    %6724 = vmatmul.mubr.f32.gmra.mrb[0].mxu0 %v6723
    %v6725 = vpop.f32.mrb[0].mxu0
    %v6726 = vadd.f32 %v6618, %v6725
    %v6727 = vpop.f32.mrb[0].mxu0
    %6728 = vmatprep.mubr.f32.mxu0 0.0
    %v6729 = vand.u32 %v1977, 4294901760
    %v6730 = vsub.f32 %v1977, %v6729
    %6731 = vmatmul.mubr.f32.gmra.mrb[0].mxu0 %v6730
    %v6732 = vpop.f32.mrb[0].mxu0
    %v6733 = vadd.f32 %v6624, %v6732
    %v6734 = vpop.f32.mrb[0].mxu0
    %6735 = vmatprep.mubr.f32.mxu0 0.0
    %v6736 = vand.u32 %v1980, 4294901760
    %v6737 = vsub.f32 %v1980, %v6736
    %6738 = vmatmul.mubr.f32.gmra.mrb[0].mxu0 %v6737
    %v6739 = vpop.f32.mrb[0].mxu0
    %v6740 = vadd.f32 %v6630, %v6739
    %v6741 = vpop.f32.mrb[0].mxu0
    %6742 = vmatprep.mubr.f32.mxu0 0.0
    %v6743 = vand.u32 %v1983, 4294901760
    %v6744 = vsub.f32 %v1983, %v6743
    %6745 = vmatmul.mubr.f32.gmra.mrb[0].mxu0 %v6744
    %v6746 = vpop.f32.mrb[0].mxu0
    %v6747 = vadd.f32 %v6636, %v6746
    %v6748 = vpop.f32.mrb[0].mxu0
    %6749 = vdwg.mxu0
    %6750 = vmatprep.subr.mxu0 0.0
    %v6751 = vand.u32 %v6396, 4294901760
    %6752 = vmatpush1.msra.mxu0 %v6751
    %6753 = vmatprep.subr.mxu0 0.0
    %v6754 = vand.u32 %v6398, 4294901760
    %6755 = vmatpush1.msra.mxu0 %v6754
    %6756 = vmatprep.subr.mxu0 0.0
    %6757 = vmatpush1.msra.mxu0 0.0
    %6758 = vmatprep.subr.mxu0 0.0
    %6759 = vmatpush1.msra.mxu0 0.0
    %6760 = vmatprep.subr.mxu0 0.0
    %6761 = vmatpush1.msra.mxu0 0.0
    %6762 = vmatprep.subr.mxu0 0.0
    %6763 = vmatpush1.msra.mxu0 0.0
    %6764 = vmatprep.subr.mxu0 0.0
    %6765 = vmatpush1.msra.mxu0 0.0
    %6766 = vmatprep.subr.mxu0 0.0
    %6767 = vmatpush1.msra.mxu0 0.0
    %6768 = vmatprep.subr.mxu0 0.0
    %6769 = vmatpush1.msra.mxu0 0.0
    %6770 = vmatprep.subr.mxu0 0.0
    %6771 = vmatpush1.msra.mxu0 0.0
    %6772 = vmatprep.subr.mxu0 0.0
    %6773 = vmatpush1.msra.mxu0 0.0
    %6774 = vmatprep.subr.mxu0 0.0
    %6775 = vmatpush1.msra.mxu0 0.0
    %6776 = vmatprep.subr.mxu0 0.0
    %6777 = vmatpush1.msra.mxu0 0.0
    %6778 = vmatprep.subr.mxu0 0.0
    %6779 = vmatpush1.msra.mxu0 0.0
    %6780 = vmatprep.subr.mxu0 0.0
    %6781 = vmatpush1.msra.mxu0 0.0
    %6782 = vmatprep.subr.mxu0 0.0
    %6783 = vmatpush1.msra.mxu0 0.0
    %6784 = vmatprep.subr.mxu0 0.0
    %6785 = vmatpush1.msra.mxu0 0.0
    %6786 = vmatprep.subr.mxu0 0.0
    %6787 = vmatpush1.msra.mxu0 0.0
    %6788 = vmatprep.subr.mxu0 0.0
    %6789 = vmatpush1.msra.mxu0 0.0
    %6790 = vmatprep.subr.mxu0 0.0
    %6791 = vmatpush1.msra.mxu0 0.0
    %6792 = vmatprep.subr.mxu0 0.0
    %6793 = vmatpush1.msra.mxu0 0.0
    %6794 = vmatprep.subr.mxu0 0.0
    %6795 = vmatpush1.msra.mxu0 0.0
    %6796 = vmatprep.subr.mxu0 0.0
    %6797 = vmatpush1.msra.mxu0 0.0
    %6798 = vmatprep.subr.mxu0 0.0
    %6799 = vmatpush1.msra.mxu0 0.0
    %6800 = vmatprep.subr.mxu0 0.0
    %6801 = vmatpush1.msra.mxu0 0.0
    %6802 = vmatprep.subr.mxu0 0.0
    %6803 = vmatpush1.msra.mxu0 0.0
    %6804 = vmatprep.subr.mxu0 0.0
    %6805 = vmatpush1.msra.mxu0 0.0
    %6806 = vmatprep.subr.mxu0 0.0
    %6807 = vmatpush1.msra.mxu0 0.0
    %6808 = vmatprep.subr.mxu0 0.0
    %6809 = vmatpush1.msra.mxu0 0.0
    %6810 = vmatprep.subr.mxu0 0.0
    %6811 = vmatpush1.msra.mxu0 0.0
    %6812 = vmatprep.subr.mxu0 0.0
    %6813 = vmatpush1.msra.mxu0 0.0
    %6814 = vmatprep.subr.mxu0 0.0
    %6815 = vmatpush1.msra.mxu0 0.0
    %6816 = vmatprep.mubr.f32.mxu0 0.0
    %v6817 = vand.u32 %v1968, 4294901760
    %v6818 = vsub.f32 %v1968, %v6817
    %v6819 = vand.u32 %v6818, 4294901760
    %6820 = vmatmul.mubr.f32.gmra.mrb[0].mxu0 %v6819
    %v6821 = vpop.f32.mrb[0].mxu0
    %v6822 = vadd.f32 %v6712, %v6821
    %v6823 = vpop.f32.mrb[0].mxu0
    %6824 = vmatprep.mubr.f32.mxu0 0.0
    %v6825 = vand.u32 %v1971, 4294901760
    %v6826 = vsub.f32 %v1971, %v6825
    %v6827 = vand.u32 %v6826, 4294901760
    %6828 = vmatmul.mubr.f32.gmra.mrb[0].mxu0 %v6827
    %v6829 = vpop.f32.mrb[0].mxu0
    %v6830 = vadd.f32 %v6719, %v6829
    %v6831 = vpop.f32.mrb[0].mxu0
    %6832 = vmatprep.mubr.f32.mxu0 0.0
    %v6833 = vand.u32 %v1974, 4294901760
    %v6834 = vsub.f32 %v1974, %v6833
    %v6835 = vand.u32 %v6834, 4294901760
    %6836 = vmatmul.mubr.f32.gmra.mrb[0].mxu0 %v6835
    %v6837 = vpop.f32.mrb[0].mxu0
    %v6838 = vadd.f32 %v6726, %v6837
    %v6839 = vpop.f32.mrb[0].mxu0
    %6840 = vmatprep.mubr.f32.mxu0 0.0
    %v6841 = vand.u32 %v1977, 4294901760
    %v6842 = vsub.f32 %v1977, %v6841
    %v6843 = vand.u32 %v6842, 4294901760
    %6844 = vmatmul.mubr.f32.gmra.mrb[0].mxu0 %v6843
    %v6845 = vpop.f32.mrb[0].mxu0
    %v6846 = vadd.f32 %v6733, %v6845
    %v6847 = vpop.f32.mrb[0].mxu0
    %6848 = vmatprep.mubr.f32.mxu0 0.0
    %v6849 = vand.u32 %v1980, 4294901760
    %v6850 = vsub.f32 %v1980, %v6849
    %v6851 = vand.u32 %v6850, 4294901760
    %6852 = vmatmul.mubr.f32.gmra.mrb[0].mxu0 %v6851
    %v6853 = vpop.f32.mrb[0].mxu0
    %v6854 = vadd.f32 %v6740, %v6853
    %v6855 = vpop.f32.mrb[0].mxu0
    %6856 = vmatprep.mubr.f32.mxu0 0.0
    %v6857 = vand.u32 %v1983, 4294901760
    %v6858 = vsub.f32 %v1983, %v6857
    %v6859 = vand.u32 %v6858, 4294901760
    %6860 = vmatmul.mubr.f32.gmra.mrb[0].mxu0 %v6859
    %v6861 = vpop.f32.mrb[0].mxu0
    %v6862 = vadd.f32 %v6747, %v6861
    %v6863 = vpop.f32.mrb[0].mxu0
    %6864 = vdwg.mxu0
    %6865 = vmatprep.subr.mxu0 0.0
    %v6866 = vand.u32 %v6396, 4294901760
    %v6867 = vsub.f32 %v6396, %v6866
    %v6868 = vand.u32 %v6867, 4294901760
    %6869 = vmatpush1.msra.mxu0 %v6868
    %6870 = vmatprep.subr.mxu0 0.0
    %v6871 = vand.u32 %v6398, 4294901760
    %v6872 = vsub.f32 %v6398, %v6871
    %v6873 = vand.u32 %v6872, 4294901760
    %6874 = vmatpush1.msra.mxu0 %v6873
    %6875 = vmatprep.subr.mxu0 0.0
    %6876 = vmatpush1.msra.mxu0 0.0
    %6877 = vmatprep.subr.mxu0 0.0
    %6878 = vmatpush1.msra.mxu0 0.0
    %6879 = vmatprep.subr.mxu0 0.0
    %6880 = vmatpush1.msra.mxu0 0.0
    %6881 = vmatprep.subr.mxu0 0.0
    %6882 = vmatpush1.msra.mxu0 0.0
    %6883 = vmatprep.subr.mxu0 0.0
    %6884 = vmatpush1.msra.mxu0 0.0
    %6885 = vmatprep.subr.mxu0 0.0
    %6886 = vmatpush1.msra.mxu0 0.0
    %6887 = vmatprep.subr.mxu0 0.0
    %6888 = vmatpush1.msra.mxu0 0.0
    %6889 = vmatprep.subr.mxu0 0.0
    %6890 = vmatpush1.msra.mxu0 0.0
    %6891 = vmatprep.subr.mxu0 0.0
    %6892 = vmatpush1.msra.mxu0 0.0
    %6893 = vmatprep.subr.mxu0 0.0
    %6894 = vmatpush1.msra.mxu0 0.0
    %6895 = vmatprep.subr.mxu0 0.0
    %6896 = vmatpush1.msra.mxu0 0.0
    %6897 = vmatprep.subr.mxu0 0.0
    %6898 = vmatpush1.msra.mxu0 0.0
    %6899 = vmatprep.subr.mxu0 0.0
    %6900 = vmatpush1.msra.mxu0 0.0
    %6901 = vmatprep.subr.mxu0 0.0
    %6902 = vmatpush1.msra.mxu0 0.0
    %6903 = vmatprep.subr.mxu0 0.0
    %6904 = vmatpush1.msra.mxu0 0.0
    %6905 = vmatprep.subr.mxu0 0.0
    %6906 = vmatpush1.msra.mxu0 0.0
    %6907 = vmatprep.subr.mxu0 0.0
    %6908 = vmatpush1.msra.mxu0 0.0
    %6909 = vmatprep.subr.mxu0 0.0
    %6910 = vmatpush1.msra.mxu0 0.0
    %6911 = vmatprep.subr.mxu0 0.0
    %6912 = vmatpush1.msra.mxu0 0.0
    %6913 = vmatprep.subr.mxu0 0.0
    %6914 = vmatpush1.msra.mxu0 0.0
    %6915 = vmatprep.subr.mxu0 0.0
    %6916 = vmatpush1.msra.mxu0 0.0
    %6917 = vmatprep.subr.mxu0 0.0
    %6918 = vmatpush1.msra.mxu0 0.0
    %6919 = vmatprep.subr.mxu0 0.0
    %6920 = vmatpush1.msra.mxu0 0.0
    %6921 = vmatprep.subr.mxu0 0.0
    %6922 = vmatpush1.msra.mxu0 0.0
    %6923 = vmatprep.subr.mxu0 0.0
    %6924 = vmatpush1.msra.mxu0 0.0
    %6925 = vmatprep.subr.mxu0 0.0
    %6926 = vmatpush1.msra.mxu0 0.0
    %6927 = vmatprep.subr.mxu0 0.0
    %6928 = vmatpush1.msra.mxu0 0.0
    %6929 = vmatprep.subr.mxu0 0.0
    %6930 = vmatpush1.msra.mxu0 0.0
    %6931 = vmatprep.subr.mxu0 0.0
    %6932 = vmatpush1.msra.mxu0 0.0
    %6933 = vmatprep.subr.mxu0 0.0
    %6934 = vmatpush1.msra.mxu0 0.0
    %6935 = vmatprep.mubr.f32.mxu0 0.0
    %v6936 = vand.u32 %v1968, 4294901760
    %6937 = vmatmul.mubr.f32.gmra.mrb[0].mxu0 %v6936
    %v6938 = vpop.f32.mrb[0].mxu0
    %v6939 = vadd.f32 %v6822, %v6938
    %v6940 = vpop.f32.mrb[0].mxu0
    %6941 = vmatprep.mubr.f32.mxu0 0.0
    %v6942 = vand.u32 %v1971, 4294901760
    %6943 = vmatmul.mubr.f32.gmra.mrb[0].mxu0 %v6942
    %v6944 = vpop.f32.mrb[0].mxu0
    %v6945 = vadd.f32 %v6830, %v6944
    %v6946 = vpop.f32.mrb[0].mxu0
    %6947 = vmatprep.mubr.f32.mxu0 0.0
    %v6948 = vand.u32 %v1974, 4294901760
    %6949 = vmatmul.mubr.f32.gmra.mrb[0].mxu0 %v6948
    %v6950 = vpop.f32.mrb[0].mxu0
    %v6951 = vadd.f32 %v6838, %v6950
    %v6952 = vpop.f32.mrb[0].mxu0
    %6953 = vmatprep.mubr.f32.mxu0 0.0
    %v6954 = vand.u32 %v1977, 4294901760
    %6955 = vmatmul.mubr.f32.gmra.mrb[0].mxu0 %v6954
    %v6956 = vpop.f32.mrb[0].mxu0
    %v6957 = vadd.f32 %v6846, %v6956
    %v6958 = vpop.f32.mrb[0].mxu0
    %6959 = vmatprep.mubr.f32.mxu0 0.0
    %v6960 = vand.u32 %v1980, 4294901760
    %6961 = vmatmul.mubr.f32.gmra.mrb[0].mxu0 %v6960
    %v6962 = vpop.f32.mrb[0].mxu0
    %v6963 = vadd.f32 %v6854, %v6962
    %v6964 = vpop.f32.mrb[0].mxu0
    %6965 = vmatprep.mubr.f32.mxu0 0.0
    %v6966 = vand.u32 %v1983, 4294901760
    %6967 = vmatmul.mubr.f32.gmra.mrb[0].mxu0 %v6966
    %v6968 = vpop.f32.mrb[0].mxu0
    %v6969 = vadd.f32 %v6862, %v6968
    %v6970 = vpop.f32.mrb[0].mxu0
    %6971 = vdwg.mxu0
    %6972 = vmatprep.subr.mxu0 0.0
    %v6973 = vand.u32 %v6396, 4294901760
    %6974 = vmatpush1.msra.mxu0 %v6973
    %6975 = vmatprep.subr.mxu0 0.0
    %v6976 = vand.u32 %v6398, 4294901760
    %6977 = vmatpush1.msra.mxu0 %v6976
    %6978 = vmatprep.subr.mxu0 0.0
    %6979 = vmatpush1.msra.mxu0 0.0
    %6980 = vmatprep.subr.mxu0 0.0
    %6981 = vmatpush1.msra.mxu0 0.0
    %6982 = vmatprep.subr.mxu0 0.0
    %6983 = vmatpush1.msra.mxu0 0.0
    %6984 = vmatprep.subr.mxu0 0.0
    %6985 = vmatpush1.msra.mxu0 0.0
    %6986 = vmatprep.subr.mxu0 0.0
    %6987 = vmatpush1.msra.mxu0 0.0
    %6988 = vmatprep.subr.mxu0 0.0
    %6989 = vmatpush1.msra.mxu0 0.0
    %6990 = vmatprep.subr.mxu0 0.0
    %6991 = vmatpush1.msra.mxu0 0.0
    %6992 = vmatprep.subr.mxu0 0.0
    %6993 = vmatpush1.msra.mxu0 0.0
    %6994 = vmatprep.subr.mxu0 0.0
    %6995 = vmatpush1.msra.mxu0 0.0
    %6996 = vmatprep.subr.mxu0 0.0
    %6997 = vmatpush1.msra.mxu0 0.0
    %6998 = vmatprep.subr.mxu0 0.0
    %6999 = vmatpush1.msra.mxu0 0.0
    %7000 = vmatprep.subr.mxu0 0.0
    %7001 = vmatpush1.msra.mxu0 0.0
    %7002 = vmatprep.subr.mxu0 0.0
    %7003 = vmatpush1.msra.mxu0 0.0
    %7004 = vmatprep.subr.mxu0 0.0
    %7005 = vmatpush1.msra.mxu0 0.0
    %7006 = vmatprep.subr.mxu0 0.0
    %7007 = vmatpush1.msra.mxu0 0.0
    %7008 = vmatprep.subr.mxu0 0.0
    %7009 = vmatpush1.msra.mxu0 0.0
    %7010 = vmatprep.subr.mxu0 0.0
    %7011 = vmatpush1.msra.mxu0 0.0
    %7012 = vmatprep.subr.mxu0 0.0
    %7013 = vmatpush1.msra.mxu0 0.0
    %7014 = vmatprep.subr.mxu0 0.0
    %7015 = vmatpush1.msra.mxu0 0.0
    %7016 = vmatprep.subr.mxu0 0.0
    %7017 = vmatpush1.msra.mxu0 0.0
    %7018 = vmatprep.subr.mxu0 0.0
    %7019 = vmatpush1.msra.mxu0 0.0
    %7020 = vmatprep.subr.mxu0 0.0
    %7021 = vmatpush1.msra.mxu0 0.0
    %7022 = vmatprep.subr.mxu0 0.0
    %7023 = vmatpush1.msra.mxu0 0.0
    %7024 = vmatprep.subr.mxu0 0.0
    %7025 = vmatpush1.msra.mxu0 0.0
    %7026 = vmatprep.subr.mxu0 0.0
    %7027 = vmatpush1.msra.mxu0 0.0
    %7028 = vmatprep.subr.mxu0 0.0
    %7029 = vmatpush1.msra.mxu0 0.0
    %7030 = vmatprep.subr.mxu0 0.0
    %7031 = vmatpush1.msra.mxu0 0.0
    %7032 = vmatprep.subr.mxu0 0.0
    %7033 = vmatpush1.msra.mxu0 0.0
    %7034 = vmatprep.subr.mxu0 0.0
    %7035 = vmatpush1.msra.mxu0 0.0
    %7036 = vmatprep.subr.mxu0 0.0
    %7037 = vmatpush1.msra.mxu0 0.0
    %7038 = vmatprep.mubr.f32.mxu0 0.0
    %v7039 = vand.u32 %v1968, 4294901760
    %7040 = vmatmul.mubr.f32.gmra.mrb[0].mxu0 %v7039
    %v7041 = vpop.f32.mrb[0].mxu0
    %v7042 = vadd.f32 %v6939, %v7041
    %v7043 = vpop.f32.mrb[0].mxu0
    %7044 = vmatprep.mubr.f32.mxu0 0.0
    %v7045 = vand.u32 %v1971, 4294901760
    %7046 = vmatmul.mubr.f32.gmra.mrb[0].mxu0 %v7045
    %v7047 = vpop.f32.mrb[0].mxu0
    %v7048 = vadd.f32 %v6945, %v7047
    %v7049 = vpop.f32.mrb[0].mxu0
    %7050 = vmatprep.mubr.f32.mxu0 0.0
    %v7051 = vand.u32 %v1974, 4294901760
    %7052 = vmatmul.mubr.f32.gmra.mrb[0].mxu0 %v7051
    %v7053 = vpop.f32.mrb[0].mxu0
    %v7054 = vadd.f32 %v6951, %v7053
    %v7055 = vpop.f32.mrb[0].mxu0
    %7056 = vmatprep.mubr.f32.mxu0 0.0
    %v7057 = vand.u32 %v1977, 4294901760
    %7058 = vmatmul.mubr.f32.gmra.mrb[0].mxu0 %v7057
    %v7059 = vpop.f32.mrb[0].mxu0
    %v7060 = vadd.f32 %v6957, %v7059
    %v7061 = vpop.f32.mrb[0].mxu0
    %7062 = vmatprep.mubr.f32.mxu0 0.0
    %v7063 = vand.u32 %v1980, 4294901760
    %7064 = vmatmul.mubr.f32.gmra.mrb[0].mxu0 %v7063
    %v7065 = vpop.f32.mrb[0].mxu0
    %v7066 = vadd.f32 %v6963, %v7065
    %v7067 = vpop.f32.mrb[0].mxu0
    %7068 = vmatprep.mubr.f32.mxu0 0.0
    %v7069 = vand.u32 %v1983, 4294901760
    %7070 = vmatmul.mubr.f32.gmra.mrb[0].mxu0 %v7069
    %v7071 = vpop.f32.mrb[0].mxu0
    %v7072 = vadd.f32 %v6969, %v7071
    %v7073 = vpop.f32.mrb[0].mxu0
    %7074 = vdwg.mxu0
    %v7076 = vsel %vm1229, %v6360, 0
    %v7079 = vsel %vm1229, %v6366, 0
    %v7082 = vsel %vm1229, %v6372, 0
    %v7085 = vsel %vm1229, %v6378, 0
    %v7088 = vsel %vm1229, %v6384, 0
    %v7091 = vsel %vm1229, %v6390, 0
    %7093 = vmatprep.subr.mxu0 0.0
    %v7094 = vand.u32 %v5077, 4294901760
    %7095 = vmatpush1.msra.mxu0 %v7094
    %7096 = vmatprep.subr.mxu0 0.0
    %v7097 = vand.u32 %v5078, 4294901760
    %7098 = vmatpush1.msra.mxu0 %v7097
    %7099 = vmatprep.subr.mxu0 0.0
    %v7100 = vand.u32 %v5079, 4294901760
    %7101 = vmatpush1.msra.mxu0 %v7100
    %7102 = vmatprep.subr.mxu0 0.0
    %v7103 = vand.u32 %v5080, 4294901760
    %7104 = vmatpush1.msra.mxu0 %v7103
    %7105 = vmatprep.subr.mxu0 0.0
    %7106 = vmatpush1.msra.mxu0 0.0
    %7107 = vmatprep.subr.mxu0 0.0
    %7108 = vmatpush1.msra.mxu0 0.0
    %7109 = vmatprep.subr.mxu0 0.0
    %7110 = vmatpush1.msra.mxu0 0.0
    %7111 = vmatprep.subr.mxu0 0.0
    %7112 = vmatpush1.msra.mxu0 0.0
    %7113 = vmatprep.subr.mxu0 0.0
    %7114 = vmatpush1.msra.mxu0 0.0
    %7115 = vmatprep.subr.mxu0 0.0
    %7116 = vmatpush1.msra.mxu0 0.0
    %7117 = vmatprep.subr.mxu0 0.0
    %7118 = vmatpush1.msra.mxu0 0.0
    %7119 = vmatprep.subr.mxu0 0.0
    %7120 = vmatpush1.msra.mxu0 0.0
    %7121 = vmatprep.subr.mxu0 0.0
    %7122 = vmatpush1.msra.mxu0 0.0
    %7123 = vmatprep.subr.mxu0 0.0
    %7124 = vmatpush1.msra.mxu0 0.0
    %7125 = vmatprep.subr.mxu0 0.0
    %7126 = vmatpush1.msra.mxu0 0.0
    %7127 = vmatprep.subr.mxu0 0.0
    %7128 = vmatpush1.msra.mxu0 0.0
    %7129 = vmatprep.subr.mxu0 0.0
    %7130 = vmatpush1.msra.mxu0 0.0
    %7131 = vmatprep.subr.mxu0 0.0
    %7132 = vmatpush1.msra.mxu0 0.0
    %7133 = vmatprep.subr.mxu0 0.0
    %7134 = vmatpush1.msra.mxu0 0.0
    %7135 = vmatprep.subr.mxu0 0.0
    %7136 = vmatpush1.msra.mxu0 0.0
    %7137 = vmatprep.subr.mxu0 0.0
    %7138 = vmatpush1.msra.mxu0 0.0
    %7139 = vmatprep.subr.mxu0 0.0
    %7140 = vmatpush1.msra.mxu0 0.0
    %7141 = vmatprep.subr.mxu0 0.0
    %7142 = vmatpush1.msra.mxu0 0.0
    %7143 = vmatprep.subr.mxu0 0.0
    %7144 = vmatpush1.msra.mxu0 0.0
    %7145 = vmatprep.subr.mxu0 0.0
    %7146 = vmatpush1.msra.mxu0 0.0
    %7147 = vmatprep.subr.mxu0 0.0
    %7148 = vmatpush1.msra.mxu0 0.0
    %7149 = vmatprep.subr.mxu0 0.0
    %7150 = vmatpush1.msra.mxu0 0.0
    %7151 = vmatprep.subr.mxu0 0.0
    %7152 = vmatpush1.msra.mxu0 0.0
    %7153 = vmatprep.subr.mxu0 0.0
    %7154 = vmatpush1.msra.mxu0 0.0
    %7155 = vmatprep.subr.mxu0 0.0
    %7156 = vmatpush1.msra.mxu0 0.0
    %7157 = vmatprep.subr.mxu0 0.0
    %7158 = vmatpush1.msra.mxu0 0.0
    %7159 = vmatprep.subr.mxu0 0.0
    %7160 = vmatpush1.msra.mxu0 0.0
    %7161 = vmatprep.mubr.f32.mxu0 0.0
    %v7162 = vand.u32 %v7076, 4294901760
    %v7163 = vsub.f32 %v7076, %v7162
    %v7164 = vand.u32 %v7163, 4294901760
    %v7165 = vsub.f32 %v7163, %v7164
    %v7166 = vand.u32 %v7165, 4294901760
    %7167 = vmatmul.mubr.f32.gmra.mrb[0].mxu0 %v7166
    %v7168 = vpop.f32.mrb[0].mxu0
    %v7169 = vadd.f32 0.0, %v7168
    %v7170 = vpop.f32.mrb[0].mxu0
    %7171 = vmatprep.mubr.f32.mxu0 0.0
    %v7172 = vand.u32 %v7079, 4294901760
    %v7173 = vsub.f32 %v7079, %v7172
    %v7174 = vand.u32 %v7173, 4294901760
    %v7175 = vsub.f32 %v7173, %v7174
    %v7176 = vand.u32 %v7175, 4294901760
    %7177 = vmatmul.mubr.f32.gmra.mrb[0].mxu0 %v7176
    %v7178 = vpop.f32.mrb[0].mxu0
    %v7179 = vadd.f32 0.0, %v7178
    %v7180 = vpop.f32.mrb[0].mxu0
    %7181 = vmatprep.mubr.f32.mxu0 0.0
    %v7182 = vand.u32 %v7082, 4294901760
    %v7183 = vsub.f32 %v7082, %v7182
    %v7184 = vand.u32 %v7183, 4294901760
    %v7185 = vsub.f32 %v7183, %v7184
    %v7186 = vand.u32 %v7185, 4294901760
    %7187 = vmatmul.mubr.f32.gmra.mrb[0].mxu0 %v7186
    %v7188 = vpop.f32.mrb[0].mxu0
    %v7189 = vadd.f32 0.0, %v7188
    %v7190 = vpop.f32.mrb[0].mxu0
    %7191 = vmatprep.mubr.f32.mxu0 0.0
    %v7192 = vand.u32 %v7085, 4294901760
    %v7193 = vsub.f32 %v7085, %v7192
    %v7194 = vand.u32 %v7193, 4294901760
    %v7195 = vsub.f32 %v7193, %v7194
    %v7196 = vand.u32 %v7195, 4294901760
    %7197 = vmatmul.mubr.f32.gmra.mrb[0].mxu0 %v7196
    %v7198 = vpop.f32.mrb[0].mxu0
    %v7199 = vadd.f32 0.0, %v7198
    %v7200 = vpop.f32.mrb[0].mxu0
    %7201 = vmatprep.mubr.f32.mxu0 0.0
    %v7202 = vand.u32 %v7088, 4294901760
    %v7203 = vsub.f32 %v7088, %v7202
    %v7204 = vand.u32 %v7203, 4294901760
    %v7205 = vsub.f32 %v7203, %v7204
    %v7206 = vand.u32 %v7205, 4294901760
    %7207 = vmatmul.mubr.f32.gmra.mrb[0].mxu0 %v7206
    %v7208 = vpop.f32.mrb[0].mxu0
    %v7209 = vadd.f32 0.0, %v7208
    %v7210 = vpop.f32.mrb[0].mxu0
    %7211 = vmatprep.mubr.f32.mxu0 0.0
    %v7212 = vand.u32 %v7091, 4294901760
    %v7213 = vsub.f32 %v7091, %v7212
    %v7214 = vand.u32 %v7213, 4294901760
    %v7215 = vsub.f32 %v7213, %v7214
    %v7216 = vand.u32 %v7215, 4294901760
    %7217 = vmatmul.mubr.f32.gmra.mrb[0].mxu0 %v7216
    %v7218 = vpop.f32.mrb[0].mxu0
    %v7219 = vadd.f32 0.0, %v7218
    %v7220 = vpop.f32.mrb[0].mxu0
    %7221 = vdwg.mxu0
    %7222 = vmatprep.subr.mxu0 0.0
    %v7223 = vand.u32 %v5077, 4294901760
    %v7224 = vsub.f32 %v5077, %v7223
    %v7225 = vand.u32 %v7224, 4294901760
    %v7226 = vsub.f32 %v7224, %v7225
    %v7227 = vand.u32 %v7226, 4294901760
    %7228 = vmatpush1.msra.mxu0 %v7227
    %7229 = vmatprep.subr.mxu0 0.0
    %v7230 = vand.u32 %v5078, 4294901760
    %v7231 = vsub.f32 %v5078, %v7230
    %v7232 = vand.u32 %v7231, 4294901760
    %v7233 = vsub.f32 %v7231, %v7232
    %v7234 = vand.u32 %v7233, 4294901760
    %7235 = vmatpush1.msra.mxu0 %v7234
    %7236 = vmatprep.subr.mxu0 0.0
    %v7237 = vand.u32 %v5079, 4294901760
    %v7238 = vsub.f32 %v5079, %v7237
    %v7239 = vand.u32 %v7238, 4294901760
    %v7240 = vsub.f32 %v7238, %v7239
    %v7241 = vand.u32 %v7240, 4294901760
    %7242 = vmatpush1.msra.mxu0 %v7241
    %7243 = vmatprep.subr.mxu0 0.0
    %v7244 = vand.u32 %v5080, 4294901760
    %v7245 = vsub.f32 %v5080, %v7244
    %v7246 = vand.u32 %v7245, 4294901760
    %v7247 = vsub.f32 %v7245, %v7246
    %v7248 = vand.u32 %v7247, 4294901760
    %7249 = vmatpush1.msra.mxu0 %v7248
    %7250 = vmatprep.subr.mxu0 0.0
    %7251 = vmatpush1.msra.mxu0 0.0
    %7252 = vmatprep.subr.mxu0 0.0
    %7253 = vmatpush1.msra.mxu0 0.0
    %7254 = vmatprep.subr.mxu0 0.0
    %7255 = vmatpush1.msra.mxu0 0.0
    %7256 = vmatprep.subr.mxu0 0.0
    %7257 = vmatpush1.msra.mxu0 0.0
    %7258 = vmatprep.subr.mxu0 0.0
    %7259 = vmatpush1.msra.mxu0 0.0
    %7260 = vmatprep.subr.mxu0 0.0
    %7261 = vmatpush1.msra.mxu0 0.0
    %7262 = vmatprep.subr.mxu0 0.0
    %7263 = vmatpush1.msra.mxu0 0.0
    %7264 = vmatprep.subr.mxu0 0.0
    %7265 = vmatpush1.msra.mxu0 0.0
    %7266 = vmatprep.subr.mxu0 0.0
    %7267 = vmatpush1.msra.mxu0 0.0
    %7268 = vmatprep.subr.mxu0 0.0
    %7269 = vmatpush1.msra.mxu0 0.0
    %7270 = vmatprep.subr.mxu0 0.0
    %7271 = vmatpush1.msra.mxu0 0.0
    %7272 = vmatprep.subr.mxu0 0.0
    %7273 = vmatpush1.msra.mxu0 0.0
    %7274 = vmatprep.subr.mxu0 0.0
    %7275 = vmatpush1.msra.mxu0 0.0
    %7276 = vmatprep.subr.mxu0 0.0
    %7277 = vmatpush1.msra.mxu0 0.0
    %7278 = vmatprep.subr.mxu0 0.0
    %7279 = vmatpush1.msra.mxu0 0.0
    %7280 = vmatprep.subr.mxu0 0.0
    %7281 = vmatpush1.msra.mxu0 0.0
    %7282 = vmatprep.subr.mxu0 0.0
    %7283 = vmatpush1.msra.mxu0 0.0
    %7284 = vmatprep.subr.mxu0 0.0
    %7285 = vmatpush1.msra.mxu0 0.0
    %7286 = vmatprep.subr.mxu0 0.0
    %7287 = vmatpush1.msra.mxu0 0.0
    %7288 = vmatprep.subr.mxu0 0.0
    %7289 = vmatpush1.msra.mxu0 0.0
    %7290 = vmatprep.subr.mxu0 0.0
    %7291 = vmatpush1.msra.mxu0 0.0
    %7292 = vmatprep.subr.mxu0 0.0
    %7293 = vmatpush1.msra.mxu0 0.0
    %7294 = vmatprep.subr.mxu0 0.0
    %7295 = vmatpush1.msra.mxu0 0.0
    %7296 = vmatprep.subr.mxu0 0.0
    %7297 = vmatpush1.msra.mxu0 0.0
    %7298 = vmatprep.subr.mxu0 0.0
    %7299 = vmatpush1.msra.mxu0 0.0
    %7300 = vmatprep.subr.mxu0 0.0
    %7301 = vmatpush1.msra.mxu0 0.0
    %7302 = vmatprep.subr.mxu0 0.0
    %7303 = vmatpush1.msra.mxu0 0.0
    %7304 = vmatprep.subr.mxu0 0.0
    %7305 = vmatpush1.msra.mxu0 0.0
    %7306 = vmatprep.mubr.f32.mxu0 0.0
    %v7307 = vand.u32 %v7076, 4294901760
    %7308 = vmatmul.mubr.f32.gmra.mrb[0].mxu0 %v7307
    %v7309 = vpop.f32.mrb[0].mxu0
    %v7310 = vadd.f32 %v7169, %v7309
    %v7311 = vpop.f32.mrb[0].mxu0
    %7312 = vmatprep.mubr.f32.mxu0 0.0
    %v7313 = vand.u32 %v7079, 4294901760
    %7314 = vmatmul.mubr.f32.gmra.mrb[0].mxu0 %v7313
    %v7315 = vpop.f32.mrb[0].mxu0
    %v7316 = vadd.f32 %v7179, %v7315
    %v7317 = vpop.f32.mrb[0].mxu0
    %7318 = vmatprep.mubr.f32.mxu0 0.0
    %v7319 = vand.u32 %v7082, 4294901760
    %7320 = vmatmul.mubr.f32.gmra.mrb[0].mxu0 %v7319
    %v7321 = vpop.f32.mrb[0].mxu0
    %v7322 = vadd.f32 %v7189, %v7321
    %v7323 = vpop.f32.mrb[0].mxu0
    %7324 = vmatprep.mubr.f32.mxu0 0.0
    %v7325 = vand.u32 %v7085, 4294901760
    %7326 = vmatmul.mubr.f32.gmra.mrb[0].mxu0 %v7325
    %v7327 = vpop.f32.mrb[0].mxu0
    %v7328 = vadd.f32 %v7199, %v7327
    %v7329 = vpop.f32.mrb[0].mxu0
    %7330 = vmatprep.mubr.f32.mxu0 0.0
    %v7331 = vand.u32 %v7088, 4294901760
    %7332 = vmatmul.mubr.f32.gmra.mrb[0].mxu0 %v7331
    %v7333 = vpop.f32.mrb[0].mxu0
    %v7334 = vadd.f32 %v7209, %v7333
    %v7335 = vpop.f32.mrb[0].mxu0
    %7336 = vmatprep.mubr.f32.mxu0 0.0
    %v7337 = vand.u32 %v7091, 4294901760
    %7338 = vmatmul.mubr.f32.gmra.mrb[0].mxu0 %v7337
    %v7339 = vpop.f32.mrb[0].mxu0
    %v7340 = vadd.f32 %v7219, %v7339
    %v7341 = vpop.f32.mrb[0].mxu0
    %7342 = vdwg.mxu0
    %7343 = vmatprep.subr.mxu0 0.0
    %v7344 = vand.u32 %v5077, 4294901760
    %v7345 = vsub.f32 %v5077, %v7344
    %7346 = vmatpush1.msra.mxu0 %v7345
    %7347 = vmatprep.subr.mxu0 0.0
    %v7348 = vand.u32 %v5078, 4294901760
    %v7349 = vsub.f32 %v5078, %v7348
    %7350 = vmatpush1.msra.mxu0 %v7349
    %7351 = vmatprep.subr.mxu0 0.0
    %v7352 = vand.u32 %v5079, 4294901760
    %v7353 = vsub.f32 %v5079, %v7352
    %7354 = vmatpush1.msra.mxu0 %v7353
    %7355 = vmatprep.subr.mxu0 0.0
    %v7356 = vand.u32 %v5080, 4294901760
    %v7357 = vsub.f32 %v5080, %v7356
    %7358 = vmatpush1.msra.mxu0 %v7357
    %7359 = vmatprep.subr.mxu0 0.0
    %7360 = vmatpush1.msra.mxu0 0.0
    %7361 = vmatprep.subr.mxu0 0.0
    %7362 = vmatpush1.msra.mxu0 0.0
    %7363 = vmatprep.subr.mxu0 0.0
    %7364 = vmatpush1.msra.mxu0 0.0
    %7365 = vmatprep.subr.mxu0 0.0
    %7366 = vmatpush1.msra.mxu0 0.0
    %7367 = vmatprep.subr.mxu0 0.0
    %7368 = vmatpush1.msra.mxu0 0.0
    %7369 = vmatprep.subr.mxu0 0.0
    %7370 = vmatpush1.msra.mxu0 0.0
    %7371 = vmatprep.subr.mxu0 0.0
    %7372 = vmatpush1.msra.mxu0 0.0
    %7373 = vmatprep.subr.mxu0 0.0
    %7374 = vmatpush1.msra.mxu0 0.0
    %7375 = vmatprep.subr.mxu0 0.0
    %7376 = vmatpush1.msra.mxu0 0.0
    %7377 = vmatprep.subr.mxu0 0.0
    %7378 = vmatpush1.msra.mxu0 0.0
    %7379 = vmatprep.subr.mxu0 0.0
    %7380 = vmatpush1.msra.mxu0 0.0
    %7381 = vmatprep.subr.mxu0 0.0
    %7382 = vmatpush1.msra.mxu0 0.0
    %7383 = vmatprep.subr.mxu0 0.0
    %7384 = vmatpush1.msra.mxu0 0.0
    %7385 = vmatprep.subr.mxu0 0.0
    %7386 = vmatpush1.msra.mxu0 0.0
    %7387 = vmatprep.subr.mxu0 0.0
    %7388 = vmatpush1.msra.mxu0 0.0
    %7389 = vmatprep.subr.mxu0 0.0
    %7390 = vmatpush1.msra.mxu0 0.0
    %7391 = vmatprep.subr.mxu0 0.0
    %7392 = vmatpush1.msra.mxu0 0.0
    %7393 = vmatprep.subr.mxu0 0.0
    %7394 = vmatpush1.msra.mxu0 0.0
    %7395 = vmatprep.subr.mxu0 0.0
    %7396 = vmatpush1.msra.mxu0 0.0
    %7397 = vmatprep.subr.mxu0 0.0
    %7398 = vmatpush1.msra.mxu0 0.0
    %7399 = vmatprep.subr.mxu0 0.0
    %7400 = vmatpush1.msra.mxu0 0.0
    %7401 = vmatprep.subr.mxu0 0.0
    %7402 = vmatpush1.msra.mxu0 0.0
    %7403 = vmatprep.subr.mxu0 0.0
    %7404 = vmatpush1.msra.mxu0 0.0
    %7405 = vmatprep.subr.mxu0 0.0
    %7406 = vmatpush1.msra.mxu0 0.0
    %7407 = vmatprep.subr.mxu0 0.0
    %7408 = vmatpush1.msra.mxu0 0.0
    %7409 = vmatprep.subr.mxu0 0.0
    %7410 = vmatpush1.msra.mxu0 0.0
    %7411 = vmatprep.subr.mxu0 0.0
    %7412 = vmatpush1.msra.mxu0 0.0
    %7413 = vmatprep.subr.mxu0 0.0
    %7414 = vmatpush1.msra.mxu0 0.0
    %7415 = vmatprep.mubr.f32.mxu0 0.0
    %v7416 = vand.u32 %v7076, 4294901760
    %v7417 = vsub.f32 %v7076, %v7416
    %7418 = vmatmul.mubr.f32.gmra.mrb[0].mxu0 %v7417
    %v7419 = vpop.f32.mrb[0].mxu0
    %v7420 = vadd.f32 %v7310, %v7419
    %v7421 = vpop.f32.mrb[0].mxu0
    %7422 = vmatprep.mubr.f32.mxu0 0.0
    %v7423 = vand.u32 %v7079, 4294901760
    %v7424 = vsub.f32 %v7079, %v7423
    %7425 = vmatmul.mubr.f32.gmra.mrb[0].mxu0 %v7424
    %v7426 = vpop.f32.mrb[0].mxu0
    %v7427 = vadd.f32 %v7316, %v7426
    %v7428 = vpop.f32.mrb[0].mxu0
    %7429 = vmatprep.mubr.f32.mxu0 0.0
    %v7430 = vand.u32 %v7082, 4294901760
    %v7431 = vsub.f32 %v7082, %v7430
    %7432 = vmatmul.mubr.f32.gmra.mrb[0].mxu0 %v7431
    %v7433 = vpop.f32.mrb[0].mxu0
    %v7434 = vadd.f32 %v7322, %v7433
    %v7435 = vpop.f32.mrb[0].mxu0
    %7436 = vmatprep.mubr.f32.mxu0 0.0
    %v7437 = vand.u32 %v7085, 4294901760
    %v7438 = vsub.f32 %v7085, %v7437
    %7439 = vmatmul.mubr.f32.gmra.mrb[0].mxu0 %v7438
    %v7440 = vpop.f32.mrb[0].mxu0
    %v7441 = vadd.f32 %v7328, %v7440
    %v7442 = vpop.f32.mrb[0].mxu0
    %7443 = vmatprep.mubr.f32.mxu0 0.0
    %v7444 = vand.u32 %v7088, 4294901760
    %v7445 = vsub.f32 %v7088, %v7444
    %7446 = vmatmul.mubr.f32.gmra.mrb[0].mxu0 %v7445
    %v7447 = vpop.f32.mrb[0].mxu0
    %v7448 = vadd.f32 %v7334, %v7447
    %v7449 = vpop.f32.mrb[0].mxu0
    %7450 = vmatprep.mubr.f32.mxu0 0.0
    %v7451 = vand.u32 %v7091, 4294901760
    %v7452 = vsub.f32 %v7091, %v7451
    %7453 = vmatmul.mubr.f32.gmra.mrb[0].mxu0 %v7452
    %v7454 = vpop.f32.mrb[0].mxu0
    %v7455 = vadd.f32 %v7340, %v7454
    %v7456 = vpop.f32.mrb[0].mxu0
    %7457 = vdwg.mxu0
    %7458 = vmatprep.subr.mxu0 0.0
    %v7459 = vand.u32 %v5077, 4294901760
    %7460 = vmatpush1.msra.mxu0 %v7459
    %7461 = vmatprep.subr.mxu0 0.0
    %v7462 = vand.u32 %v5078, 4294901760
    %7463 = vmatpush1.msra.mxu0 %v7462
    %7464 = vmatprep.subr.mxu0 0.0
    %v7465 = vand.u32 %v5079, 4294901760
    %7466 = vmatpush1.msra.mxu0 %v7465
    %7467 = vmatprep.subr.mxu0 0.0
    %v7468 = vand.u32 %v5080, 4294901760
    %7469 = vmatpush1.msra.mxu0 %v7468
    %7470 = vmatprep.subr.mxu0 0.0
    %7471 = vmatpush1.msra.mxu0 0.0
    %7472 = vmatprep.subr.mxu0 0.0
    %7473 = vmatpush1.msra.mxu0 0.0
    %7474 = vmatprep.subr.mxu0 0.0
    %7475 = vmatpush1.msra.mxu0 0.0
    %7476 = vmatprep.subr.mxu0 0.0
    %7477 = vmatpush1.msra.mxu0 0.0
    %7478 = vmatprep.subr.mxu0 0.0
    %7479 = vmatpush1.msra.mxu0 0.0
    %7480 = vmatprep.subr.mxu0 0.0
    %7481 = vmatpush1.msra.mxu0 0.0
    %7482 = vmatprep.subr.mxu0 0.0
    %7483 = vmatpush1.msra.mxu0 0.0
    %7484 = vmatprep.subr.mxu0 0.0
    %7485 = vmatpush1.msra.mxu0 0.0
    %7486 = vmatprep.subr.mxu0 0.0
    %7487 = vmatpush1.msra.mxu0 0.0
    %7488 = vmatprep.subr.mxu0 0.0
    %7489 = vmatpush1.msra.mxu0 0.0
    %7490 = vmatprep.subr.mxu0 0.0
    %7491 = vmatpush1.msra.mxu0 0.0
    %7492 = vmatprep.subr.mxu0 0.0
    %7493 = vmatpush1.msra.mxu0 0.0
    %7494 = vmatprep.subr.mxu0 0.0
    %7495 = vmatpush1.msra.mxu0 0.0
    %7496 = vmatprep.subr.mxu0 0.0
    %7497 = vmatpush1.msra.mxu0 0.0
    %7498 = vmatprep.subr.mxu0 0.0
    %7499 = vmatpush1.msra.mxu0 0.0
    %7500 = vmatprep.subr.mxu0 0.0
    %7501 = vmatpush1.msra.mxu0 0.0
    %7502 = vmatprep.subr.mxu0 0.0
    %7503 = vmatpush1.msra.mxu0 0.0
    %7504 = vmatprep.subr.mxu0 0.0
    %7505 = vmatpush1.msra.mxu0 0.0
    %7506 = vmatprep.subr.mxu0 0.0
    %7507 = vmatpush1.msra.mxu0 0.0
    %7508 = vmatprep.subr.mxu0 0.0
    %7509 = vmatpush1.msra.mxu0 0.0
    %7510 = vmatprep.subr.mxu0 0.0
    %7511 = vmatpush1.msra.mxu0 0.0
    %7512 = vmatprep.subr.mxu0 0.0
    %7513 = vmatpush1.msra.mxu0 0.0
    %7514 = vmatprep.subr.mxu0 0.0
    %7515 = vmatpush1.msra.mxu0 0.0
    %7516 = vmatprep.subr.mxu0 0.0
    %7517 = vmatpush1.msra.mxu0 0.0
    %7518 = vmatprep.subr.mxu0 0.0
    %7519 = vmatpush1.msra.mxu0 0.0
    %7520 = vmatprep.subr.mxu0 0.0
    %7521 = vmatpush1.msra.mxu0 0.0
    %7522 = vmatprep.subr.mxu0 0.0
    %7523 = vmatpush1.msra.mxu0 0.0
    %7524 = vmatprep.subr.mxu0 0.0
    %7525 = vmatpush1.msra.mxu0 0.0
    %7526 = vmatprep.mubr.f32.mxu0 0.0
    %v7527 = vand.u32 %v7076, 4294901760
    %v7528 = vsub.f32 %v7076, %v7527
    %v7529 = vand.u32 %v7528, 4294901760
    %7530 = vmatmul.mubr.f32.gmra.mrb[0].mxu0 %v7529
    %v7531 = vpop.f32.mrb[0].mxu0
    %v7532 = vadd.f32 %v7420, %v7531
    %v7533 = vpop.f32.mrb[0].mxu0
    %7534 = vmatprep.mubr.f32.mxu0 0.0
    %v7535 = vand.u32 %v7079, 4294901760
    %v7536 = vsub.f32 %v7079, %v7535
    %v7537 = vand.u32 %v7536, 4294901760
    %7538 = vmatmul.mubr.f32.gmra.mrb[0].mxu0 %v7537
    %v7539 = vpop.f32.mrb[0].mxu0
    %v7540 = vadd.f32 %v7427, %v7539
    %v7541 = vpop.f32.mrb[0].mxu0
    %7542 = vmatprep.mubr.f32.mxu0 0.0
    %v7543 = vand.u32 %v7082, 4294901760
    %v7544 = vsub.f32 %v7082, %v7543
    %v7545 = vand.u32 %v7544, 4294901760
    %7546 = vmatmul.mubr.f32.gmra.mrb[0].mxu0 %v7545
    %v7547 = vpop.f32.mrb[0].mxu0
    %v7548 = vadd.f32 %v7434, %v7547
    %v7549 = vpop.f32.mrb[0].mxu0
    %7550 = vmatprep.mubr.f32.mxu0 0.0
    %v7551 = vand.u32 %v7085, 4294901760
    %v7552 = vsub.f32 %v7085, %v7551
    %v7553 = vand.u32 %v7552, 4294901760
    %7554 = vmatmul.mubr.f32.gmra.mrb[0].mxu0 %v7553
    %v7555 = vpop.f32.mrb[0].mxu0
    %v7556 = vadd.f32 %v7441, %v7555
    %v7557 = vpop.f32.mrb[0].mxu0
    %7558 = vmatprep.mubr.f32.mxu0 0.0
    %v7559 = vand.u32 %v7088, 4294901760
    %v7560 = vsub.f32 %v7088, %v7559
    %v7561 = vand.u32 %v7560, 4294901760
    %7562 = vmatmul.mubr.f32.gmra.mrb[0].mxu0 %v7561
    %v7563 = vpop.f32.mrb[0].mxu0
    %v7564 = vadd.f32 %v7448, %v7563
    %v7565 = vpop.f32.mrb[0].mxu0
    %7566 = vmatprep.mubr.f32.mxu0 0.0
    %v7567 = vand.u32 %v7091, 4294901760
    %v7568 = vsub.f32 %v7091, %v7567
    %v7569 = vand.u32 %v7568, 4294901760
    %7570 = vmatmul.mubr.f32.gmra.mrb[0].mxu0 %v7569
    %v7571 = vpop.f32.mrb[0].mxu0
    %v7572 = vadd.f32 %v7455, %v7571
    %v7573 = vpop.f32.mrb[0].mxu0
    %7574 = vdwg.mxu0
    %7575 = vmatprep.subr.mxu0 0.0
    %v7576 = vand.u32 %v5077, 4294901760
    %v7577 = vsub.f32 %v5077, %v7576
    %v7578 = vand.u32 %v7577, 4294901760
    %7579 = vmatpush1.msra.mxu0 %v7578
    %7580 = vmatprep.subr.mxu0 0.0
    %v7581 = vand.u32 %v5078, 4294901760
    %v7582 = vsub.f32 %v5078, %v7581
    %v7583 = vand.u32 %v7582, 4294901760
    %7584 = vmatpush1.msra.mxu0 %v7583
    %7585 = vmatprep.subr.mxu0 0.0
    %v7586 = vand.u32 %v5079, 4294901760
    %v7587 = vsub.f32 %v5079, %v7586
    %v7588 = vand.u32 %v7587, 4294901760
    %7589 = vmatpush1.msra.mxu0 %v7588
    %7590 = vmatprep.subr.mxu0 0.0
    %v7591 = vand.u32 %v5080, 4294901760
    %v7592 = vsub.f32 %v5080, %v7591
    %v7593 = vand.u32 %v7592, 4294901760
    %7594 = vmatpush1.msra.mxu0 %v7593
    %7595 = vmatprep.subr.mxu0 0.0
    %7596 = vmatpush1.msra.mxu0 0.0
    %7597 = vmatprep.subr.mxu0 0.0
    %7598 = vmatpush1.msra.mxu0 0.0
    %7599 = vmatprep.subr.mxu0 0.0
    %7600 = vmatpush1.msra.mxu0 0.0
    %7601 = vmatprep.subr.mxu0 0.0
    %7602 = vmatpush1.msra.mxu0 0.0
    %7603 = vmatprep.subr.mxu0 0.0
    %7604 = vmatpush1.msra.mxu0 0.0
    %7605 = vmatprep.subr.mxu0 0.0
    %7606 = vmatpush1.msra.mxu0 0.0
    %7607 = vmatprep.subr.mxu0 0.0
    %7608 = vmatpush1.msra.mxu0 0.0
    %7609 = vmatprep.subr.mxu0 0.0
    %7610 = vmatpush1.msra.mxu0 0.0
    %7611 = vmatprep.subr.mxu0 0.0
    %7612 = vmatpush1.msra.mxu0 0.0
    %7613 = vmatprep.subr.mxu0 0.0
    %7614 = vmatpush1.msra.mxu0 0.0
    %7615 = vmatprep.subr.mxu0 0.0
    %7616 = vmatpush1.msra.mxu0 0.0
    %7617 = vmatprep.subr.mxu0 0.0
    %7618 = vmatpush1.msra.mxu0 0.0
    %7619 = vmatprep.subr.mxu0 0.0
    %7620 = vmatpush1.msra.mxu0 0.0
    %7621 = vmatprep.subr.mxu0 0.0
    %7622 = vmatpush1.msra.mxu0 0.0
    %7623 = vmatprep.subr.mxu0 0.0
    %7624 = vmatpush1.msra.mxu0 0.0
    %7625 = vmatprep.subr.mxu0 0.0
    %7626 = vmatpush1.msra.mxu0 0.0
    %7627 = vmatprep.subr.mxu0 0.0
    %7628 = vmatpush1.msra.mxu0 0.0
    %7629 = vmatprep.subr.mxu0 0.0
    %7630 = vmatpush1.msra.mxu0 0.0
    %7631 = vmatprep.subr.mxu0 0.0
    %7632 = vmatpush1.msra.mxu0 0.0
    %7633 = vmatprep.subr.mxu0 0.0
    %7634 = vmatpush1.msra.mxu0 0.0
    %7635 = vmatprep.subr.mxu0 0.0
    %7636 = vmatpush1.msra.mxu0 0.0
    %7637 = vmatprep.subr.mxu0 0.0
    %7638 = vmatpush1.msra.mxu0 0.0
    %7639 = vmatprep.subr.mxu0 0.0
    %7640 = vmatpush1.msra.mxu0 0.0
    %7641 = vmatprep.subr.mxu0 0.0
    %7642 = vmatpush1.msra.mxu0 0.0
    %7643 = vmatprep.subr.mxu0 0.0
    %7644 = vmatpush1.msra.mxu0 0.0
    %7645 = vmatprep.subr.mxu0 0.0
    %7646 = vmatpush1.msra.mxu0 0.0
    %7647 = vmatprep.subr.mxu0 0.0
    %7648 = vmatpush1.msra.mxu0 0.0
    %7649 = vmatprep.subr.mxu0 0.0
    %7650 = vmatpush1.msra.mxu0 0.0
    %7651 = vmatprep.mubr.f32.mxu0 0.0
    %v7652 = vand.u32 %v7076, 4294901760
    %7653 = vmatmul.mubr.f32.gmra.mrb[0].mxu0 %v7652
    %v7654 = vpop.f32.mrb[0].mxu0
    %v7655 = vadd.f32 %v7532, %v7654
    %v7656 = vpop.f32.mrb[0].mxu0
    %7657 = vmatprep.mubr.f32.mxu0 0.0
    %v7658 = vand.u32 %v7079, 4294901760
    %7659 = vmatmul.mubr.f32.gmra.mrb[0].mxu0 %v7658
    %v7660 = vpop.f32.mrb[0].mxu0
    %v7661 = vadd.f32 %v7540, %v7660
    %v7662 = vpop.f32.mrb[0].mxu0
    %7663 = vmatprep.mubr.f32.mxu0 0.0
    %v7664 = vand.u32 %v7082, 4294901760
    %7665 = vmatmul.mubr.f32.gmra.mrb[0].mxu0 %v7664
    %v7666 = vpop.f32.mrb[0].mxu0
    %v7667 = vadd.f32 %v7548, %v7666
    %v7668 = vpop.f32.mrb[0].mxu0
    %7669 = vmatprep.mubr.f32.mxu0 0.0
    %v7670 = vand.u32 %v7085, 4294901760
    %7671 = vmatmul.mubr.f32.gmra.mrb[0].mxu0 %v7670
    %v7672 = vpop.f32.mrb[0].mxu0
    %v7673 = vadd.f32 %v7556, %v7672
    %v7674 = vpop.f32.mrb[0].mxu0
    %7675 = vmatprep.mubr.f32.mxu0 0.0
    %v7676 = vand.u32 %v7088, 4294901760
    %7677 = vmatmul.mubr.f32.gmra.mrb[0].mxu0 %v7676
    %v7678 = vpop.f32.mrb[0].mxu0
    %v7679 = vadd.f32 %v7564, %v7678
    %v7680 = vpop.f32.mrb[0].mxu0
    %7681 = vmatprep.mubr.f32.mxu0 0.0
    %v7682 = vand.u32 %v7091, 4294901760
    %7683 = vmatmul.mubr.f32.gmra.mrb[0].mxu0 %v7682
    %v7684 = vpop.f32.mrb[0].mxu0
    %v7685 = vadd.f32 %v7572, %v7684
    %v7686 = vpop.f32.mrb[0].mxu0
    %7687 = vdwg.mxu0
    %7688 = vmatprep.subr.mxu0 0.0
    %v7689 = vand.u32 %v5077, 4294901760
    %7690 = vmatpush1.msra.mxu0 %v7689
    %7691 = vmatprep.subr.mxu0 0.0
    %v7692 = vand.u32 %v5078, 4294901760
    %7693 = vmatpush1.msra.mxu0 %v7692
    %7694 = vmatprep.subr.mxu0 0.0
    %v7695 = vand.u32 %v5079, 4294901760
    %7696 = vmatpush1.msra.mxu0 %v7695
    %7697 = vmatprep.subr.mxu0 0.0
    %v7698 = vand.u32 %v5080, 4294901760
    %7699 = vmatpush1.msra.mxu0 %v7698
    %7700 = vmatprep.subr.mxu0 0.0
    %7701 = vmatpush1.msra.mxu0 0.0
    %7702 = vmatprep.subr.mxu0 0.0
    %7703 = vmatpush1.msra.mxu0 0.0
    %7704 = vmatprep.subr.mxu0 0.0
    %7705 = vmatpush1.msra.mxu0 0.0
    %7706 = vmatprep.subr.mxu0 0.0
    %7707 = vmatpush1.msra.mxu0 0.0
    %7708 = vmatprep.subr.mxu0 0.0
    %7709 = vmatpush1.msra.mxu0 0.0
    %7710 = vmatprep.subr.mxu0 0.0
    %7711 = vmatpush1.msra.mxu0 0.0
    %7712 = vmatprep.subr.mxu0 0.0
    %7713 = vmatpush1.msra.mxu0 0.0
    %7714 = vmatprep.subr.mxu0 0.0
    %7715 = vmatpush1.msra.mxu0 0.0
    %7716 = vmatprep.subr.mxu0 0.0
    %7717 = vmatpush1.msra.mxu0 0.0
    %7718 = vmatprep.subr.mxu0 0.0
    %7719 = vmatpush1.msra.mxu0 0.0
    %7720 = vmatprep.subr.mxu0 0.0
    %7721 = vmatpush1.msra.mxu0 0.0
    %7722 = vmatprep.subr.mxu0 0.0
    %7723 = vmatpush1.msra.mxu0 0.0
    %7724 = vmatprep.subr.mxu0 0.0
    %7725 = vmatpush1.msra.mxu0 0.0
    %7726 = vmatprep.subr.mxu0 0.0
    %7727 = vmatpush1.msra.mxu0 0.0
    %7728 = vmatprep.subr.mxu0 0.0
    %7729 = vmatpush1.msra.mxu0 0.0
    %7730 = vmatprep.subr.mxu0 0.0
    %7731 = vmatpush1.msra.mxu0 0.0
    %7732 = vmatprep.subr.mxu0 0.0
    %7733 = vmatpush1.msra.mxu0 0.0
    %7734 = vmatprep.subr.mxu0 0.0
    %7735 = vmatpush1.msra.mxu0 0.0
    %7736 = vmatprep.subr.mxu0 0.0
    %7737 = vmatpush1.msra.mxu0 0.0
    %7738 = vmatprep.subr.mxu0 0.0
    %7739 = vmatpush1.msra.mxu0 0.0
    %7740 = vmatprep.subr.mxu0 0.0
    %7741 = vmatpush1.msra.mxu0 0.0
    %7742 = vmatprep.subr.mxu0 0.0
    %7743 = vmatpush1.msra.mxu0 0.0
    %7744 = vmatprep.subr.mxu0 0.0
    %7745 = vmatpush1.msra.mxu0 0.0
    %7746 = vmatprep.subr.mxu0 0.0
    %7747 = vmatpush1.msra.mxu0 0.0
    %7748 = vmatprep.subr.mxu0 0.0
    %7749 = vmatpush1.msra.mxu0 0.0
    %7750 = vmatprep.subr.mxu0 0.0
    %7751 = vmatpush1.msra.mxu0 0.0
    %7752 = vmatprep.subr.mxu0 0.0
    %7753 = vmatpush1.msra.mxu0 0.0
    %7754 = vmatprep.subr.mxu0 0.0
    %7755 = vmatpush1.msra.mxu0 0.0
    %7756 = vmatprep.mubr.f32.mxu0 0.0
    %v7757 = vand.u32 %v7076, 4294901760
    %7758 = vmatmul.mubr.f32.gmra.mrb[0].mxu0 %v7757
    %v7759 = vpop.f32.mrb[0].mxu0
    %v7760 = vadd.f32 %v7655, %v7759
    %v7761 = vpop.f32.mrb[0].mxu0
    %7762 = vmatprep.mubr.f32.mxu0 0.0
    %v7763 = vand.u32 %v7079, 4294901760
    %7764 = vmatmul.mubr.f32.gmra.mrb[0].mxu0 %v7763
    %v7765 = vpop.f32.mrb[0].mxu0
    %v7766 = vadd.f32 %v7661, %v7765
    %v7767 = vpop.f32.mrb[0].mxu0
    %7768 = vmatprep.mubr.f32.mxu0 0.0
    %v7769 = vand.u32 %v7082, 4294901760
    %7770 = vmatmul.mubr.f32.gmra.mrb[0].mxu0 %v7769
    %v7771 = vpop.f32.mrb[0].mxu0
    %v7772 = vadd.f32 %v7667, %v7771
    %v7773 = vpop.f32.mrb[0].mxu0
    %7774 = vmatprep.mubr.f32.mxu0 0.0
    %v7775 = vand.u32 %v7085, 4294901760
    %7776 = vmatmul.mubr.f32.gmra.mrb[0].mxu0 %v7775
    %v7777 = vpop.f32.mrb[0].mxu0
    %v7778 = vadd.f32 %v7673, %v7777
    %v7779 = vpop.f32.mrb[0].mxu0
    %7780 = vmatprep.mubr.f32.mxu0 0.0
    %v7781 = vand.u32 %v7088, 4294901760
    %7782 = vmatmul.mubr.f32.gmra.mrb[0].mxu0 %v7781
    %v7783 = vpop.f32.mrb[0].mxu0
    %v7784 = vadd.f32 %v7679, %v7783
    %v7785 = vpop.f32.mrb[0].mxu0
    %7786 = vmatprep.mubr.f32.mxu0 0.0
    %v7787 = vand.u32 %v7091, 4294901760
    %7788 = vmatmul.mubr.f32.gmra.mrb[0].mxu0 %v7787
    %v7789 = vpop.f32.mrb[0].mxu0
    %v7790 = vadd.f32 %v7685, %v7789
    %v7791 = vpop.f32.mrb[0].mxu0
    %7792 = vdwg.mxu0
    %v7793 = vmul.f32 %v3572, %v7760
    %v7794 = vmul.f32 %v3577, %v7766
    %v7795 = vmul.f32 %v3582, %v7772
    %v7796 = vmul.f32 %v3587, %v7778
    %v7797 = vmul.f32 %v3592, %v7784
    %v7798 = vmul.f32 %v3597, %v7790
    %v7799 = vadd.f32 %v7793, 0.0
    %v7800 = vadd.f32 %v7794, 0.0
    %v7801 = vadd.f32 %v7795, 0.0
    %v7802 = vadd.f32 %v7796, 0.0
    %v7803 = vadd.f32 %v7797, 0.0
    %v7804 = vadd.f32 %v7798, 0.0
    %v7805 = vmul.f32 %v3613, %v7760
    %v7806 = vmul.f32 %v3617, %v7766
    %v7807 = vmul.f32 %v3621, %v7772
    %v7808 = vmul.f32 %v3625, %v7778
    %v7809 = vmul.f32 %v3629, %v7784
    %v7810 = vmul.f32 %v3633, %v7790
    %7817 = vrot.lane.b32.xlu0 %v7805, 96
    %v7818 = vpop.permute.xlu0 %7817
    %7819 = vrot.lane.b32.xlu0 %v7806, 96
    %v7820 = vpop.permute.xlu0 %7819
    %7821 = vrot.lane.b32.xlu0 %v7807, 96
    %v7822 = vpop.permute.xlu0 %7821
    %7823 = vrot.lane.b32.xlu0 %v7808, 96
    %v7824 = vpop.permute.xlu0 %7823
    %7825 = vrot.lane.b32.xlu0 %v7809, 96
    %v7826 = vpop.permute.xlu0 %7825
    %7827 = vrot.lane.b32.xlu0 %v7810, 96
    %v7828 = vpop.permute.xlu0 %7827
    %v7835 = vadd.f32 %v7799, %v7818
    %v7836 = vadd.f32 %v7800, %v7820
    %v7837 = vadd.f32 %v7801, %v7822
    %v7838 = vadd.f32 %v7802, %v7824
    %v7839 = vadd.f32 %v7803, %v7826
    %v7840 = vadd.f32 %v7804, %v7828
    %v7841 = vmul.f32 %v3673, %v7760
    %v7842 = vmul.f32 %v3677, %v7766
    %v7843 = vmul.f32 %v3681, %v7772
    %v7844 = vmul.f32 %v3685, %v7778
    %v7845 = vmul.f32 %v3689, %v7784
    %v7846 = vmul.f32 %v3693, %v7790
    %7853 = vrot.lane.b32.xlu0 %v7841, 64
    %v7854 = vpop.permute.xlu0 %7853
    %7855 = vrot.lane.b32.xlu0 %v7842, 64
    %v7856 = vpop.permute.xlu0 %7855
    %7857 = vrot.lane.b32.xlu0 %v7843, 64
    %v7858 = vpop.permute.xlu0 %7857
    %7859 = vrot.lane.b32.xlu0 %v7844, 64
    %v7860 = vpop.permute.xlu0 %7859
    %7861 = vrot.lane.b32.xlu0 %v7845, 64
    %v7862 = vpop.permute.xlu0 %7861
    %7863 = vrot.lane.b32.xlu0 %v7846, 64
    %v7864 = vpop.permute.xlu0 %7863
    %v7871 = vadd.f32 %v7835, %v7854
    %v7872 = vadd.f32 %v7836, %v7856
    %v7873 = vadd.f32 %v7837, %v7858
    %v7874 = vadd.f32 %v7838, %v7860
    %v7875 = vadd.f32 %v7839, %v7862
    %v7876 = vadd.f32 %v7840, %v7864
    %v7877 = vmul.f32 %v3709, %v7760
    %v7878 = vmul.f32 %v3713, %v7766
    %v7879 = vmul.f32 %v3717, %v7772
    %v7880 = vmul.f32 %v3721, %v7778
    %v7881 = vmul.f32 %v3725, %v7784
    %v7882 = vmul.f32 %v3729, %v7790
    %7889 = vrot.lane.b32.xlu0 %v7877, 32
    %v7890 = vpop.permute.xlu0 %7889
    %7891 = vrot.lane.b32.xlu0 %v7878, 32
    %v7892 = vpop.permute.xlu0 %7891
    %7893 = vrot.lane.b32.xlu0 %v7879, 32
    %v7894 = vpop.permute.xlu0 %7893
    %7895 = vrot.lane.b32.xlu0 %v7880, 32
    %v7896 = vpop.permute.xlu0 %7895
    %7897 = vrot.lane.b32.xlu0 %v7881, 32
    %v7898 = vpop.permute.xlu0 %7897
    %7899 = vrot.lane.b32.xlu0 %v7882, 32
    %v7900 = vpop.permute.xlu0 %7899
    %v7907 = vadd.f32 %v7871, %v7890
    %v7908 = vadd.f32 %v7872, %v7892
    %v7909 = vadd.f32 %v7873, %v7894
    %v7910 = vadd.f32 %v7874, %v7896
    %v7911 = vadd.f32 %v7875, %v7898
    %v7912 = vadd.f32 %v7876, %v7900
    %v7913 = vmul.f32 %v7907, %v7042
    %v7914 = vmul.f32 %v7908, %v7048
    %v7915 = vmul.f32 %v7909, %v7054
    %v7916 = vmul.f32 %v7910, %v7060
    %v7917 = vmul.f32 %v7911, %v7066
    %v7918 = vmul.f32 %v7912, %v7072
    %v7919 = vsel %vm142, %v7913, 0.0
    %7920 = vadd.xlane.f32.xlu0 %v7919
    %v7921 = vpop.xlane.xlu0 %7920
    %v7922 = vsel %vm142, %v7914, 0.0
    %7923 = vadd.xlane.f32.xlu0 %v7922
    %v7924 = vpop.xlane.xlu0 %7923
    %v7925 = vsel %vm142, %v7915, 0.0
    %7926 = vadd.xlane.f32.xlu0 %v7925
    %v7927 = vpop.xlane.xlu0 %7926
    %v7928 = vsel %vm142, %v7916, 0.0
    %7929 = vadd.xlane.f32.xlu0 %v7928
    %v7930 = vpop.xlane.xlu0 %7929
    %v7931 = vsel %vm142, %v7917, 0.0
    %7932 = vadd.xlane.f32.xlu0 %v7931
    %v7933 = vpop.xlane.xlu0 %7932
    %v7934 = vsel %vm142, %v7918, 0.0
    %7935 = vadd.xlane.f32.xlu0 %v7934
    %v7936 = vpop.xlane.xlu0 %7935
    %v7937 = vsel %vm3791, %v7921, -1e+30
    %v7938 = vsel %vm3792, %v7924, -1e+30
    %v7939 = vsel %vm3793, %v7927, -1e+30
    %v7940 = vsel %vm3794, %v7930, -1e+30
    %v7941 = vsel %vm3795, %v7933, -1e+30
    %v7942 = vsel %vm3796, %v7936, -1e+30
    %v7943 = vsel %vm142, %v7937, -inf
    %v7944 = vsel %vm142, %v7938, -inf
    %v7945 = vsel %vm142, %v7939, -inf
    %v7946 = vsel %vm142, %v7940, -inf
    %v7947 = vsel %vm142, %v7941, -inf
    %v7948 = vmax.f32 %v7943, %v7947
    %v7949 = vsel %vm142, %v7942, -inf
    %v7950 = vmax.f32 %v7944, %v7949
    %v7951 = vmax.f32 %v7948, %v7950
    %v7952 = vmax.f32 %v7945, %v7946
    %v7953 = vmax.f32 %v7951, %v7952
    %v7954 = vrot.slane %v7953, 4
    %v7955 = vmax.f32 %v7953, %v7954
    %v7956 = vrot.slane %v7955, 2
    %v7957 = vmax.f32 %v7955, %v7956
    %v7958 = vrot.slane %v7957, 1
    %v7959 = vmax.f32 %v7957, %v7958
    %v7960 = vmul.f32 %v100, %v7959
    %v7961 = vmul.f32 %v101, %v7959
    %v7962 = vmul.f32 %v102, %v7959
    %v7963 = vmul.f32 %v103, %v7959
    %v7964 = vmul.f32 %v104, %v7959
    %v7965 = vmul.f32 %v105, %v7959
    %v7966 = vsel %vm142, %v7960, 0.0
    %7967 = vadd.xlane.f32.xlu0 %v7966
    %v7968 = vpop.xlane.xlu0 %7967
    %v7969 = vsel %vm142, %v7961, 0.0
    %7970 = vadd.xlane.f32.xlu0 %v7969
    %v7971 = vpop.xlane.xlu0 %7970
    %v7972 = vsel %vm142, %v7962, 0.0
    %7973 = vadd.xlane.f32.xlu0 %v7972
    %v7974 = vpop.xlane.xlu0 %7973
    %v7975 = vsel %vm142, %v7963, 0.0
    %7976 = vadd.xlane.f32.xlu0 %v7975
    %v7977 = vpop.xlane.xlu0 %7976
    %v7978 = vsel %vm142, %v7964, 0.0
    %7979 = vadd.xlane.f32.xlu0 %v7978
    %v7980 = vpop.xlane.xlu0 %7979
    %v7981 = vsel %vm142, %v7965, 0.0
    %7982 = vadd.xlane.f32.xlu0 %v7981
    %v7983 = vpop.xlane.xlu0 %7982
    %v7984 = vsub.f32 %v7921, %v7968
    %v7985 = vsub.f32 %v7924, %v7971
    %v7986 = vsub.f32 %v7927, %v7974
    %v7987 = vsub.f32 %v7930, %v7977
    %v7988 = vsub.f32 %v7933, %v7980
    %v7989 = vsub.f32 %v7936, %v7983
    %v7990 = vmul.f32 %v7984, 1.442695
    %v7991 = vpow.pop %v7990
    %v7992 = vmul.f32 %v7985, 1.442695
    %v7993 = vpow.pop %v7992
    %v7994 = vmul.f32 %v7986, 1.442695
    %v7995 = vpow.pop %v7994
    %v7996 = vmul.f32 %v7987, 1.442695
    %v7997 = vpow.pop %v7996
    %v7998 = vmul.f32 %v7988, 1.442695
    %v7999 = vpow.pop %v7998
    %v8000 = vmul.f32 %v7989, 1.442695
    %v8001 = vpow.pop %v8000
    %v8002 = vmul.f32 %v7907, %v7991
    %v8003 = vmul.f32 %v7908, %v7993
    %v8004 = vmul.f32 %v7909, %v7995
    %v8005 = vmul.f32 %v7910, %v7997
    %v8006 = vmul.f32 %v7911, %v7999
    %v8007 = vmul.f32 %v7912, %v8001
    %8014 = vrot.lane.b32.xlu0 %v8002, 112
    %v8015 = vpop.permute.xlu0 %8014
    %8016 = vrot.lane.b32.xlu0 %v8003, 112
    %v8017 = vpop.permute.xlu0 %8016
    %8018 = vrot.lane.b32.xlu0 %v8004, 112
    %v8019 = vpop.permute.xlu0 %8018
    %8020 = vrot.lane.b32.xlu0 %v8005, 112
    %v8021 = vpop.permute.xlu0 %8020
    %8022 = vrot.lane.b32.xlu0 %v8006, 112
    %v8023 = vpop.permute.xlu0 %8022
    %8024 = vrot.lane.b32.xlu0 %v8007, 112
    %v8025 = vpop.permute.xlu0 %8024
    %v8032 = vsel %vm142, %v8015, %v7991
    %v8033 = vsel %vm142, %v8017, %v7993
    %v8034 = vsel %vm142, %v8019, %v7995
    %v8035 = vsel %vm142, %v8021, %v7997
    %v8036 = vsel %vm142, %v8023, %v7999
    %v8037 = vsel %vm142, %v8025, %v8001
    %8038 = vmatprep.subr.mxu0 0.0
    %v8039 = vand.u32 %v8032, 4294901760
    %8040 = vmatpush1.msra.mxu0 %v8039
    %8041 = vmatprep.subr.mxu0 0.0
    %v8042 = vand.u32 %v8033, 4294901760
    %8043 = vmatpush1.msra.mxu0 %v8042
    %8044 = vmatprep.subr.mxu0 0.0
    %v8045 = vand.u32 %v8034, 4294901760
    %8046 = vmatpush1.msra.mxu0 %v8045
    %8047 = vmatprep.subr.mxu0 0.0
    %v8048 = vand.u32 %v8035, 4294901760
    %8049 = vmatpush1.msra.mxu0 %v8048
    %8050 = vmatprep.subr.mxu0 0.0
    %v8051 = vand.u32 %v8036, 4294901760
    %8052 = vmatpush1.msra.mxu0 %v8051
    %8053 = vmatprep.subr.mxu0 0.0
    %v8054 = vand.u32 %v8037, 4294901760
    %8055 = vmatpush1.msra.mxu0 %v8054
    %8056 = vmatprep.subr.mxu0 0.0
    %8057 = vmatpush1.msra.mxu0 0.0
    %8058 = vmatprep.subr.mxu0 0.0
    %8059 = vmatpush1.msra.mxu0 0.0
    %8060 = vmatprep.subr.mxu0 0.0
    %8061 = vmatpush1.msra.mxu0 0.0
    %8062 = vmatprep.subr.mxu0 0.0
    %8063 = vmatpush1.msra.mxu0 0.0
    %8064 = vmatprep.subr.mxu0 0.0
    %8065 = vmatpush1.msra.mxu0 0.0
    %8066 = vmatprep.subr.mxu0 0.0
    %8067 = vmatpush1.msra.mxu0 0.0
    %8068 = vmatprep.subr.mxu0 0.0
    %8069 = vmatpush1.msra.mxu0 0.0
    %8070 = vmatprep.subr.mxu0 0.0
    %8071 = vmatpush1.msra.mxu0 0.0
    %8072 = vmatprep.subr.mxu0 0.0
    %8073 = vmatpush1.msra.mxu0 0.0
    %8074 = vmatprep.subr.mxu0 0.0
    %8075 = vmatpush1.msra.mxu0 0.0
    %8076 = vmatprep.subr.mxu0 0.0
    %8077 = vmatpush1.msra.mxu0 0.0
    %8078 = vmatprep.subr.mxu0 0.0
    %8079 = vmatpush1.msra.mxu0 0.0
    %8080 = vmatprep.subr.mxu0 0.0
    %8081 = vmatpush1.msra.mxu0 0.0
    %8082 = vmatprep.subr.mxu0 0.0
    %8083 = vmatpush1.msra.mxu0 0.0
    %8084 = vmatprep.subr.mxu0 0.0
    %8085 = vmatpush1.msra.mxu0 0.0
    %8086 = vmatprep.subr.mxu0 0.0
    %8087 = vmatpush1.msra.mxu0 0.0
    %8088 = vmatprep.subr.mxu0 0.0
    %8089 = vmatpush1.msra.mxu0 0.0
    %8090 = vmatprep.subr.mxu0 0.0
    %8091 = vmatpush1.msra.mxu0 0.0
    %8092 = vmatprep.subr.mxu0 0.0
    %8093 = vmatpush1.msra.mxu0 0.0
    %8094 = vmatprep.subr.mxu0 0.0
    %8095 = vmatpush1.msra.mxu0 0.0
    %8096 = vmatprep.subr.mxu0 0.0
    %8097 = vmatpush1.msra.mxu0 0.0
    %8098 = vmatprep.subr.mxu0 0.0
    %8099 = vmatpush1.msra.mxu0 0.0
    %8100 = vmatprep.subr.mxu0 0.0
    %8101 = vmatpush1.msra.mxu0 0.0
    %8102 = vmatprep.subr.mxu0 0.0
    %8103 = vmatpush1.msra.mxu0 0.0
    %8104 = vmatprep.subr.mxu0 0.0
    %8105 = vmatpush1.msra.mxu0 0.0
    %8106 = vmatprep.subr.mxu0 0.0
    %8107 = vmatpush1.msra.mxu0 0.0
    %8108 = vmatprep.mubr.f32.mxu0 0.0
    %v8109 = vand.u32 %v3932, 4294901760
    %v8110 = vsub.f32 %v3932, %v8109
    %v8111 = vand.u32 %v8110, 4294901760
    %v8112 = vsub.f32 %v8110, %v8111
    %v8113 = vand.u32 %v8112, 4294901760
    %8114 = vmatmul.mubr.f32.gmra.mrb[0].mxu0 %v8113
    %v8115 = vpop.f32.mrb[0].mxu0
    %v8116 = vadd.f32 0.0, %v8115
    %v8117 = vpop.f32.mrb[0].mxu0
    %8118 = vmatprep.mubr.f32.mxu0 0.0
    %v8119 = vand.u32 %v3935, 4294901760
    %v8120 = vsub.f32 %v3935, %v8119
    %v8121 = vand.u32 %v8120, 4294901760
    %v8122 = vsub.f32 %v8120, %v8121
    %v8123 = vand.u32 %v8122, 4294901760
    %8124 = vmatmul.mubr.f32.gmra.mrb[0].mxu0 %v8123
    %v8125 = vpop.f32.mrb[0].mxu0
    %v8126 = vadd.f32 0.0, %v8125
    %v8127 = vpop.f32.mrb[0].mxu0
    %8128 = vdwg.mxu0
    %8129 = vmatprep.subr.mxu0 0.0
    %v8130 = vand.u32 %v8032, 4294901760
    %v8131 = vsub.f32 %v8032, %v8130
    %v8132 = vand.u32 %v8131, 4294901760
    %v8133 = vsub.f32 %v8131, %v8132
    %v8134 = vand.u32 %v8133, 4294901760
    %8135 = vmatpush1.msra.mxu0 %v8134
    %8136 = vmatprep.subr.mxu0 0.0
    %v8137 = vand.u32 %v8033, 4294901760
    %v8138 = vsub.f32 %v8033, %v8137
    %v8139 = vand.u32 %v8138, 4294901760
    %v8140 = vsub.f32 %v8138, %v8139
    %v8141 = vand.u32 %v8140, 4294901760
    %8142 = vmatpush1.msra.mxu0 %v8141
    %8143 = vmatprep.subr.mxu0 0.0
    %v8144 = vand.u32 %v8034, 4294901760
    %v8145 = vsub.f32 %v8034, %v8144
    %v8146 = vand.u32 %v8145, 4294901760
    %v8147 = vsub.f32 %v8145, %v8146
    %v8148 = vand.u32 %v8147, 4294901760
    %8149 = vmatpush1.msra.mxu0 %v8148
    %8150 = vmatprep.subr.mxu0 0.0
    %v8151 = vand.u32 %v8035, 4294901760
    %v8152 = vsub.f32 %v8035, %v8151
    %v8153 = vand.u32 %v8152, 4294901760
    %v8154 = vsub.f32 %v8152, %v8153
    %v8155 = vand.u32 %v8154, 4294901760
    %8156 = vmatpush1.msra.mxu0 %v8155
    %8157 = vmatprep.subr.mxu0 0.0
    %v8158 = vand.u32 %v8036, 4294901760
    %v8159 = vsub.f32 %v8036, %v8158
    %v8160 = vand.u32 %v8159, 4294901760
    %v8161 = vsub.f32 %v8159, %v8160
    %v8162 = vand.u32 %v8161, 4294901760
    %8163 = vmatpush1.msra.mxu0 %v8162
    %8164 = vmatprep.subr.mxu0 0.0
    %v8165 = vand.u32 %v8037, 4294901760
    %v8166 = vsub.f32 %v8037, %v8165
    %v8167 = vand.u32 %v8166, 4294901760
    %v8168 = vsub.f32 %v8166, %v8167
    %v8169 = vand.u32 %v8168, 4294901760
    %8170 = vmatpush1.msra.mxu0 %v8169
    %8171 = vmatprep.subr.mxu0 0.0
    %8172 = vmatpush1.msra.mxu0 0.0
    %8173 = vmatprep.subr.mxu0 0.0
    %8174 = vmatpush1.msra.mxu0 0.0
    %8175 = vmatprep.subr.mxu0 0.0
    %8176 = vmatpush1.msra.mxu0 0.0
    %8177 = vmatprep.subr.mxu0 0.0
    %8178 = vmatpush1.msra.mxu0 0.0
    %8179 = vmatprep.subr.mxu0 0.0
    %8180 = vmatpush1.msra.mxu0 0.0
    %8181 = vmatprep.subr.mxu0 0.0
    %8182 = vmatpush1.msra.mxu0 0.0
    %8183 = vmatprep.subr.mxu0 0.0
    %8184 = vmatpush1.msra.mxu0 0.0
    %8185 = vmatprep.subr.mxu0 0.0
    %8186 = vmatpush1.msra.mxu0 0.0
    %8187 = vmatprep.subr.mxu0 0.0
    %8188 = vmatpush1.msra.mxu0 0.0
    %8189 = vmatprep.subr.mxu0 0.0
    %8190 = vmatpush1.msra.mxu0 0.0
    %8191 = vmatprep.subr.mxu0 0.0
    %8192 = vmatpush1.msra.mxu0 0.0
    %8193 = vmatprep.subr.mxu0 0.0
    %8194 = vmatpush1.msra.mxu0 0.0
    %8195 = vmatprep.subr.mxu0 0.0
    %8196 = vmatpush1.msra.mxu0 0.0
    %8197 = vmatprep.subr.mxu0 0.0
    %8198 = vmatpush1.msra.mxu0 0.0
    %8199 = vmatprep.subr.mxu0 0.0
    %8200 = vmatpush1.msra.mxu0 0.0
    %8201 = vmatprep.subr.mxu0 0.0
    %8202 = vmatpush1.msra.mxu0 0.0
    %8203 = vmatprep.subr.mxu0 0.0
    %8204 = vmatpush1.msra.mxu0 0.0
    %8205 = vmatprep.subr.mxu0 0.0
    %8206 = vmatpush1.msra.mxu0 0.0
    %8207 = vmatprep.subr.mxu0 0.0
    %8208 = vmatpush1.msra.mxu0 0.0
    %8209 = vmatprep.subr.mxu0 0.0
    %8210 = vmatpush1.msra.mxu0 0.0
    %8211 = vmatprep.subr.mxu0 0.0
    %8212 = vmatpush1.msra.mxu0 0.0
    %8213 = vmatprep.subr.mxu0 0.0
    %8214 = vmatpush1.msra.mxu0 0.0
    %8215 = vmatprep.subr.mxu0 0.0
    %8216 = vmatpush1.msra.mxu0 0.0
    %8217 = vmatprep.subr.mxu0 0.0
    %8218 = vmatpush1.msra.mxu0 0.0
    %8219 = vmatprep.subr.mxu0 0.0
    %8220 = vmatpush1.msra.mxu0 0.0
    %8221 = vmatprep.subr.mxu0 0.0
    %8222 = vmatpush1.msra.mxu0 0.0
    %8223 = vmatprep.mubr.f32.mxu0 0.0
    %v8224 = vand.u32 %v3932, 4294901760
    %8225 = vmatmul.mubr.f32.gmra.mrb[0].mxu0 %v8224
    %v8226 = vpop.f32.mrb[0].mxu0
    %v8227 = vadd.f32 %v8116, %v8226
    %v8228 = vpop.f32.mrb[0].mxu0
    %8229 = vmatprep.mubr.f32.mxu0 0.0
    %v8230 = vand.u32 %v3935, 4294901760
    %8231 = vmatmul.mubr.f32.gmra.mrb[0].mxu0 %v8230
    %v8232 = vpop.f32.mrb[0].mxu0
    %v8233 = vadd.f32 %v8126, %v8232
    %v8234 = vpop.f32.mrb[0].mxu0
    %8235 = vdwg.mxu0
    %8236 = vmatprep.subr.mxu0 0.0
    %v8237 = vand.u32 %v8032, 4294901760
    %v8238 = vsub.f32 %v8032, %v8237
    %8239 = vmatpush1.msra.mxu0 %v8238
    %8240 = vmatprep.subr.mxu0 0.0
    %v8241 = vand.u32 %v8033, 4294901760
    %v8242 = vsub.f32 %v8033, %v8241
    %8243 = vmatpush1.msra.mxu0 %v8242
    %8244 = vmatprep.subr.mxu0 0.0
    %v8245 = vand.u32 %v8034, 4294901760
    %v8246 = vsub.f32 %v8034, %v8245
    %8247 = vmatpush1.msra.mxu0 %v8246
    %8248 = vmatprep.subr.mxu0 0.0
    %v8249 = vand.u32 %v8035, 4294901760
    %v8250 = vsub.f32 %v8035, %v8249
    %8251 = vmatpush1.msra.mxu0 %v8250
    %8252 = vmatprep.subr.mxu0 0.0
    %v8253 = vand.u32 %v8036, 4294901760
    %v8254 = vsub.f32 %v8036, %v8253
    %8255 = vmatpush1.msra.mxu0 %v8254
    %8256 = vmatprep.subr.mxu0 0.0
    %v8257 = vand.u32 %v8037, 4294901760
    %v8258 = vsub.f32 %v8037, %v8257
    %8259 = vmatpush1.msra.mxu0 %v8258
    %8260 = vmatprep.subr.mxu0 0.0
    %8261 = vmatpush1.msra.mxu0 0.0
    %8262 = vmatprep.subr.mxu0 0.0
    %8263 = vmatpush1.msra.mxu0 0.0
    %8264 = vmatprep.subr.mxu0 0.0
    %8265 = vmatpush1.msra.mxu0 0.0
    %8266 = vmatprep.subr.mxu0 0.0
    %8267 = vmatpush1.msra.mxu0 0.0
    %8268 = vmatprep.subr.mxu0 0.0
    %8269 = vmatpush1.msra.mxu0 0.0
    %8270 = vmatprep.subr.mxu0 0.0
    %8271 = vmatpush1.msra.mxu0 0.0
    %8272 = vmatprep.subr.mxu0 0.0
    %8273 = vmatpush1.msra.mxu0 0.0
    %8274 = vmatprep.subr.mxu0 0.0
    %8275 = vmatpush1.msra.mxu0 0.0
    %8276 = vmatprep.subr.mxu0 0.0
    %8277 = vmatpush1.msra.mxu0 0.0
    %8278 = vmatprep.subr.mxu0 0.0
    %8279 = vmatpush1.msra.mxu0 0.0
    %8280 = vmatprep.subr.mxu0 0.0
    %8281 = vmatpush1.msra.mxu0 0.0
    %8282 = vmatprep.subr.mxu0 0.0
    %8283 = vmatpush1.msra.mxu0 0.0
    %8284 = vmatprep.subr.mxu0 0.0
    %8285 = vmatpush1.msra.mxu0 0.0
    %8286 = vmatprep.subr.mxu0 0.0
    %8287 = vmatpush1.msra.mxu0 0.0
    %8288 = vmatprep.subr.mxu0 0.0
    %8289 = vmatpush1.msra.mxu0 0.0
    %8290 = vmatprep.subr.mxu0 0.0
    %8291 = vmatpush1.msra.mxu0 0.0
    %8292 = vmatprep.subr.mxu0 0.0
    %8293 = vmatpush1.msra.mxu0 0.0
    %8294 = vmatprep.subr.mxu0 0.0
    %8295 = vmatpush1.msra.mxu0 0.0
    %8296 = vmatprep.subr.mxu0 0.0
    %8297 = vmatpush1.msra.mxu0 0.0
    %8298 = vmatprep.subr.mxu0 0.0
    %8299 = vmatpush1.msra.mxu0 0.0
    %8300 = vmatprep.subr.mxu0 0.0
    %8301 = vmatpush1.msra.mxu0 0.0
    %8302 = vmatprep.subr.mxu0 0.0
    %8303 = vmatpush1.msra.mxu0 0.0
    %8304 = vmatprep.subr.mxu0 0.0
    %8305 = vmatpush1.msra.mxu0 0.0
    %8306 = vmatprep.subr.mxu0 0.0
    %8307 = vmatpush1.msra.mxu0 0.0
    %8308 = vmatprep.subr.mxu0 0.0
    %8309 = vmatpush1.msra.mxu0 0.0
    %8310 = vmatprep.subr.mxu0 0.0
    %8311 = vmatpush1.msra.mxu0 0.0
    %8312 = vmatprep.mubr.f32.mxu0 0.0
    %v8313 = vand.u32 %v3932, 4294901760
    %v8314 = vsub.f32 %v3932, %v8313
    %8315 = vmatmul.mubr.f32.gmra.mrb[0].mxu0 %v8314
    %v8316 = vpop.f32.mrb[0].mxu0
    %v8317 = vadd.f32 %v8227, %v8316
    %v8318 = vpop.f32.mrb[0].mxu0
    %8319 = vmatprep.mubr.f32.mxu0 0.0
    %v8320 = vand.u32 %v3935, 4294901760
    %v8321 = vsub.f32 %v3935, %v8320
    %8322 = vmatmul.mubr.f32.gmra.mrb[0].mxu0 %v8321
    %v8323 = vpop.f32.mrb[0].mxu0
    %v8324 = vadd.f32 %v8233, %v8323
    %v8325 = vpop.f32.mrb[0].mxu0
    %8326 = vdwg.mxu0
    %8327 = vmatprep.subr.mxu0 0.0
    %v8328 = vand.u32 %v8032, 4294901760
    %8329 = vmatpush1.msra.mxu0 %v8328
    %8330 = vmatprep.subr.mxu0 0.0
    %v8331 = vand.u32 %v8033, 4294901760
    %8332 = vmatpush1.msra.mxu0 %v8331
    %8333 = vmatprep.subr.mxu0 0.0
    %v8334 = vand.u32 %v8034, 4294901760
    %8335 = vmatpush1.msra.mxu0 %v8334
    %8336 = vmatprep.subr.mxu0 0.0
    %v8337 = vand.u32 %v8035, 4294901760
    %8338 = vmatpush1.msra.mxu0 %v8337
    %8339 = vmatprep.subr.mxu0 0.0
    %v8340 = vand.u32 %v8036, 4294901760
    %8341 = vmatpush1.msra.mxu0 %v8340
    %8342 = vmatprep.subr.mxu0 0.0
    %v8343 = vand.u32 %v8037, 4294901760
    %8344 = vmatpush1.msra.mxu0 %v8343
    %8345 = vmatprep.subr.mxu0 0.0
    %8346 = vmatpush1.msra.mxu0 0.0
    %8347 = vmatprep.subr.mxu0 0.0
    %8348 = vmatpush1.msra.mxu0 0.0
    %8349 = vmatprep.subr.mxu0 0.0
    %8350 = vmatpush1.msra.mxu0 0.0
    %8351 = vmatprep.subr.mxu0 0.0
    %8352 = vmatpush1.msra.mxu0 0.0
    %8353 = vmatprep.subr.mxu0 0.0
    %8354 = vmatpush1.msra.mxu0 0.0
    %8355 = vmatprep.subr.mxu0 0.0
    %8356 = vmatpush1.msra.mxu0 0.0
    %8357 = vmatprep.subr.mxu0 0.0
    %8358 = vmatpush1.msra.mxu0 0.0
    %8359 = vmatprep.subr.mxu0 0.0
    %8360 = vmatpush1.msra.mxu0 0.0
    %8361 = vmatprep.subr.mxu0 0.0
    %8362 = vmatpush1.msra.mxu0 0.0
    %8363 = vmatprep.subr.mxu0 0.0
    %8364 = vmatpush1.msra.mxu0 0.0
    %8365 = vmatprep.subr.mxu0 0.0
    %8366 = vmatpush1.msra.mxu0 0.0
    %8367 = vmatprep.subr.mxu0 0.0
    %8368 = vmatpush1.msra.mxu0 0.0
    %8369 = vmatprep.subr.mxu0 0.0
    %8370 = vmatpush1.msra.mxu0 0.0
    %8371 = vmatprep.subr.mxu0 0.0
    %8372 = vmatpush1.msra.mxu0 0.0
    %8373 = vmatprep.subr.mxu0 0.0
    %8374 = vmatpush1.msra.mxu0 0.0
    %8375 = vmatprep.subr.mxu0 0.0
    %8376 = vmatpush1.msra.mxu0 0.0
    %8377 = vmatprep.subr.mxu0 0.0
    %8378 = vmatpush1.msra.mxu0 0.0
    %8379 = vmatprep.subr.mxu0 0.0
    %8380 = vmatpush1.msra.mxu0 0.0
    %8381 = vmatprep.subr.mxu0 0.0
    %8382 = vmatpush1.msra.mxu0 0.0
    %8383 = vmatprep.subr.mxu0 0.0
    %8384 = vmatpush1.msra.mxu0 0.0
    %8385 = vmatprep.subr.mxu0 0.0
    %8386 = vmatpush1.msra.mxu0 0.0
    %8387 = vmatprep.subr.mxu0 0.0
    %8388 = vmatpush1.msra.mxu0 0.0
    %8389 = vmatprep.subr.mxu0 0.0
    %8390 = vmatpush1.msra.mxu0 0.0
    %8391 = vmatprep.subr.mxu0 0.0
    %8392 = vmatpush1.msra.mxu0 0.0
    %8393 = vmatprep.subr.mxu0 0.0
    %8394 = vmatpush1.msra.mxu0 0.0
    %8395 = vmatprep.subr.mxu0 0.0
    %8396 = vmatpush1.msra.mxu0 0.0
    %8397 = vmatprep.mubr.f32.mxu0 0.0
    %v8398 = vand.u32 %v3932, 4294901760
    %v8399 = vsub.f32 %v3932, %v8398
    %v8400 = vand.u32 %v8399, 4294901760
    %8401 = vmatmul.mubr.f32.gmra.mrb[0].mxu0 %v8400
    %v8402 = vpop.f32.mrb[0].mxu0
    %v8403 = vadd.f32 %v8317, %v8402
    %v8404 = vpop.f32.mrb[0].mxu0
    %8405 = vmatprep.mubr.f32.mxu0 0.0
    %v8406 = vand.u32 %v3935, 4294901760
    %v8407 = vsub.f32 %v3935, %v8406
    %v8408 = vand.u32 %v8407, 4294901760
    %8409 = vmatmul.mubr.f32.gmra.mrb[0].mxu0 %v8408
    %v8410 = vpop.f32.mrb[0].mxu0
    %v8411 = vadd.f32 %v8324, %v8410
    %v8412 = vpop.f32.mrb[0].mxu0
    %8413 = vdwg.mxu0
    %8414 = vmatprep.subr.mxu0 0.0
    %v8415 = vand.u32 %v8032, 4294901760
    %v8416 = vsub.f32 %v8032, %v8415
    %v8417 = vand.u32 %v8416, 4294901760
    %8418 = vmatpush1.msra.mxu0 %v8417
    %8419 = vmatprep.subr.mxu0 0.0
    %v8420 = vand.u32 %v8033, 4294901760
    %v8421 = vsub.f32 %v8033, %v8420
    %v8422 = vand.u32 %v8421, 4294901760
    %8423 = vmatpush1.msra.mxu0 %v8422
    %8424 = vmatprep.subr.mxu0 0.0
    %v8425 = vand.u32 %v8034, 4294901760
    %v8426 = vsub.f32 %v8034, %v8425
    %v8427 = vand.u32 %v8426, 4294901760
    %8428 = vmatpush1.msra.mxu0 %v8427
    %8429 = vmatprep.subr.mxu0 0.0
    %v8430 = vand.u32 %v8035, 4294901760
    %v8431 = vsub.f32 %v8035, %v8430
    %v8432 = vand.u32 %v8431, 4294901760
    %8433 = vmatpush1.msra.mxu0 %v8432
    %8434 = vmatprep.subr.mxu0 0.0
    %v8435 = vand.u32 %v8036, 4294901760
    %v8436 = vsub.f32 %v8036, %v8435
    %v8437 = vand.u32 %v8436, 4294901760
    %8438 = vmatpush1.msra.mxu0 %v8437
    %8439 = vmatprep.subr.mxu0 0.0
    %v8440 = vand.u32 %v8037, 4294901760
    %v8441 = vsub.f32 %v8037, %v8440
    %v8442 = vand.u32 %v8441, 4294901760
    %8443 = vmatpush1.msra.mxu0 %v8442
    %8444 = vmatprep.subr.mxu0 0.0
    %8445 = vmatpush1.msra.mxu0 0.0
    %8446 = vmatprep.subr.mxu0 0.0
    %8447 = vmatpush1.msra.mxu0 0.0
    %8448 = vmatprep.subr.mxu0 0.0
    %8449 = vmatpush1.msra.mxu0 0.0
    %8450 = vmatprep.subr.mxu0 0.0
    %8451 = vmatpush1.msra.mxu0 0.0
    %8452 = vmatprep.subr.mxu0 0.0
    %8453 = vmatpush1.msra.mxu0 0.0
    %8454 = vmatprep.subr.mxu0 0.0
    %8455 = vmatpush1.msra.mxu0 0.0
    %8456 = vmatprep.subr.mxu0 0.0
    %8457 = vmatpush1.msra.mxu0 0.0
    %8458 = vmatprep.subr.mxu0 0.0
    %8459 = vmatpush1.msra.mxu0 0.0
    %8460 = vmatprep.subr.mxu0 0.0
    %8461 = vmatpush1.msra.mxu0 0.0
    %8462 = vmatprep.subr.mxu0 0.0
    %8463 = vmatpush1.msra.mxu0 0.0
    %8464 = vmatprep.subr.mxu0 0.0
    %8465 = vmatpush1.msra.mxu0 0.0
    %8466 = vmatprep.subr.mxu0 0.0
    %8467 = vmatpush1.msra.mxu0 0.0
    %8468 = vmatprep.subr.mxu0 0.0
    %8469 = vmatpush1.msra.mxu0 0.0
    %8470 = vmatprep.subr.mxu0 0.0
    %8471 = vmatpush1.msra.mxu0 0.0
    %8472 = vmatprep.subr.mxu0 0.0
    %8473 = vmatpush1.msra.mxu0 0.0
    %8474 = vmatprep.subr.mxu0 0.0
    %8475 = vmatpush1.msra.mxu0 0.0
    %8476 = vmatprep.subr.mxu0 0.0
    %8477 = vmatpush1.msra.mxu0 0.0
    %8478 = vmatprep.subr.mxu0 0.0
    %8479 = vmatpush1.msra.mxu0 0.0
    %8480 = vmatprep.subr.mxu0 0.0
    %8481 = vmatpush1.msra.mxu0 0.0
    %8482 = vmatprep.subr.mxu0 0.0
    %8483 = vmatpush1.msra.mxu0 0.0
    %8484 = vmatprep.subr.mxu0 0.0
    %8485 = vmatpush1.msra.mxu0 0.0
    %8486 = vmatprep.subr.mxu0 0.0
    %8487 = vmatpush1.msra.mxu0 0.0
    %8488 = vmatprep.subr.mxu0 0.0
    %8489 = vmatpush1.msra.mxu0 0.0
    %8490 = vmatprep.subr.mxu0 0.0
    %8491 = vmatpush1.msra.mxu0 0.0
    %8492 = vmatprep.subr.mxu0 0.0
    %8493 = vmatpush1.msra.mxu0 0.0
    %8494 = vmatprep.subr.mxu0 0.0
    %8495 = vmatpush1.msra.mxu0 0.0
    %8496 = vmatprep.mubr.f32.mxu0 0.0
    %v8497 = vand.u32 %v3932, 4294901760
    %8498 = vmatmul.mubr.f32.gmra.mrb[0].mxu0 %v8497
    %v8499 = vpop.f32.mrb[0].mxu0
    %v8500 = vadd.f32 %v8403, %v8499
    %v8501 = vpop.f32.mrb[0].mxu0
    %8502 = vmatprep.mubr.f32.mxu0 0.0
    %v8503 = vand.u32 %v3935, 4294901760
    %8504 = vmatmul.mubr.f32.gmra.mrb[0].mxu0 %v8503
    %v8505 = vpop.f32.mrb[0].mxu0
    %v8506 = vadd.f32 %v8411, %v8505
    %v8507 = vpop.f32.mrb[0].mxu0
    %8508 = vdwg.mxu0
    %8509 = vmatprep.subr.mxu0 0.0
    %v8510 = vand.u32 %v8032, 4294901760
    %8511 = vmatpush1.msra.mxu0 %v8510
    %8512 = vmatprep.subr.mxu0 0.0
    %v8513 = vand.u32 %v8033, 4294901760
    %8514 = vmatpush1.msra.mxu0 %v8513
    %8515 = vmatprep.subr.mxu0 0.0
    %v8516 = vand.u32 %v8034, 4294901760
    %8517 = vmatpush1.msra.mxu0 %v8516
    %8518 = vmatprep.subr.mxu0 0.0
    %v8519 = vand.u32 %v8035, 4294901760
    %8520 = vmatpush1.msra.mxu0 %v8519
    %8521 = vmatprep.subr.mxu0 0.0
    %v8522 = vand.u32 %v8036, 4294901760
    %8523 = vmatpush1.msra.mxu0 %v8522
    %8524 = vmatprep.subr.mxu0 0.0
    %v8525 = vand.u32 %v8037, 4294901760
    %8526 = vmatpush1.msra.mxu0 %v8525
    %8527 = vmatprep.subr.mxu0 0.0
    %8528 = vmatpush1.msra.mxu0 0.0
    %8529 = vmatprep.subr.mxu0 0.0
    %8530 = vmatpush1.msra.mxu0 0.0
    %8531 = vmatprep.subr.mxu0 0.0
    %8532 = vmatpush1.msra.mxu0 0.0
    %8533 = vmatprep.subr.mxu0 0.0
    %8534 = vmatpush1.msra.mxu0 0.0
    %8535 = vmatprep.subr.mxu0 0.0
    %8536 = vmatpush1.msra.mxu0 0.0
    %8537 = vmatprep.subr.mxu0 0.0
    %8538 = vmatpush1.msra.mxu0 0.0
    %8539 = vmatprep.subr.mxu0 0.0
    %8540 = vmatpush1.msra.mxu0 0.0
    %8541 = vmatprep.subr.mxu0 0.0
    %8542 = vmatpush1.msra.mxu0 0.0
    %8543 = vmatprep.subr.mxu0 0.0
    %8544 = vmatpush1.msra.mxu0 0.0
    %8545 = vmatprep.subr.mxu0 0.0
    %8546 = vmatpush1.msra.mxu0 0.0
    %8547 = vmatprep.subr.mxu0 0.0
    %8548 = vmatpush1.msra.mxu0 0.0
    %8549 = vmatprep.subr.mxu0 0.0
    %8550 = vmatpush1.msra.mxu0 0.0
    %8551 = vmatprep.subr.mxu0 0.0
    %8552 = vmatpush1.msra.mxu0 0.0
    %8553 = vmatprep.subr.mxu0 0.0
    %8554 = vmatpush1.msra.mxu0 0.0
    %8555 = vmatprep.subr.mxu0 0.0
    %8556 = vmatpush1.msra.mxu0 0.0
    %8557 = vmatprep.subr.mxu0 0.0
    %8558 = vmatpush1.msra.mxu0 0.0
    %8559 = vmatprep.subr.mxu0 0.0
    %8560 = vmatpush1.msra.mxu0 0.0
    %8561 = vmatprep.subr.mxu0 0.0
    %8562 = vmatpush1.msra.mxu0 0.0
    %8563 = vmatprep.subr.mxu0 0.0
    %8564 = vmatpush1.msra.mxu0 0.0
    %8565 = vmatprep.subr.mxu0 0.0
    %8566 = vmatpush1.msra.mxu0 0.0
    %8567 = vmatprep.subr.mxu0 0.0
    %8568 = vmatpush1.msra.mxu0 0.0
    %8569 = vmatprep.subr.mxu0 0.0
    %8570 = vmatpush1.msra.mxu0 0.0
    %8571 = vmatprep.subr.mxu0 0.0
    %8572 = vmatpush1.msra.mxu0 0.0
    %8573 = vmatprep.subr.mxu0 0.0
    %8574 = vmatpush1.msra.mxu0 0.0
    %8575 = vmatprep.subr.mxu0 0.0
    %8576 = vmatpush1.msra.mxu0 0.0
    %8577 = vmatprep.subr.mxu0 0.0
    %8578 = vmatpush1.msra.mxu0 0.0
    %8579 = vmatprep.mubr.f32.mxu0 0.0
    %v8580 = vand.u32 %v3932, 4294901760
    %8581 = vmatmul.mubr.f32.gmra.mrb[0].mxu0 %v8580
    %v8582 = vpop.f32.mrb[0].mxu0
    %v8583 = vadd.f32 %v8500, %v8582
    %v8584 = vpop.f32.mrb[0].mxu0
    %8585 = vmatprep.mubr.f32.mxu0 0.0
    %v8586 = vand.u32 %v3935, 4294901760
    %8587 = vmatmul.mubr.f32.gmra.mrb[0].mxu0 %v8586
    %v8588 = vpop.f32.mrb[0].mxu0
    %v8589 = vadd.f32 %v8506, %v8588
    %v8590 = vpop.f32.mrb[0].mxu0
    %8591 = vdwg.mxu0
    %v8592 = vadd.f32 %v8583, 1e-16
    %v8593 = vadd.f32 %v8589, 1e-16
    %8595 = vset.pattern.permute.xlu0 16
    %8596 = vperm.xlu0 %8595, %v8592
    %v8597 = vpop.permute.xlu0 %8596
    %8600 = vset.pattern.permute.xlu0 16
    %8601 = vperm.xlu0 %8600, %v8593
    %v8602 = vpop.permute.xlu0 %8601
    %v8604 = vrcp.pop %v8597
    %v8605 = vmul.f32 %v8583, %v8604
    %v8606 = vrcp.pop %v8602
    %v8607 = vmul.f32 %v8589, %v8606
    %v8609 = vsel %vm142, %v8605, 0
    %v8612 = vsel %vm142, %v8607, 0
    %8614 = vmatprep.subr.mxu0 0.0
    %v8615 = vand.u32 %v5081, 4294901760
    %8616 = vmatpush1.msra.mxu0 %v8615
    %8617 = vmatprep.subr.mxu0 0.0
    %v8618 = vand.u32 %v5082, 4294901760
    %8619 = vmatpush1.msra.mxu0 %v8618
    %8620 = vmatprep.subr.mxu0 0.0
    %8621 = vmatpush1.msra.mxu0 0.0
    %8622 = vmatprep.subr.mxu0 0.0
    %8623 = vmatpush1.msra.mxu0 0.0
    %8624 = vmatprep.subr.mxu0 0.0
    %8625 = vmatpush1.msra.mxu0 0.0
    %8626 = vmatprep.subr.mxu0 0.0
    %8627 = vmatpush1.msra.mxu0 0.0
    %8628 = vmatprep.subr.mxu0 0.0
    %8629 = vmatpush1.msra.mxu0 0.0
    %8630 = vmatprep.subr.mxu0 0.0
    %8631 = vmatpush1.msra.mxu0 0.0
    %8632 = vmatprep.subr.mxu0 0.0
    %8633 = vmatpush1.msra.mxu0 0.0
    %8634 = vmatprep.subr.mxu0 0.0
    %8635 = vmatpush1.msra.mxu0 0.0
    %8636 = vmatprep.subr.mxu0 0.0
    %8637 = vmatpush1.msra.mxu0 0.0
    %8638 = vmatprep.subr.mxu0 0.0
    %8639 = vmatpush1.msra.mxu0 0.0
    %8640 = vmatprep.subr.mxu0 0.0
    %8641 = vmatpush1.msra.mxu0 0.0
    %8642 = vmatprep.subr.mxu0 0.0
    %8643 = vmatpush1.msra.mxu0 0.0
    %8644 = vmatprep.subr.mxu0 0.0
    %8645 = vmatpush1.msra.mxu0 0.0
    %8646 = vmatprep.subr.mxu0 0.0
    %8647 = vmatpush1.msra.mxu0 0.0
    %8648 = vmatprep.subr.mxu0 0.0
    %8649 = vmatpush1.msra.mxu0 0.0
    %8650 = vmatprep.subr.mxu0 0.0
    %8651 = vmatpush1.msra.mxu0 0.0
    %8652 = vmatprep.subr.mxu0 0.0
    %8653 = vmatpush1.msra.mxu0 0.0
    %8654 = vmatprep.subr.mxu0 0.0
    %8655 = vmatpush1.msra.mxu0 0.0
    %8656 = vmatprep.subr.mxu0 0.0
    %8657 = vmatpush1.msra.mxu0 0.0
    %8658 = vmatprep.subr.mxu0 0.0
    %8659 = vmatpush1.msra.mxu0 0.0
    %8660 = vmatprep.subr.mxu0 0.0
    %8661 = vmatpush1.msra.mxu0 0.0
    %8662 = vmatprep.subr.mxu0 0.0
    %8663 = vmatpush1.msra.mxu0 0.0
    %8664 = vmatprep.subr.mxu0 0.0
    %8665 = vmatpush1.msra.mxu0 0.0
    %8666 = vmatprep.subr.mxu0 0.0
    %8667 = vmatpush1.msra.mxu0 0.0
    %8668 = vmatprep.subr.mxu0 0.0
    %8669 = vmatpush1.msra.mxu0 0.0
    %8670 = vmatprep.subr.mxu0 0.0
    %8671 = vmatpush1.msra.mxu0 0.0
    %8672 = vmatprep.subr.mxu0 0.0
    %8673 = vmatpush1.msra.mxu0 0.0
    %8674 = vmatprep.subr.mxu0 0.0
    %8675 = vmatpush1.msra.mxu0 0.0
    %8676 = vmatprep.subr.mxu0 0.0
    %8677 = vmatpush1.msra.mxu0 0.0
    %8678 = vmatprep.subr.mxu0 0.0
    %8679 = vmatpush1.msra.mxu0 0.0
    %8680 = vmatprep.mubr.f32.mxu0 0.0
    %v8681 = vand.u32 %v8609, 4294901760
    %v8682 = vsub.f32 %v8609, %v8681
    %v8683 = vand.u32 %v8682, 4294901760
    %v8684 = vsub.f32 %v8682, %v8683
    %v8685 = vand.u32 %v8684, 4294901760
    %8686 = vmatmul.mubr.f32.gmra.mrb[0].mxu0 %v8685
    %v8687 = vpop.f32.mrb[0].mxu0
    %v8688 = vadd.f32 0.0, %v8687
    %v8689 = vpop.f32.mrb[0].mxu0
    %8690 = vmatprep.mubr.f32.mxu0 0.0
    %v8691 = vand.u32 %v8612, 4294901760
    %v8692 = vsub.f32 %v8612, %v8691
    %v8693 = vand.u32 %v8692, 4294901760
    %v8694 = vsub.f32 %v8692, %v8693
    %v8695 = vand.u32 %v8694, 4294901760
    %8696 = vmatmul.mubr.f32.gmra.mrb[0].mxu0 %v8695
    %v8697 = vpop.f32.mrb[0].mxu0
    %v8698 = vadd.f32 0.0, %v8697
    %v8699 = vpop.f32.mrb[0].mxu0
    %8700 = vdwg.mxu0
    %8701 = vmatprep.subr.mxu0 0.0
    %v8702 = vand.u32 %v5081, 4294901760
    %v8703 = vsub.f32 %v5081, %v8702
    %v8704 = vand.u32 %v8703, 4294901760
    %v8705 = vsub.f32 %v8703, %v8704
    %v8706 = vand.u32 %v8705, 4294901760
    %8707 = vmatpush1.msra.mxu0 %v8706
    %8708 = vmatprep.subr.mxu0 0.0
    %v8709 = vand.u32 %v5082, 4294901760
    %v8710 = vsub.f32 %v5082, %v8709
    %v8711 = vand.u32 %v8710, 4294901760
    %v8712 = vsub.f32 %v8710, %v8711
    %v8713 = vand.u32 %v8712, 4294901760
    %8714 = vmatpush1.msra.mxu0 %v8713
    %8715 = vmatprep.subr.mxu0 0.0
    %8716 = vmatpush1.msra.mxu0 0.0
    %8717 = vmatprep.subr.mxu0 0.0
    %8718 = vmatpush1.msra.mxu0 0.0
    %8719 = vmatprep.subr.mxu0 0.0
    %8720 = vmatpush1.msra.mxu0 0.0
    %8721 = vmatprep.subr.mxu0 0.0
    %8722 = vmatpush1.msra.mxu0 0.0
    %8723 = vmatprep.subr.mxu0 0.0
    %8724 = vmatpush1.msra.mxu0 0.0
    %8725 = vmatprep.subr.mxu0 0.0
    %8726 = vmatpush1.msra.mxu0 0.0
    %8727 = vmatprep.subr.mxu0 0.0
    %8728 = vmatpush1.msra.mxu0 0.0
    %8729 = vmatprep.subr.mxu0 0.0
    %8730 = vmatpush1.msra.mxu0 0.0
    %8731 = vmatprep.subr.mxu0 0.0
    %8732 = vmatpush1.msra.mxu0 0.0
    %8733 = vmatprep.subr.mxu0 0.0
    %8734 = vmatpush1.msra.mxu0 0.0
    %8735 = vmatprep.subr.mxu0 0.0
    %8736 = vmatpush1.msra.mxu0 0.0
    %8737 = vmatprep.subr.mxu0 0.0
    %8738 = vmatpush1.msra.mxu0 0.0
    %8739 = vmatprep.subr.mxu0 0.0
    %8740 = vmatpush1.msra.mxu0 0.0
    %8741 = vmatprep.subr.mxu0 0.0
    %8742 = vmatpush1.msra.mxu0 0.0
    %8743 = vmatprep.subr.mxu0 0.0
    %8744 = vmatpush1.msra.mxu0 0.0
    %8745 = vmatprep.subr.mxu0 0.0
    %8746 = vmatpush1.msra.mxu0 0.0
    %8747 = vmatprep.subr.mxu0 0.0
    %8748 = vmatpush1.msra.mxu0 0.0
    %8749 = vmatprep.subr.mxu0 0.0
    %8750 = vmatpush1.msra.mxu0 0.0
    %8751 = vmatprep.subr.mxu0 0.0
    %8752 = vmatpush1.msra.mxu0 0.0
    %8753 = vmatprep.subr.mxu0 0.0
    %8754 = vmatpush1.msra.mxu0 0.0
    %8755 = vmatprep.subr.mxu0 0.0
    %8756 = vmatpush1.msra.mxu0 0.0
    %8757 = vmatprep.subr.mxu0 0.0
    %8758 = vmatpush1.msra.mxu0 0.0
    %8759 = vmatprep.subr.mxu0 0.0
    %8760 = vmatpush1.msra.mxu0 0.0
    %8761 = vmatprep.subr.mxu0 0.0
    %8762 = vmatpush1.msra.mxu0 0.0
    %8763 = vmatprep.subr.mxu0 0.0
    %8764 = vmatpush1.msra.mxu0 0.0
    %8765 = vmatprep.subr.mxu0 0.0
    %8766 = vmatpush1.msra.mxu0 0.0
    %8767 = vmatprep.subr.mxu0 0.0
    %8768 = vmatpush1.msra.mxu0 0.0
    %8769 = vmatprep.subr.mxu0 0.0
    %8770 = vmatpush1.msra.mxu0 0.0
    %8771 = vmatprep.subr.mxu0 0.0
    %8772 = vmatpush1.msra.mxu0 0.0
    %8773 = vmatprep.subr.mxu0 0.0
    %8774 = vmatpush1.msra.mxu0 0.0
    %8775 = vmatprep.mubr.f32.mxu0 0.0
    %v8776 = vand.u32 %v8609, 4294901760
    %8777 = vmatmul.mubr.f32.gmra.mrb[0].mxu0 %v8776
    %v8778 = vpop.f32.mrb[0].mxu0
    %v8779 = vadd.f32 %v8688, %v8778
    %v8780 = vpop.f32.mrb[0].mxu0
    %8781 = vmatprep.mubr.f32.mxu0 0.0
    %v8782 = vand.u32 %v8612, 4294901760
    %8783 = vmatmul.mubr.f32.gmra.mrb[0].mxu0 %v8782
    %v8784 = vpop.f32.mrb[0].mxu0
    %v8785 = vadd.f32 %v8698, %v8784
    %v8786 = vpop.f32.mrb[0].mxu0
    %8787 = vdwg.mxu0
    %8788 = vmatprep.subr.mxu0 0.0
    %v8789 = vand.u32 %v5081, 4294901760
    %v8790 = vsub.f32 %v5081, %v8789
    %8791 = vmatpush1.msra.mxu0 %v8790
    %8792 = vmatprep.subr.mxu0 0.0
    %v8793 = vand.u32 %v5082, 4294901760
    %v8794 = vsub.f32 %v5082, %v8793
    %8795 = vmatpush1.msra.mxu0 %v8794
    %8796 = vmatprep.subr.mxu0 0.0
    %8797 = vmatpush1.msra.mxu0 0.0
    %8798 = vmatprep.subr.mxu0 0.0
    %8799 = vmatpush1.msra.mxu0 0.0
    %8800 = vmatprep.subr.mxu0 0.0
    %8801 = vmatpush1.msra.mxu0 0.0
    %8802 = vmatprep.subr.mxu0 0.0
    %8803 = vmatpush1.msra.mxu0 0.0
    %8804 = vmatprep.subr.mxu0 0.0
    %8805 = vmatpush1.msra.mxu0 0.0
    %8806 = vmatprep.subr.mxu0 0.0
    %8807 = vmatpush1.msra.mxu0 0.0
    %8808 = vmatprep.subr.mxu0 0.0
    %8809 = vmatpush1.msra.mxu0 0.0
    %8810 = vmatprep.subr.mxu0 0.0
    %8811 = vmatpush1.msra.mxu0 0.0
    %8812 = vmatprep.subr.mxu0 0.0
    %8813 = vmatpush1.msra.mxu0 0.0
    %8814 = vmatprep.subr.mxu0 0.0
    %8815 = vmatpush1.msra.mxu0 0.0
    %8816 = vmatprep.subr.mxu0 0.0
    %8817 = vmatpush1.msra.mxu0 0.0
    %8818 = vmatprep.subr.mxu0 0.0
    %8819 = vmatpush1.msra.mxu0 0.0
    %8820 = vmatprep.subr.mxu0 0.0
    %8821 = vmatpush1.msra.mxu0 0.0
    %8822 = vmatprep.subr.mxu0 0.0
    %8823 = vmatpush1.msra.mxu0 0.0
    %8824 = vmatprep.subr.mxu0 0.0
    %8825 = vmatpush1.msra.mxu0 0.0
    %8826 = vmatprep.subr.mxu0 0.0
    %8827 = vmatpush1.msra.mxu0 0.0
    %8828 = vmatprep.subr.mxu0 0.0
    %8829 = vmatpush1.msra.mxu0 0.0
    %8830 = vmatprep.subr.mxu0 0.0
    %8831 = vmatpush1.msra.mxu0 0.0
    %8832 = vmatprep.subr.mxu0 0.0
    %8833 = vmatpush1.msra.mxu0 0.0
    %8834 = vmatprep.subr.mxu0 0.0
    %8835 = vmatpush1.msra.mxu0 0.0
    %8836 = vmatprep.subr.mxu0 0.0
    %8837 = vmatpush1.msra.mxu0 0.0
    %8838 = vmatprep.subr.mxu0 0.0
    %8839 = vmatpush1.msra.mxu0 0.0
    %8840 = vmatprep.subr.mxu0 0.0
    %8841 = vmatpush1.msra.mxu0 0.0
    %8842 = vmatprep.subr.mxu0 0.0
    %8843 = vmatpush1.msra.mxu0 0.0
    %8844 = vmatprep.subr.mxu0 0.0
    %8845 = vmatpush1.msra.mxu0 0.0
    %8846 = vmatprep.subr.mxu0 0.0
    %8847 = vmatpush1.msra.mxu0 0.0
    %8848 = vmatprep.subr.mxu0 0.0
    %8849 = vmatpush1.msra.mxu0 0.0
    %8850 = vmatprep.subr.mxu0 0.0
    %8851 = vmatpush1.msra.mxu0 0.0
    %8852 = vmatprep.subr.mxu0 0.0
    %8853 = vmatpush1.msra.mxu0 0.0
    %8854 = vmatprep.subr.mxu0 0.0
    %8855 = vmatpush1.msra.mxu0 0.0
    %8856 = vmatprep.mubr.f32.mxu0 0.0
    %v8857 = vand.u32 %v8609, 4294901760
    %v8858 = vsub.f32 %v8609, %v8857
    %8859 = vmatmul.mubr.f32.gmra.mrb[0].mxu0 %v8858
    %v8860 = vpop.f32.mrb[0].mxu0
    %v8861 = vadd.f32 %v8779, %v8860
    %v8862 = vpop.f32.mrb[0].mxu0
    %8863 = vmatprep.mubr.f32.mxu0 0.0
    %v8864 = vand.u32 %v8612, 4294901760
    %v8865 = vsub.f32 %v8612, %v8864
    %8866 = vmatmul.mubr.f32.gmra.mrb[0].mxu0 %v8865
    %v8867 = vpop.f32.mrb[0].mxu0
    %v8868 = vadd.f32 %v8785, %v8867
    %v8869 = vpop.f32.mrb[0].mxu0
    %8870 = vdwg.mxu0
    %8871 = vmatprep.subr.mxu0 0.0
    %v8872 = vand.u32 %v5081, 4294901760
    %8873 = vmatpush1.msra.mxu0 %v8872
    %8874 = vmatprep.subr.mxu0 0.0
    %v8875 = vand.u32 %v5082, 4294901760
    %8876 = vmatpush1.msra.mxu0 %v8875
    %8877 = vmatprep.subr.mxu0 0.0
    %8878 = vmatpush1.msra.mxu0 0.0
    %8879 = vmatprep.subr.mxu0 0.0
    %8880 = vmatpush1.msra.mxu0 0.0
    %8881 = vmatprep.subr.mxu0 0.0
    %8882 = vmatpush1.msra.mxu0 0.0
    %8883 = vmatprep.subr.mxu0 0.0
    %8884 = vmatpush1.msra.mxu0 0.0
    %8885 = vmatprep.subr.mxu0 0.0
    %8886 = vmatpush1.msra.mxu0 0.0
    %8887 = vmatprep.subr.mxu0 0.0
    %8888 = vmatpush1.msra.mxu0 0.0
    %8889 = vmatprep.subr.mxu0 0.0
    %8890 = vmatpush1.msra.mxu0 0.0
    %8891 = vmatprep.subr.mxu0 0.0
    %8892 = vmatpush1.msra.mxu0 0.0
    %8893 = vmatprep.subr.mxu0 0.0
    %8894 = vmatpush1.msra.mxu0 0.0
    %8895 = vmatprep.subr.mxu0 0.0
    %8896 = vmatpush1.msra.mxu0 0.0
    %8897 = vmatprep.subr.mxu0 0.0
    %8898 = vmatpush1.msra.mxu0 0.0
    %8899 = vmatprep.subr.mxu0 0.0
    %8900 = vmatpush1.msra.mxu0 0.0
    %8901 = vmatprep.subr.mxu0 0.0
    %8902 = vmatpush1.msra.mxu0 0.0
    %8903 = vmatprep.subr.mxu0 0.0
    %8904 = vmatpush1.msra.mxu0 0.0
    %8905 = vmatprep.subr.mxu0 0.0
    %8906 = vmatpush1.msra.mxu0 0.0
    %8907 = vmatprep.subr.mxu0 0.0
    %8908 = vmatpush1.msra.mxu0 0.0
    %8909 = vmatprep.subr.mxu0 0.0
    %8910 = vmatpush1.msra.mxu0 0.0
    %8911 = vmatprep.subr.mxu0 0.0
    %8912 = vmatpush1.msra.mxu0 0.0
    %8913 = vmatprep.subr.mxu0 0.0
    %8914 = vmatpush1.msra.mxu0 0.0
    %8915 = vmatprep.subr.mxu0 0.0
    %8916 = vmatpush1.msra.mxu0 0.0
    %8917 = vmatprep.subr.mxu0 0.0
    %8918 = vmatpush1.msra.mxu0 0.0
    %8919 = vmatprep.subr.mxu0 0.0
    %8920 = vmatpush1.msra.mxu0 0.0
    %8921 = vmatprep.subr.mxu0 0.0
    %8922 = vmatpush1.msra.mxu0 0.0
    %8923 = vmatprep.subr.mxu0 0.0
    %8924 = vmatpush1.msra.mxu0 0.0
    %8925 = vmatprep.subr.mxu0 0.0
    %8926 = vmatpush1.msra.mxu0 0.0
    %8927 = vmatprep.subr.mxu0 0.0
    %8928 = vmatpush1.msra.mxu0 0.0
    %8929 = vmatprep.subr.mxu0 0.0
    %8930 = vmatpush1.msra.mxu0 0.0
    %8931 = vmatprep.subr.mxu0 0.0
    %8932 = vmatpush1.msra.mxu0 0.0
    %8933 = vmatprep.subr.mxu0 0.0
    %8934 = vmatpush1.msra.mxu0 0.0
    %8935 = vmatprep.subr.mxu0 0.0
    %8936 = vmatpush1.msra.mxu0 0.0
    %8937 = vmatprep.mubr.f32.mxu0 0.0
    %v8938 = vand.u32 %v8609, 4294901760
    %v8939 = vsub.f32 %v8609, %v8938
    %v8940 = vand.u32 %v8939, 4294901760
    %8941 = vmatmul.mubr.f32.gmra.mrb[0].mxu0 %v8940
    %v8942 = vpop.f32.mrb[0].mxu0
    %v8943 = vadd.f32 %v8861, %v8942
    %v8944 = vpop.f32.mrb[0].mxu0
    %8945 = vmatprep.mubr.f32.mxu0 0.0
    %v8946 = vand.u32 %v8612, 4294901760
    %v8947 = vsub.f32 %v8612, %v8946
    %v8948 = vand.u32 %v8947, 4294901760
    %8949 = vmatmul.mubr.f32.gmra.mrb[0].mxu0 %v8948
    %v8950 = vpop.f32.mrb[0].mxu0
    %v8951 = vadd.f32 %v8868, %v8950
    %v8952 = vpop.f32.mrb[0].mxu0
    %8953 = vdwg.mxu0
    %8954 = vmatprep.subr.mxu0 0.0
    %v8955 = vand.u32 %v5081, 4294901760
    %v8956 = vsub.f32 %v5081, %v8955
    %v8957 = vand.u32 %v8956, 4294901760
    %8958 = vmatpush1.msra.mxu0 %v8957
    %8959 = vmatprep.subr.mxu0 0.0
    %v8960 = vand.u32 %v5082, 4294901760
    %v8961 = vsub.f32 %v5082, %v8960
    %v8962 = vand.u32 %v8961, 4294901760
    %8963 = vmatpush1.msra.mxu0 %v8962
    %8964 = vmatprep.subr.mxu0 0.0
    %8965 = vmatpush1.msra.mxu0 0.0
    %8966 = vmatprep.subr.mxu0 0.0
    %8967 = vmatpush1.msra.mxu0 0.0
    %8968 = vmatprep.subr.mxu0 0.0
    %8969 = vmatpush1.msra.mxu0 0.0
    %8970 = vmatprep.subr.mxu0 0.0
    %8971 = vmatpush1.msra.mxu0 0.0
    %8972 = vmatprep.subr.mxu0 0.0
    %8973 = vmatpush1.msra.mxu0 0.0
    %8974 = vmatprep.subr.mxu0 0.0
    %8975 = vmatpush1.msra.mxu0 0.0
    %8976 = vmatprep.subr.mxu0 0.0
    %8977 = vmatpush1.msra.mxu0 0.0
    %8978 = vmatprep.subr.mxu0 0.0
    %8979 = vmatpush1.msra.mxu0 0.0
    %8980 = vmatprep.subr.mxu0 0.0
    %8981 = vmatpush1.msra.mxu0 0.0
    %8982 = vmatprep.subr.mxu0 0.0
    %8983 = vmatpush1.msra.mxu0 0.0
    %8984 = vmatprep.subr.mxu0 0.0
    %8985 = vmatpush1.msra.mxu0 0.0
    %8986 = vmatprep.subr.mxu0 0.0
    %8987 = vmatpush1.msra.mxu0 0.0
    %8988 = vmatprep.subr.mxu0 0.0
    %8989 = vmatpush1.msra.mxu0 0.0
    %8990 = vmatprep.subr.mxu0 0.0
    %8991 = vmatpush1.msra.mxu0 0.0
    %8992 = vmatprep.subr.mxu0 0.0
    %8993 = vmatpush1.msra.mxu0 0.0
    %8994 = vmatprep.subr.mxu0 0.0
    %8995 = vmatpush1.msra.mxu0 0.0
    %8996 = vmatprep.subr.mxu0 0.0
    %8997 = vmatpush1.msra.mxu0 0.0
    %8998 = vmatprep.subr.mxu0 0.0
    %8999 = vmatpush1.msra.mxu0 0.0
    %9000 = vmatprep.subr.mxu0 0.0
    %9001 = vmatpush1.msra.mxu0 0.0
    %9002 = vmatprep.subr.mxu0 0.0
    %9003 = vmatpush1.msra.mxu0 0.0
    %9004 = vmatprep.subr.mxu0 0.0
    %9005 = vmatpush1.msra.mxu0 0.0
    %9006 = vmatprep.subr.mxu0 0.0
    %9007 = vmatpush1.msra.mxu0 0.0
    %9008 = vmatprep.subr.mxu0 0.0
    %9009 = vmatpush1.msra.mxu0 0.0
    %9010 = vmatprep.subr.mxu0 0.0
    %9011 = vmatpush1.msra.mxu0 0.0
    %9012 = vmatprep.subr.mxu0 0.0
    %9013 = vmatpush1.msra.mxu0 0.0
    %9014 = vmatprep.subr.mxu0 0.0
    %9015 = vmatpush1.msra.mxu0 0.0
    %9016 = vmatprep.subr.mxu0 0.0
    %9017 = vmatpush1.msra.mxu0 0.0
    %9018 = vmatprep.subr.mxu0 0.0
    %9019 = vmatpush1.msra.mxu0 0.0
    %9020 = vmatprep.subr.mxu0 0.0
    %9021 = vmatpush1.msra.mxu0 0.0
    %9022 = vmatprep.subr.mxu0 0.0
    %9023 = vmatpush1.msra.mxu0 0.0
    %9024 = vmatprep.mubr.f32.mxu0 0.0
    %v9025 = vand.u32 %v8609, 4294901760
    %9026 = vmatmul.mubr.f32.gmra.mrb[0].mxu0 %v9025
    %v9027 = vpop.f32.mrb[0].mxu0
    %v9028 = vadd.f32 %v8943, %v9027
    %v9029 = vpop.f32.mrb[0].mxu0
    %9030 = vmatprep.mubr.f32.mxu0 0.0
    %v9031 = vand.u32 %v8612, 4294901760
    %9032 = vmatmul.mubr.f32.gmra.mrb[0].mxu0 %v9031
    %v9033 = vpop.f32.mrb[0].mxu0
    %v9034 = vadd.f32 %v8951, %v9033
    %v9035 = vpop.f32.mrb[0].mxu0
    %9036 = vdwg.mxu0
    %9037 = vmatprep.subr.mxu0 0.0
    %v9038 = vand.u32 %v5081, 4294901760
    %9039 = vmatpush1.msra.mxu0 %v9038
    %9040 = vmatprep.subr.mxu0 0.0
    %v9041 = vand.u32 %v5082, 4294901760
    %9042 = vmatpush1.msra.mxu0 %v9041
    %9043 = vmatprep.subr.mxu0 0.0
    %9044 = vmatpush1.msra.mxu0 0.0
    %9045 = vmatprep.subr.mxu0 0.0
    %9046 = vmatpush1.msra.mxu0 0.0
    %9047 = vmatprep.subr.mxu0 0.0
    %9048 = vmatpush1.msra.mxu0 0.0
    %9049 = vmatprep.subr.mxu0 0.0
    %9050 = vmatpush1.msra.mxu0 0.0
    %9051 = vmatprep.subr.mxu0 0.0
    %9052 = vmatpush1.msra.mxu0 0.0
    %9053 = vmatprep.subr.mxu0 0.0
    %9054 = vmatpush1.msra.mxu0 0.0
    %9055 = vmatprep.subr.mxu0 0.0
    %9056 = vmatpush1.msra.mxu0 0.0
    %9057 = vmatprep.subr.mxu0 0.0
    %9058 = vmatpush1.msra.mxu0 0.0
    %9059 = vmatprep.subr.mxu0 0.0
    %9060 = vmatpush1.msra.mxu0 0.0
    %9061 = vmatprep.subr.mxu0 0.0
    %9062 = vmatpush1.msra.mxu0 0.0
    %9063 = vmatprep.subr.mxu0 0.0
    %9064 = vmatpush1.msra.mxu0 0.0
    %9065 = vmatprep.subr.mxu0 0.0
    %9066 = vmatpush1.msra.mxu0 0.0
    %9067 = vmatprep.subr.mxu0 0.0
    %9068 = vmatpush1.msra.mxu0 0.0
    %9069 = vmatprep.subr.mxu0 0.0
    %9070 = vmatpush1.msra.mxu0 0.0
    %9071 = vmatprep.subr.mxu0 0.0
    %9072 = vmatpush1.msra.mxu0 0.0
    %9073 = vmatprep.subr.mxu0 0.0
    %9074 = vmatpush1.msra.mxu0 0.0
    %9075 = vmatprep.subr.mxu0 0.0
    %9076 = vmatpush1.msra.mxu0 0.0
    %9077 = vmatprep.subr.mxu0 0.0
    %9078 = vmatpush1.msra.mxu0 0.0
    %9079 = vmatprep.subr.mxu0 0.0
    %9080 = vmatpush1.msra.mxu0 0.0
    %9081 = vmatprep.subr.mxu0 0.0
    %9082 = vmatpush1.msra.mxu0 0.0
    %9083 = vmatprep.subr.mxu0 0.0
    %9084 = vmatpush1.msra.mxu0 0.0
    %9085 = vmatprep.subr.mxu0 0.0
    %9086 = vmatpush1.msra.mxu0 0.0
    %9087 = vmatprep.subr.mxu0 0.0
    %9088 = vmatpush1.msra.mxu0 0.0
    %9089 = vmatprep.subr.mxu0 0.0
    %9090 = vmatpush1.msra.mxu0 0.0
    %9091 = vmatprep.subr.mxu0 0.0
    %9092 = vmatpush1.msra.mxu0 0.0
    %9093 = vmatprep.subr.mxu0 0.0
    %9094 = vmatpush1.msra.mxu0 0.0
    %9095 = vmatprep.subr.mxu0 0.0
    %9096 = vmatpush1.msra.mxu0 0.0
    %9097 = vmatprep.subr.mxu0 0.0
    %9098 = vmatpush1.msra.mxu0 0.0
    %9099 = vmatprep.subr.mxu0 0.0
    %9100 = vmatpush1.msra.mxu0 0.0
    %9101 = vmatprep.subr.mxu0 0.0
    %9102 = vmatpush1.msra.mxu0 0.0
    %9103 = vmatprep.mubr.f32.mxu0 0.0
    %v9104 = vand.u32 %v8609, 4294901760
    %9105 = vmatmul.mubr.f32.gmra.mrb[0].mxu0 %v9104
    %v9106 = vpop.f32.mrb[0].mxu0
    %v9107 = vadd.f32 %v9028, %v9106
    %v9108 = vpop.f32.mrb[0].mxu0
    %9109 = vmatprep.mubr.f32.mxu0 0.0
    %v9110 = vand.u32 %v8612, 4294901760
    %9111 = vmatmul.mubr.f32.gmra.mrb[0].mxu0 %v9110
    %v9112 = vpop.f32.mrb[0].mxu0
    %v9113 = vadd.f32 %v9034, %v9112
    %v9114 = vpop.f32.mrb[0].mxu0
    %9115 = vdwg.mxu0
    %v9116 = vmul.f32 %v1194, %v9107
    %v9117 = vmul.f32 %v1199, %v9113
    %v9118 = vadd.f32 %v9116, 0.0
    %v9119 = vadd.f32 %v9117, 0.0
    %v9120 = vmul.f32 %v1207, %v9107
    %v9121 = vmul.f32 %v1211, %v9113
    %9124 = vrot.lane.b32.xlu0 %v9120, 112
    %v9125 = vpop.permute.xlu0 %9124
    %9126 = vrot.lane.b32.xlu0 %v9121, 112
    %v9127 = vpop.permute.xlu0 %9126
    %v9130 = vadd.f32 %v9118, %v9125
    %v9131 = vadd.f32 %v9119, %v9127
    %v9132 = vmul.f32 %v1238, %v9107
    %v9133 = vmul.f32 %v1242, %v9113
    %9136 = vrot.lane.b32.xlu0 %v9132, 96
    %v9137 = vpop.permute.xlu0 %9136
    %9138 = vrot.lane.b32.xlu0 %v9133, 96
    %v9139 = vpop.permute.xlu0 %9138
    %v9142 = vadd.f32 %v9130, %v9137
    %v9143 = vadd.f32 %v9131, %v9139
    %9144 = vst.msk [vmem:[#allocation10] sm:$0xff] %vm142, %v9142
    %9145 = vst.msk [vmem:[#allocation10 + $0x8] sm:$0xff] %vm142, %v9143
    // Predicated region
    $region62: #{tpu_custom_call.1} parent=1 // pred_check
      _
    $region63: #{tpu_custom_call.1} parent=1 // pred_check_branch
      %9147 = sbr.rel (0) target = $region65
    $region64: #{tpu_custom_call.1} parent=1 // pred_region
      %s9149 = ssub.s32 256, 256
      %9150 = vsyncadd [#allocation4], %s9149
      %s9151 = sshll.u32 [#allocation10], 4
      %s9152 = int_to_ptr.vmem [resolvable:$true] %s9151
      %9157 = dma.vmem_to_hbm [thread:$0]  %s9152, 256, %s11, [#allocation4], 128, 128, 8
    $region65: #{tpu_custom_call.1} parent=1 // pred_fallthru
      _
    // Predicated region
    $region66: #{tpu_custom_call.1} parent=1 // pred_check
      _
    $region67: #{tpu_custom_call.1} parent=1 // pred_check_branch
      %9159 = sbr.rel (0) target = $region69
    $region68: #{tpu_custom_call.1} parent=1 // pred_region
      %9160 = dma.done [#allocation4], 256
    $region69: #{tpu_custom_call.1} parent=1 // pred_fallthru
      _
    %9161 = vsyncpa [#allocation3], 1
    %9162 = vsyncpa [#allocation6], 1
    %9163 = vsyncpa [#allocation9], 1
    %9164 = vsyncpa [#allocation4], 1

</llo_original>
